<compile_context>
chip_gen: v7x
topology: tpu7x:2x2x1
jax: 0.10.0
libtpu: 0.0.40
codegen_flags: <defaults>
</compile_context>

<pallas_src>
import math
from functools import partial

import jax
import jax.numpy as jnp
import numpy as np
from jax.experimental import pallas as pl
from jax.experimental.pallas import tpu as pltpu


# packed parameter names consumed by the fused Pallas kernel (stacked over layers)
PACKED_KEYS = [
    "sa_wqkv", "sa_bqkv", "sa_wo", "sa_bo", "n1_g", "n1_b",
    "ca_wq", "ca_bq", "ca_wkv", "ca_bkv", "ca_wo", "ca_bo", "n2_g", "n2_b",
    "ff_w1", "ff_b1", "ff_w2", "ff_b2", "n3_g", "n3_b",
]


# ----------------------------------------------------------------------------
# In-kernel math (operates on plain jnp values loaded from refs)
# ----------------------------------------------------------------------------

def _layernorm(x, g, b, eps=1e-12):
    # TODO(synk): eps=1e-12 matches the repo's custom LayerNorm; torch default is 1e-5.
    mu = jnp.mean(x, axis=-1, keepdims=True)
    var = jnp.mean(jnp.square(x - mu), axis=-1, keepdims=True)
    return g * ((x - mu) * jax.lax.rsqrt(var + eps)) + b


def _mha(q, k, v, bias, bt, tq, tk, n_head, scale):
    """q: [bt*tq, D]; k,v: [bt*tk, D]; bias: [bt, tq|1, tk] additive. Returns [bt*tq, D]."""
    D = q.shape[-1]
    dh = D // n_head
    outs = []
    for b in range(bt):                                    # static, small batch tile
        qh = jnp.transpose(q[b * tq:(b + 1) * tq].reshape(tq, n_head, dh), (1, 0, 2))
        kh = jnp.transpose(k[b * tk:(b + 1) * tk].reshape(tk, n_head, dh), (1, 0, 2))
        vh = jnp.transpose(v[b * tk:(b + 1) * tk].reshape(tk, n_head, dh), (1, 0, 2))
        s = jnp.einsum("hqd,hkd->hqk", qh, kh,
                       preferred_element_type=jnp.float32) * scale
        s = s + bias[b][None]                              # additive 0 / -10000 mask bias
        s = s - jnp.max(s, axis=-1, keepdims=True)
        p = jnp.exp(s)
        p = p * pl.reciprocal(jnp.sum(p, axis=-1, keepdims=True), approx=True)
        o = jnp.einsum("hqk,hkd->hqd", p, vh, preferred_element_type=jnp.float32)
        outs.append(jnp.transpose(o, (1, 0, 2)).reshape(tq, D))   # concat heads -> [tq, D]
    return jnp.concatenate(outs, axis=0) if bt > 1 else outs[0]


def _kernel_layer(x, enc, tbias, sbias, w, n_head):
    Bt, T, D = x.shape
    S = enc.shape[1]
    dh = D // n_head
    scale = 1.0 / math.sqrt(dh)
    cdt = w["sa_wqkv"].dtype                 # compute dtype of the matmul inputs (bf16/f32)

    xr = x.reshape(Bt * T, D)
    er = enc.reshape(Bt * S, D)

    def dense(a, wname, bname):
        return (jnp.dot(a.astype(cdt), w[wname], preferred_element_type=jnp.float32)
                + w[bname])

    # ---- masked self-attention (single fused QKV matmul) + residual + norm ----
    qkv = dense(xr, "sa_wqkv", "sa_bqkv")                       # [Bt*T, 3D]
    q, k, v = qkv[:, :D], qkv[:, D:2 * D], qkv[:, 2 * D:]       # 128-aligned column splits
    ctx = _mha(q, k, v, tbias, Bt, T, T, n_head, scale)         # [Bt*T, D]
    sa = (jnp.dot(ctx.astype(cdt), w["sa_wo"], preferred_element_type=jnp.float32)
          + w["sa_bo"])
    xr = _layernorm(sa + xr, w["n1_g"], w["n1_b"])

    # ---- encoder-decoder attention (fused KV matmul) + residual + norm ----
    q = dense(xr, "ca_wq", "ca_bq")                             # [Bt*T, D]
    kv = dense(er, "ca_wkv", "ca_bkv")                          # [Bt*S, 2D]
    k, v = kv[:, :D], kv[:, D:]
    ctx = _mha(q, k, v, sbias, Bt, T, S, n_head, scale)
    ca = (jnp.dot(ctx.astype(cdt), w["ca_wo"], preferred_element_type=jnp.float32)
          + w["ca_bo"])
    xr = _layernorm(ca + xr, w["n2_g"], w["n2_b"])

    # ---- position-wise FFN + residual + norm ----
    h = jnp.maximum(dense(xr, "ff_w1", "ff_b1"), 0.0)
    f = (jnp.dot(h.astype(cdt), w["ff_w2"], preferred_element_type=jnp.float32)
         + w["ff_b2"])
    xr = _layernorm(f + xr, w["n3_g"], w["n3_b"])
    return xr.reshape(Bt, T, D)


# ----------------------------------------------------------------------------
# Pallas kernels
# ----------------------------------------------------------------------------

def decoder_stack_kernel(n_head, x_ref, enc_ref, tbias_ref, sbias_ref, *rest):
    *w_refs, out_ref = rest
    l = pl.program_id(1)

    @pl.when(l == 0)
    def _():
        out_ref[...] = x_ref[...]          # load this batch tile's activations once

    w = {name: r[0] for name, r in zip(PACKED_KEYS, w_refs)}
    y = _kernel_layer(out_ref[...], enc_ref[...], tbias_ref[...], sbias_ref[...], w, n_head)
    out_ref[...] = y                       # carried across the (arbitrary) layer axis


def decoder_stack(x, enc, tbias, sbias, packed, n_head, batch_tile=None):
    B, T, D = x.shape
    S = enc.shape[1]
    weights = [packed[k] for k in PACKED_KEYS]
    L = weights[0].shape[0]
    Bt = B if batch_tile is None else batch_tile
    assert B % Bt == 0, "batch_tile must divide the batch size"

    def wspec(a):
        nd = a.ndim
        blk = (1,) + a.shape[1:]
        return pl.BlockSpec(blk, lambda b, l, _nd=nd: (l,) + (0,) * (_nd - 1))

    in_specs = [
        pl.BlockSpec((Bt, T, D), lambda b, l: (b, 0, 0)),   # x (resident across layers)
        pl.BlockSpec((Bt, S, D), lambda b, l: (b, 0, 0)),   # enc_src
        pl.BlockSpec((Bt, T, T), lambda b, l: (b, 0, 0)),   # additive trg-mask bias
        pl.BlockSpec((Bt, 1, S), lambda b, l: (b, 0, 0)),   # additive src-mask bias
    ] + [wspec(w) for w in weights]                         # layer-l weights, streamed

    # VMEM budget: resident activations/masks (+double buffer) + 2x per-layer weights + slack
    act_bytes = (Bt * T * D + Bt * S * D + Bt * T * T + Bt * S) * 4
    w_bytes = sum(int(np.prod(a.shape[1:])) * a.dtype.itemsize for a in weights)
    vmem_limit = int(min(max(2 * w_bytes + 4 * act_bytes + (8 << 20), 32 << 20), 64 << 20))

    # NOTE (v7x): marking the batch-tile axis "parallel" shards it across TensorCores, which
    # duplicates per-layer weight streaming per core; acceptable given v7x HBM bandwidth.
    return pl.pallas_call(
        partial(decoder_stack_kernel, n_head),
        out_shape=jax.ShapeDtypeStruct((B, T, D), jnp.float32),
        grid=(B // Bt, L),
        in_specs=in_specs,
        out_specs=pl.BlockSpec((Bt, T, D), lambda b, l: (b, 0, 0)),
        compiler_params=pltpu.CompilerParams(
            dimension_semantics=("parallel", "arbitrary"),
            vmem_limit_bytes=vmem_limit),
    )(x, enc, tbias, sbias, *weights)


def final_linear_kernel(x_ref, w_ref, b_ref, out_ref):
    wv = w_ref[...]
    out_ref[...] = (jnp.dot(x_ref[...].astype(wv.dtype), wv,
                            preferred_element_type=jnp.float32) + b_ref[...])


def final_linear(x, w, b, tile_n=512):
    """[B*T, D] @ [D, Vp] + [1, Vp]; rows merged so each vocab weight tile is DMA'd once."""
    B, T, D = x.shape
    Vp = w.shape[1]
    R = B * T
    TN = math.gcd(Vp, tile_n)               # Vp and tile_n are multiples of 128
    x2 = x.reshape(R, D)
    out = pl.pallas_call(
        final_linear_kernel,
        out_shape=jax.ShapeDtypeStruct((R, Vp), jnp.float32),
        grid=(Vp // TN,),
        in_specs=[
            pl.BlockSpec((R, D), lambda j: (0, 0)),     # small x block stays resident
            pl.BlockSpec((D, TN), lambda j: (0, j)),    # vocab weight tile streamed once
            pl.BlockSpec((1, TN), lambda j: (0, j)),
        ],
        out_specs=pl.BlockSpec((R, TN), lambda j: (0, j)),
        compiler_params=pltpu.CompilerParams(
            dimension_semantics=("parallel",)),
    )(x2, w, b)
    return out.reshape(B, T, Vp)


# ----------------------------------------------------------------------------
# Parameter init / packing / embedding glue
# ----------------------------------------------------------------------------

def sinusoid_pos_encoding(max_len, d_model):
    pos = np.arange(max_len, dtype=np.float32)[:, None]
    two_i = np.arange(0, d_model, 2, dtype=np.float32)
    enc = np.zeros((max_len, d_model), dtype=np.float32)
    enc[:, 0::2] = np.sin(pos / (10000.0 ** (two_i / d_model)))
    enc[:, 1::2] = np.cos(pos / (10000.0 ** (two_i / d_model)))
    return jnp.asarray(enc)


def init_params(key, vocab, max_len, d_model, ffn_hidden, n_layers, pad_idx=1):
    n_dense_per_layer = 10
    keys = iter(jax.random.split(key, 2 + n_layers * n_dense_per_layer))

    def dense(fan_in, fan_out):
        kw, kb = jax.random.split(next(keys))
        w = jax.random.normal(kw, (fan_in, fan_out), jnp.float32) * 0.05
        b = jax.random.normal(kb, (1, fan_out), jnp.float32) * 0.05
        return w, b

    emb_table = jax.random.normal(next(keys), (vocab, d_model), jnp.float32) * 0.05
    emb_table = emb_table.at[pad_idx].set(0.0)   # padding_idx row is zero

    layers = []
    for _ in range(n_layers):
        p = {}
        for pre in ("sa", "ca"):
            for nm in ("q", "k", "v", "o"):
                w, b = dense(d_model, d_model)
                p[f"{pre}_w{nm}"], p[f"{pre}_b{nm}"] = w, b
        p["ff_w1"], p["ff_b1"] = dense(d_model, ffn_hidden)
        p["ff_w2"], p["ff_b2"] = dense(ffn_hidden, d_model)
        for i in (1, 2, 3):
            p[f"n{i}_g"] = jnp.ones((1, d_model), jnp.float32)
            p[f"n{i}_b"] = jnp.zeros((1, d_model), jnp.float32)
        layers.append(p)

    out_w, out_b = dense(d_model, vocab)
    return {
        "emb_table": emb_table,
        "pos_enc": sinusoid_pos_encoding(max_len, d_model),
        "layers": layers,
        "out_w": out_w,
        "out_b": out_b,
    }


def pack_params(layers, weight_dtype=jnp.bfloat16):
    """Fuse QKV / KV weights into dense [D, 3D] / [D, 2D] matrices, stacked over L.

    Matmul weights are cast to `weight_dtype` (bf16 halves HBM streaming bytes and VMEM);
    biases and LayerNorm params stay f32 (added to f32 accumulators).
    """
    packed_layers = []
    for p in layers:
        q = {}
        q["sa_wqkv"] = jnp.concatenate(
            [p["sa_wq"], p["sa_wk"], p["sa_wv"]], axis=1).astype(weight_dtype)
        q["sa_bqkv"] = jnp.concatenate([p["sa_bq"], p["sa_bk"], p["sa_bv"]], axis=1)
        q["sa_wo"] = p["sa_wo"].astype(weight_dtype)
        q["sa_bo"] = p["sa_bo"]
        q["ca_wq"] = p["ca_wq"].astype(weight_dtype)
        q["ca_bq"] = p["ca_bq"]
        q["ca_wkv"] = jnp.concatenate([p["ca_wk"], p["ca_wv"]], axis=1).astype(weight_dtype)
        q["ca_bkv"] = jnp.concatenate([p["ca_bk"], p["ca_bv"]], axis=1)
        q["ca_wo"] = p["ca_wo"].astype(weight_dtype)
        q["ca_bo"] = p["ca_bo"]
        q["ff_w1"] = p["ff_w1"].astype(weight_dtype)
        q["ff_b1"] = p["ff_b1"]
        q["ff_w2"] = p["ff_w2"].astype(weight_dtype)
        q["ff_b2"] = p["ff_b2"]
        for nm in ("n1_g", "n1_b", "n2_g", "n2_b", "n3_g", "n3_b"):
            q[nm] = p[nm]
        packed_layers.append(q)
    return {k: jnp.stack([q[k] for q in packed_layers], axis=0) for k in PACKED_KEYS}


def prepare_decoder_params(params, weight_dtype=jnp.bfloat16):
    """One-time packing / vocab padding (hoisted out of the per-call forward)."""
    D, V = params["out_w"].shape
    Vp = pl.cdiv(V, 128) * 128
    out_w = jnp.zeros((D, Vp), weight_dtype).at[:, :V].set(
        params["out_w"].astype(weight_dtype))
    out_b = jnp.zeros((1, Vp), jnp.float32).at[:, :V].set(params["out_b"])
    return {
        "emb_table": params["emb_table"],
        "pos_enc": params["pos_enc"],
        "packed": pack_params(params["layers"], weight_dtype),
        "out_w": out_w,
        "out_b": out_b,
    }


def decoder_forward(trg, enc_src, trg_mask, src_mask, prepared, *, n_head, vocab):
    T = trg.shape[1]
    # TODO(synk): token-embedding gather + sinusoidal positional encoding stay in plain JAX
    # (XLA gather); everything downstream runs in Pallas kernels.
    x = prepared["emb_table"][trg] + prepared["pos_enc"][:T][None, :, :]
    # additive mask biases (0 keep / -10000 masked), hoisted out of the kernel
    tbias = (trg_mask - 1.0) * 10000.0
    sbias = (src_mask - 1.0) * 10000.0
    x = decoder_stack(x, enc_src, tbias, sbias, prepared["packed"], n_head)
    logits = final_linear(x, prepared["out_w"], prepared["out_b"])
    return logits[:, :, :vocab]


# ----------------------------------------------------------------------------
# Pure-JAX reference (original per-head / per-layer formulation, f32)
# ----------------------------------------------------------------------------

def _ref_mha(xq, xkv, wq, bq, wk, bk, wv, bv, wo, bo, mask, n_head):
    d_model = xq.shape[-1]
    dh = d_model // n_head
    scale = 1.0 / math.sqrt(dh)
    q = jnp.dot(xq, wq) + bq
    k = jnp.dot(xkv, wk) + bk
    v = jnp.dot(xkv, wv) + bv
    heads = []
    for h in range(n_head):
        qh = q[:, h * dh:(h + 1) * dh]
        kh = k[:, h * dh:(h + 1) * dh]
        vh = v[:, h * dh:(h + 1) * dh]
        s = jnp.dot(qh, kh.T) * scale
        s = jnp.where(mask == 0, -10000.0, s)
        s = s - jnp.max(s, axis=-1, keepdims=True)
        p = jnp.exp(s)
        p = p / jnp.sum(p, axis=-1, keepdims=True)
        heads.append(jnp.dot(p, vh))
    o = jnp.concatenate(heads, axis=-1)
    return jnp.dot(o, wo) + bo


def _ref_layer(x, enc, tmask, smask, w, n_head):
    sa = _ref_mha(x, x, w["sa_wq"], w["sa_bq"], w["sa_wk"], w["sa_bk"],
                  w["sa_wv"], w["sa_bv"], w["sa_wo"], w["sa_bo"], tmask, n_head)
    x = _layernorm(sa + x, w["n1_g"], w["n1_b"])
    ca = _ref_mha(x, enc, w["ca_wq"], w["ca_bq"], w["ca_wk"], w["ca_bk"],
                  w["ca_wv"], w["ca_bv"], w["ca_wo"], w["ca_bo"], smask, n_head)
    x = _layernorm(ca + x, w["n2_g"], w["n2_b"])
    h = jnp.maximum(jnp.dot(x, w["ff_w1"]) + w["ff_b1"], 0.0)
    f = jnp.dot(h, w["ff_w2"]) + w["ff_b2"]
    x = _layernorm(f + x, w["n3_g"], w["n3_b"])
    return x


def reference_decoder(trg, enc_src, trg_mask, src_mask, params, n_head):
    T = trg.shape[1]
    x = params["emb_table"][trg] + params["pos_enc"][:T][None, :, :]
    for lp in params["layers"]:
        x = jnp.stack([
            _ref_layer(x[b], enc_src[b], trg_mask[b], src_mask[b], lp, n_head)
            for b in range(x.shape[0])
        ])
    return jnp.einsum("btd,dv->btv", x, params["out_w"]) + params["out_b"][0]


# ----------------------------------------------------------------------------

if __name__ == "__main__":
    B, T, S = 2, 8, 16
    d_model, ffn_hidden, n_head, n_layers = 128, 256, 4, 2
    dec_voc_size, max_len = 50, 32
    pad_idx = 1

    key = jax.random.PRNGKey(0)
    k_tok, k_enc, k_par = jax.random.split(key, 3)

    trg = jax.random.randint(k_tok, (B, T), 2, dec_voc_size).astype(jnp.int32)
    enc_src = jax.random.normal(k_enc, (B, S, d_model), jnp.float32)

    # trg_mask: causal lower-triangular; src_mask: last two source positions padded
    trg_mask = jnp.broadcast_to(jnp.tril(jnp.ones((T, T), jnp.float32)), (B, T, T))
    src_mask = jnp.ones((B, 1, S), jnp.float32).at[:, :, S - 2:].set(0.0)

    params = init_params(k_par, dec_voc_size, max_len, d_model, ffn_hidden, n_layers, pad_idx)
    fwd = jax.jit(partial(decoder_forward, n_head=n_head, vocab=dec_voc_size))

    # performance path: bf16-streamed weights
    prepared_bf16 = prepare_decoder_params(params, weight_dtype=jnp.bfloat16)
    out_bf16 = jax.block_until_ready(fwd(trg, enc_src, trg_mask, src_mask, prepared_bf16))
    assert out_bf16.shape == (B, T, dec_voc_size)

    # parity path: f32 weights for a tight check against the pure-JAX reference
    prepared_f32 = prepare_decoder_params(params, weight_dtype=jnp.float32)
    out_f32 = jax.block_until_ready(fwd(trg, enc_src, trg_mask, src_mask, prepared_f32))

    ref = reference_decoder(trg, enc_src, trg_mask, src_mask, params, n_head)
    np.testing.assert_allclose(np.asarray(out_f32), np.asarray(ref), rtol=2e-2, atol=2e-2)
    # bf16 weight/activation streaming quantization => looser tolerance vs the f32 reference
    np.testing.assert_allclose(np.asarray(out_bf16), np.asarray(ref), rtol=6e-2, atol=6e-2)

    print("KERNEL_OK")
</pallas_src>

<mosaic_0001>
module attributes {stable_mosaic.version = 11 : i64} {
  func.func @final_linear_kernel(%arg0: i32, %arg1: memref<16x128xf32, #tpu.memory_space<vmem>>, %arg2: memref<128x128xbf16, #tpu.memory_space<vmem>>, %arg3: memref<1x128xf32, #tpu.memory_space<vmem>>, %arg4: memref<16x128xf32, #tpu.memory_space<vmem>>) attributes {dimension_semantics = [#tpu.dimension_semantics<parallel>], iteration_bounds = array<i64: 1>, scalar_prefetch = 0 : i64, scratch_operands = 0 : i64, tpu.core_type = #tpu.core_type<tc>, window_params = [{pipeline_mode = #tpu.pipeline_mode<synchronous>, transform_indices = @transform_0, window_bounds = array<i64: 16, 128>}, {transform_indices = @transform_1, window_bounds = array<i64: 128, 128>}, {transform_indices = @transform_2, window_bounds = array<i64: 1, 128>}, {transform_indices = @transform_3, window_bounds = array<i64: 16, 128>}]} {
    %c0 = arith.constant 0 : index
    %c0_0 = arith.constant 0 : index
    %0 = vector.load %arg2[%c0, %c0_0] : memref<128x128xbf16, #tpu.memory_space<vmem>>, vector<128x128xbf16>
    %c0_1 = arith.constant 0 : index
    %c0_2 = arith.constant 0 : index
    %1 = vector.load %arg1[%c0_1, %c0_2] : memref<16x128xf32, #tpu.memory_space<vmem>>, vector<16x128xf32>
    %2 = arith.truncf %1 : vector<16x128xf32> to vector<16x128xbf16>
    %cst = arith.constant dense<0.000000e+00> : vector<16x128xf32>
    %3 = tpu.matmul %2, %0, %cst {dimension_numbers = #tpu.dot_dimension_numbers<[1], [0], [0], [1], [0, 0, 1, 1], [], []>} : vector<16x128xbf16>, vector<128x128xbf16>, vector<16x128xf32> -> vector<16x128xf32>
    %c0_3 = arith.constant 0 : index
    %c0_4 = arith.constant 0 : index
    %4 = vector.load %arg3[%c0_3, %c0_4] : memref<1x128xf32, #tpu.memory_space<vmem>>, vector<1x128xf32>
    %5 = vector.broadcast %4 : vector<1x128xf32> to vector<16x128xf32>
    %6 = arith.addf %3, %5 : vector<16x128xf32>
    %c0_5 = arith.constant 0 : index
    %c0_6 = arith.constant 0 : index
    %7 = vector.load %arg4[%c0_5, %c0_6] : memref<16x128xf32, #tpu.memory_space<vmem>>, vector<16x128xf32>
    tpu.vector_store %arg4[%c0_5, %c0_6], %6 {strides = array<i32>} : memref<16x128xf32, #tpu.memory_space<vmem>>, vector<16x128xf32>,
    return
  }
  func.func @transform_0(%arg0: i32) -> (i32, i32) {
    %c0_i32 = arith.constant 0 : i32
    %c0_i32_0 = arith.constant 0 : i32
    %c0_i32_1 = arith.constant 0 : i32
    return %c0_i32, %c0_i32_0 : i32, i32
  }
  func.func @transform_1(%arg0: i32) -> (i32, i32) {
    %c0_i32 = arith.constant 0 : i32
    %c0_i32_0 = arith.constant 0 : i32
    return %c0_i32, %arg0 : i32, i32
  }
  func.func @transform_2(%arg0: i32) -> (i32, i32) {
    %c0_i32 = arith.constant 0 : i32
    %c0_i32_0 = arith.constant 0 : i32
    return %c0_i32, %arg0 : i32, i32
  }
  func.func @transform_3(%arg0: i32) -> (i32, i32) {
    %c0_i32 = arith.constant 0 : i32
    %c0_i32_0 = arith.constant 0 : i32
    return %c0_i32, %arg0 : i32, i32
  }
}

module attributes {stable_mosaic.version = 11 : i64} {
  func.func @decoder_stack_kernel(%arg0: i32, %arg1: i32, %arg2: memref<2x8x128xf32, #tpu.memory_space<vmem>>, %arg3: memref<2x16x128xf32, #tpu.memory_space<vmem>>, %arg4: memref<2x8x8xf32, #tpu.memory_space<vmem>>, %arg5: memref<2x1x16xf32, #tpu.memory_space<vmem>>, %arg6: memref<1x128x384xbf16, #tpu.memory_space<vmem>>, %arg7: memref<1x1x384xf32, #tpu.memory_space<vmem>>, %arg8: memref<1x128x128xbf16, #tpu.memory_space<vmem>>, %arg9: memref<1x1x128xf32, #tpu.memory_space<vmem>>, %arg10: memref<1x1x128xf32, #tpu.memory_space<vmem>>, %arg11: memref<1x1x128xf32, #tpu.memory_space<vmem>>, %arg12: memref<1x128x128xbf16, #tpu.memory_space<vmem>>, %arg13: memref<1x1x128xf32, #tpu.memory_space<vmem>>, %arg14: memref<1x128x256xbf16, #tpu.memory_space<vmem>>, %arg15: memref<1x1x256xf32, #tpu.memory_space<vmem>>, %arg16: memref<1x128x128xbf16, #tpu.memory_space<vmem>>, %arg17: memref<1x1x128xf32, #tpu.memory_space<vmem>>, %arg18: memref<1x1x128xf32, #tpu.memory_space<vmem>>, %arg19: memref<1x1x128xf32, #tpu.memory_space<vmem>>, %arg20: memref<1x128x256xbf16, #tpu.memory_space<vmem>>, %arg21: memref<1x1x256xf32, #tpu.memory_space<vmem>>, %arg22: memref<1x256x128xbf16, #tpu.memory_space<vmem>>, %arg23: memref<1x1x128xf32, #tpu.memory_space<vmem>>, %arg24: memref<1x1x128xf32, #tpu.memory_space<vmem>>, %arg25: memref<1x1x128xf32, #tpu.memory_space<vmem>>, %arg26: memref<2x8x128xf32, #tpu.memory_space<vmem>>) attributes {dimension_semantics = [#tpu.dimension_semantics<parallel>, #tpu.dimension_semantics<arbitrary>], iteration_bounds = array<i64: 1, 2>, scalar_prefetch = 0 : i64, scratch_operands = 0 : i64, tpu.core_type = #tpu.core_type<tc>, window_params = [{transform_indices = @transform_0, window_bounds = array<i64: 2, 8, 128>}, {transform_indices = @transform_1, window_bounds = array<i64: 2, 16, 128>}, {transform_indices = @transform_2, window_bounds = array<i64: 2, 8, 8>}, {transform_indices = @transform_3, window_bounds = array<i64: 2, 1, 16>}, {transform_indices = @transform_4, window_bounds = array<i64: 1, 128, 384>}, {transform_indices = @transform_5, window_bounds = array<i64: 1, 1, 384>}, {transform_indices = @transform_6, window_bounds = array<i64: 1, 128, 128>}, {transform_indices = @transform_7, window_bounds = array<i64: 1, 1, 128>}, {transform_indices = @transform_8, window_bounds = array<i64: 1, 1, 128>}, {transform_indices = @transform_9, window_bounds = array<i64: 1, 1, 128>}, {transform_indices = @transform_10, window_bounds = array<i64: 1, 128, 128>}, {transform_indices = @transform_11, window_bounds = array<i64: 1, 1, 128>}, {transform_indices = @transform_12, window_bounds = array<i64: 1, 128, 256>}, {transform_indices = @transform_13, window_bounds = array<i64: 1, 1, 256>}, {transform_indices = @transform_14, window_bounds = array<i64: 1, 128, 128>}, {transform_indices = @transform_15, window_bounds = array<i64: 1, 1, 128>}, {transform_indices = @transform_16, window_bounds = array<i64: 1, 1, 128>}, {transform_indices = @transform_17, window_bounds = array<i64: 1, 1, 128>}, {transform_indices = @transform_18, window_bounds = array<i64: 1, 128, 256>}, {transform_indices = @transform_19, window_bounds = array<i64: 1, 1, 256>}, {transform_indices = @transform_20, window_bounds = array<i64: 1, 256, 128>}, {transform_indices = @transform_21, window_bounds = array<i64: 1, 1, 128>}, {transform_indices = @transform_22, window_bounds = array<i64: 1, 1, 128>}, {transform_indices = @transform_23, window_bounds = array<i64: 1, 1, 128>}, {transform_indices = @transform_24, window_bounds = array<i64: 2, 8, 128>}]} {
    %c0_i32 = arith.constant 0 : i32
    %0 = arith.cmpi eq, %arg1, %c0_i32 : i32
    %1 = arith.extui %0 : i1 to i32
    %c0_i32_0 = arith.constant 0 : i32
    %2 = arith.cmpi ne, %1, %c0_i32_0 : i32
    scf.if %2 {
      %c0_117 = arith.constant 0 : index
      %c0_118 = arith.constant 0 : index
      %c0_119 = arith.constant 0 : index
      %277 = vector.load %arg2[%c0_117, %c0_118, %c0_119] : memref<2x8x128xf32, #tpu.memory_space<vmem>>, vector<2x8x128xf32>
      %c0_120 = arith.constant 0 : index
      %c0_121 = arith.constant 0 : index
      %c0_122 = arith.constant 0 : index
      %278 = vector.load %arg26[%c0_120, %c0_121, %c0_122] : memref<2x8x128xf32, #tpu.memory_space<vmem>>, vector<2x8x128xf32>
      tpu.vector_store %arg26[%c0_120, %c0_121, %c0_122], %277 {strides = array<i32>} : memref<2x8x128xf32, #tpu.memory_space<vmem>>, vector<2x8x128xf32>,
    } else {
    }
    %c0 = arith.constant 0 : index
    %c0_1 = arith.constant 0 : index
    %c0_2 = arith.constant 0 : index
    %3 = vector.load %arg6[%c0, %c0_1, %c0_2] : memref<1x128x384xbf16, #tpu.memory_space<vmem>>, vector<1x128x384xbf16>
    %4 = vector.shape_cast %3 : vector<1x128x384xbf16> to vector<128x384xbf16>
    %c0_3 = arith.constant 0 : index
    %c0_4 = arith.constant 0 : index
    %c0_5 = arith.constant 0 : index
    %5 = vector.load %arg7[%c0_3, %c0_4, %c0_5] : memref<1x1x384xf32, #tpu.memory_space<vmem>>, vector<1x1x384xf32>
    %6 = vector.shape_cast %5 : vector<1x1x384xf32> to vector<1x384xf32>
    %c0_6 = arith.constant 0 : index
    %c0_7 = arith.constant 0 : index
    %c0_8 = arith.constant 0 : index
    %7 = vector.load %arg8[%c0_6, %c0_7, %c0_8] : memref<1x128x128xbf16, #tpu.memory_space<vmem>>, vector<1x128x128xbf16>
    %8 = vector.shape_cast %7 : vector<1x128x128xbf16> to vector<128x128xbf16>
    %c0_9 = arith.constant 0 : index
    %c0_10 = arith.constant 0 : index
    %c0_11 = arith.constant 0 : index
    %9 = vector.load %arg9[%c0_9, %c0_10, %c0_11] : memref<1x1x128xf32, #tpu.memory_space<vmem>>, vector<1x1x128xf32>
    %10 = vector.shape_cast %9 : vector<1x1x128xf32> to vector<1x128xf32>
    %c0_12 = arith.constant 0 : index
    %c0_13 = arith.constant 0 : index
    %c0_14 = arith.constant 0 : index
    %11 = vector.load %arg10[%c0_12, %c0_13, %c0_14] : memref<1x1x128xf32, #tpu.memory_space<vmem>>, vector<1x1x128xf32>
    %12 = vector.shape_cast %11 : vector<1x1x128xf32> to vector<1x128xf32>
    %c0_15 = arith.constant 0 : index
    %c0_16 = arith.constant 0 : index
    %c0_17 = arith.constant 0 : index
    %13 = vector.load %arg11[%c0_15, %c0_16, %c0_17] : memref<1x1x128xf32, #tpu.memory_space<vmem>>, vector<1x1x128xf32>
    %14 = vector.shape_cast %13 : vector<1x1x128xf32> to vector<1x128xf32>
    %c0_18 = arith.constant 0 : index
    %c0_19 = arith.constant 0 : index
    %c0_20 = arith.constant 0 : index
    %15 = vector.load %arg12[%c0_18, %c0_19, %c0_20] : memref<1x128x128xbf16, #tpu.memory_space<vmem>>, vector<1x128x128xbf16>
    %16 = vector.shape_cast %15 : vector<1x128x128xbf16> to vector<128x128xbf16>
    %c0_21 = arith.constant 0 : index
    %c0_22 = arith.constant 0 : index
    %c0_23 = arith.constant 0 : index
    %17 = vector.load %arg13[%c0_21, %c0_22, %c0_23] : memref<1x1x128xf32, #tpu.memory_space<vmem>>, vector<1x1x128xf32>
    %18 = vector.shape_cast %17 : vector<1x1x128xf32> to vector<1x128xf32>
    %c0_24 = arith.constant 0 : index
    %c0_25 = arith.constant 0 : index
    %c0_26 = arith.constant 0 : index
    %19 = vector.load %arg14[%c0_24, %c0_25, %c0_26] : memref<1x128x256xbf16, #tpu.memory_space<vmem>>, vector<1x128x256xbf16>
    %20 = vector.shape_cast %19 : vector<1x128x256xbf16> to vector<128x256xbf16>
    %c0_27 = arith.constant 0 : index
    %c0_28 = arith.constant 0 : index
    %c0_29 = arith.constant 0 : index
    %21 = vector.load %arg15[%c0_27, %c0_28, %c0_29] : memref<1x1x256xf32, #tpu.memory_space<vmem>>, vector<1x1x256xf32>
    %22 = vector.shape_cast %21 : vector<1x1x256xf32> to vector<1x256xf32>
    %c0_30 = arith.constant 0 : index
    %c0_31 = arith.constant 0 : index
    %c0_32 = arith.constant 0 : index
    %23 = vector.load %arg16[%c0_30, %c0_31, %c0_32] : memref<1x128x128xbf16, #tpu.memory_space<vmem>>, vector<1x128x128xbf16>
    %24 = vector.shape_cast %23 : vector<1x128x128xbf16> to vector<128x128xbf16>
    %c0_33 = arith.constant 0 : index
    %c0_34 = arith.constant 0 : index
    %c0_35 = arith.constant 0 : index
    %25 = vector.load %arg17[%c0_33, %c0_34, %c0_35] : memref<1x1x128xf32, #tpu.memory_space<vmem>>, vector<1x1x128xf32>
    %26 = vector.shape_cast %25 : vector<1x1x128xf32> to vector<1x128xf32>
    %c0_36 = arith.constant 0 : index
    %c0_37 = arith.constant 0 : index
    %c0_38 = arith.constant 0 : index
    %27 = vector.load %arg18[%c0_36, %c0_37, %c0_38] : memref<1x1x128xf32, #tpu.memory_space<vmem>>, vector<1x1x128xf32>
    %28 = vector.shape_cast %27 : vector<1x1x128xf32> to vector<1x128xf32>
    %c0_39 = arith.constant 0 : index
    %c0_40 = arith.constant 0 : index
    %c0_41 = arith.constant 0 : index
    %29 = vector.load %arg19[%c0_39, %c0_40, %c0_41] : memref<1x1x128xf32, #tpu.memory_space<vmem>>, vector<1x1x128xf32>
    %30 = vector.shape_cast %29 : vector<1x1x128xf32> to vector<1x128xf32>
    %c0_42 = arith.constant 0 : index
    %c0_43 = arith.constant 0 : index
    %c0_44 = arith.constant 0 : index
    %31 = vector.load %arg20[%c0_42, %c0_43, %c0_44] : memref<1x128x256xbf16, #tpu.memory_space<vmem>>, vector<1x128x256xbf16>
    %32 = vector.shape_cast %31 : vector<1x128x256xbf16> to vector<128x256xbf16>
    %c0_45 = arith.constant 0 : index
    %c0_46 = arith.constant 0 : index
    %c0_47 = arith.constant 0 : index
    %33 = vector.load %arg21[%c0_45, %c0_46, %c0_47] : memref<1x1x256xf32, #tpu.memory_space<vmem>>, vector<1x1x256xf32>
    %34 = vector.shape_cast %33 : vector<1x1x256xf32> to vector<1x256xf32>
    %c0_48 = arith.constant 0 : index
    %c0_49 = arith.constant 0 : index
    %c0_50 = arith.constant 0 : index
    %35 = vector.load %arg22[%c0_48, %c0_49, %c0_50] : memref<1x256x128xbf16, #tpu.memory_space<vmem>>, vector<1x256x128xbf16>
    %36 = vector.shape_cast %35 : vector<1x256x128xbf16> to vector<256x128xbf16>
    %c0_51 = arith.constant 0 : index
    %c0_52 = arith.constant 0 : index
    %c0_53 = arith.constant 0 : index
    %37 = vector.load %arg23[%c0_51, %c0_52, %c0_53] : memref<1x1x128xf32, #tpu.memory_space<vmem>>, vector<1x1x128xf32>
    %38 = vector.shape_cast %37 : vector<1x1x128xf32> to vector<1x128xf32>
    %c0_54 = arith.constant 0 : index
    %c0_55 = arith.constant 0 : index
    %c0_56 = arith.constant 0 : index
    %39 = vector.load %arg24[%c0_54, %c0_55, %c0_56] : memref<1x1x128xf32, #tpu.memory_space<vmem>>, vector<1x1x128xf32>
    %40 = vector.shape_cast %39 : vector<1x1x128xf32> to vector<1x128xf32>
    %c0_57 = arith.constant 0 : index
    %c0_58 = arith.constant 0 : index
    %c0_59 = arith.constant 0 : index
    %41 = vector.load %arg25[%c0_57, %c0_58, %c0_59] : memref<1x1x128xf32, #tpu.memory_space<vmem>>, vector<1x1x128xf32>
    %42 = vector.shape_cast %41 : vector<1x1x128xf32> to vector<1x128xf32>
    %c0_60 = arith.constant 0 : index
    %c0_61 = arith.constant 0 : index
    %c0_62 = arith.constant 0 : index
    %43 = vector.load %arg26[%c0_60, %c0_61, %c0_62] : memref<2x8x128xf32, #tpu.memory_space<vmem>>, vector<2x8x128xf32>
    %c0_63 = arith.constant 0 : index
    %c0_64 = arith.constant 0 : index
    %c0_65 = arith.constant 0 : index
    %44 = vector.load %arg3[%c0_63, %c0_64, %c0_65] : memref<2x16x128xf32, #tpu.memory_space<vmem>>, vector<2x16x128xf32>
    %c0_66 = arith.constant 0 : index
    %c0_67 = arith.constant 0 : index
    %c0_68 = arith.constant 0 : index
    %45 = vector.load %arg4[%c0_66, %c0_67, %c0_68] : memref<2x8x8xf32, #tpu.memory_space<vmem>>, vector<2x8x8xf32>
    %c0_69 = arith.constant 0 : index
    %c0_70 = arith.constant 0 : index
    %c0_71 = arith.constant 0 : index
    %46 = vector.load %arg5[%c0_69, %c0_70, %c0_71] : memref<2x1x16xf32, #tpu.memory_space<vmem>>, vector<2x1x16xf32>
    %47 = vector.shape_cast %43 : vector<2x8x128xf32> to vector<16x128xf32>
    %48 = vector.shape_cast %44 : vector<2x16x128xf32> to vector<32x128xf32>
    %49 = arith.truncf %47 : vector<16x128xf32> to vector<16x128xbf16>
    %cst = arith.constant dense<0.000000e+00> : vector<16x384xf32>
    %50 = tpu.matmul %49, %4, %cst {dimension_numbers = #tpu.dot_dimension_numbers<[1], [0], [0], [1], [0, 0, 1, 1], [], []>} : vector<16x128xbf16>, vector<128x384xbf16>, vector<16x384xf32> -> vector<16x384xf32>
    %51 = vector.broadcast %6 : vector<1x384xf32> to vector<16x384xf32>
    %52 = arith.addf %50, %51 : vector<16x384xf32>
    %53 = vector.extract_strided_slice %52 {offsets = [0, 0], sizes = [16, 128], strides = [1, 1]} : vector<16x384xf32> to vector<16x128xf32>
    %54 = vector.extract_strided_slice %52 {offsets = [0, 128], sizes = [16, 128], strides = [1, 1]} : vector<16x384xf32> to vector<16x128xf32>
    %55 = vector.extract_strided_slice %52 {offsets = [0, 256], sizes = [16, 128], strides = [1, 1]} : vector<16x384xf32> to vector<16x128xf32>
    %56 = vector.extract_strided_slice %53 {offsets = [0, 0], sizes = [8, 128], strides = [1, 1]} : vector<16x128xf32> to vector<8x128xf32>
    %57 = vector.shape_cast %56 : vector<8x128xf32> to vector<8x4x32xf32>
    %58 = tpu.transpose %57, [1, 0, 2] : vector<8x4x32xf32> -> vector<4x8x32xf32>
    %59 = vector.extract_strided_slice %54 {offsets = [0, 0], sizes = [8, 128], strides = [1, 1]} : vector<16x128xf32> to vector<8x128xf32>
    %60 = vector.shape_cast %59 : vector<8x128xf32> to vector<8x4x32xf32>
    %61 = tpu.transpose %60, [1, 0, 2] : vector<8x4x32xf32> -> vector<4x8x32xf32>
    %62 = vector.extract_strided_slice %55 {offsets = [0, 0], sizes = [8, 128], strides = [1, 1]} : vector<16x128xf32> to vector<8x128xf32>
    %63 = vector.shape_cast %62 : vector<8x128xf32> to vector<8x4x32xf32>
    %64 = tpu.transpose %63, [1, 0, 2] : vector<8x4x32xf32> -> vector<4x8x32xf32>
    "tpu.trace_start"() <{level = 10 : i32, message = "hqd,hkd->hqk"}> : () -> ()
    %cst_72 = arith.constant dense<0.000000e+00> : vector<4x8x8xf32>
    %65 = tpu.matmul %58, %61, %cst_72 {dimension_numbers = #tpu.dot_dimension_numbers<[2], [2], [1], [1], [0, 0, 0, 1, 1, 1], [0], [0]>} : vector<4x8x32xf32>, vector<4x8x32xf32>, vector<4x8x8xf32> -> vector<4x8x8xf32>
    "tpu.trace_stop"() : () -> ()
    %cst_73 = arith.constant 0.176776692 : f32
    %66 = vector.broadcast %cst_73 : f32 to vector<4x8x8xf32>
    %67 = arith.mulf %65, %66 : vector<4x8x8xf32>
    %68 = vector.extract_strided_slice %45 {offsets = [0, 0, 0], sizes = [1, 8, 8], strides = [1, 1, 1]} : vector<2x8x8xf32> to vector<1x8x8xf32>
    %69 = vector.shape_cast %68 : vector<1x8x8xf32> to vector<8x8xf32>
    %70 = vector.shape_cast %69 : vector<8x8xf32> to vector<1x8x8xf32>
    %71 = vector.broadcast %70 : vector<1x8x8xf32> to vector<4x8x8xf32>
    %72 = arith.addf %67, %71 : vector<4x8x8xf32>
    %cst_74 = arith.constant dense<0xFF800000> : vector<4x8xf32>
    %73 = vector.multi_reduction <maximumf>, %72, %cst_74 [2] : vector<4x8x8xf32> to vector<4x8xf32>
    %74 = vector.shape_cast %73 : vector<4x8xf32> to vector<4x8x1xf32>
    %75 = vector.broadcast %74 : vector<4x8x1xf32> to vector<4x8x8xf32>
    %76 = arith.subf %72, %75 : vector<4x8x8xf32>
    %77 = math.exp %76 : vector<4x8x8xf32>
    %cst_75 = arith.constant dense<0.000000e+00> : vector<4x8xf32>
    %78 = vector.multi_reduction <add>, %77, %cst_75 [2] : vector<4x8x8xf32> to vector<4x8xf32>
    %79 = vector.shape_cast %78 : vector<4x8xf32> to vector<4x8x1xf32>
    %80 = tpu.reciprocal %79 {approx = true} : vector<4x8x1xf32> -> vector<4x8x1xf32>
    %81 = vector.broadcast %80 : vector<4x8x1xf32> to vector<4x8x8xf32>
    %82 = arith.mulf %77, %81 : vector<4x8x8xf32>
    "tpu.trace_start"() <{level = 10 : i32, message = "hqk,hkd->hqd"}> : () -> ()
    %cst_76 = arith.constant dense<0.000000e+00> : vector<4x8x32xf32>
    %83 = tpu.matmul %82, %64, %cst_76 {dimension_numbers = #tpu.dot_dimension_numbers<[2], [1], [1], [2], [0, 0, 0, 1, 1, 2], [0], [0]>} : vector<4x8x8xf32>, vector<4x8x32xf32>, vector<4x8x32xf32> -> vector<4x8x32xf32>
    "tpu.trace_stop"() : () -> ()
    %84 = tpu.transpose %83, [1, 0, 2] : vector<4x8x32xf32> -> vector<8x4x32xf32>
    %85 = vector.shape_cast %84 : vector<8x4x32xf32> to vector<8x128xf32>
    %86 = vector.extract_strided_slice %53 {offsets = [8, 0], sizes = [8, 128], strides = [1, 1]} : vector<16x128xf32> to vector<8x128xf32>
    %87 = vector.shape_cast %86 : vector<8x128xf32> to vector<8x4x32xf32>
    %88 = tpu.transpose %87, [1, 0, 2] : vector<8x4x32xf32> -> vector<4x8x32xf32>
    %89 = vector.extract_strided_slice %54 {offsets = [8, 0], sizes = [8, 128], strides = [1, 1]} : vector<16x128xf32> to vector<8x128xf32>
    %90 = vector.shape_cast %89 : vector<8x128xf32> to vector<8x4x32xf32>
    %91 = tpu.transpose %90, [1, 0, 2] : vector<8x4x32xf32> -> vector<4x8x32xf32>
    %92 = vector.extract_strided_slice %55 {offsets = [8, 0], sizes = [8, 128], strides = [1, 1]} : vector<16x128xf32> to vector<8x128xf32>
    %93 = vector.shape_cast %92 : vector<8x128xf32> to vector<8x4x32xf32>
    %94 = tpu.transpose %93, [1, 0, 2] : vector<8x4x32xf32> -> vector<4x8x32xf32>
    "tpu.trace_start"() <{level = 10 : i32, message = "hqd,hkd->hqk"}> : () -> ()
    %cst_77 = arith.constant dense<0.000000e+00> : vector<4x8x8xf32>
    %95 = tpu.matmul %88, %91, %cst_77 {dimension_numbers = #tpu.dot_dimension_numbers<[2], [2], [1], [1], [0, 0, 0, 1, 1, 1], [0], [0]>} : vector<4x8x32xf32>, vector<4x8x32xf32>, vector<4x8x8xf32> -> vector<4x8x8xf32>
    "tpu.trace_stop"() : () -> ()
    %cst_78 = arith.constant 0.176776692 : f32
    %96 = vector.broadcast %cst_78 : f32 to vector<4x8x8xf32>
    %97 = arith.mulf %95, %96 : vector<4x8x8xf32>
    %98 = vector.extract_strided_slice %45 {offsets = [1, 0, 0], sizes = [1, 8, 8], strides = [1, 1, 1]} : vector<2x8x8xf32> to vector<1x8x8xf32>
    %99 = vector.shape_cast %98 : vector<1x8x8xf32> to vector<8x8xf32>
    %100 = vector.shape_cast %99 : vector<8x8xf32> to vector<1x8x8xf32>
    %101 = vector.broadcast %100 : vector<1x8x8xf32> to vector<4x8x8xf32>
    %102 = arith.addf %97, %101 : vector<4x8x8xf32>
    %cst_79 = arith.constant dense<0xFF800000> : vector<4x8xf32>
    %103 = vector.multi_reduction <maximumf>, %102, %cst_79 [2] : vector<4x8x8xf32> to vector<4x8xf32>
    %104 = vector.shape_cast %103 : vector<4x8xf32> to vector<4x8x1xf32>
    %105 = vector.broadcast %104 : vector<4x8x1xf32> to vector<4x8x8xf32>
    %106 = arith.subf %102, %105 : vector<4x8x8xf32>
    %107 = math.exp %106 : vector<4x8x8xf32>
    %cst_80 = arith.constant dense<0.000000e+00> : vector<4x8xf32>
    %108 = vector.multi_reduction <add>, %107, %cst_80 [2] : vector<4x8x8xf32> to vector<4x8xf32>
    %109 = vector.shape_cast %108 : vector<4x8xf32> to vector<4x8x1xf32>
    %110 = tpu.reciprocal %109 {approx = true} : vector<4x8x1xf32> -> vector<4x8x1xf32>
    %111 = vector.broadcast %110 : vector<4x8x1xf32> to vector<4x8x8xf32>
    %112 = arith.mulf %107, %111 : vector<4x8x8xf32>
    "tpu.trace_start"() <{level = 10 : i32, message = "hqk,hkd->hqd"}> : () -> ()
    %cst_81 = arith.constant dense<0.000000e+00> : vector<4x8x32xf32>
    %113 = tpu.matmul %112, %94, %cst_81 {dimension_numbers = #tpu.dot_dimension_numbers<[2], [1], [1], [2], [0, 0, 0, 1, 1, 2], [0], [0]>} : vector<4x8x8xf32>, vector<4x8x32xf32>, vector<4x8x32xf32> -> vector<4x8x32xf32>
    "tpu.trace_stop"() : () -> ()
    %114 = tpu.transpose %113, [1, 0, 2] : vector<4x8x32xf32> -> vector<8x4x32xf32>
    %115 = vector.shape_cast %114 : vector<8x4x32xf32> to vector<8x128xf32>
    %116 = tpu.concatenate %85, %115 in 0 : vector<8x128xf32>, vector<8x128xf32> -> vector<16x128xf32>
    %117 = arith.truncf %116 : vector<16x128xf32> to vector<16x128xbf16>
    %cst_82 = arith.constant dense<0.000000e+00> : vector<16x128xf32>
    %118 = tpu.matmul %117, %8, %cst_82 {dimension_numbers = #tpu.dot_dimension_numbers<[1], [0], [0], [1], [0, 0, 1, 1], [], []>} : vector<16x128xbf16>, vector<128x128xbf16>, vector<16x128xf32> -> vector<16x128xf32>
    %119 = vector.broadcast %10 : vector<1x128xf32> to vector<16x128xf32>
    %120 = arith.addf %118, %119 : vector<16x128xf32>
    %121 = arith.addf %120, %47 : vector<16x128xf32>
    %cst_83 = arith.constant dense<0.000000e+00> : vector<16xf32>
    %122 = vector.multi_reduction <add>, %121, %cst_83 [1] : vector<16x128xf32> to vector<16xf32>
    %123 = vector.shape_cast %122 : vector<16xf32> to vector<16x1xf32>
    %cst_84 = arith.constant 1.280000e+02 : f32
    %124 = vector.broadcast %cst_84 : f32 to vector<16x1xf32>
    %125 = arith.divf %123, %124 : vector<16x1xf32>
    %126 = vector.broadcast %125 : vector<16x1xf32> to vector<16x128xf32>
    %127 = arith.subf %121, %126 : vector<16x128xf32>
    %128 = arith.mulf %127, %127 : vector<16x128xf32>
    %cst_85 = arith.constant dense<0.000000e+00> : vector<16xf32>
    %129 = vector.multi_reduction <add>, %128, %cst_85 [1] : vector<16x128xf32> to vector<16xf32>
    %130 = vector.shape_cast %129 : vector<16xf32> to vector<16x1xf32>
    %cst_86 = arith.constant 1.280000e+02 : f32
    %131 = vector.broadcast %cst_86 : f32 to vector<16x1xf32>
    %132 = arith.divf %130, %131 : vector<16x1xf32>
    %133 = vector.broadcast %125 : vector<16x1xf32> to vector<16x128xf32>
    %134 = arith.subf %121, %133 : vector<16x128xf32>
    %cst_87 = arith.constant 9.99999996E-13 : f32
    %135 = vector.broadcast %cst_87 : f32 to vector<16x1xf32>
    %136 = arith.addf %132, %135 : vector<16x1xf32>
    %137 = math.rsqrt %136 : vector<16x1xf32>
    %138 = vector.broadcast %137 : vector<16x1xf32> to vector<16x128xf32>
    %139 = arith.mulf %134, %138 : vector<16x128xf32>
    %140 = vector.broadcast %12 : vector<1x128xf32> to vector<16x128xf32>
    %141 = arith.mulf %140, %139 : vector<16x128xf32>
    %142 = vector.broadcast %14 : vector<1x128xf32> to vector<16x128xf32>
    %143 = arith.addf %141, %142 : vector<16x128xf32>
    %144 = arith.truncf %143 : vector<16x128xf32> to vector<16x128xbf16>
    %cst_88 = arith.constant dense<0.000000e+00> : vector<16x128xf32>
    %145 = tpu.matmul %144, %16, %cst_88 {dimension_numbers = #tpu.dot_dimension_numbers<[1], [0], [0], [1], [0, 0, 1, 1], [], []>} : vector<16x128xbf16>, vector<128x128xbf16>, vector<16x128xf32> -> vector<16x128xf32>
    %146 = vector.broadcast %18 : vector<1x128xf32> to vector<16x128xf32>
    %147 = arith.addf %145, %146 : vector<16x128xf32>
    %148 = arith.truncf %48 : vector<32x128xf32> to vector<32x128xbf16>
    %cst_89 = arith.constant dense<0.000000e+00> : vector<32x256xf32>
    %149 = tpu.matmul %148, %20, %cst_89 {dimension_numbers = #tpu.dot_dimension_numbers<[1], [0], [0], [1], [0, 0, 1, 1], [], []>} : vector<32x128xbf16>, vector<128x256xbf16>, vector<32x256xf32> -> vector<32x256xf32>
    %150 = vector.broadcast %22 : vector<1x256xf32> to vector<32x256xf32>
    %151 = arith.addf %149, %150 : vector<32x256xf32>
    %152 = vector.extract_strided_slice %151 {offsets = [0, 0], sizes = [32, 128], strides = [1, 1]} : vector<32x256xf32> to vector<32x128xf32>
    %153 = vector.extract_strided_slice %151 {offsets = [0, 128], sizes = [32, 128], strides = [1, 1]} : vector<32x256xf32> to vector<32x128xf32>
    %154 = vector.extract_strided_slice %147 {offsets = [0, 0], sizes = [8, 128], strides = [1, 1]} : vector<16x128xf32> to vector<8x128xf32>
    %155 = vector.shape_cast %154 : vector<8x128xf32> to vector<8x4x32xf32>
    %156 = tpu.transpose %155, [1, 0, 2] : vector<8x4x32xf32> -> vector<4x8x32xf32>
    %157 = vector.extract_strided_slice %152 {offsets = [0, 0], sizes = [16, 128], strides = [1, 1]} : vector<32x128xf32> to vector<16x128xf32>
    %158 = vector.shape_cast %157 : vector<16x128xf32> to vector<16x4x32xf32>
    %159 = tpu.transpose %158, [1, 0, 2] : vector<16x4x32xf32> -> vector<4x16x32xf32>
    %160 = vector.extract_strided_slice %153 {offsets = [0, 0], sizes = [16, 128], strides = [1, 1]} : vector<32x128xf32> to vector<16x128xf32>
    %161 = vector.shape_cast %160 : vector<16x128xf32> to vector<16x4x32xf32>
    %162 = tpu.transpose %161, [1, 0, 2] : vector<16x4x32xf32> -> vector<4x16x32xf32>
    "tpu.trace_start"() <{level = 10 : i32, message = "hqd,hkd->hqk"}> : () -> ()
    %cst_90 = arith.constant dense<0.000000e+00> : vector<4x8x16xf32>
    %163 = tpu.matmul %156, %159, %cst_90 {dimension_numbers = #tpu.dot_dimension_numbers<[2], [2], [1], [1], [0, 0, 0, 1, 1, 1], [0], [0]>} : vector<4x8x32xf32>, vector<4x16x32xf32>, vector<4x8x16xf32> -> vector<4x8x16xf32>
    "tpu.trace_stop"() : () -> ()
    %cst_91 = arith.constant 0.176776692 : f32
    %164 = vector.broadcast %cst_91 : f32 to vector<4x8x16xf32>
    %165 = arith.mulf %163, %164 : vector<4x8x16xf32>
    %166 = vector.extract_strided_slice %46 {offsets = [0, 0, 0], sizes = [1, 1, 16], strides = [1, 1, 1]} : vector<2x1x16xf32> to vector<1x1x16xf32>
    %167 = vector.shape_cast %166 : vector<1x1x16xf32> to vector<1x16xf32>
    %168 = vector.shape_cast %167 : vector<1x16xf32> to vector<1x1x16xf32>
    %169 = vector.broadcast %168 : vector<1x1x16xf32> to vector<4x8x16xf32>
    %170 = arith.addf %165, %169 : vector<4x8x16xf32>
    %cst_92 = arith.constant dense<0xFF800000> : vector<4x8xf32>
    %171 = vector.multi_reduction <maximumf>, %170, %cst_92 [2] : vector<4x8x16xf32> to vector<4x8xf32>
    %172 = vector.shape_cast %171 : vector<4x8xf32> to vector<4x8x1xf32>
    %173 = vector.broadcast %172 : vector<4x8x1xf32> to vector<4x8x16xf32>
    %174 = arith.subf %170, %173 : vector<4x8x16xf32>
    %175 = math.exp %174 : vector<4x8x16xf32>
    %cst_93 = arith.constant dense<0.000000e+00> : vector<4x8xf32>
    %176 = vector.multi_reduction <add>, %175, %cst_93 [2] : vector<4x8x16xf32> to vector<4x8xf32>
    %177 = vector.shape_cast %176 : vector<4x8xf32> to vector<4x8x1xf32>
    %178 = tpu.reciprocal %177 {approx = true} : vector<4x8x1xf32> -> vector<4x8x1xf32>
    %179 = vector.broadcast %178 : vector<4x8x1xf32> to vector<4x8x16xf32>
    %180 = arith.mulf %175, %179 : vector<4x8x16xf32>
    "tpu.trace_start"() <{level = 10 : i32, message = "hqk,hkd->hqd"}> : () -> ()
    %cst_94 = arith.constant dense<0.000000e+00> : vector<4x8x32xf32>
    %181 = tpu.matmul %180, %162, %cst_94 {dimension_numbers = #tpu.dot_dimension_numbers<[2], [1], [1], [2], [0, 0, 0, 1, 1, 2], [0], [0]>} : vector<4x8x16xf32>, vector<4x16x32xf32>, vector<4x8x32xf32> -> vector<4x8x32xf32>
    "tpu.trace_stop"() : () -> ()
    %182 = tpu.transpose %181, [1, 0, 2] : vector<4x8x32xf32> -> vector<8x4x32xf32>
    %183 = vector.shape_cast %182 : vector<8x4x32xf32> to vector<8x128xf32>
    %184 = vector.extract_strided_slice %147 {offsets = [8, 0], sizes = [8, 128], strides = [1, 1]} : vector<16x128xf32> to vector<8x128xf32>
    %185 = vector.shape_cast %184 : vector<8x128xf32> to vector<8x4x32xf32>
    %186 = tpu.transpose %185, [1, 0, 2] : vector<8x4x32xf32> -> vector<4x8x32xf32>
    %187 = vector.extract_strided_slice %152 {offsets = [16, 0], sizes = [16, 128], strides = [1, 1]} : vector<32x128xf32> to vector<16x128xf32>
    %188 = vector.shape_cast %187 : vector<16x128xf32> to vector<16x4x32xf32>
    %189 = tpu.transpose %188, [1, 0, 2] : vector<16x4x32xf32> -> vector<4x16x32xf32>
    %190 = vector.extract_strided_slice %153 {offsets = [16, 0], sizes = [16, 128], strides = [1, 1]} : vector<32x128xf32> to vector<16x128xf32>
    %191 = vector.shape_cast %190 : vector<16x128xf32> to vector<16x4x32xf32>
    %192 = tpu.transpose %191, [1, 0, 2] : vector<16x4x32xf32> -> vector<4x16x32xf32>
    "tpu.trace_start"() <{level = 10 : i32, message = "hqd,hkd->hqk"}> : () -> ()
    %cst_95 = arith.constant dense<0.000000e+00> : vector<4x8x16xf32>
    %193 = tpu.matmul %186, %189, %cst_95 {dimension_numbers = #tpu.dot_dimension_numbers<[2], [2], [1], [1], [0, 0, 0, 1, 1, 1], [0], [0]>} : vector<4x8x32xf32>, vector<4x16x32xf32>, vector<4x8x16xf32> -> vector<4x8x16xf32>
    "tpu.trace_stop"() : () -> ()
    %cst_96 = arith.constant 0.176776692 : f32
    %194 = vector.broadcast %cst_96 : f32 to vector<4x8x16xf32>
    %195 = arith.mulf %193, %194 : vector<4x8x16xf32>
    %196 = vector.extract_strided_slice %46 {offsets = [1, 0, 0], sizes = [1, 1, 16], strides = [1, 1, 1]} : vector<2x1x16xf32> to vector<1x1x16xf32>
    %197 = vector.shape_cast %196 : vector<1x1x16xf32> to vector<1x16xf32>
    %198 = vector.shape_cast %197 : vector<1x16xf32> to vector<1x1x16xf32>
    %199 = vector.broadcast %198 : vector<1x1x16xf32> to vector<4x8x16xf32>
    %200 = arith.addf %195, %199 : vector<4x8x16xf32>
    %cst_97 = arith.constant dense<0xFF800000> : vector<4x8xf32>
    %201 = vector.multi_reduction <maximumf>, %200, %cst_97 [2] : vector<4x8x16xf32> to vector<4x8xf32>
    %202 = vector.shape_cast %201 : vector<4x8xf32> to vector<4x8x1xf32>
    %203 = vector.broadcast %202 : vector<4x8x1xf32> to vector<4x8x16xf32>
    %204 = arith.subf %200, %203 : vector<4x8x16xf32>
    %205 = math.exp %204 : vector<4x8x16xf32>
    %cst_98 = arith.constant dense<0.000000e+00> : vector<4x8xf32>
    %206 = vector.multi_reduction <add>, %205, %cst_98 [2] : vector<4x8x16xf32> to vector<4x8xf32>
    %207 = vector.shape_cast %206 : vector<4x8xf32> to vector<4x8x1xf32>
    %208 = tpu.reciprocal %207 {approx = true} : vector<4x8x1xf32> -> vector<4x8x1xf32>
    %209 = vector.broadcast %208 : vector<4x8x1xf32> to vector<4x8x16xf32>
    %210 = arith.mulf %205, %209 : vector<4x8x16xf32>
    "tpu.trace_start"() <{level = 10 : i32, message = "hqk,hkd->hqd"}> : () -> ()
    %cst_99 = arith.constant dense<0.000000e+00> : vector<4x8x32xf32>
    %211 = tpu.matmul %210, %192, %cst_99 {dimension_numbers = #tpu.dot_dimension_numbers<[2], [1], [1], [2], [0, 0, 0, 1, 1, 2], [0], [0]>} : vector<4x8x16xf32>, vector<4x16x32xf32>, vector<4x8x32xf32> -> vector<4x8x32xf32>
    "tpu.trace_stop"() : () -> ()
    %212 = tpu.transpose %211, [1, 0, 2] : vector<4x8x32xf32> -> vector<8x4x32xf32>
    %213 = vector.shape_cast %212 : vector<8x4x32xf32> to vector<8x128xf32>
    %214 = tpu.concatenate %183, %213 in 0 : vector<8x128xf32>, vector<8x128xf32> -> vector<16x128xf32>
    %215 = arith.truncf %214 : vector<16x128xf32> to vector<16x128xbf16>
    %cst_100 = arith.constant dense<0.000000e+00> : vector<16x128xf32>
    %216 = tpu.matmul %215, %24, %cst_100 {dimension_numbers = #tpu.dot_dimension_numbers<[1], [0], [0], [1], [0, 0, 1, 1], [], []>} : vector<16x128xbf16>, vector<128x128xbf16>, vector<16x128xf32> -> vector<16x128xf32>
    %217 = vector.broadcast %26 : vector<1x128xf32> to vector<16x128xf32>
    %218 = arith.addf %216, %217 : vector<16x128xf32>
    %219 = arith.addf %218, %143 : vector<16x128xf32>
    %cst_101 = arith.constant dense<0.000000e+00> : vector<16xf32>
    %220 = vector.multi_reduction <add>, %219, %cst_101 [1] : vector<16x128xf32> to vector<16xf32>
    %221 = vector.shape_cast %220 : vector<16xf32> to vector<16x1xf32>
    %cst_102 = arith.constant 1.280000e+02 : f32
    %222 = vector.broadcast %cst_102 : f32 to vector<16x1xf32>
    %223 = arith.divf %221, %222 : vector<16x1xf32>
    %224 = vector.broadcast %223 : vector<16x1xf32> to vector<16x128xf32>
    %225 = arith.subf %219, %224 : vector<16x128xf32>
    %226 = arith.mulf %225, %225 : vector<16x128xf32>
    %cst_103 = arith.constant dense<0.000000e+00> : vector<16xf32>
    %227 = vector.multi_reduction <add>, %226, %cst_103 [1] : vector<16x128xf32> to vector<16xf32>
    %228 = vector.shape_cast %227 : vector<16xf32> to vector<16x1xf32>
    %cst_104 = arith.constant 1.280000e+02 : f32
    %229 = vector.broadcast %cst_104 : f32 to vector<16x1xf32>
    %230 = arith.divf %228, %229 : vector<16x1xf32>
    %231 = vector.broadcast %223 : vector<16x1xf32> to vector<16x128xf32>
    %232 = arith.subf %219, %231 : vector<16x128xf32>
    %cst_105 = arith.constant 9.99999996E-13 : f32
    %233 = vector.broadcast %cst_105 : f32 to vector<16x1xf32>
    %234 = arith.addf %230, %233 : vector<16x1xf32>
    %235 = math.rsqrt %234 : vector<16x1xf32>
    %236 = vector.broadcast %235 : vector<16x1xf32> to vector<16x128xf32>
    %237 = arith.mulf %232, %236 : vector<16x128xf32>
    %238 = vector.broadcast %28 : vector<1x128xf32> to vector<16x128xf32>
    %239 = arith.mulf %238, %237 : vector<16x128xf32>
    %240 = vector.broadcast %30 : vector<1x128xf32> to vector<16x128xf32>
    %241 = arith.addf %239, %240 : vector<16x128xf32>
    %242 = arith.truncf %241 : vector<16x128xf32> to vector<16x128xbf16>
    %cst_106 = arith.constant dense<0.000000e+00> : vector<16x256xf32>
    %243 = tpu.matmul %242, %32, %cst_106 {dimension_numbers = #tpu.dot_dimension_numbers<[1], [0], [0], [1], [0, 0, 1, 1], [], []>} : vector<16x128xbf16>, vector<128x256xbf16>, vector<16x256xf32> -> vector<16x256xf32>
    %244 = vector.broadcast %34 : vector<1x256xf32> to vector<16x256xf32>
    %245 = arith.addf %243, %244 : vector<16x256xf32>
    %cst_107 = arith.constant 0.000000e+00 : f32
    %246 = vector.broadcast %cst_107 : f32 to vector<16x256xf32>
    %247 = arith.maximumf %245, %246 : vector<16x256xf32>
    %248 = arith.truncf %247 : vector<16x256xf32> to vector<16x256xbf16>
    %cst_108 = arith.constant dense<0.000000e+00> : vector<16x128xf32>
    %249 = tpu.matmul %248, %36, %cst_108 {dimension_numbers = #tpu.dot_dimension_numbers<[1], [0], [0], [1], [0, 0, 1, 1], [], []>} : vector<16x256xbf16>, vector<256x128xbf16>, vector<16x128xf32> -> vector<16x128xf32>
    %250 = vector.broadcast %38 : vector<1x128xf32> to vector<16x128xf32>
    %251 = arith.addf %249, %250 : vector<16x128xf32>
    %252 = arith.addf %251, %241 : vector<16x128xf32>
    %cst_109 = arith.constant dense<0.000000e+00> : vector<16xf32>
    %253 = vector.multi_reduction <add>, %252, %cst_109 [1] : vector<16x128xf32> to vector<16xf32>
    %254 = vector.shape_cast %253 : vector<16xf32> to vector<16x1xf32>
    %cst_110 = arith.constant 1.280000e+02 : f32
    %255 = vector.broadcast %cst_110 : f32 to vector<16x1xf32>
    %256 = arith.divf %254, %255 : vector<16x1xf32>
    %257 = vector.broadcast %256 : vector<16x1xf32> to vector<16x128xf32>
    %258 = arith.subf %252, %257 : vector<16x128xf32>
    %259 = arith.mulf %258, %258 : vector<16x128xf32>
    %cst_111 = arith.constant dense<0.000000e+00> : vector<16xf32>
    %260 = vector.multi_reduction <add>, %259, %cst_111 [1] : vector<16x128xf32> to vector<16xf32>
    %261 = vector.shape_cast %260 : vector<16xf32> to vector<16x1xf32>
    %cst_112 = arith.constant 1.280000e+02 : f32
    %262 = vector.broadcast %cst_112 : f32 to vector<16x1xf32>
    %263 = arith.divf %261, %262 : vector<16x1xf32>
    %264 = vector.broadcast %256 : vector<16x1xf32> to vector<16x128xf32>
    %265 = arith.subf %252, %264 : vector<16x128xf32>
    %cst_113 = arith.constant 9.99999996E-13 : f32
    %266 = vector.broadcast %cst_113 : f32 to vector<16x1xf32>
    %267 = arith.addf %263, %266 : vector<16x1xf32>
    %268 = math.rsqrt %267 : vector<16x1xf32>
    %269 = vector.broadcast %268 : vector<16x1xf32> to vector<16x128xf32>
    %270 = arith.mulf %265, %269 : vector<16x128xf32>
    %271 = vector.broadcast %40 : vector<1x128xf32> to vector<16x128xf32>
    %272 = arith.mulf %271, %270 : vector<16x128xf32>
    %273 = vector.broadcast %42 : vector<1x128xf32> to vector<16x128xf32>
    %274 = arith.addf %272, %273 : vector<16x128xf32>
    %275 = vector.shape_cast %274 : vector<16x128xf32> to vector<2x8x128xf32>
    %c0_114 = arith.constant 0 : index
    %c0_115 = arith.constant 0 : index
    %c0_116 = arith.constant 0 : index
    %276 = vector.load %arg26[%c0_114, %c0_115, %c0_116] : memref<2x8x128xf32, #tpu.memory_space<vmem>>, vector<2x8x128xf32>
    tpu.vector_store %arg26[%c0_114, %c0_115, %c0_116], %275 {strides = array<i32>} : memref<2x8x128xf32, #tpu.memory_space<vmem>>, vector<2x8x128xf32>,
    return
  }
  func.func @transform_0(%arg0: i32, %arg1: i32) -> (i32, i32, i32) {
    %c0_i32 = arith.constant 0 : i32
    %c0_i32_0 = arith.constant 0 : i32
    %c0_i32_1 = arith.constant 0 : i32
    return %arg0, %c0_i32, %c0_i32_0 : i32, i32, i32
  }
  func.func @transform_1(%arg0: i32, %arg1: i32) -> (i32, i32, i32) {
    %c0_i32 = arith.constant 0 : i32
    %c0_i32_0 = arith.constant 0 : i32
    %c0_i32_1 = arith.constant 0 : i32
    return %arg0, %c0_i32, %c0_i32_0 : i32, i32, i32
  }
  func.func @transform_2(%arg0: i32, %arg1: i32) -> (i32, i32, i32) {
    %c0_i32 = arith.constant 0 : i32
    %c0_i32_0 = arith.constant 0 : i32
    %c0_i32_1 = arith.constant 0 : i32
    return %arg0, %c0_i32, %c0_i32_0 : i32, i32, i32
  }
  func.func @transform_3(%arg0: i32, %arg1: i32) -> (i32, i32, i32) {
    %c0_i32 = arith.constant 0 : i32
    %c0_i32_0 = arith.constant 0 : i32
    %c0_i32_1 = arith.constant 0 : i32
    return %arg0, %c0_i32, %c0_i32_0 : i32, i32, i32
  }
  func.func @transform_4(%arg0: i32, %arg1: i32) -> (i32, i32, i32) {
    %c0_i32 = arith.constant 0 : i32
    %c0_i32_0 = arith.constant 0 : i32
    %c0_i32_1 = arith.constant 0 : i32
    return %arg1, %c0_i32, %c0_i32_0 : i32, i32, i32
  }
  func.func @transform_5(%arg0: i32, %arg1: i32) -> (i32, i32, i32) {
    %c0_i32 = arith.constant 0 : i32
    %c0_i32_0 = arith.constant 0 : i32
    %c0_i32_1 = arith.constant 0 : i32
    return %arg1, %c0_i32, %c0_i32_0 : i32, i32, i32
  }
  func.func @transform_6(%arg0: i32, %arg1: i32) -> (i32, i32, i32) {
    %c0_i32 = arith.constant 0 : i32
    %c0_i32_0 = arith.constant 0 : i32
    %c0_i32_1 = arith.constant 0 : i32
    return %arg1, %c0_i32, %c0_i32_0 : i32, i32, i32
  }
  func.func @transform_7(%arg0: i32, %arg1: i32) -> (i32, i32, i32) {
    %c0_i32 = arith.constant 0 : i32
    %c0_i32_0 = arith.constant 0 : i32
    %c0_i32_1 = arith.constant 0 : i32
    return %arg1, %c0_i32, %c0_i32_0 : i32, i32, i32
  }
  func.func @transform_8(%arg0: i32, %arg1: i32) -> (i32, i32, i32) {
    %c0_i32 = arith.constant 0 : i32
    %c0_i32_0 = arith.constant 0 : i32
    %c0_i32_1 = arith.constant 0 : i32
    return %arg1, %c0_i32, %c0_i32_0 : i32, i32, i32
  }
  func.func @transform_9(%arg0: i32, %arg1: i32) -> (i32, i32, i32) {
    %c0_i32 = arith.constant 0 : i32
    %c0_i32_0 = arith.constant 0 : i32
    %c0_i32_1 = arith.constant 0 : i32
    return %arg1, %c0_i32, %c0_i32_0 : i32, i32, i32
  }
  func.func @transform_10(%arg0: i32, %arg1: i32) -> (i32, i32, i32) {
    %c0_i32 = arith.constant 0 : i32
    %c0_i32_0 = arith.constant 0 : i32
    %c0_i32_1 = arith.constant 0 : i32
    return %arg1, %c0_i32, %c0_i32_0 : i32, i32, i32
  }
  func.func @transform_11(%arg0: i32, %arg1: i32) -> (i32, i32, i32) {
    %c0_i32 = arith.constant 0 : i32
    %c0_i32_0 = arith.constant 0 : i32
    %c0_i32_1 = arith.constant 0 : i32
    return %arg1, %c0_i32, %c0_i32_0 : i32, i32, i32
  }
  func.func @transform_12(%arg0: i32, %arg1: i32) -> (i32, i32, i32) {
    %c0_i32 = arith.constant 0 : i32
    %c0_i32_0 = arith.constant 0 : i32
    %c0_i32_1 = arith.constant 0 : i32
    return %arg1, %c0_i32, %c0_i32_0 : i32, i32, i32
  }
  func.func @transform_13(%arg0: i32, %arg1: i32) -> (i32, i32, i32) {
    %c0_i32 = arith.constant 0 : i32
    %c0_i32_0 = arith.constant 0 : i32
    %c0_i32_1 = arith.constant 0 : i32
    return %arg1, %c0_i32, %c0_i32_0 : i32, i32, i32
  }
  func.func @transform_14(%arg0: i32, %arg1: i32) -> (i32, i32, i32) {
    %c0_i32 = arith.constant 0 : i32
    %c0_i32_0 = arith.constant 0 : i32
    %c0_i32_1 = arith.constant 0 : i32
    return %arg1, %c0_i32, %c0_i32_0 : i32, i32, i32
  }
  func.func @transform_15(%arg0: i32, %arg1: i32) -> (i32, i32, i32) {
    %c0_i32 = arith.constant 0 : i32
    %c0_i32_0 = arith.constant 0 : i32
    %c0_i32_1 = arith.constant 0 : i32
    return %arg1, %c0_i32, %c0_i32_0 : i32, i32, i32
  }
  func.func @transform_16(%arg0: i32, %arg1: i32) -> (i32, i32, i32) {
    %c0_i32 = arith.constant 0 : i32
    %c0_i32_0 = arith.constant 0 : i32
    %c0_i32_1 = arith.constant 0 : i32
    return %arg1, %c0_i32, %c0_i32_0 : i32, i32, i32
  }
  func.func @transform_17(%arg0: i32, %arg1: i32) -> (i32, i32, i32) {
    %c0_i32 = arith.constant 0 : i32
    %c0_i32_0 = arith.constant 0 : i32
    %c0_i32_1 = arith.constant 0 : i32
    return %arg1, %c0_i32, %c0_i32_0 : i32, i32, i32
  }
  func.func @transform_18(%arg0: i32, %arg1: i32) -> (i32, i32, i32) {
    %c0_i32 = arith.constant 0 : i32
    %c0_i32_0 = arith.constant 0 : i32
    %c0_i32_1 = arith.constant 0 : i32
    return %arg1, %c0_i32, %c0_i32_0 : i32, i32, i32
  }
  func.func @transform_19(%arg0: i32, %arg1: i32) -> (i32, i32, i32) {
    %c0_i32 = arith.constant 0 : i32
    %c0_i32_0 = arith.constant 0 : i32
    %c0_i32_1 = arith.constant 0 : i32
    return %arg1, %c0_i32, %c0_i32_0 : i32, i32, i32
  }
  func.func @transform_20(%arg0: i32, %arg1: i32) -> (i32, i32, i32) {
    %c0_i32 = arith.constant 0 : i32
    %c0_i32_0 = arith.constant 0 : i32
    %c0_i32_1 = arith.constant 0 : i32
    return %arg1, %c0_i32, %c0_i32_0 : i32, i32, i32
  }
  func.func @transform_21(%arg0: i32, %arg1: i32) -> (i32, i32, i32) {
    %c0_i32 = arith.constant 0 : i32
    %c0_i32_0 = arith.constant 0 : i32
    %c0_i32_1 = arith.constant 0 : i32
    return %arg1, %c0_i32, %c0_i32_0 : i32, i32, i32
  }
  func.func @transform_22(%arg0: i32, %arg1: i32) -> (i32, i32, i32) {
    %c0_i32 = arith.constant 0 : i32
    %c0_i32_0 = arith.constant 0 : i32
    %c0_i32_1 = arith.constant 0 : i32
    return %arg1, %c0_i32, %c0_i32_0 : i32, i32, i32
  }
  func.func @transform_23(%arg0: i32, %arg1: i32) -> (i32, i32, i32) {
    %c0_i32 = arith.constant 0 : i32
    %c0_i32_0 = arith.constant 0 : i32
    %c0_i32_1 = arith.constant 0 : i32
    return %arg1, %c0_i32, %c0_i32_0 : i32, i32, i32
  }
  func.func @transform_24(%arg0: i32, %arg1: i32) -> (i32, i32, i32) {
    %c0_i32 = arith.constant 0 : i32
    %c0_i32_0 = arith.constant 0 : i32
    %c0_i32_1 = arith.constant 0 : i32
    return %arg0, %c0_i32, %c0_i32_0 : i32, i32, i32
  }
}

</mosaic_0001>

<llo_original>
// kernel: decoder_forward.3
$region0: #{decoder_forward.3}
  #allocation0 [shape = 'u32[]', space=smem, size = 0x4, offset = 0x4, fixed_abs, tag = 'smem constant byte address 0x4 - core index']
  #allocation1 [shape = 'u32[144,128]{1,0:T(1,128)}', space=vmem, size = 0x12000, scoped, tag = 'internal scratch']
  %s0 = inlined_call_operand.vmem [shape: f32[16,128], index: 0, kind: input, shape index: {}]
  %s1 = inlined_call_operand.vmem [shape: bf16[128,128], index: 1, kind: input, shape index: {}]
  %s2 = inlined_call_operand.vmem [shape: f32[1,128], index: 2, kind: input, shape index: {}]
  %s3 = inlined_call_operand.hbm [shape: f32[16,128], index: 3, kind: output, shape index: {}]
  %s4 = sld [smem:[#allocation0]]
  $region22: #{decoder_forward.3} parent=0
    _
  %s6 = ssub.s32 1, %s4
  %s7 = scalar_select 0, %s6, %s4
  $region1: #{decoder_forward.3} parent=0
    #allocation2 [shape = 'u8[8192]{0}', space=vmem, size = 0x2000, scoped, tag = 'output window, operand 0, single buffered']
    #allocation3 [shape = 's32[1]{0}', space=sflag, size = 0x4, scoped, tag = 'scoped memory for decoder_forward.3']
    %8 = vsyncpa [#allocation3], 0
    // Predicated region
    $region2: #{decoder_forward.3} parent=1 // pred_check
      _
    $region3: #{decoder_forward.3} parent=1 // pred_check_branch
      %10 = sbr.rel (0) target = $region5
    $region4: #{decoder_forward.3} parent=1 // pred_region
      _
    $region5: #{decoder_forward.3} parent=1 // pred_fallthru
      _
    // Predicated region
    $region6: #{decoder_forward.3} parent=1 // pred_check
      _
    $region7: #{decoder_forward.3} parent=1 // pred_check_branch
      %12 = sbr.rel (0) target = $region9
    $region8: #{decoder_forward.3} parent=1 // pred_region
      _
    $region9: #{decoder_forward.3} parent=1 // pred_fallthru
      _
    // Predicated region
    $region10: #{decoder_forward.3} parent=1 // pred_check
      _
    $region11: #{decoder_forward.3} parent=1 // pred_check_branch
      %14 = sbr.rel (0) target = $region13
    $region12: #{decoder_forward.3} parent=1 // pred_region
      _
    $region13: #{decoder_forward.3} parent=1 // pred_fallthru
      _
    %v16 = vld [vmem:[%s1] sm:$0xf]
    %v17 = vld [vmem:[%s1 + $0x4] sm:$0xf]
    %v18 = vld [vmem:[%s1 + $0x8] sm:$0xf]
    %v19 = vld [vmem:[%s1 + $0xc] sm:$0xf]
    %v20 = vld [vmem:[%s1 + $0x10] sm:$0xf]
    %v21 = vld [vmem:[%s1 + $0x14] sm:$0xf]
    %v22 = vld [vmem:[%s1 + $0x18] sm:$0xf]
    %v23 = vld [vmem:[%s1 + $0x1c] sm:$0xf]
    %v24 = vld [vmem:[%s1 + $0x20] sm:$0xf]
    %v25 = vld [vmem:[%s1 + $0x24] sm:$0xf]
    %v26 = vld [vmem:[%s1 + $0x28] sm:$0xf]
    %v27 = vld [vmem:[%s1 + $0x2c] sm:$0xf]
    %v28 = vld [vmem:[%s1 + $0x30] sm:$0xf]
    %v29 = vld [vmem:[%s1 + $0x34] sm:$0xf]
    %v30 = vld [vmem:[%s1 + $0x38] sm:$0xf]
    %v31 = vld [vmem:[%s1 + $0x3c] sm:$0xf]
    %v32 = vld [vmem:[%s0] sm:$0xff]
    %v33 = vld [vmem:[%s0 + $0x8] sm:$0xff]
    %v34 = vpack.c.bf16 %v33, %v32
    %v35 = vld [vmem:[%s2] sm:$0x1]
    %v37 = vlaneseq
    %v38 = vshrl.u32 %v37, 7
    %v39 = vsub.s32 0, %v38
    %v40 = vrot.slane %v35, %v39
    %v58 = vunpack.c.l.b16 %v16
    %v59 = vunpack.c.l.b16 %v17
    %v60 = vunpack.c.l.b16 %v18
    %v61 = vunpack.c.l.b16 %v19
    %v62 = vunpack.c.l.b16 %v20
    %v63 = vunpack.c.l.b16 %v21
    %v64 = vunpack.c.l.b16 %v22
    %v65 = vunpack.c.l.b16 %v23
    %v66 = vunpack.c.l.b16 %v24
    %v67 = vunpack.c.l.b16 %v25
    %v68 = vunpack.c.l.b16 %v26
    %v69 = vunpack.c.l.b16 %v27
    %v70 = vunpack.c.l.b16 %v28
    %v71 = vunpack.c.l.b16 %v29
    %v72 = vunpack.c.l.b16 %v30
    %v73 = vunpack.c.l.b16 %v31
    %v74 = vpack.c.b16 %v59, %v58
    %v75 = vpack.c.b16 %v61, %v60
    %v76 = vpack.c.b16 %v63, %v62
    %v77 = vpack.c.b16 %v65, %v64
    %v78 = vpack.c.b16 %v67, %v66
    %v79 = vpack.c.b16 %v69, %v68
    %v80 = vpack.c.b16 %v71, %v70
    %v81 = vpack.c.b16 %v73, %v72
    %90 = vmatprep.subr.bf16.mxu0 0
    %91 = vmatpush1.bf16.msra.mxu0 %v74
    %92 = vmatprep.subr.bf16.mxu0 0
    %93 = vmatpush1.bf16.msra.mxu0 %v75
    %94 = vmatprep.subr.bf16.mxu0 0
    %95 = vmatpush1.bf16.msra.mxu0 %v76
    %96 = vmatprep.subr.bf16.mxu0 0
    %97 = vmatpush1.bf16.msra.mxu0 %v77
    %98 = vmatprep.subr.bf16.mxu0 0
    %99 = vmatpush1.bf16.msra.mxu0 %v78
    %100 = vmatprep.subr.bf16.mxu0 0
    %101 = vmatpush1.bf16.msra.mxu0 %v79
    %102 = vmatprep.subr.bf16.mxu0 0
    %103 = vmatpush1.bf16.msra.mxu0 %v80
    %104 = vmatprep.subr.bf16.mxu0 0
    %105 = vmatpush1.bf16.msra.mxu0 %v81
    %106 = vmatprep.subr.bf16.mxu0 0
    %107 = vmatpush1.bf16.msra.mxu0 0
    %108 = vmatprep.subr.bf16.mxu0 0
    %109 = vmatpush1.bf16.msra.mxu0 0
    %110 = vmatprep.subr.bf16.mxu0 0
    %111 = vmatpush1.bf16.msra.mxu0 0
    %112 = vmatprep.subr.bf16.mxu0 0
    %113 = vmatpush1.bf16.msra.mxu0 0
    %114 = vmatprep.subr.bf16.mxu0 0
    %115 = vmatpush1.bf16.msra.mxu0 0
    %116 = vmatprep.subr.bf16.mxu0 0
    %117 = vmatpush1.bf16.msra.mxu0 0
    %118 = vmatprep.subr.bf16.mxu0 0
    %119 = vmatpush1.bf16.msra.mxu0 0
    %120 = vmatprep.subr.bf16.mxu0 0
    %121 = vmatpush1.bf16.msra.mxu0 0
    %122 = vmatprep.mubr.bf16.mxu0 0
    %123 = vmatmul.mubr.bf16.gmra.mrb[0].mxu0 %v34
    %v124 = vpop.f32.mrb[0].mxu0
    %v125 = vadd.f32 %v40, %v124
    %v126 = vpop.f32.mrb[0].mxu0
    %v127 = vpop.f32.mrb[0].mxu0
    %v128 = vadd.f32 %v40, %v127
    %v129 = vpop.f32.mrb[0].mxu0
    %130 = vdwg.mxu0
    %131 = vst [vmem:[#allocation2] sm:$0xff] %v125
    %132 = vst [vmem:[#allocation2 + $0x8] sm:$0xff] %v128
    // Predicated region
    $region14: #{decoder_forward.3} parent=1 // pred_check
      _
    $region15: #{decoder_forward.3} parent=1 // pred_check_branch
      %134 = sbr.rel (0) target = $region17
    $region16: #{decoder_forward.3} parent=1 // pred_region
      %s136 = ssub.s32 256, 256
      %137 = vsyncadd [#allocation3], %s136
      %s138 = sshll.u32 [#allocation2], 4
      %s139 = int_to_ptr.vmem [resolvable:$true] %s138
      %144 = dma.vmem_to_hbm [thread:$0]  %s139, 256, %s3, [#allocation3], 128, 128, 8
    $region17: #{decoder_forward.3} parent=1 // pred_fallthru
      _
    // Predicated region
    $region18: #{decoder_forward.3} parent=1 // pred_check
      _
    $region19: #{decoder_forward.3} parent=1 // pred_check_branch
      %146 = sbr.rel (0) target = $region21
    $region20: #{decoder_forward.3} parent=1 // pred_region
      %147 = dma.done [#allocation3], 256
    $region21: #{decoder_forward.3} parent=1 // pred_fallthru
      _
    %148 = vsyncpa [#allocation3], 1

// kernel: decoder_forward.2
$region0: #{decoder_forward.2}
  #allocation0 [shape = 'u32[]', space=smem, size = 0x4, offset = 0x4, fixed_abs, tag = 'smem constant byte address 0x4 - core index']
  #allocation1 [shape = 'u32[144,128]{1,0:T(1,128)}', space=vmem, size = 0x12000, scoped, tag = 'internal scratch']
  %s0 = inlined_call_operand.vmem [shape: f32[2,8,128], index: 0, kind: input, shape index: {}]
  %s1 = inlined_call_operand.vmem [shape: f32[2,16,128], index: 1, kind: input, shape index: {}]
  %s2 = inlined_call_operand.vmem [shape: f32[2,8,8], index: 2, kind: input, shape index: {}]
  %s3 = inlined_call_operand.vmem [shape: f32[2,1,16], index: 3, kind: input, shape index: {}]
  %s4 = inlined_call_operand.hbm [shape: bf16[2,128,384], index: 4, kind: input, shape index: {}]
  %s5 = inlined_call_operand.vmem [shape: f32[2,1,384], index: 5, kind: input, shape index: {}]
  %s6 = inlined_call_operand.hbm [shape: bf16[2,128,128], index: 6, kind: input, shape index: {}]
  %s7 = inlined_call_operand.vmem [shape: f32[2,1,128], index: 7, kind: input, shape index: {}]
  %s8 = inlined_call_operand.vmem [shape: f32[2,1,128], index: 8, kind: input, shape index: {}]
  %s9 = inlined_call_operand.vmem [shape: f32[2,1,128], index: 9, kind: input, shape index: {}]
  %s10 = inlined_call_operand.hbm [shape: bf16[2,128,128], index: 10, kind: input, shape index: {}]
  %s11 = inlined_call_operand.hbm [shape: f32[2,1,128], index: 11, kind: input, shape index: {}]
  %s12 = inlined_call_operand.vmem [shape: bf16[2,128,256], index: 12, kind: input, shape index: {}]
  %s13 = inlined_call_operand.hbm [shape: f32[2,1,256], index: 13, kind: input, shape index: {}]
  %s14 = inlined_call_operand.hbm [shape: bf16[2,128,128], index: 14, kind: input, shape index: {}]
  %s15 = inlined_call_operand.hbm [shape: f32[2,1,128], index: 15, kind: input, shape index: {}]
  %s16 = inlined_call_operand.vmem [shape: f32[2,1,128], index: 16, kind: input, shape index: {}]
  %s17 = inlined_call_operand.vmem [shape: f32[2,1,128], index: 17, kind: input, shape index: {}]
  %s18 = inlined_call_operand.hbm [shape: bf16[2,128,256], index: 18, kind: input, shape index: {}]
  %s19 = inlined_call_operand.hbm [shape: f32[2,1,256], index: 19, kind: input, shape index: {}]
  %s20 = inlined_call_operand.hbm [shape: bf16[2,256,128], index: 20, kind: input, shape index: {}]
  %s21 = inlined_call_operand.hbm [shape: f32[2,1,128], index: 21, kind: input, shape index: {}]
  %s22 = inlined_call_operand.vmem [shape: f32[2,1,128], index: 22, kind: input, shape index: {}]
  %s23 = inlined_call_operand.vmem [shape: f32[2,1,128], index: 23, kind: input, shape index: {}]
  %s24 = inlined_call_operand.vmem [shape: f32[2,8,128], index: 24, kind: output, shape index: {}]
  %s25 = sld [smem:[#allocation0]]
  $region177: #{decoder_forward.2} parent=0
    _
  %s27 = ssub.s32 1, %s25
  %s28 = scalar_select 0, %s27, %s25
  $region1: #{decoder_forward.2} parent=0
    #allocation2 [shape = 'u8[196608]{0}', space=vmem, size = 0x30000, scoped, tag = 'input window, operand 4']
    #allocation3 [shape = 's32[2]{0}', space=sflag, size = 0x8, scoped, tag = 'scoped memory for decoder_forward.2']
    #allocation4 [shape = 'u8[65536]{0}', space=vmem, size = 0x10000, scoped, tag = 'input window, operand 6']
    #allocation5 [shape = 's32[2]{0}', space=sflag, size = 0x8, scoped, tag = 'scoped memory for decoder_forward.2']
    #allocation6 [shape = 'u8[65536]{0}', space=vmem, size = 0x10000, scoped, tag = 'input window, operand 10']
    #allocation7 [shape = 'u8[1024]{0}', space=vmem, size = 0x400, scoped, tag = 'input window, operand 11']
    #allocation8 [shape = 's32[2]{0}', space=sflag, size = 0x8, scoped, tag = 'scoped memory for decoder_forward.2']
    #allocation9 [shape = 'u8[2048]{0}', space=vmem, size = 0x800, scoped, tag = 'input window, operand 13']
    #allocation10 [shape = 'u8[65536]{0}', space=vmem, size = 0x10000, scoped, tag = 'input window, operand 14']
    #allocation11 [shape = 's32[2]{0}', space=sflag, size = 0x8, scoped, tag = 'scoped memory for decoder_forward.2']
    #allocation12 [shape = 'u8[1024]{0}', space=vmem, size = 0x400, scoped, tag = 'input window, operand 15']
    #allocation13 [shape = 'u8[131072]{0}', space=vmem, size = 0x20000, scoped, tag = 'input window, operand 18']
    #allocation14 [shape = 's32[2]{0}', space=sflag, size = 0x8, scoped, tag = 'scoped memory for decoder_forward.2']
    #allocation15 [shape = 'u8[2048]{0}', space=vmem, size = 0x800, scoped, tag = 'input window, operand 19']
    #allocation16 [shape = 'u8[131072]{0}', space=vmem, size = 0x20000, scoped, tag = 'input window, operand 20']
    #allocation17 [shape = 's32[2]{0}', space=sflag, size = 0x8, scoped, tag = 'scoped memory for decoder_forward.2']
    #allocation18 [shape = 'u8[1024]{0}', space=vmem, size = 0x400, scoped, tag = 'input window, operand 21']
    %29 = vsyncpa [#allocation3], 0
    %s30 = scalar_lea.sflag [#allocation3], 1
    %31 = vsyncpa %s30, 0
    %32 = vsyncpa [#allocation5], 0
    %s33 = scalar_lea.sflag [#allocation5], 1
    %34 = vsyncpa %s33, 0
    %35 = vsyncpa [#allocation8], 0
    %s36 = scalar_lea.sflag [#allocation8], 1
    %37 = vsyncpa %s36, 0
    %38 = vsyncpa [#allocation11], 0
    %s39 = scalar_lea.sflag [#allocation11], 1
    %40 = vsyncpa %s39, 0
    %41 = vsyncpa [#allocation14], 0
    %s42 = scalar_lea.sflag [#allocation14], 1
    %43 = vsyncpa %s42, 0
    %44 = vsyncpa [#allocation17], 0
    %s45 = scalar_lea.sflag [#allocation17], 1
    %46 = vsyncpa %s45, 0
    loop: start=0, step=1, limit=4
    $region2: #{decoder_forward.2} parent=1 // loop_pre_header
      _
    $region3: #{decoder_forward.2} parent=1 // loop_header
      %s48 = sphi 0, %s52
      %p49 = scmp.ge.s32.totalorder %s48, 4
      %s55 = sphi 0, %s67
      %s56 = sphi 0, %s63
      %s57 = sphi 0, %s55
      %s58 = sphi 0, %s56
      %s59 = sphi 0, %s57
      %s60 = sphi 0, %s58
      %s70 = sphi 0, %s72
      %s73 = sphi 0, %s70
      %s74 = sphi 0, %s73
      %s90 = sphi 0, %s74
      %s96 = sphi 0, %s98
      %s99 = sphi 0, %s96
      %s100 = sphi 0, %s99
      %s116 = sphi 0, %s100
      %s122 = sphi 0, %s124
      %s125 = sphi 0, %s122
      %s126 = sphi 0, %s125
      %s142 = sphi 0, %s126
      %s148 = sphi 0, %s150
      %s151 = sphi 0, %s148
      %s152 = sphi 0, %s151
      %s168 = sphi 0, %s152
      %s174 = sphi 0, %s176
      %s177 = sphi 0, %s174
      %s178 = sphi 0, %s177
      %s194 = sphi 0, %s178
      %s200 = sphi 0, %s202
      %s203 = sphi 0, %s200
      %s204 = sphi 0, %s203
      %s220 = sphi 0, %s204
      %s226 = sphi 0, %s228
      %s229 = sphi 0, %s226
      %s230 = sphi 0, %s229
      %s246 = sphi 0, %s230
      %s252 = sphi 0, %s254
      %s255 = sphi 0, %s252
      %s256 = sphi 0, %s255
      %s272 = sphi 0, %s256
      %s278 = sphi 0, %s280
      %s281 = sphi 0, %s278
      %s282 = sphi 0, %s281
      %s298 = sphi 0, %s282
      %s304 = sphi 0, %s306
      %s307 = sphi 0, %s304
      %s308 = sphi 0, %s307
      %s324 = sphi 0, %s308
      %s330 = sphi 0, %s332
      %s333 = sphi 0, %s330
      %s334 = sphi 0, %s333
      %s350 = sphi 0, %s334
      %s356 = sphi 0, %s358
      %s359 = sphi 0, %s356
      %s360 = sphi 0, %s359
      %s376 = sphi 0, %s360
      %s382 = sphi 0, %s384
      %s385 = sphi 0, %s382
      %s386 = sphi 0, %s385
      %s402 = sphi 0, %s386
      %s408 = sphi 0, %s410
      %s411 = sphi 0, %s408
      %s412 = sphi 0, %s411
      %s428 = sphi 0, %s412
      %s434 = sphi 0, %s436
      %s437 = sphi 0, %s434
      %s438 = sphi 0, %s437
      %s454 = sphi 0, %s438
      %s460 = sphi 0, %s462
      %s463 = sphi 0, %s460
      %s464 = sphi 0, %s463
      %s480 = sphi 0, %s464
      %s486 = sphi 0, %s488
      %s489 = sphi 0, %s486
      %s490 = sphi 0, %s489
      %s506 = sphi 0, %s490
      %s512 = sphi 0, %s514
      %s515 = sphi 0, %s512
      %s516 = sphi 0, %s515
      %s532 = sphi 0, %s516
      %s538 = sphi 0, %s540
      %s541 = sphi 0, %s538
      %s542 = sphi 0, %s541
      %s558 = sphi 0, %s542
      %s564 = sphi 0, %s566
      %s567 = sphi 0, %s564
      %s568 = sphi 0, %s567
      %s584 = sphi 0, %s568
      %s590 = sphi 0, %s592
      %s593 = sphi 0, %s590
      %s594 = sphi 0, %s593
      %s610 = sphi 0, %s594
      %s616 = sphi 0, %s618
      %s619 = sphi 0, %s616
      %s620 = sphi 0, %s619
      %s636 = sphi 0, %s620
      %s642 = sphi 0, %s644
      %s645 = sphi 0, %s642
      %s646 = sphi 0, %s645
      %s662 = sphi 0, %s646
      %s668 = sphi 0, %s670
      %s671 = sphi 0, %s668
      %s672 = sphi 0, %s671
      %s688 = sphi 0, %s672
      %s694 = sphi 0, %s696
      %s697 = sphi 0, %s694
      %s698 = sphi 0, %s697
      %s714 = sphi 0, %s698
    $region4: #{decoder_forward.2} parent=1 // loop_header_branch
      %51 = sbr.rel (%p49) target = $region8
    $region5: #{decoder_forward.2} parent=1 // loop_body
      %s53 = ssub.s32 %s48, 1
      %s54 = ssub.s32 %s48, 2
      %s61 = sadd.s32 1, %s56
      %p62 = scmp.ge.s32.totalorder %s61, 2
      %s63 = scalar_select %p62, 0, %s61
      %s64 = sadd.s32 1, %s55
      %s65 = scalar_select %p62, %s64, %s55
      %p66 = scmp.ge.s32.totalorder %s65, 1
      %s67 = scalar_select %p66, 0, %s65
      %s68 = ssub.s32 %s55, %s67
      %p69 = scmp.eq.s32.totalorder %s68, 0
      %s71 = sadd.s32 %s70, 1
      %s72 = scalar_select %p69, %s70, %s71
      %p75 = pneg %p69
      %p76 = scmp.eq.s32.totalorder %s48, 1
      %p77 = por %p75, %p76
      %p78 = scmp.ne.s32.totalorder %s70, %s73
      %p79 = scmp.eq.s32.totalorder %s48, 0
      %p80 = por %p78, %p79
      %p81 = scmp.ne.s32.totalorder %s70, %s73
      %p82 = scmp.eq.s32.totalorder %s53, 1
      %p83 = por %p81, %p82
      %p84 = scmp.ne.s32.totalorder %s73, %s74
      %p85 = scmp.eq.s32.totalorder %s53, 0
      %p86 = por %p84, %p85
      %p87 = scmp.ne.s32.totalorder %s73, %s74
      %p88 = scmp.eq.s32.totalorder %s54, 1
      %p89 = por %p87, %p88
      %p91 = scmp.ne.s32.totalorder %s74, %s90
      %p92 = scmp.eq.s32.totalorder %s54, 0
      %p93 = por %p91, %p92
      %s94 = ssub.s32 %s55, %s67
      %p95 = scmp.eq.s32.totalorder %s94, 0
      %s97 = sadd.s32 %s96, 1
      %s98 = scalar_select %p95, %s96, %s97
      %p101 = pneg %p95
      %p102 = scmp.eq.s32.totalorder %s48, 1
      %p103 = por %p101, %p102
      %p104 = scmp.ne.s32.totalorder %s96, %s99
      %p105 = scmp.eq.s32.totalorder %s48, 0
      %p106 = por %p104, %p105
      %p107 = scmp.ne.s32.totalorder %s96, %s99
      %p108 = scmp.eq.s32.totalorder %s53, 1
      %p109 = por %p107, %p108
      %p110 = scmp.ne.s32.totalorder %s99, %s100
      %p111 = scmp.eq.s32.totalorder %s53, 0
      %p112 = por %p110, %p111
      %p113 = scmp.ne.s32.totalorder %s99, %s100
      %p114 = scmp.eq.s32.totalorder %s54, 1
      %p115 = por %p113, %p114
      %p117 = scmp.ne.s32.totalorder %s100, %s116
      %p118 = scmp.eq.s32.totalorder %s54, 0
      %p119 = por %p117, %p118
      %s120 = ssub.s32 %s55, %s67
      %p121 = scmp.eq.s32.totalorder %s120, 0
      %s123 = sadd.s32 %s122, 1
      %s124 = scalar_select %p121, %s122, %s123
      %p127 = pneg %p121
      %p128 = scmp.eq.s32.totalorder %s48, 1
      %p129 = por %p127, %p128
      %p130 = scmp.ne.s32.totalorder %s122, %s125
      %p131 = scmp.eq.s32.totalorder %s48, 0
      %p132 = por %p130, %p131
      %p133 = scmp.ne.s32.totalorder %s122, %s125
      %p134 = scmp.eq.s32.totalorder %s53, 1
      %p135 = por %p133, %p134
      %p136 = scmp.ne.s32.totalorder %s125, %s126
      %p137 = scmp.eq.s32.totalorder %s53, 0
      %p138 = por %p136, %p137
      %p139 = scmp.ne.s32.totalorder %s125, %s126
      %p140 = scmp.eq.s32.totalorder %s54, 1
      %p141 = por %p139, %p140
      %p143 = scmp.ne.s32.totalorder %s126, %s142
      %p144 = scmp.eq.s32.totalorder %s54, 0
      %p145 = por %p143, %p144
      %s146 = ssub.s32 %s55, %s67
      %p147 = scmp.eq.s32.totalorder %s146, 0
      %s149 = sadd.s32 %s148, 1
      %s150 = scalar_select %p147, %s148, %s149
      %p153 = pneg %p147
      %p154 = scmp.eq.s32.totalorder %s48, 1
      %p155 = por %p153, %p154
      %p156 = scmp.ne.s32.totalorder %s148, %s151
      %p157 = scmp.eq.s32.totalorder %s48, 0
      %p158 = por %p156, %p157
      %p159 = scmp.ne.s32.totalorder %s148, %s151
      %p160 = scmp.eq.s32.totalorder %s53, 1
      %p161 = por %p159, %p160
      %p162 = scmp.ne.s32.totalorder %s151, %s152
      %p163 = scmp.eq.s32.totalorder %s53, 0
      %p164 = por %p162, %p163
      %p165 = scmp.ne.s32.totalorder %s151, %s152
      %p166 = scmp.eq.s32.totalorder %s54, 1
      %p167 = por %p165, %p166
      %p169 = scmp.ne.s32.totalorder %s152, %s168
      %p170 = scmp.eq.s32.totalorder %s54, 0
      %p171 = por %p169, %p170
      %s172 = ssub.s32 %s56, %s63
      %p173 = scmp.eq.s32.totalorder %s172, 0
      %s175 = sadd.s32 %s174, 1
      %s176 = scalar_select %p173, %s174, %s175
      %p179 = pneg %p173
      %p180 = scmp.eq.s32.totalorder %s48, 1
      %p181 = por %p179, %p180
      %p182 = scmp.ne.s32.totalorder %s174, %s177
      %p183 = scmp.eq.s32.totalorder %s48, 0
      %p184 = por %p182, %p183
      %p185 = scmp.ne.s32.totalorder %s174, %s177
      %p186 = scmp.eq.s32.totalorder %s53, 1
      %p187 = por %p185, %p186
      %p188 = scmp.ne.s32.totalorder %s177, %s178
      %p189 = scmp.eq.s32.totalorder %s53, 0
      %p190 = por %p188, %p189
      %p191 = scmp.ne.s32.totalorder %s177, %s178
      %p192 = scmp.eq.s32.totalorder %s54, 1
      %p193 = por %p191, %p192
      %p195 = scmp.ne.s32.totalorder %s178, %s194
      %p196 = scmp.eq.s32.totalorder %s54, 0
      %p197 = por %p195, %p196
      %s198 = ssub.s32 %s56, %s63
      %p199 = scmp.eq.s32.totalorder %s198, 0
      %s201 = sadd.s32 %s200, 1
      %s202 = scalar_select %p199, %s200, %s201
      %p205 = pneg %p199
      %p206 = scmp.eq.s32.totalorder %s48, 1
      %p207 = por %p205, %p206
      %p208 = scmp.ne.s32.totalorder %s200, %s203
      %p209 = scmp.eq.s32.totalorder %s48, 0
      %p210 = por %p208, %p209
      %p211 = scmp.ne.s32.totalorder %s200, %s203
      %p212 = scmp.eq.s32.totalorder %s53, 1
      %p213 = por %p211, %p212
      %p214 = scmp.ne.s32.totalorder %s203, %s204
      %p215 = scmp.eq.s32.totalorder %s53, 0
      %p216 = por %p214, %p215
      %p217 = scmp.ne.s32.totalorder %s203, %s204
      %p218 = scmp.eq.s32.totalorder %s54, 1
      %p219 = por %p217, %p218
      %p221 = scmp.ne.s32.totalorder %s204, %s220
      %p222 = scmp.eq.s32.totalorder %s54, 0
      %p223 = por %p221, %p222
      %s224 = ssub.s32 %s56, %s63
      %p225 = scmp.eq.s32.totalorder %s224, 0
      %s227 = sadd.s32 %s226, 1
      %s228 = scalar_select %p225, %s226, %s227
      %p231 = pneg %p225
      %p232 = scmp.eq.s32.totalorder %s48, 1
      %p233 = por %p231, %p232
      %p234 = scmp.ne.s32.totalorder %s226, %s229
      %p235 = scmp.eq.s32.totalorder %s48, 0
      %p236 = por %p234, %p235
      %p237 = scmp.ne.s32.totalorder %s226, %s229
      %p238 = scmp.eq.s32.totalorder %s53, 1
      %p239 = por %p237, %p238
      %p240 = scmp.ne.s32.totalorder %s229, %s230
      %p241 = scmp.eq.s32.totalorder %s53, 0
      %p242 = por %p240, %p241
      %p243 = scmp.ne.s32.totalorder %s229, %s230
      %p244 = scmp.eq.s32.totalorder %s54, 1
      %p245 = por %p243, %p244
      %p247 = scmp.ne.s32.totalorder %s230, %s246
      %p248 = scmp.eq.s32.totalorder %s54, 0
      %p249 = por %p247, %p248
      %s250 = ssub.s32 %s56, %s63
      %p251 = scmp.eq.s32.totalorder %s250, 0
      %s253 = sadd.s32 %s252, 1
      %s254 = scalar_select %p251, %s252, %s253
      %p257 = pneg %p251
      %p258 = scmp.eq.s32.totalorder %s48, 1
      %p259 = por %p257, %p258
      %p260 = scmp.ne.s32.totalorder %s252, %s255
      %p261 = scmp.eq.s32.totalorder %s48, 0
      %p262 = por %p260, %p261
      %p263 = scmp.ne.s32.totalorder %s252, %s255
      %p264 = scmp.eq.s32.totalorder %s53, 1
      %p265 = por %p263, %p264
      %p266 = scmp.ne.s32.totalorder %s255, %s256
      %p267 = scmp.eq.s32.totalorder %s53, 0
      %p268 = por %p266, %p267
      %p269 = scmp.ne.s32.totalorder %s255, %s256
      %p270 = scmp.eq.s32.totalorder %s54, 1
      %p271 = por %p269, %p270
      %p273 = scmp.ne.s32.totalorder %s256, %s272
      %p274 = scmp.eq.s32.totalorder %s54, 0
      %p275 = por %p273, %p274
      %s276 = ssub.s32 %s56, %s63
      %p277 = scmp.eq.s32.totalorder %s276, 0
      %s279 = sadd.s32 %s278, 1
      %s280 = scalar_select %p277, %s278, %s279
      %p283 = pneg %p277
      %p284 = scmp.eq.s32.totalorder %s48, 1
      %p285 = por %p283, %p284
      %p286 = scmp.ne.s32.totalorder %s278, %s281
      %p287 = scmp.eq.s32.totalorder %s48, 0
      %p288 = por %p286, %p287
      %p289 = scmp.ne.s32.totalorder %s278, %s281
      %p290 = scmp.eq.s32.totalorder %s53, 1
      %p291 = por %p289, %p290
      %p292 = scmp.ne.s32.totalorder %s281, %s282
      %p293 = scmp.eq.s32.totalorder %s53, 0
      %p294 = por %p292, %p293
      %p295 = scmp.ne.s32.totalorder %s281, %s282
      %p296 = scmp.eq.s32.totalorder %s54, 1
      %p297 = por %p295, %p296
      %p299 = scmp.ne.s32.totalorder %s282, %s298
      %p300 = scmp.eq.s32.totalorder %s54, 0
      %p301 = por %p299, %p300
      %s302 = ssub.s32 %s56, %s63
      %p303 = scmp.eq.s32.totalorder %s302, 0
      %s305 = sadd.s32 %s304, 1
      %s306 = scalar_select %p303, %s304, %s305
      %p309 = pneg %p303
      %p310 = scmp.eq.s32.totalorder %s48, 1
      %p311 = por %p309, %p310
      %p312 = scmp.ne.s32.totalorder %s304, %s307
      %p313 = scmp.eq.s32.totalorder %s48, 0
      %p314 = por %p312, %p313
      %p315 = scmp.ne.s32.totalorder %s304, %s307
      %p316 = scmp.eq.s32.totalorder %s53, 1
      %p317 = por %p315, %p316
      %p318 = scmp.ne.s32.totalorder %s307, %s308
      %p319 = scmp.eq.s32.totalorder %s53, 0
      %p320 = por %p318, %p319
      %p321 = scmp.ne.s32.totalorder %s307, %s308
      %p322 = scmp.eq.s32.totalorder %s54, 1
      %p323 = por %p321, %p322
      %p325 = scmp.ne.s32.totalorder %s308, %s324
      %p326 = scmp.eq.s32.totalorder %s54, 0
      %p327 = por %p325, %p326
      %s328 = ssub.s32 %s56, %s63
      %p329 = scmp.eq.s32.totalorder %s328, 0
      %s331 = sadd.s32 %s330, 1
      %s332 = scalar_select %p329, %s330, %s331
      %p335 = pneg %p329
      %p336 = scmp.eq.s32.totalorder %s48, 1
      %p337 = por %p335, %p336
      %p338 = scmp.ne.s32.totalorder %s330, %s333
      %p339 = scmp.eq.s32.totalorder %s48, 0
      %p340 = por %p338, %p339
      %p341 = scmp.ne.s32.totalorder %s330, %s333
      %p342 = scmp.eq.s32.totalorder %s53, 1
      %p343 = por %p341, %p342
      %p344 = scmp.ne.s32.totalorder %s333, %s334
      %p345 = scmp.eq.s32.totalorder %s53, 0
      %p346 = por %p344, %p345
      %p347 = scmp.ne.s32.totalorder %s333, %s334
      %p348 = scmp.eq.s32.totalorder %s54, 1
      %p349 = por %p347, %p348
      %p351 = scmp.ne.s32.totalorder %s334, %s350
      %p352 = scmp.eq.s32.totalorder %s54, 0
      %p353 = por %p351, %p352
      %s354 = ssub.s32 %s56, %s63
      %p355 = scmp.eq.s32.totalorder %s354, 0
      %s357 = sadd.s32 %s356, 1
      %s358 = scalar_select %p355, %s356, %s357
      %p361 = pneg %p355
      %p362 = scmp.eq.s32.totalorder %s48, 1
      %p363 = por %p361, %p362
      %p364 = scmp.ne.s32.totalorder %s356, %s359
      %p365 = scmp.eq.s32.totalorder %s48, 0
      %p366 = por %p364, %p365
      %p367 = scmp.ne.s32.totalorder %s356, %s359
      %p368 = scmp.eq.s32.totalorder %s53, 1
      %p369 = por %p367, %p368
      %p370 = scmp.ne.s32.totalorder %s359, %s360
      %p371 = scmp.eq.s32.totalorder %s53, 0
      %p372 = por %p370, %p371
      %p373 = scmp.ne.s32.totalorder %s359, %s360
      %p374 = scmp.eq.s32.totalorder %s54, 1
      %p375 = por %p373, %p374
      %p377 = scmp.ne.s32.totalorder %s360, %s376
      %p378 = scmp.eq.s32.totalorder %s54, 0
      %p379 = por %p377, %p378
      %s380 = ssub.s32 %s56, %s63
      %p381 = scmp.eq.s32.totalorder %s380, 0
      %s383 = sadd.s32 %s382, 1
      %s384 = scalar_select %p381, %s382, %s383
      %p387 = pneg %p381
      %p388 = scmp.eq.s32.totalorder %s48, 1
      %p389 = por %p387, %p388
      %p390 = scmp.ne.s32.totalorder %s382, %s385
      %p391 = scmp.eq.s32.totalorder %s48, 0
      %p392 = por %p390, %p391
      %p393 = scmp.ne.s32.totalorder %s382, %s385
      %p394 = scmp.eq.s32.totalorder %s53, 1
      %p395 = por %p393, %p394
      %p396 = scmp.ne.s32.totalorder %s385, %s386
      %p397 = scmp.eq.s32.totalorder %s53, 0
      %p398 = por %p396, %p397
      %p399 = scmp.ne.s32.totalorder %s385, %s386
      %p400 = scmp.eq.s32.totalorder %s54, 1
      %p401 = por %p399, %p400
      %p403 = scmp.ne.s32.totalorder %s386, %s402
      %p404 = scmp.eq.s32.totalorder %s54, 0
      %p405 = por %p403, %p404
      %s406 = ssub.s32 %s56, %s63
      %p407 = scmp.eq.s32.totalorder %s406, 0
      %s409 = sadd.s32 %s408, 1
      %s410 = scalar_select %p407, %s408, %s409
      %p413 = pneg %p407
      %p414 = scmp.eq.s32.totalorder %s48, 1
      %p415 = por %p413, %p414
      %p416 = scmp.ne.s32.totalorder %s408, %s411
      %p417 = scmp.eq.s32.totalorder %s48, 0
      %p418 = por %p416, %p417
      %p419 = scmp.ne.s32.totalorder %s408, %s411
      %p420 = scmp.eq.s32.totalorder %s53, 1
      %p421 = por %p419, %p420
      %p422 = scmp.ne.s32.totalorder %s411, %s412
      %p423 = scmp.eq.s32.totalorder %s53, 0
      %p424 = por %p422, %p423
      %p425 = scmp.ne.s32.totalorder %s411, %s412
      %p426 = scmp.eq.s32.totalorder %s54, 1
      %p427 = por %p425, %p426
      %p429 = scmp.ne.s32.totalorder %s412, %s428
      %p430 = scmp.eq.s32.totalorder %s54, 0
      %p431 = por %p429, %p430
      %s432 = ssub.s32 %s56, %s63
      %p433 = scmp.eq.s32.totalorder %s432, 0
      %s435 = sadd.s32 %s434, 1
      %s436 = scalar_select %p433, %s434, %s435
      %p439 = pneg %p433
      %p440 = scmp.eq.s32.totalorder %s48, 1
      %p441 = por %p439, %p440
      %p442 = scmp.ne.s32.totalorder %s434, %s437
      %p443 = scmp.eq.s32.totalorder %s48, 0
      %p444 = por %p442, %p443
      %p445 = scmp.ne.s32.totalorder %s434, %s437
      %p446 = scmp.eq.s32.totalorder %s53, 1
      %p447 = por %p445, %p446
      %p448 = scmp.ne.s32.totalorder %s437, %s438
      %p449 = scmp.eq.s32.totalorder %s53, 0
      %p450 = por %p448, %p449
      %p451 = scmp.ne.s32.totalorder %s437, %s438
      %p452 = scmp.eq.s32.totalorder %s54, 1
      %p453 = por %p451, %p452
      %p455 = scmp.ne.s32.totalorder %s438, %s454
      %p456 = scmp.eq.s32.totalorder %s54, 0
      %p457 = por %p455, %p456
      %s458 = ssub.s32 %s56, %s63
      %p459 = scmp.eq.s32.totalorder %s458, 0
      %s461 = sadd.s32 %s460, 1
      %s462 = scalar_select %p459, %s460, %s461
      %p465 = pneg %p459
      %p466 = scmp.eq.s32.totalorder %s48, 1
      %p467 = por %p465, %p466
      %p468 = scmp.ne.s32.totalorder %s460, %s463
      %p469 = scmp.eq.s32.totalorder %s48, 0
      %p470 = por %p468, %p469
      %p471 = scmp.ne.s32.totalorder %s460, %s463
      %p472 = scmp.eq.s32.totalorder %s53, 1
      %p473 = por %p471, %p472
      %p474 = scmp.ne.s32.totalorder %s463, %s464
      %p475 = scmp.eq.s32.totalorder %s53, 0
      %p476 = por %p474, %p475
      %p477 = scmp.ne.s32.totalorder %s463, %s464
      %p478 = scmp.eq.s32.totalorder %s54, 1
      %p479 = por %p477, %p478
      %p481 = scmp.ne.s32.totalorder %s464, %s480
      %p482 = scmp.eq.s32.totalorder %s54, 0
      %p483 = por %p481, %p482
      %s484 = ssub.s32 %s56, %s63
      %p485 = scmp.eq.s32.totalorder %s484, 0
      %s487 = sadd.s32 %s486, 1
      %s488 = scalar_select %p485, %s486, %s487
      %p491 = pneg %p485
      %p492 = scmp.eq.s32.totalorder %s48, 1
      %p493 = por %p491, %p492
      %p494 = scmp.ne.s32.totalorder %s486, %s489
      %p495 = scmp.eq.s32.totalorder %s48, 0
      %p496 = por %p494, %p495
      %p497 = scmp.ne.s32.totalorder %s486, %s489
      %p498 = scmp.eq.s32.totalorder %s53, 1
      %p499 = por %p497, %p498
      %p500 = scmp.ne.s32.totalorder %s489, %s490
      %p501 = scmp.eq.s32.totalorder %s53, 0
      %p502 = por %p500, %p501
      %p503 = scmp.ne.s32.totalorder %s489, %s490
      %p504 = scmp.eq.s32.totalorder %s54, 1
      %p505 = por %p503, %p504
      %p507 = scmp.ne.s32.totalorder %s490, %s506
      %p508 = scmp.eq.s32.totalorder %s54, 0
      %p509 = por %p507, %p508
      %s510 = ssub.s32 %s56, %s63
      %p511 = scmp.eq.s32.totalorder %s510, 0
      %s513 = sadd.s32 %s512, 1
      %s514 = scalar_select %p511, %s512, %s513
      %p517 = pneg %p511
      %p518 = scmp.eq.s32.totalorder %s48, 1
      %p519 = por %p517, %p518
      %p520 = scmp.ne.s32.totalorder %s512, %s515
      %p521 = scmp.eq.s32.totalorder %s48, 0
      %p522 = por %p520, %p521
      %p523 = scmp.ne.s32.totalorder %s512, %s515
      %p524 = scmp.eq.s32.totalorder %s53, 1
      %p525 = por %p523, %p524
      %p526 = scmp.ne.s32.totalorder %s515, %s516
      %p527 = scmp.eq.s32.totalorder %s53, 0
      %p528 = por %p526, %p527
      %p529 = scmp.ne.s32.totalorder %s515, %s516
      %p530 = scmp.eq.s32.totalorder %s54, 1
      %p531 = por %p529, %p530
      %p533 = scmp.ne.s32.totalorder %s516, %s532
      %p534 = scmp.eq.s32.totalorder %s54, 0
      %p535 = por %p533, %p534
      %s536 = ssub.s32 %s56, %s63
      %p537 = scmp.eq.s32.totalorder %s536, 0
      %s539 = sadd.s32 %s538, 1
      %s540 = scalar_select %p537, %s538, %s539
      %p543 = pneg %p537
      %p544 = scmp.eq.s32.totalorder %s48, 1
      %p545 = por %p543, %p544
      %p546 = scmp.ne.s32.totalorder %s538, %s541
      %p547 = scmp.eq.s32.totalorder %s48, 0
      %p548 = por %p546, %p547
      %p549 = scmp.ne.s32.totalorder %s538, %s541
      %p550 = scmp.eq.s32.totalorder %s53, 1
      %p551 = por %p549, %p550
      %p552 = scmp.ne.s32.totalorder %s541, %s542
      %p553 = scmp.eq.s32.totalorder %s53, 0
      %p554 = por %p552, %p553
      %p555 = scmp.ne.s32.totalorder %s541, %s542
      %p556 = scmp.eq.s32.totalorder %s54, 1
      %p557 = por %p555, %p556
      %p559 = scmp.ne.s32.totalorder %s542, %s558
      %p560 = scmp.eq.s32.totalorder %s54, 0
      %p561 = por %p559, %p560
      %s562 = ssub.s32 %s56, %s63
      %p563 = scmp.eq.s32.totalorder %s562, 0
      %s565 = sadd.s32 %s564, 1
      %s566 = scalar_select %p563, %s564, %s565
      %p569 = pneg %p563
      %p570 = scmp.eq.s32.totalorder %s48, 1
      %p571 = por %p569, %p570
      %p572 = scmp.ne.s32.totalorder %s564, %s567
      %p573 = scmp.eq.s32.totalorder %s48, 0
      %p574 = por %p572, %p573
      %p575 = scmp.ne.s32.totalorder %s564, %s567
      %p576 = scmp.eq.s32.totalorder %s53, 1
      %p577 = por %p575, %p576
      %p578 = scmp.ne.s32.totalorder %s567, %s568
      %p579 = scmp.eq.s32.totalorder %s53, 0
      %p580 = por %p578, %p579
      %p581 = scmp.ne.s32.totalorder %s567, %s568
      %p582 = scmp.eq.s32.totalorder %s54, 1
      %p583 = por %p581, %p582
      %p585 = scmp.ne.s32.totalorder %s568, %s584
      %p586 = scmp.eq.s32.totalorder %s54, 0
      %p587 = por %p585, %p586
      %s588 = ssub.s32 %s56, %s63
      %p589 = scmp.eq.s32.totalorder %s588, 0
      %s591 = sadd.s32 %s590, 1
      %s592 = scalar_select %p589, %s590, %s591
      %p595 = pneg %p589
      %p596 = scmp.eq.s32.totalorder %s48, 1
      %p597 = por %p595, %p596
      %p598 = scmp.ne.s32.totalorder %s590, %s593
      %p599 = scmp.eq.s32.totalorder %s48, 0
      %p600 = por %p598, %p599
      %p601 = scmp.ne.s32.totalorder %s590, %s593
      %p602 = scmp.eq.s32.totalorder %s53, 1
      %p603 = por %p601, %p602
      %p604 = scmp.ne.s32.totalorder %s593, %s594
      %p605 = scmp.eq.s32.totalorder %s53, 0
      %p606 = por %p604, %p605
      %p607 = scmp.ne.s32.totalorder %s593, %s594
      %p608 = scmp.eq.s32.totalorder %s54, 1
      %p609 = por %p607, %p608
      %p611 = scmp.ne.s32.totalorder %s594, %s610
      %p612 = scmp.eq.s32.totalorder %s54, 0
      %p613 = por %p611, %p612
      %s614 = ssub.s32 %s56, %s63
      %p615 = scmp.eq.s32.totalorder %s614, 0
      %s617 = sadd.s32 %s616, 1
      %s618 = scalar_select %p615, %s616, %s617
      %p621 = pneg %p615
      %p622 = scmp.eq.s32.totalorder %s48, 1
      %p623 = por %p621, %p622
      %p624 = scmp.ne.s32.totalorder %s616, %s619
      %p625 = scmp.eq.s32.totalorder %s48, 0
      %p626 = por %p624, %p625
      %p627 = scmp.ne.s32.totalorder %s616, %s619
      %p628 = scmp.eq.s32.totalorder %s53, 1
      %p629 = por %p627, %p628
      %p630 = scmp.ne.s32.totalorder %s619, %s620
      %p631 = scmp.eq.s32.totalorder %s53, 0
      %p632 = por %p630, %p631
      %p633 = scmp.ne.s32.totalorder %s619, %s620
      %p634 = scmp.eq.s32.totalorder %s54, 1
      %p635 = por %p633, %p634
      %p637 = scmp.ne.s32.totalorder %s620, %s636
      %p638 = scmp.eq.s32.totalorder %s54, 0
      %p639 = por %p637, %p638
      %s640 = ssub.s32 %s56, %s63
      %p641 = scmp.eq.s32.totalorder %s640, 0
      %s643 = sadd.s32 %s642, 1
      %s644 = scalar_select %p641, %s642, %s643
      %p647 = pneg %p641
      %p648 = scmp.eq.s32.totalorder %s48, 1
      %p649 = por %p647, %p648
      %p650 = scmp.ne.s32.totalorder %s642, %s645
      %p651 = scmp.eq.s32.totalorder %s48, 0
      %p652 = por %p650, %p651
      %p653 = scmp.ne.s32.totalorder %s642, %s645
      %p654 = scmp.eq.s32.totalorder %s53, 1
      %p655 = por %p653, %p654
      %p656 = scmp.ne.s32.totalorder %s645, %s646
      %p657 = scmp.eq.s32.totalorder %s53, 0
      %p658 = por %p656, %p657
      %p659 = scmp.ne.s32.totalorder %s645, %s646
      %p660 = scmp.eq.s32.totalorder %s54, 1
      %p661 = por %p659, %p660
      %p663 = scmp.ne.s32.totalorder %s646, %s662
      %p664 = scmp.eq.s32.totalorder %s54, 0
      %p665 = por %p663, %p664
      %s666 = ssub.s32 %s56, %s63
      %p667 = scmp.eq.s32.totalorder %s666, 0
      %s669 = sadd.s32 %s668, 1
      %s670 = scalar_select %p667, %s668, %s669
      %p673 = pneg %p667
      %p674 = scmp.eq.s32.totalorder %s48, 1
      %p675 = por %p673, %p674
      %p676 = scmp.ne.s32.totalorder %s668, %s671
      %p677 = scmp.eq.s32.totalorder %s48, 0
      %p678 = por %p676, %p677
      %p679 = scmp.ne.s32.totalorder %s668, %s671
      %p680 = scmp.eq.s32.totalorder %s53, 1
      %p681 = por %p679, %p680
      %p682 = scmp.ne.s32.totalorder %s671, %s672
      %p683 = scmp.eq.s32.totalorder %s53, 0
      %p684 = por %p682, %p683
      %p685 = scmp.ne.s32.totalorder %s671, %s672
      %p686 = scmp.eq.s32.totalorder %s54, 1
      %p687 = por %p685, %p686
      %p689 = scmp.ne.s32.totalorder %s672, %s688
      %p690 = scmp.eq.s32.totalorder %s54, 0
      %p691 = por %p689, %p690
      %s692 = ssub.s32 %s55, %s67
      %p693 = scmp.eq.s32.totalorder %s692, 0
      %s695 = sadd.s32 %s694, 1
      %s696 = scalar_select %p693, %s694, %s695
      %p699 = pneg %p693
      %p700 = scmp.eq.s32.totalorder %s48, 1
      %p701 = por %p699, %p700
      %p702 = scmp.ne.s32.totalorder %s694, %s697
      %p703 = scmp.eq.s32.totalorder %s48, 0
      %p704 = por %p702, %p703
      %p705 = scmp.ne.s32.totalorder %s694, %s697
      %p706 = scmp.eq.s32.totalorder %s53, 1
      %p707 = por %p705, %p706
      %p708 = scmp.ne.s32.totalorder %s697, %s698
      %p709 = scmp.eq.s32.totalorder %s53, 0
      %p710 = por %p708, %p709
      %p711 = scmp.ne.s32.totalorder %s697, %s698
      %p712 = scmp.eq.s32.totalorder %s54, 1
      %p713 = por %p711, %p712
      %p715 = scmp.ne.s32.totalorder %s698, %s714
      %p716 = scmp.eq.s32.totalorder %s54, 0
      %p717 = por %p715, %p716
      %p718 = scmp.le.s32.totalorder 1, %s48
      %p719 = scmp.lt.s32.totalorder %s48, 3
      %p720 = pnand %p718, %p719
      %p721 = pneg %p720
      // Predicated region
      $region9: #{decoder_forward.2} parent=5 // pred_check
        _
      $region10: #{decoder_forward.2} parent=5 // pred_check_branch
        %723 = sbr.rel (%p720) target = $region12
      $region11: #{decoder_forward.2} parent=5 // pred_region
        %s724 = ssub.s32 %s48, 1
        // Predicated region
        $region13: #{decoder_forward.2} parent=11 // pred_check
          %p725 = pneg %p86
        $region14: #{decoder_forward.2} parent=11 // pred_check_branch
          %727 = sbr.rel (%p725) target = $region16
        $region15: #{decoder_forward.2} parent=11 // pred_region
          %s728 = smul.u32 2, %s57
          %p729 = scmp.lt.s32.totalorder %s728, 1
          %s730 = scalar_select %p729, %s728, 1
          %s731 = smul.addr %s730, 8
          %s732 = scalar_lea.vmem %s0, %s731
          %s733 = smul.u32 2, %s57
        $region16: #{decoder_forward.2} parent=11 // pred_fallthru
          _
        // Predicated region
        $region17: #{decoder_forward.2} parent=11 // pred_check
          %p734 = pneg %p112
        $region18: #{decoder_forward.2} parent=11 // pred_check_branch
          %736 = sbr.rel (%p734) target = $region20
        $region19: #{decoder_forward.2} parent=11 // pred_region
          %s737 = smul.u32 2, %s57
          %p738 = scmp.lt.s32.totalorder %s737, 1
          %s739 = scalar_select %p738, %s737, 1
          %s740 = smul.addr %s739, 2
          %s741 = smul.addr %s740, 8
          %s742 = scalar_lea.vmem %s1, %s741
          %s743 = smul.u32 2, %s57
        $region20: #{decoder_forward.2} parent=11 // pred_fallthru
          _
        // Predicated region
        $region21: #{decoder_forward.2} parent=11 // pred_check
          %p744 = pneg %p138
        $region22: #{decoder_forward.2} parent=11 // pred_check_branch
          %746 = sbr.rel (%p744) target = $region24
        $region23: #{decoder_forward.2} parent=11 // pred_region
          %s747 = smul.u32 2, %s57
          %p748 = scmp.lt.s32.totalorder %s747, 1
          %s749 = scalar_select %p748, %s747, 1
          %s750 = smul.addr %s749, 8
          %s751 = scalar_lea.vmem %s2, %s750
          %s752 = smul.u32 2, %s57
        $region24: #{decoder_forward.2} parent=11 // pred_fallthru
          _
        // Predicated region
        $region25: #{decoder_forward.2} parent=11 // pred_check
          %p753 = pneg %p164
        $region26: #{decoder_forward.2} parent=11 // pred_check_branch
          %755 = sbr.rel (%p753) target = $region28
        $region27: #{decoder_forward.2} parent=11 // pred_region
          %s756 = smul.u32 2, %s57
          %p757 = scmp.lt.s32.totalorder %s756, 1
          %s758 = scalar_select %p757, %s756, 1
          %s759 = scalar_lea.vmem %s3, %s758
          %s760 = smul.u32 2, %s57
        $region28: #{decoder_forward.2} parent=11 // pred_fallthru
          _
      $region12: #{decoder_forward.2} parent=5 // pred_fallthru
        _
      %p761 = scmp.lt.s32.totalorder %s48, 2
      // Predicated region
      $region29: #{decoder_forward.2} parent=5 // pred_check
        %p762 = pneg %p761
      $region30: #{decoder_forward.2} parent=5 // pred_check_branch
        %764 = sbr.rel (%p762) target = $region32
      $region31: #{decoder_forward.2} parent=5 // pred_region
        // Predicated region
        $region33: #{decoder_forward.2} parent=31 // pred_check
          %p765 = pneg %p184
        $region34: #{decoder_forward.2} parent=31 // pred_check_branch
          %767 = sbr.rel (%p765) target = $region36
        $region35: #{decoder_forward.2} parent=31 // pred_region
          %s768 = sand.u32 %s174, 1
          %s769 = scalar_lea.sflag [#allocation3], %s768
          %s770 = sand.u32 %s174, 1
          %s771 = smul.addr %s770, 192
          %s772 = scalar_lea.vmem [#allocation2], %s771
          %s774 = ssub.s32 3072, 3072
          %775 = vsyncadd %s769, %s774
          %s776 = smul.addr %s56, 48
          %s777 = smul.addr %s776, 64
          %s778 = scalar_lea.hbm %s4, %s777
          %s779 = sshll.u32 %s772, 4
          %s780 = int_to_ptr.vmem [resolvable:$true] %s779
          %785 = dma.hbm_to_vmem [thread:$0]  %s778, 3072, %s780, %s769, 192, 192, 12
        $region36: #{decoder_forward.2} parent=31 // pred_fallthru
          _
        // Predicated region
        $region37: #{decoder_forward.2} parent=31 // pred_check
          %p786 = pneg %p210
        $region38: #{decoder_forward.2} parent=31 // pred_check_branch
          %788 = sbr.rel (%p786) target = $region40
        $region39: #{decoder_forward.2} parent=31 // pred_region
          %p789 = scmp.lt.s32.totalorder %s56, 1
          %s790 = scalar_select %p789, %s56, 1
          %s791 = smul.addr %s790, 3
          %s792 = scalar_lea.vmem %s5, %s791
        $region40: #{decoder_forward.2} parent=31 // pred_fallthru
          _
        // Predicated region
        $region41: #{decoder_forward.2} parent=31 // pred_check
          %p793 = pneg %p236
        $region42: #{decoder_forward.2} parent=31 // pred_check_branch
          %795 = sbr.rel (%p793) target = $region44
        $region43: #{decoder_forward.2} parent=31 // pred_region
          %s796 = sand.u32 %s48, 1
          %s797 = scalar_lea.sflag [#allocation5], %s796
          %s798 = sand.u32 %s226, 1
          %s799 = smul.addr %s798, 64
          %s800 = scalar_lea.vmem [#allocation4], %s799
          %s802 = ssub.s32 1024, 1024
          %803 = vsyncadd %s797, %s802
          %s804 = smul.addr %s56, 16
          %s805 = smul.addr %s804, 64
          %s806 = scalar_lea.hbm %s6, %s805
          %s807 = sshll.u32 %s800, 4
          %s808 = int_to_ptr.vmem [resolvable:$true] %s807
          %813 = dma.hbm_to_vmem [thread:$0]  %s806, 1024, %s808, %s797, 64, 64, 4
        $region44: #{decoder_forward.2} parent=31 // pred_fallthru
          _
        // Predicated region
        $region45: #{decoder_forward.2} parent=31 // pred_check
          %p814 = pneg %p262
        $region46: #{decoder_forward.2} parent=31 // pred_check_branch
          %816 = sbr.rel (%p814) target = $region48
        $region47: #{decoder_forward.2} parent=31 // pred_region
          %p817 = scmp.lt.s32.totalorder %s56, 1
          %s818 = scalar_select %p817, %s56, 1
          %s819 = scalar_lea.vmem %s7, %s818
        $region48: #{decoder_forward.2} parent=31 // pred_fallthru
          _
        // Predicated region
        $region49: #{decoder_forward.2} parent=31 // pred_check
          %p820 = pneg %p288
        $region50: #{decoder_forward.2} parent=31 // pred_check_branch
          %822 = sbr.rel (%p820) target = $region52
        $region51: #{decoder_forward.2} parent=31 // pred_region
          %p823 = scmp.lt.s32.totalorder %s56, 1
          %s824 = scalar_select %p823, %s56, 1
          %s825 = scalar_lea.vmem %s8, %s824
        $region52: #{decoder_forward.2} parent=31 // pred_fallthru
          _
        // Predicated region
        $region53: #{decoder_forward.2} parent=31 // pred_check
          %p826 = pneg %p314
        $region54: #{decoder_forward.2} parent=31 // pred_check_branch
          %828 = sbr.rel (%p826) target = $region56
        $region55: #{decoder_forward.2} parent=31 // pred_region
          %p829 = scmp.lt.s32.totalorder %s56, 1
          %s830 = scalar_select %p829, %s56, 1
          %s831 = scalar_lea.vmem %s9, %s830
        $region56: #{decoder_forward.2} parent=31 // pred_fallthru
          _
        // Predicated region
        $region57: #{decoder_forward.2} parent=31 // pred_check
          %p832 = pneg %p340
        $region58: #{decoder_forward.2} parent=31 // pred_check_branch
          %834 = sbr.rel (%p832) target = $region60
        $region59: #{decoder_forward.2} parent=31 // pred_region
          %s835 = sand.u32 %s48, 1
          %s836 = scalar_lea.sflag [#allocation5], %s835
          %s837 = sand.u32 %s330, 1
          %s838 = smul.addr %s837, 64
          %s839 = scalar_lea.vmem [#allocation6], %s838
          %s841 = ssub.s32 1024, 1024
          %842 = vsyncadd %s836, %s841
          %s843 = smul.addr %s56, 16
          %s844 = smul.addr %s843, 64
          %s845 = scalar_lea.hbm %s10, %s844
          %s846 = sshll.u32 %s839, 4
          %s847 = int_to_ptr.vmem [resolvable:$true] %s846
          %852 = dma.hbm_to_vmem [thread:$0]  %s845, 1024, %s847, %s836, 64, 64, 4
        $region60: #{decoder_forward.2} parent=31 // pred_fallthru
          _
        // Predicated region
        $region61: #{decoder_forward.2} parent=31 // pred_check
          %p853 = pneg %p366
        $region62: #{decoder_forward.2} parent=31 // pred_check_branch
          %855 = sbr.rel (%p853) target = $region64
        $region63: #{decoder_forward.2} parent=31 // pred_region
          %s856 = sand.u32 %s48, 1
          %s857 = scalar_lea.sflag [#allocation8], %s856
          %s858 = sand.u32 %s356, 1
          %s859 = scalar_lea.vmem [#allocation7], %s858
          %s861 = ssub.s32 16, 16
          %862 = vsyncadd %s857, %s861
          %s863 = smul.addr %s56, 16
          %s864 = scalar_lea.hbm %s11, %s863
          %s866 = sshll.u32 %s859, 4
          %s867 = int_to_ptr.vmem [resolvable:$true] %s866
          %869 = dma.hbm_to_vmem [thread:$0]  %s864, 16, %s867, %s857
        $region64: #{decoder_forward.2} parent=31 // pred_fallthru
          _
        // Predicated region
        $region65: #{decoder_forward.2} parent=31 // pred_check
          %p870 = pneg %p392
        $region66: #{decoder_forward.2} parent=31 // pred_check_branch
          %872 = sbr.rel (%p870) target = $region68
        $region67: #{decoder_forward.2} parent=31 // pred_region
          %p873 = scmp.lt.s32.totalorder %s56, 1
          %s874 = scalar_select %p873, %s56, 1
          %s875 = smul.addr %s874, 32
          %s876 = smul.addr %s875, 4
          %s877 = scalar_lea.vmem %s12, %s876
        $region68: #{decoder_forward.2} parent=31 // pred_fallthru
          _
        // Predicated region
        $region69: #{decoder_forward.2} parent=31 // pred_check
          %p878 = pneg %p418
        $region70: #{decoder_forward.2} parent=31 // pred_check_branch
          %880 = sbr.rel (%p878) target = $region72
        $region71: #{decoder_forward.2} parent=31 // pred_region
          %s881 = sand.u32 %s48, 1
          %s882 = scalar_lea.sflag [#allocation8], %s881
          %s883 = sand.u32 %s408, 1
          %s884 = smul.addr %s883, 2
          %s885 = scalar_lea.vmem [#allocation9], %s884
          %s887 = ssub.s32 32, 32
          %888 = vsyncadd %s882, %s887
          %s889 = smul.addr %s56, 2
          %s890 = smul.addr %s889, 16
          %s891 = scalar_lea.hbm %s13, %s890
          %s893 = sshll.u32 %s885, 4
          %s894 = int_to_ptr.vmem [resolvable:$true] %s893
          %896 = dma.hbm_to_vmem [thread:$0]  %s891, 32, %s894, %s882
        $region72: #{decoder_forward.2} parent=31 // pred_fallthru
          _
        // Predicated region
        $region73: #{decoder_forward.2} parent=31 // pred_check
          %p897 = pneg %p444
        $region74: #{decoder_forward.2} parent=31 // pred_check_branch
          %899 = sbr.rel (%p897) target = $region76
        $region75: #{decoder_forward.2} parent=31 // pred_region
          %s900 = sand.u32 %s48, 1
          %s901 = scalar_lea.sflag [#allocation11], %s900
          %s902 = sand.u32 %s434, 1
          %s903 = smul.addr %s902, 64
          %s904 = scalar_lea.vmem [#allocation10], %s903
          %s906 = ssub.s32 1024, 1024
          %907 = vsyncadd %s901, %s906
          %s908 = smul.addr %s56, 16
          %s909 = smul.addr %s908, 64
          %s910 = scalar_lea.hbm %s14, %s909
          %s911 = sshll.u32 %s904, 4
          %s912 = int_to_ptr.vmem [resolvable:$true] %s911
          %917 = dma.hbm_to_vmem [thread:$0]  %s910, 1024, %s912, %s901, 64, 64, 4
        $region76: #{decoder_forward.2} parent=31 // pred_fallthru
          _
        // Predicated region
        $region77: #{decoder_forward.2} parent=31 // pred_check
          %p918 = pneg %p470
        $region78: #{decoder_forward.2} parent=31 // pred_check_branch
          %920 = sbr.rel (%p918) target = $region80
        $region79: #{decoder_forward.2} parent=31 // pred_region
          %s921 = sand.u32 %s48, 1
          %s922 = scalar_lea.sflag [#allocation11], %s921
          %s923 = sand.u32 %s460, 1
          %s924 = scalar_lea.vmem [#allocation12], %s923
          %s926 = ssub.s32 16, 16
          %927 = vsyncadd %s922, %s926
          %s928 = smul.addr %s56, 16
          %s929 = scalar_lea.hbm %s15, %s928
          %s931 = sshll.u32 %s924, 4
          %s932 = int_to_ptr.vmem [resolvable:$true] %s931
          %934 = dma.hbm_to_vmem [thread:$0]  %s929, 16, %s932, %s922
        $region80: #{decoder_forward.2} parent=31 // pred_fallthru
          _
        // Predicated region
        $region81: #{decoder_forward.2} parent=31 // pred_check
          %p935 = pneg %p496
        $region82: #{decoder_forward.2} parent=31 // pred_check_branch
          %937 = sbr.rel (%p935) target = $region84
        $region83: #{decoder_forward.2} parent=31 // pred_region
          %p938 = scmp.lt.s32.totalorder %s56, 1
          %s939 = scalar_select %p938, %s56, 1
          %s940 = scalar_lea.vmem %s16, %s939
        $region84: #{decoder_forward.2} parent=31 // pred_fallthru
          _
        // Predicated region
        $region85: #{decoder_forward.2} parent=31 // pred_check
          %p941 = pneg %p522
        $region86: #{decoder_forward.2} parent=31 // pred_check_branch
          %943 = sbr.rel (%p941) target = $region88
        $region87: #{decoder_forward.2} parent=31 // pred_region
          %p944 = scmp.lt.s32.totalorder %s56, 1
          %s945 = scalar_select %p944, %s56, 1
          %s946 = scalar_lea.vmem %s17, %s945
        $region88: #{decoder_forward.2} parent=31 // pred_fallthru
          _
        // Predicated region
        $region89: #{decoder_forward.2} parent=31 // pred_check
          %p947 = pneg %p548
        $region90: #{decoder_forward.2} parent=31 // pred_check_branch
          %949 = sbr.rel (%p947) target = $region92
        $region91: #{decoder_forward.2} parent=31 // pred_region
          %s950 = sand.u32 %s48, 1
          %s951 = scalar_lea.sflag [#allocation14], %s950
          %s952 = sand.u32 %s538, 1
          %s953 = smul.addr %s952, 128
          %s954 = scalar_lea.vmem [#allocation13], %s953
          %s956 = ssub.s32 2048, 2048
          %957 = vsyncadd %s951, %s956
          %s958 = smul.addr %s56, 32
          %s959 = smul.addr %s958, 64
          %s960 = scalar_lea.hbm %s18, %s959
          %s961 = sshll.u32 %s954, 4
          %s962 = int_to_ptr.vmem [resolvable:$true] %s961
          %967 = dma.hbm_to_vmem [thread:$0]  %s960, 2048, %s962, %s951, 128, 128, 8
        $region92: #{decoder_forward.2} parent=31 // pred_fallthru
          _
        // Predicated region
        $region93: #{decoder_forward.2} parent=31 // pred_check
          %p968 = pneg %p574
        $region94: #{decoder_forward.2} parent=31 // pred_check_branch
          %970 = sbr.rel (%p968) target = $region96
        $region95: #{decoder_forward.2} parent=31 // pred_region
          %s971 = sand.u32 %s48, 1
          %s972 = scalar_lea.sflag [#allocation14], %s971
          %s973 = sand.u32 %s564, 1
          %s974 = smul.addr %s973, 2
          %s975 = scalar_lea.vmem [#allocation15], %s974
          %s977 = ssub.s32 32, 32
          %978 = vsyncadd %s972, %s977
          %s979 = smul.addr %s56, 2
          %s980 = smul.addr %s979, 16
          %s981 = scalar_lea.hbm %s19, %s980
          %s983 = sshll.u32 %s975, 4
          %s984 = int_to_ptr.vmem [resolvable:$true] %s983
          %986 = dma.hbm_to_vmem [thread:$0]  %s981, 32, %s984, %s972
        $region96: #{decoder_forward.2} parent=31 // pred_fallthru
          _
        // Predicated region
        $region97: #{decoder_forward.2} parent=31 // pred_check
          %p987 = pneg %p600
        $region98: #{decoder_forward.2} parent=31 // pred_check_branch
          %989 = sbr.rel (%p987) target = $region100
        $region99: #{decoder_forward.2} parent=31 // pred_region
          %s990 = sand.u32 %s48, 1
          %s991 = scalar_lea.sflag [#allocation17], %s990
          %s992 = sand.u32 %s590, 1
          %s993 = smul.addr %s992, 128
          %s994 = scalar_lea.vmem [#allocation16], %s993
          %s996 = ssub.s32 2048, 2048
          %997 = vsyncadd %s991, %s996
          %s998 = smul.addr %s56, 32
          %s999 = smul.addr %s998, 64
          %s1000 = scalar_lea.hbm %s20, %s999
          %s1001 = sshll.u32 %s994, 4
          %s1002 = int_to_ptr.vmem [resolvable:$true] %s1001
          %1007 = dma.hbm_to_vmem [thread:$0]  %s1000, 2048, %s1002, %s991, 64, 64, 4
        $region100: #{decoder_forward.2} parent=31 // pred_fallthru
          _
        // Predicated region
        $region101: #{decoder_forward.2} parent=31 // pred_check
          %p1008 = pneg %p626
        $region102: #{decoder_forward.2} parent=31 // pred_check_branch
          %1010 = sbr.rel (%p1008) target = $region104
        $region103: #{decoder_forward.2} parent=31 // pred_region
          %s1011 = sand.u32 %s48, 1
          %s1012 = scalar_lea.sflag [#allocation17], %s1011
          %s1013 = sand.u32 %s616, 1
          %s1014 = scalar_lea.vmem [#allocation18], %s1013
          %s1016 = ssub.s32 16, 16
          %1017 = vsyncadd %s1012, %s1016
          %s1018 = smul.addr %s56, 16
          %s1019 = scalar_lea.hbm %s21, %s1018
          %s1021 = sshll.u32 %s1014, 4
          %s1022 = int_to_ptr.vmem [resolvable:$true] %s1021
          %1024 = dma.hbm_to_vmem [thread:$0]  %s1019, 16, %s1022, %s1012
        $region104: #{decoder_forward.2} parent=31 // pred_fallthru
          _
        // Predicated region
        $region105: #{decoder_forward.2} parent=31 // pred_check
          %p1025 = pneg %p652
        $region106: #{decoder_forward.2} parent=31 // pred_check_branch
          %1027 = sbr.rel (%p1025) target = $region108
        $region107: #{decoder_forward.2} parent=31 // pred_region
          %p1028 = scmp.lt.s32.totalorder %s56, 1
          %s1029 = scalar_select %p1028, %s56, 1
          %s1030 = scalar_lea.vmem %s22, %s1029
        $region108: #{decoder_forward.2} parent=31 // pred_fallthru
          _
        // Predicated region
        $region109: #{decoder_forward.2} parent=31 // pred_check
          %p1031 = pneg %p678
        $region110: #{decoder_forward.2} parent=31 // pred_check_branch
          %1033 = sbr.rel (%p1031) target = $region112
        $region111: #{decoder_forward.2} parent=31 // pred_region
          %p1034 = scmp.lt.s32.totalorder %s56, 1
          %s1035 = scalar_select %p1034, %s56, 1
          %s1036 = scalar_lea.vmem %s23, %s1035
        $region112: #{decoder_forward.2} parent=31 // pred_fallthru
          _
      $region32: #{decoder_forward.2} parent=5 // pred_fallthru
        _
      %p1037 = scmp.le.s32.totalorder 1, %s48
      %p1038 = scmp.lt.s32.totalorder %s48, 3
      %p1039 = pnand %p1037, %p1038
      %p1040 = pneg %p1039
      // Predicated region
      $region113: #{decoder_forward.2} parent=5 // pred_check
        _
      $region114: #{decoder_forward.2} parent=5 // pred_check_branch
        %1042 = sbr.rel (%p1039) target = $region116
      $region115: #{decoder_forward.2} parent=5 // pred_region
        %s1043 = ssub.s32 %s48, 1
        %s1044 = sand.u32 %s177, 1
        %s1045 = scalar_lea.sflag [#allocation3], %s1044
        %s1046 = sand.u32 %s177, 1
        %s1047 = smul.addr %s1046, 192
        %s1048 = scalar_lea.vmem [#allocation2], %s1047
        // Predicated region
        $region117: #{decoder_forward.2} parent=115 // pred_check
          %p1049 = pneg %p190
        $region118: #{decoder_forward.2} parent=115 // pred_check_branch
          %1051 = sbr.rel (%p1049) target = $region120
        $region119: #{decoder_forward.2} parent=115 // pred_region
          %1052 = dma.done %s1045, 3072
        $region120: #{decoder_forward.2} parent=115 // pred_fallthru
          _
        %s1053 = sand.u32 %s53, 1
        %s1054 = scalar_lea.sflag [#allocation5], %s1053
        %s1055 = sand.u32 %s229, 1
        %s1056 = smul.addr %s1055, 64
        %s1057 = scalar_lea.vmem [#allocation4], %s1056
        // Predicated region
        $region121: #{decoder_forward.2} parent=115 // pred_check
          %p1058 = pneg %p242
        $region122: #{decoder_forward.2} parent=115 // pred_check_branch
          %1060 = sbr.rel (%p1058) target = $region124
        $region123: #{decoder_forward.2} parent=115 // pred_region
          %1061 = dma.done %s1054, 1024
        $region124: #{decoder_forward.2} parent=115 // pred_fallthru
          _
        %s1062 = sand.u32 %s53, 1
        %s1063 = scalar_lea.sflag [#allocation5], %s1062
        %s1064 = sand.u32 %s333, 1
        %s1065 = smul.addr %s1064, 64
        %s1066 = scalar_lea.vmem [#allocation6], %s1065
        // Predicated region
        $region125: #{decoder_forward.2} parent=115 // pred_check
          %p1067 = pneg %p346
        $region126: #{decoder_forward.2} parent=115 // pred_check_branch
          %1069 = sbr.rel (%p1067) target = $region128
        $region127: #{decoder_forward.2} parent=115 // pred_region
          %1070 = dma.done %s1063, 1024
        $region128: #{decoder_forward.2} parent=115 // pred_fallthru
          _
        %s1071 = sand.u32 %s53, 1
        %s1072 = scalar_lea.sflag [#allocation8], %s1071
        %s1073 = sand.u32 %s359, 1
        %s1074 = scalar_lea.vmem [#allocation7], %s1073
        // Predicated region
        $region129: #{decoder_forward.2} parent=115 // pred_check
          %p1075 = pneg %p372
        $region130: #{decoder_forward.2} parent=115 // pred_check_branch
          %1077 = sbr.rel (%p1075) target = $region132
        $region131: #{decoder_forward.2} parent=115 // pred_region
          %1078 = dma.done %s1072, 16
        $region132: #{decoder_forward.2} parent=115 // pred_fallthru
          _
        %s1079 = sand.u32 %s53, 1
        %s1080 = scalar_lea.sflag [#allocation8], %s1079
        %s1081 = sand.u32 %s411, 1
        %s1082 = smul.addr %s1081, 2
        %s1083 = scalar_lea.vmem [#allocation9], %s1082
        // Predicated region
        $region133: #{decoder_forward.2} parent=115 // pred_check
          %p1084 = pneg %p424
        $region134: #{decoder_forward.2} parent=115 // pred_check_branch
          %1086 = sbr.rel (%p1084) target = $region136
        $region135: #{decoder_forward.2} parent=115 // pred_region
          %1087 = dma.done %s1080, 32
        $region136: #{decoder_forward.2} parent=115 // pred_fallthru
          _
        %s1088 = sand.u32 %s53, 1
        %s1089 = scalar_lea.sflag [#allocation11], %s1088
        %s1090 = sand.u32 %s437, 1
        %s1091 = smul.addr %s1090, 64
        %s1092 = scalar_lea.vmem [#allocation10], %s1091
        // Predicated region
        $region137: #{decoder_forward.2} parent=115 // pred_check
          %p1093 = pneg %p450
        $region138: #{decoder_forward.2} parent=115 // pred_check_branch
          %1095 = sbr.rel (%p1093) target = $region140
        $region139: #{decoder_forward.2} parent=115 // pred_region
          %1096 = dma.done %s1089, 1024
        $region140: #{decoder_forward.2} parent=115 // pred_fallthru
          _
        %s1097 = sand.u32 %s53, 1
        %s1098 = scalar_lea.sflag [#allocation11], %s1097
        %s1099 = sand.u32 %s463, 1
        %s1100 = scalar_lea.vmem [#allocation12], %s1099
        // Predicated region
        $region141: #{decoder_forward.2} parent=115 // pred_check
          %p1101 = pneg %p476
        $region142: #{decoder_forward.2} parent=115 // pred_check_branch
          %1103 = sbr.rel (%p1101) target = $region144
        $region143: #{decoder_forward.2} parent=115 // pred_region
          %1104 = dma.done %s1098, 16
        $region144: #{decoder_forward.2} parent=115 // pred_fallthru
          _
        %s1105 = sand.u32 %s53, 1
        %s1106 = scalar_lea.sflag [#allocation14], %s1105
        %s1107 = sand.u32 %s541, 1
        %s1108 = smul.addr %s1107, 128
        %s1109 = scalar_lea.vmem [#allocation13], %s1108
        // Predicated region
        $region145: #{decoder_forward.2} parent=115 // pred_check
          %p1110 = pneg %p554
        $region146: #{decoder_forward.2} parent=115 // pred_check_branch
          %1112 = sbr.rel (%p1110) target = $region148
        $region147: #{decoder_forward.2} parent=115 // pred_region
          %1113 = dma.done %s1106, 2048
        $region148: #{decoder_forward.2} parent=115 // pred_fallthru
          _
        %s1114 = sand.u32 %s53, 1
        %s1115 = scalar_lea.sflag [#allocation14], %s1114
        %s1116 = sand.u32 %s567, 1
        %s1117 = smul.addr %s1116, 2
        %s1118 = scalar_lea.vmem [#allocation15], %s1117
        // Predicated region
        $region149: #{decoder_forward.2} parent=115 // pred_check
          %p1119 = pneg %p580
        $region150: #{decoder_forward.2} parent=115 // pred_check_branch
          %1121 = sbr.rel (%p1119) target = $region152
        $region151: #{decoder_forward.2} parent=115 // pred_region
          %1122 = dma.done %s1115, 32
        $region152: #{decoder_forward.2} parent=115 // pred_fallthru
          _
        %s1123 = sand.u32 %s53, 1
        %s1124 = scalar_lea.sflag [#allocation17], %s1123
        %s1125 = sand.u32 %s593, 1
        %s1126 = smul.addr %s1125, 128
        %s1127 = scalar_lea.vmem [#allocation16], %s1126
        // Predicated region
        $region153: #{decoder_forward.2} parent=115 // pred_check
          %p1128 = pneg %p606
        $region154: #{decoder_forward.2} parent=115 // pred_check_branch
          %1130 = sbr.rel (%p1128) target = $region156
        $region155: #{decoder_forward.2} parent=115 // pred_region
          %1131 = dma.done %s1124, 2048
        $region156: #{decoder_forward.2} parent=115 // pred_fallthru
          _
        %s1132 = sand.u32 %s53, 1
        %s1133 = scalar_lea.sflag [#allocation17], %s1132
        %s1134 = sand.u32 %s619, 1
        %s1135 = scalar_lea.vmem [#allocation18], %s1134
        // Predicated region
        $region157: #{decoder_forward.2} parent=115 // pred_check
          %p1136 = pneg %p632
        $region158: #{decoder_forward.2} parent=115 // pred_check_branch
          %1138 = sbr.rel (%p1136) target = $region160
        $region159: #{decoder_forward.2} parent=115 // pred_region
          %1139 = dma.done %s1133, 16
        $region160: #{decoder_forward.2} parent=115 // pred_fallthru
          _
        %s1140 = smul.u32 2, %s57
        %p1141 = scmp.lt.s32.totalorder %s1140, 1
        %s1142 = scalar_select %p1141, %s1140, 1
        %s1143 = smul.addr %s1142, 8
        %s1144 = scalar_lea.vmem %s0, %s1143
        %p1145 = pneg %p86
        %p1146 = pneg %p83
        %s1147 = smul.u32 2, %s57
        %p1148 = scmp.lt.s32.totalorder %s1147, 1
        %s1149 = scalar_select %p1148, %s1147, 1
        %s1150 = smul.addr %s1149, 2
        %s1151 = smul.addr %s1150, 8
        %s1152 = scalar_lea.vmem %s1, %s1151
        %p1153 = pneg %p112
        %p1154 = pneg %p109
        %s1155 = smul.u32 2, %s57
        %p1156 = scmp.lt.s32.totalorder %s1155, 1
        %s1157 = scalar_select %p1156, %s1155, 1
        %s1158 = smul.addr %s1157, 8
        %s1159 = scalar_lea.vmem %s2, %s1158
        %p1160 = pneg %p138
        %p1161 = pneg %p135
        %s1162 = smul.u32 2, %s57
        %p1163 = scmp.lt.s32.totalorder %s1162, 1
        %s1164 = scalar_select %p1163, %s1162, 1
        %s1165 = scalar_lea.vmem %s3, %s1164
        %p1166 = pneg %p164
        %p1167 = pneg %p161
        %s1168 = sand.u32 %s177, 1
        %s1169 = scalar_lea.sflag [#allocation3], %s1168
        %s1170 = sand.u32 %s177, 1
        %s1171 = smul.addr %s1170, 192
        %s1172 = scalar_lea.vmem [#allocation2], %s1171
        %p1173 = pneg %p190
        %p1174 = pneg %p187
        %p1175 = scmp.lt.s32.totalorder %s58, 1
        %s1176 = scalar_select %p1175, %s58, 1
        %s1177 = smul.addr %s1176, 3
        %s1178 = scalar_lea.vmem %s5, %s1177
        %p1179 = pneg %p216
        %p1180 = pneg %p213
        %s1181 = sand.u32 %s53, 1
        %s1182 = scalar_lea.sflag [#allocation5], %s1181
        %s1183 = sand.u32 %s229, 1
        %s1184 = smul.addr %s1183, 64
        %s1185 = scalar_lea.vmem [#allocation4], %s1184
        %p1186 = pneg %p242
        %p1187 = pneg %p239
        %p1188 = scmp.lt.s32.totalorder %s58, 1
        %s1189 = scalar_select %p1188, %s58, 1
        %s1190 = scalar_lea.vmem %s7, %s1189
        %p1191 = pneg %p268
        %p1192 = pneg %p265
        %p1193 = scmp.lt.s32.totalorder %s58, 1
        %s1194 = scalar_select %p1193, %s58, 1
        %s1195 = scalar_lea.vmem %s8, %s1194
        %p1196 = pneg %p294
        %p1197 = pneg %p291
        %p1198 = scmp.lt.s32.totalorder %s58, 1
        %s1199 = scalar_select %p1198, %s58, 1
        %s1200 = scalar_lea.vmem %s9, %s1199
        %p1201 = pneg %p320
        %p1202 = pneg %p317
        %s1203 = sand.u32 %s53, 1
        %s1204 = scalar_lea.sflag [#allocation5], %s1203
        %s1205 = sand.u32 %s333, 1
        %s1206 = smul.addr %s1205, 64
        %s1207 = scalar_lea.vmem [#allocation6], %s1206
        %p1208 = pneg %p346
        %p1209 = pneg %p343
        %s1210 = sand.u32 %s53, 1
        %s1211 = scalar_lea.sflag [#allocation8], %s1210
        %s1212 = sand.u32 %s359, 1
        %s1213 = scalar_lea.vmem [#allocation7], %s1212
        %p1214 = pneg %p372
        %p1215 = pneg %p369
        %p1216 = scmp.lt.s32.totalorder %s58, 1
        %s1217 = scalar_select %p1216, %s58, 1
        %s1218 = smul.addr %s1217, 32
        %s1219 = smul.addr %s1218, 4
        %s1220 = scalar_lea.vmem %s12, %s1219
        %p1221 = pneg %p398
        %p1222 = pneg %p395
        %s1223 = sand.u32 %s53, 1
        %s1224 = scalar_lea.sflag [#allocation8], %s1223
        %s1225 = sand.u32 %s411, 1
        %s1226 = smul.addr %s1225, 2
        %s1227 = scalar_lea.vmem [#allocation9], %s1226
        %p1228 = pneg %p424
        %p1229 = pneg %p421
        %s1230 = sand.u32 %s53, 1
        %s1231 = scalar_lea.sflag [#allocation11], %s1230
        %s1232 = sand.u32 %s437, 1
        %s1233 = smul.addr %s1232, 64
        %s1234 = scalar_lea.vmem [#allocation10], %s1233
        %p1235 = pneg %p450
        %p1236 = pneg %p447
        %s1237 = sand.u32 %s53, 1
        %s1238 = scalar_lea.sflag [#allocation11], %s1237
        %s1239 = sand.u32 %s463, 1
        %s1240 = scalar_lea.vmem [#allocation12], %s1239
        %p1241 = pneg %p476
        %p1242 = pneg %p473
        %p1243 = scmp.lt.s32.totalorder %s58, 1
        %s1244 = scalar_select %p1243, %s58, 1
        %s1245 = scalar_lea.vmem %s16, %s1244
        %p1246 = pneg %p502
        %p1247 = pneg %p499
        %p1248 = scmp.lt.s32.totalorder %s58, 1
        %s1249 = scalar_select %p1248, %s58, 1
        %s1250 = scalar_lea.vmem %s17, %s1249
        %p1251 = pneg %p528
        %p1252 = pneg %p525
        %s1253 = sand.u32 %s53, 1
        %s1254 = scalar_lea.sflag [#allocation14], %s1253
        %s1255 = sand.u32 %s541, 1
        %s1256 = smul.addr %s1255, 128
        %s1257 = scalar_lea.vmem [#allocation13], %s1256
        %p1258 = pneg %p554
        %p1259 = pneg %p551
        %s1260 = sand.u32 %s53, 1
        %s1261 = scalar_lea.sflag [#allocation14], %s1260
        %s1262 = sand.u32 %s567, 1
        %s1263 = smul.addr %s1262, 2
        %s1264 = scalar_lea.vmem [#allocation15], %s1263
        %p1265 = pneg %p580
        %p1266 = pneg %p577
        %s1267 = sand.u32 %s53, 1
        %s1268 = scalar_lea.sflag [#allocation17], %s1267
        %s1269 = sand.u32 %s593, 1
        %s1270 = smul.addr %s1269, 128
        %s1271 = scalar_lea.vmem [#allocation16], %s1270
        %p1272 = pneg %p606
        %p1273 = pneg %p603
        %s1274 = sand.u32 %s53, 1
        %s1275 = scalar_lea.sflag [#allocation17], %s1274
        %s1276 = sand.u32 %s619, 1
        %s1277 = scalar_lea.vmem [#allocation18], %s1276
        %p1278 = pneg %p632
        %p1279 = pneg %p629
        %p1280 = scmp.lt.s32.totalorder %s58, 1
        %s1281 = scalar_select %p1280, %s58, 1
        %s1282 = scalar_lea.vmem %s22, %s1281
        %p1283 = pneg %p658
        %p1284 = pneg %p655
        %p1285 = scmp.lt.s32.totalorder %s58, 1
        %s1286 = scalar_select %p1285, %s58, 1
        %s1287 = scalar_lea.vmem %s23, %s1286
        %p1288 = pneg %p684
        %p1289 = pneg %p681
        %p1290 = pneg %p710
        %p1291 = pneg %p707
        %s1292 = smul.u32 2, %s57
        %p1293 = scmp.lt.s32.totalorder %s1292, 1
        %s1294 = scalar_select %p1293, %s1292, 1
        %s1295 = smul.addr %s1294, 8
        %s1296 = scalar_lea.vmem %s24, %s1295
        %s1297 = smul.u32 2, %s57
        %p1298 = scmp.lt.s32.totalorder %s1297, 1
        %s1299 = scalar_select %p1298, %s1297, 1
        %s1300 = smul.addr %s1299, 8
        %s1301 = scalar_lea.vmem %s0, %s1300
        %s1302 = smul.u32 2, %s57
        %s1303 = smul.u32 2, %s57
        %p1304 = scmp.lt.s32.totalorder %s1303, 1
        %s1305 = scalar_select %p1304, %s1303, 1
        %s1306 = smul.addr %s1305, 2
        %s1307 = smul.addr %s1306, 8
        %s1308 = scalar_lea.vmem %s1, %s1307
        %s1309 = smul.u32 2, %s57
        %s1310 = smul.u32 2, %s57
        %p1311 = scmp.lt.s32.totalorder %s1310, 1
        %s1312 = scalar_select %p1311, %s1310, 1
        %s1313 = smul.addr %s1312, 8
        %s1314 = scalar_lea.vmem %s2, %s1313
        %s1315 = smul.u32 2, %s57
        %s1316 = smul.u32 2, %s57
        %p1317 = scmp.lt.s32.totalorder %s1316, 1
        %s1318 = scalar_select %p1317, %s1316, 1
        %s1319 = scalar_lea.vmem %s3, %s1318
        %s1320 = smul.u32 2, %s57
        %p1321 = scmp.lt.s32.totalorder %s58, 1
        %s1322 = scalar_select %p1321, %s58, 1
        %s1323 = smul.addr %s1322, 3
        %s1324 = scalar_lea.vmem %s5, %s1323
        %p1325 = scmp.lt.s32.totalorder %s58, 1
        %s1326 = scalar_select %p1325, %s58, 1
        %s1327 = scalar_lea.vmem %s7, %s1326
        %p1328 = scmp.lt.s32.totalorder %s58, 1
        %s1329 = scalar_select %p1328, %s58, 1
        %s1330 = scalar_lea.vmem %s8, %s1329
        %p1331 = scmp.lt.s32.totalorder %s58, 1
        %s1332 = scalar_select %p1331, %s58, 1
        %s1333 = scalar_lea.vmem %s9, %s1332
        %p1334 = scmp.lt.s32.totalorder %s58, 1
        %s1335 = scalar_select %p1334, %s58, 1
        %s1336 = smul.addr %s1335, 32
        %s1337 = smul.addr %s1336, 4
        %s1338 = scalar_lea.vmem %s12, %s1337
        %p1339 = scmp.lt.s32.totalorder %s58, 1
        %s1340 = scalar_select %p1339, %s58, 1
        %s1341 = scalar_lea.vmem %s16, %s1340
        %p1342 = scmp.lt.s32.totalorder %s58, 1
        %s1343 = scalar_select %p1342, %s58, 1
        %s1344 = scalar_lea.vmem %s17, %s1343
        %p1345 = scmp.lt.s32.totalorder %s58, 1
        %s1346 = scalar_select %p1345, %s58, 1
        %s1347 = scalar_lea.vmem %s22, %s1346
        %p1348 = scmp.lt.s32.totalorder %s58, 1
        %s1349 = scalar_select %p1348, %s58, 1
        %s1350 = scalar_lea.vmem %s23, %s1349
        %s1351 = smul.u32 2, %s57
        %p1352 = scmp.lt.s32.totalorder %s1351, 1
        %s1353 = scalar_select %p1352, %s1351, 1
        %s1354 = smul.addr %s1353, 8
        %s1355 = scalar_lea.vmem %s24, %s1354
        %s1356 = smul.u32 2, %s57
        %p1358 = scmp.eq.s32.totalorder %s58, 0
        // Predicated region
        $region161: #{decoder_forward.2} parent=115 // pred_check
          %p1359 = pneg %p1358
        $region162: #{decoder_forward.2} parent=115 // pred_check_branch
          %1361 = sbr.rel (%p1359) target = $region164
        $region163: #{decoder_forward.2} parent=115 // pred_region
          %v1362 = vld [vmem:[%s1301] sm:$0xff]
          %v1363 = vld [vmem:[%s1301 + $0x8] sm:$0xff]
          %1364 = vst [vmem:[%s1355] sm:$0xff] %v1362
          %1365 = vst [vmem:[%s1355 + $0x8] sm:$0xff] %v1363
        $region164: #{decoder_forward.2} parent=115 // pred_fallthru
          _
        %v1366 = vld [vmem:[%s1048] sm:$0xff]
        %v1367 = vld [vmem:[%s1048 + $0x8] sm:$0xf]
        %v1368 = vld [vmem:[%s1048 + $0xc] sm:$0xff]
        %v1369 = vld [vmem:[%s1048 + $0x14] sm:$0xf]
        %v1370 = vld [vmem:[%s1048 + $0x18] sm:$0xff]
        %v1371 = vld [vmem:[%s1048 + $0x20] sm:$0xf]
        %v1372 = vld [vmem:[%s1048 + $0x24] sm:$0xff]
        %v1373 = vld [vmem:[%s1048 + $0x2c] sm:$0xf]
        %v1374 = vld [vmem:[%s1048 + $0x30] sm:$0xff]
        %v1375 = vld [vmem:[%s1048 + $0x38] sm:$0xf]
        %v1376 = vld [vmem:[%s1048 + $0x3c] sm:$0xff]
        %v1377 = vld [vmem:[%s1048 + $0x44] sm:$0xf]
        %v1378 = vld [vmem:[%s1048 + $0x48] sm:$0xff]
        %v1379 = vld [vmem:[%s1048 + $0x50] sm:$0xf]
        %v1380 = vld [vmem:[%s1048 + $0x54] sm:$0xff]
        %v1381 = vld [vmem:[%s1048 + $0x5c] sm:$0xf]
        %v1382 = vld [vmem:[%s1048 + $0x60] sm:$0xff]
        %v1383 = vld [vmem:[%s1048 + $0x68] sm:$0xf]
        %v1384 = vld [vmem:[%s1048 + $0x6c] sm:$0xff]
        %v1385 = vld [vmem:[%s1048 + $0x74] sm:$0xf]
        %v1386 = vld [vmem:[%s1048 + $0x78] sm:$0xff]
        %v1387 = vld [vmem:[%s1048 + $0x80] sm:$0xf]
        %v1388 = vld [vmem:[%s1048 + $0x84] sm:$0xff]
        %v1389 = vld [vmem:[%s1048 + $0x8c] sm:$0xf]
        %v1390 = vld [vmem:[%s1048 + $0x90] sm:$0xff]
        %v1391 = vld [vmem:[%s1048 + $0x98] sm:$0xf]
        %v1392 = vld [vmem:[%s1048 + $0x9c] sm:$0xff]
        %v1393 = vld [vmem:[%s1048 + $0xa4] sm:$0xf]
        %v1394 = vld [vmem:[%s1048 + $0xa8] sm:$0xff]
        %v1395 = vld [vmem:[%s1048 + $0xb0] sm:$0xf]
        %v1396 = vld [vmem:[%s1048 + $0xb4] sm:$0xff]
        %v1397 = vld [vmem:[%s1048 + $0xbc] sm:$0xf]
        %v1398 = vld [vmem:[%s1324] sm:$0x7]
        %v1399 = vld [vmem:[%s1057] sm:$0xf]
        %v1400 = vld [vmem:[%s1057 + $0x4] sm:$0xf]
        %v1401 = vld [vmem:[%s1057 + $0x8] sm:$0xf]
        %v1402 = vld [vmem:[%s1057 + $0xc] sm:$0xf]
        %v1403 = vld [vmem:[%s1057 + $0x10] sm:$0xf]
        %v1404 = vld [vmem:[%s1057 + $0x14] sm:$0xf]
        %v1405 = vld [vmem:[%s1057 + $0x18] sm:$0xf]
        %v1406 = vld [vmem:[%s1057 + $0x1c] sm:$0xf]
        %v1407 = vld [vmem:[%s1057 + $0x20] sm:$0xf]
        %v1408 = vld [vmem:[%s1057 + $0x24] sm:$0xf]
        %v1409 = vld [vmem:[%s1057 + $0x28] sm:$0xf]
        %v1410 = vld [vmem:[%s1057 + $0x2c] sm:$0xf]
        %v1411 = vld [vmem:[%s1057 + $0x30] sm:$0xf]
        %v1412 = vld [vmem:[%s1057 + $0x34] sm:$0xf]
        %v1413 = vld [vmem:[%s1057 + $0x38] sm:$0xf]
        %v1414 = vld [vmem:[%s1057 + $0x3c] sm:$0xf]
        %v1415 = vld [vmem:[%s1327] sm:$0x1]
        %v1416 = vld [vmem:[%s1330] sm:$0x1]
        %v1417 = vld [vmem:[%s1333] sm:$0x1]
        %v1418 = vld [vmem:[%s1066] sm:$0xf]
        %v1419 = vld [vmem:[%s1066 + $0x4] sm:$0xf]
        %v1420 = vld [vmem:[%s1066 + $0x8] sm:$0xf]
        %v1421 = vld [vmem:[%s1066 + $0xc] sm:$0xf]
        %v1422 = vld [vmem:[%s1066 + $0x10] sm:$0xf]
        %v1423 = vld [vmem:[%s1066 + $0x14] sm:$0xf]
        %v1424 = vld [vmem:[%s1066 + $0x18] sm:$0xf]
        %v1425 = vld [vmem:[%s1066 + $0x1c] sm:$0xf]
        %v1426 = vld [vmem:[%s1066 + $0x20] sm:$0xf]
        %v1427 = vld [vmem:[%s1066 + $0x24] sm:$0xf]
        %v1428 = vld [vmem:[%s1066 + $0x28] sm:$0xf]
        %v1429 = vld [vmem:[%s1066 + $0x2c] sm:$0xf]
        %v1430 = vld [vmem:[%s1066 + $0x30] sm:$0xf]
        %v1431 = vld [vmem:[%s1066 + $0x34] sm:$0xf]
        %v1432 = vld [vmem:[%s1066 + $0x38] sm:$0xf]
        %v1433 = vld [vmem:[%s1066 + $0x3c] sm:$0xf]
        %v1434 = vld [vmem:[%s1074] sm:$0x1]
        %v1435 = vld [vmem:[%s1338] sm:$0xff]
        %v1436 = vld [vmem:[%s1338 + $0x8] sm:$0xff]
        %v1437 = vld [vmem:[%s1338 + $0x10] sm:$0xff]
        %v1438 = vld [vmem:[%s1338 + $0x18] sm:$0xff]
        %v1439 = vld [vmem:[%s1338 + $0x20] sm:$0xff]
        %v1440 = vld [vmem:[%s1338 + $0x28] sm:$0xff]
        %v1441 = vld [vmem:[%s1338 + $0x30] sm:$0xff]
        %v1442 = vld [vmem:[%s1338 + $0x38] sm:$0xff]
        %v1443 = vld [vmem:[%s1338 + $0x40] sm:$0xff]
        %v1444 = vld [vmem:[%s1338 + $0x48] sm:$0xff]
        %v1445 = vld [vmem:[%s1338 + $0x50] sm:$0xff]
        %v1446 = vld [vmem:[%s1338 + $0x58] sm:$0xff]
        %v1447 = vld [vmem:[%s1338 + $0x60] sm:$0xff]
        %v1448 = vld [vmem:[%s1338 + $0x68] sm:$0xff]
        %v1449 = vld [vmem:[%s1338 + $0x70] sm:$0xff]
        %v1450 = vld [vmem:[%s1338 + $0x78] sm:$0xff]
        %v1451 = vld [vmem:[%s1083] sm:$0x3]
        %v1452 = vld [vmem:[%s1092] sm:$0xf]
        %v1453 = vld [vmem:[%s1092 + $0x4] sm:$0xf]
        %v1454 = vld [vmem:[%s1092 + $0x8] sm:$0xf]
        %v1455 = vld [vmem:[%s1092 + $0xc] sm:$0xf]
        %v1456 = vld [vmem:[%s1092 + $0x10] sm:$0xf]
        %v1457 = vld [vmem:[%s1092 + $0x14] sm:$0xf]
        %v1458 = vld [vmem:[%s1092 + $0x18] sm:$0xf]
        %v1459 = vld [vmem:[%s1092 + $0x1c] sm:$0xf]
        %v1460 = vld [vmem:[%s1092 + $0x20] sm:$0xf]
        %v1461 = vld [vmem:[%s1092 + $0x24] sm:$0xf]
        %v1462 = vld [vmem:[%s1092 + $0x28] sm:$0xf]
        %v1463 = vld [vmem:[%s1092 + $0x2c] sm:$0xf]
        %v1464 = vld [vmem:[%s1092 + $0x30] sm:$0xf]
        %v1465 = vld [vmem:[%s1092 + $0x34] sm:$0xf]
        %v1466 = vld [vmem:[%s1092 + $0x38] sm:$0xf]
        %v1467 = vld [vmem:[%s1092 + $0x3c] sm:$0xf]
        %v1468 = vld [vmem:[%s1100] sm:$0x1]
        %v1469 = vld [vmem:[%s1341] sm:$0x1]
        %v1470 = vld [vmem:[%s1344] sm:$0x1]
        %v1471 = vld [vmem:[%s1109] sm:$0xff]
        %v1472 = vld [vmem:[%s1109 + $0x8] sm:$0xff]
        %v1473 = vld [vmem:[%s1109 + $0x10] sm:$0xff]
        %v1474 = vld [vmem:[%s1109 + $0x18] sm:$0xff]
        %v1475 = vld [vmem:[%s1109 + $0x20] sm:$0xff]
        %v1476 = vld [vmem:[%s1109 + $0x28] sm:$0xff]
        %v1477 = vld [vmem:[%s1109 + $0x30] sm:$0xff]
        %v1478 = vld [vmem:[%s1109 + $0x38] sm:$0xff]
        %v1479 = vld [vmem:[%s1109 + $0x40] sm:$0xff]
        %v1480 = vld [vmem:[%s1109 + $0x48] sm:$0xff]
        %v1481 = vld [vmem:[%s1109 + $0x50] sm:$0xff]
        %v1482 = vld [vmem:[%s1109 + $0x58] sm:$0xff]
        %v1483 = vld [vmem:[%s1109 + $0x60] sm:$0xff]
        %v1484 = vld [vmem:[%s1109 + $0x68] sm:$0xff]
        %v1485 = vld [vmem:[%s1109 + $0x70] sm:$0xff]
        %v1486 = vld [vmem:[%s1109 + $0x78] sm:$0xff]
        %v1487 = vld [vmem:[%s1118] sm:$0x3]
        %v1488 = vld [vmem:[%s1127] sm:$0xf]
        %v1489 = vld [vmem:[%s1127 + $0x4] sm:$0xf]
        %v1490 = vld [vmem:[%s1127 + $0x8] sm:$0xf]
        %v1491 = vld [vmem:[%s1127 + $0xc] sm:$0xf]
        %v1492 = vld [vmem:[%s1127 + $0x10] sm:$0xf]
        %v1493 = vld [vmem:[%s1127 + $0x14] sm:$0xf]
        %v1494 = vld [vmem:[%s1127 + $0x18] sm:$0xf]
        %v1495 = vld [vmem:[%s1127 + $0x1c] sm:$0xf]
        %v1496 = vld [vmem:[%s1127 + $0x20] sm:$0xf]
        %v1497 = vld [vmem:[%s1127 + $0x24] sm:$0xf]
        %v1498 = vld [vmem:[%s1127 + $0x28] sm:$0xf]
        %v1499 = vld [vmem:[%s1127 + $0x2c] sm:$0xf]
        %v1500 = vld [vmem:[%s1127 + $0x30] sm:$0xf]
        %v1501 = vld [vmem:[%s1127 + $0x34] sm:$0xf]
        %v1502 = vld [vmem:[%s1127 + $0x38] sm:$0xf]
        %v1503 = vld [vmem:[%s1127 + $0x3c] sm:$0xf]
        %v1504 = vld [vmem:[%s1127 + $0x40] sm:$0xf]
        %v1505 = vld [vmem:[%s1127 + $0x44] sm:$0xf]
        %v1506 = vld [vmem:[%s1127 + $0x48] sm:$0xf]
        %v1507 = vld [vmem:[%s1127 + $0x4c] sm:$0xf]
        %v1508 = vld [vmem:[%s1127 + $0x50] sm:$0xf]
        %v1509 = vld [vmem:[%s1127 + $0x54] sm:$0xf]
        %v1510 = vld [vmem:[%s1127 + $0x58] sm:$0xf]
        %v1511 = vld [vmem:[%s1127 + $0x5c] sm:$0xf]
        %v1512 = vld [vmem:[%s1127 + $0x60] sm:$0xf]
        %v1513 = vld [vmem:[%s1127 + $0x64] sm:$0xf]
        %v1514 = vld [vmem:[%s1127 + $0x68] sm:$0xf]
        %v1515 = vld [vmem:[%s1127 + $0x6c] sm:$0xf]
        %v1516 = vld [vmem:[%s1127 + $0x70] sm:$0xf]
        %v1517 = vld [vmem:[%s1127 + $0x74] sm:$0xf]
        %v1518 = vld [vmem:[%s1127 + $0x78] sm:$0xf]
        %v1519 = vld [vmem:[%s1127 + $0x7c] sm:$0xf]
        %v1520 = vld [vmem:[%s1135] sm:$0x1]
        %v1521 = vld [vmem:[%s1347] sm:$0x1]
        %v1522 = vld [vmem:[%s1350] sm:$0x1]
        %v1523 = vld [vmem:[%s1355] sm:$0xff]
        %v1524 = vld [vmem:[%s1355 + $0x8] sm:$0xff]
        %v1525 = vld [vmem:[%s1308] sm:$0xff]
        %v1526 = vld [vmem:[%s1308 + $0x8] sm:$0xff]
        %v1527 = vld [vmem:[%s1308 + $0x10] sm:$0xff]
        %v1528 = vld [vmem:[%s1308 + $0x18] sm:$0xff]
        %v1529 = vld [vmem:[%s1314] sm:$0xff]
        %v1530 = vld [vmem:[%s1314 + $0x8] sm:$0xff]
        %v1531 = vld [vmem:[%s1319] sm:$0x1]
        %v1532 = vld [vmem:[%s1319 + $0x1] sm:$0x1]
        %v1533 = vpack.c.bf16 %v1524, %v1523
        %v1535 = vlaneseq
        %v1536 = vshrl.u32 %v1535, 7
        %v1537 = vsub.s32 0, %v1536
        %v1538 = vrot.slane %v1398, %v1537
        %v1539 = vlaneseq
        %v1540 = vshrl.u32 %v1539, 7
        %v1541 = vsub.s32 1, %v1540
        %v1542 = vrot.slane %v1398, %v1541
        %v1543 = vlaneseq
        %v1544 = vshrl.u32 %v1543, 7
        %v1545 = vsub.s32 2, %v1544
        %v1546 = vrot.slane %v1398, %v1545
        %v1582 = vunpack.c.l.b16 %v1366
        %v1583 = vunpack.c.h.b16 %v1366
        %v1584 = vunpack.c.l.b16 %v1367
        %v1585 = vunpack.c.l.b16 %v1368
        %v1586 = vunpack.c.h.b16 %v1368
        %v1587 = vunpack.c.l.b16 %v1369
        %v1588 = vunpack.c.l.b16 %v1370
        %v1589 = vunpack.c.h.b16 %v1370
        %v1590 = vunpack.c.l.b16 %v1371
        %v1591 = vunpack.c.l.b16 %v1372
        %v1592 = vunpack.c.h.b16 %v1372
        %v1593 = vunpack.c.l.b16 %v1373
        %v1594 = vunpack.c.l.b16 %v1374
        %v1595 = vunpack.c.h.b16 %v1374
        %v1596 = vunpack.c.l.b16 %v1375
        %v1597 = vunpack.c.l.b16 %v1376
        %v1598 = vunpack.c.h.b16 %v1376
        %v1599 = vunpack.c.l.b16 %v1377
        %v1600 = vunpack.c.l.b16 %v1378
        %v1601 = vunpack.c.h.b16 %v1378
        %v1602 = vunpack.c.l.b16 %v1379
        %v1603 = vunpack.c.l.b16 %v1380
        %v1604 = vunpack.c.h.b16 %v1380
        %v1605 = vunpack.c.l.b16 %v1381
        %v1606 = vunpack.c.l.b16 %v1382
        %v1607 = vunpack.c.h.b16 %v1382
        %v1608 = vunpack.c.l.b16 %v1383
        %v1609 = vunpack.c.l.b16 %v1384
        %v1610 = vunpack.c.h.b16 %v1384
        %v1611 = vunpack.c.l.b16 %v1385
        %v1612 = vunpack.c.l.b16 %v1386
        %v1613 = vunpack.c.h.b16 %v1386
        %v1614 = vunpack.c.l.b16 %v1387
        %v1615 = vunpack.c.l.b16 %v1388
        %v1616 = vunpack.c.h.b16 %v1388
        %v1617 = vunpack.c.l.b16 %v1389
        %v1618 = vunpack.c.l.b16 %v1390
        %v1619 = vunpack.c.h.b16 %v1390
        %v1620 = vunpack.c.l.b16 %v1391
        %v1621 = vunpack.c.l.b16 %v1392
        %v1622 = vunpack.c.h.b16 %v1392
        %v1623 = vunpack.c.l.b16 %v1393
        %v1624 = vunpack.c.l.b16 %v1394
        %v1625 = vunpack.c.h.b16 %v1394
        %v1626 = vunpack.c.l.b16 %v1395
        %v1627 = vunpack.c.l.b16 %v1396
        %v1628 = vunpack.c.h.b16 %v1396
        %v1629 = vunpack.c.l.b16 %v1397
        %v1630 = vpack.c.b16 %v1585, %v1582
        %v1631 = vpack.c.b16 %v1586, %v1583
        %v1632 = vpack.c.b16 %v1587, %v1584
        %v1633 = vpack.c.b16 %v1591, %v1588
        %v1634 = vpack.c.b16 %v1592, %v1589
        %v1635 = vpack.c.b16 %v1593, %v1590
        %v1636 = vpack.c.b16 %v1597, %v1594
        %v1637 = vpack.c.b16 %v1598, %v1595
        %v1638 = vpack.c.b16 %v1599, %v1596
        %v1639 = vpack.c.b16 %v1603, %v1600
        %v1640 = vpack.c.b16 %v1604, %v1601
        %v1641 = vpack.c.b16 %v1605, %v1602
        %v1642 = vpack.c.b16 %v1609, %v1606
        %v1643 = vpack.c.b16 %v1610, %v1607
        %v1644 = vpack.c.b16 %v1611, %v1608
        %v1645 = vpack.c.b16 %v1615, %v1612
        %v1646 = vpack.c.b16 %v1616, %v1613
        %v1647 = vpack.c.b16 %v1617, %v1614
        %v1648 = vpack.c.b16 %v1621, %v1618
        %v1649 = vpack.c.b16 %v1622, %v1619
        %v1650 = vpack.c.b16 %v1623, %v1620
        %v1651 = vpack.c.b16 %v1627, %v1624
        %v1652 = vpack.c.b16 %v1628, %v1625
        %v1653 = vpack.c.b16 %v1629, %v1626
        %1678 = vmatprep.subr.bf16.mxu0 %v1631
        %1679 = vmatpush1.bf16.msra.mxu0 %v1630
        %1680 = vmatprep.subr.bf16.mxu0 %v1634
        %1681 = vmatpush1.bf16.msra.mxu0 %v1633
        %1682 = vmatprep.subr.bf16.mxu0 %v1637
        %1683 = vmatpush1.bf16.msra.mxu0 %v1636
        %1684 = vmatprep.subr.bf16.mxu0 %v1640
        %1685 = vmatpush1.bf16.msra.mxu0 %v1639
        %1686 = vmatprep.subr.bf16.mxu0 %v1643
        %1687 = vmatpush1.bf16.msra.mxu0 %v1642
        %1688 = vmatprep.subr.bf16.mxu0 %v1646
        %1689 = vmatpush1.bf16.msra.mxu0 %v1645
        %1690 = vmatprep.subr.bf16.mxu0 %v1649
        %1691 = vmatpush1.bf16.msra.mxu0 %v1648
        %1692 = vmatprep.subr.bf16.mxu0 %v1652
        %1693 = vmatpush1.bf16.msra.mxu0 %v1651
        %1694 = vmatprep.subr.bf16.mxu0 0
        %1695 = vmatpush1.bf16.msra.mxu0 0
        %1696 = vmatprep.subr.bf16.mxu0 0
        %1697 = vmatpush1.bf16.msra.mxu0 0
        %1698 = vmatprep.subr.bf16.mxu0 0
        %1699 = vmatpush1.bf16.msra.mxu0 0
        %1700 = vmatprep.subr.bf16.mxu0 0
        %1701 = vmatpush1.bf16.msra.mxu0 0
        %1702 = vmatprep.subr.bf16.mxu0 0
        %1703 = vmatpush1.bf16.msra.mxu0 0
        %1704 = vmatprep.subr.bf16.mxu0 0
        %1705 = vmatpush1.bf16.msra.mxu0 0
        %1706 = vmatprep.subr.bf16.mxu0 0
        %1707 = vmatpush1.bf16.msra.mxu0 0
        %1708 = vmatprep.subr.bf16.mxu0 0
        %1709 = vmatpush1.bf16.msra.mxu0 0
        %1710 = vmatprep.mubr.bf16.mxu0 0
        %1711 = vmatmul.mubr.bf16.gmra.mrb[0].mxu0 %v1533
        %v1712 = vpop.f32.mrb[0].mxu0
        %v1713 = vadd.f32 %v1538, %v1712
        %v1714 = vpop.f32.mrb[0].mxu0
        %v1715 = vadd.f32 %v1542, %v1714
        %v1716 = vpop.f32.mrb[0].mxu0
        %v1717 = vadd.f32 %v1538, %v1716
        %v1718 = vpop.f32.mrb[0].mxu0
        %v1719 = vadd.f32 %v1542, %v1718
        %1720 = vdwg.mxu0
        %1721 = vmatprep.subr.bf16.mxu0 0
        %1722 = vmatpush1.bf16.msra.mxu0 %v1632
        %1723 = vmatprep.subr.bf16.mxu0 0
        %1724 = vmatpush1.bf16.msra.mxu0 %v1635
        %1725 = vmatprep.subr.bf16.mxu0 0
        %1726 = vmatpush1.bf16.msra.mxu0 %v1638
        %1727 = vmatprep.subr.bf16.mxu0 0
        %1728 = vmatpush1.bf16.msra.mxu0 %v1641
        %1729 = vmatprep.subr.bf16.mxu0 0
        %1730 = vmatpush1.bf16.msra.mxu0 %v1644
        %1731 = vmatprep.subr.bf16.mxu0 0
        %1732 = vmatpush1.bf16.msra.mxu0 %v1647
        %1733 = vmatprep.subr.bf16.mxu0 0
        %1734 = vmatpush1.bf16.msra.mxu0 %v1650
        %1735 = vmatprep.subr.bf16.mxu0 0
        %1736 = vmatpush1.bf16.msra.mxu0 %v1653
        %1737 = vmatprep.subr.bf16.mxu0 0
        %1738 = vmatpush1.bf16.msra.mxu0 0
        %1739 = vmatprep.subr.bf16.mxu0 0
        %1740 = vmatpush1.bf16.msra.mxu0 0
        %1741 = vmatprep.subr.bf16.mxu0 0
        %1742 = vmatpush1.bf16.msra.mxu0 0
        %1743 = vmatprep.subr.bf16.mxu0 0
        %1744 = vmatpush1.bf16.msra.mxu0 0
        %1745 = vmatprep.subr.bf16.mxu0 0
        %1746 = vmatpush1.bf16.msra.mxu0 0
        %1747 = vmatprep.subr.bf16.mxu0 0
        %1748 = vmatpush1.bf16.msra.mxu0 0
        %1749 = vmatprep.subr.bf16.mxu0 0
        %1750 = vmatpush1.bf16.msra.mxu0 0
        %1751 = vmatprep.subr.bf16.mxu0 0
        %1752 = vmatpush1.bf16.msra.mxu0 0
        %1753 = vmatprep.mubr.bf16.mxu0 0
        %1754 = vmatmul.mubr.bf16.gmra.mrb[0].mxu0 %v1533
        %v1755 = vpop.f32.mrb[0].mxu0
        %v1756 = vadd.f32 %v1546, %v1755
        %v1757 = vpop.f32.mrb[0].mxu0
        %v1758 = vpop.f32.mrb[0].mxu0
        %v1759 = vadd.f32 %v1546, %v1758
        %v1760 = vpop.f32.mrb[0].mxu0
        %1761 = vdwg.mxu0
        %1763 = vrot.lane.b32.xlu0 %v1713, 96
        %v1764 = vpop.permute.xlu0 %1763
        %1766 = vrot.lane.b32.xlu0 %v1713, 64
        %v1767 = vpop.permute.xlu0 %1766
        %1769 = vrot.lane.b32.xlu0 %v1713, 32
        %v1770 = vpop.permute.xlu0 %1769
        %v1772 = vcombine.low %v1713, %v1767
        %v1773 = vcombine.high %v1713, %v1767
        %v1775 = vunpack.c.l.s4 1983009808
        %v1776 = vunpack.c.0.s8 %v1775
        %v1777 = vlaneseq
        %v1778 = vshrl.u32 %v1777, 7
        %v1779 = vsub.s32 %v1776, %v1778
        %v1780 = vrot.slane %v1772, %v1779
        %v1782 = vunpack.c.l.s4 1983009808
        %v1783 = vunpack.c.0.s8 %v1782
        %v1784 = vlaneseq
        %v1785 = vshrl.u32 %v1784, 7
        %v1786 = vsub.s32 %v1783, %v1785
        %v1787 = vrot.slane %v1773, %v1786
        %v1788 = vcombine.low %v1764, %v1770
        %v1789 = vcombine.high %v1764, %v1770
        %v1791 = vunpack.c.l.s4 1983009808
        %v1792 = vunpack.c.0.s8 %v1791
        %v1793 = vlaneseq
        %v1794 = vshrl.u32 %v1793, 7
        %v1795 = vsub.s32 %v1792, %v1794
        %v1796 = vrot.slane %v1788, %v1795
        %v1798 = vunpack.c.l.s4 1983009808
        %v1799 = vunpack.c.0.s8 %v1798
        %v1800 = vlaneseq
        %v1801 = vshrl.u32 %v1800, 7
        %v1802 = vsub.s32 %v1799, %v1801
        %v1803 = vrot.slane %v1789, %v1802
        %v1804 = vcombine.low %v1780, %v1796
        %v1805 = vcombine.high %v1780, %v1796
        %v1807 = vunpack.c.l.s4 1934713408
        %v1808 = vunpack.c.0.s8 %v1807
        %v1809 = vlaneseq
        %v1810 = vshrl.u32 %v1809, 7
        %v1811 = vsub.s32 %v1808, %v1810
        %v1812 = vrot.slane %v1804, %v1811
        %v1814 = vunpack.c.l.s4 1934713408
        %v1815 = vunpack.c.0.s8 %v1814
        %v1816 = vlaneseq
        %v1817 = vshrl.u32 %v1816, 7
        %v1818 = vsub.s32 %v1815, %v1817
        %v1819 = vrot.slane %v1805, %v1818
        %v1820 = vcombine.low %v1787, %v1803
        %v1821 = vcombine.high %v1787, %v1803
        %v1823 = vunpack.c.l.s4 1934713408
        %v1824 = vunpack.c.0.s8 %v1823
        %v1825 = vlaneseq
        %v1826 = vshrl.u32 %v1825, 7
        %v1827 = vsub.s32 %v1824, %v1826
        %v1828 = vrot.slane %v1820, %v1827
        %v1830 = vunpack.c.l.s4 1934713408
        %v1831 = vunpack.c.0.s8 %v1830
        %v1832 = vlaneseq
        %v1833 = vshrl.u32 %v1832, 7
        %v1834 = vsub.s32 %v1831, %v1833
        %v1835 = vrot.slane %v1821, %v1834
        %v1836 = vcombine.high %v1812, 0.0
        %v1837 = vcombine.high %v1819, 0.0
        %v1838 = vcombine.high %v1828, 0.0
        %v1839 = vcombine.high %v1835, 0.0
        %v1840 = vcombine.low %v1812, %v1819
        %v1842 = vunpack.c.l.s4 1983009808
        %v1843 = vunpack.c.0.s8 %v1842
        %v1844 = vlaneseq
        %v1845 = vshrl.u32 %v1844, 7
        %v1846 = vsub.s32 %v1843, %v1845
        %v1847 = vrot.slane %v1840, %v1846
        %v1848 = vcombine.low %v1836, %v1837
        %v1850 = vunpack.c.l.s4 1983009808
        %v1851 = vunpack.c.0.s8 %v1850
        %v1852 = vlaneseq
        %v1853 = vshrl.u32 %v1852, 7
        %v1854 = vsub.s32 %v1851, %v1853
        %v1855 = vrot.slane %v1848, %v1854
        %v1856 = vcombine.low %v1828, %v1835
        %v1858 = vunpack.c.l.s4 1983009808
        %v1859 = vunpack.c.0.s8 %v1858
        %v1860 = vlaneseq
        %v1861 = vshrl.u32 %v1860, 7
        %v1862 = vsub.s32 %v1859, %v1861
        %v1863 = vrot.slane %v1856, %v1862
        %v1864 = vcombine.low %v1838, %v1839
        %v1866 = vunpack.c.l.s4 1983009808
        %v1867 = vunpack.c.0.s8 %v1866
        %v1868 = vlaneseq
        %v1869 = vshrl.u32 %v1868, 7
        %v1870 = vsub.s32 %v1867, %v1869
        %v1871 = vrot.slane %v1864, %v1870
        %v1872 = vcombine.low %v1847, %v1855
        %v1873 = vcombine.high %v1847, %v1855
        %v1875 = vunpack.c.l.s4 1934713408
        %v1876 = vunpack.c.0.s8 %v1875
        %v1877 = vlaneseq
        %v1878 = vshrl.u32 %v1877, 7
        %v1879 = vsub.s32 %v1876, %v1878
        %v1880 = vrot.slane %v1872, %v1879
        %v1882 = vunpack.c.l.s4 1934713408
        %v1883 = vunpack.c.0.s8 %v1882
        %v1884 = vlaneseq
        %v1885 = vshrl.u32 %v1884, 7
        %v1886 = vsub.s32 %v1883, %v1885
        %v1887 = vrot.slane %v1873, %v1886
        %v1888 = vcombine.low %v1863, %v1871
        %v1889 = vcombine.high %v1863, %v1871
        %v1891 = vunpack.c.l.s4 1934713408
        %v1892 = vunpack.c.0.s8 %v1891
        %v1893 = vlaneseq
        %v1894 = vshrl.u32 %v1893, 7
        %v1895 = vsub.s32 %v1892, %v1894
        %v1896 = vrot.slane %v1888, %v1895
        %v1898 = vunpack.c.l.s4 1934713408
        %v1899 = vunpack.c.0.s8 %v1898
        %v1900 = vlaneseq
        %v1901 = vshrl.u32 %v1900, 7
        %v1902 = vsub.s32 %v1899, %v1901
        %v1903 = vrot.slane %v1889, %v1902
        %v1904 = vcombine.low %v1880, %v1896
        %v1905 = vcombine.high %v1880, %v1896
        %v1906 = vcombine.low %v1887, %v1903
        %v1907 = vcombine.high %v1887, %v1903
        %1909 = vrot.lane.b32.xlu0 %v1715, 96
        %v1910 = vpop.permute.xlu0 %1909
        %1912 = vrot.lane.b32.xlu0 %v1715, 64
        %v1913 = vpop.permute.xlu0 %1912
        %1915 = vrot.lane.b32.xlu0 %v1715, 32
        %v1916 = vpop.permute.xlu0 %1915
        %v1918 = vcombine.low %v1715, %v1913
        %v1919 = vcombine.high %v1715, %v1913
        %v1921 = vunpack.c.l.s4 1983009808
        %v1922 = vunpack.c.0.s8 %v1921
        %v1923 = vlaneseq
        %v1924 = vshrl.u32 %v1923, 7
        %v1925 = vsub.s32 %v1922, %v1924
        %v1926 = vrot.slane %v1918, %v1925
        %v1928 = vunpack.c.l.s4 1983009808
        %v1929 = vunpack.c.0.s8 %v1928
        %v1930 = vlaneseq
        %v1931 = vshrl.u32 %v1930, 7
        %v1932 = vsub.s32 %v1929, %v1931
        %v1933 = vrot.slane %v1919, %v1932
        %v1934 = vcombine.low %v1910, %v1916
        %v1935 = vcombine.high %v1910, %v1916
        %v1937 = vunpack.c.l.s4 1983009808
        %v1938 = vunpack.c.0.s8 %v1937
        %v1939 = vlaneseq
        %v1940 = vshrl.u32 %v1939, 7
        %v1941 = vsub.s32 %v1938, %v1940
        %v1942 = vrot.slane %v1934, %v1941
        %v1944 = vunpack.c.l.s4 1983009808
        %v1945 = vunpack.c.0.s8 %v1944
        %v1946 = vlaneseq
        %v1947 = vshrl.u32 %v1946, 7
        %v1948 = vsub.s32 %v1945, %v1947
        %v1949 = vrot.slane %v1935, %v1948
        %v1950 = vcombine.low %v1926, %v1942
        %v1951 = vcombine.high %v1926, %v1942
        %v1953 = vunpack.c.l.s4 1934713408
        %v1954 = vunpack.c.0.s8 %v1953
        %v1955 = vlaneseq
        %v1956 = vshrl.u32 %v1955, 7
        %v1957 = vsub.s32 %v1954, %v1956
        %v1958 = vrot.slane %v1950, %v1957
        %v1960 = vunpack.c.l.s4 1934713408
        %v1961 = vunpack.c.0.s8 %v1960
        %v1962 = vlaneseq
        %v1963 = vshrl.u32 %v1962, 7
        %v1964 = vsub.s32 %v1961, %v1963
        %v1965 = vrot.slane %v1951, %v1964
        %v1966 = vcombine.low %v1933, %v1949
        %v1967 = vcombine.high %v1933, %v1949
        %v1969 = vunpack.c.l.s4 1934713408
        %v1970 = vunpack.c.0.s8 %v1969
        %v1971 = vlaneseq
        %v1972 = vshrl.u32 %v1971, 7
        %v1973 = vsub.s32 %v1970, %v1972
        %v1974 = vrot.slane %v1966, %v1973
        %v1976 = vunpack.c.l.s4 1934713408
        %v1977 = vunpack.c.0.s8 %v1976
        %v1978 = vlaneseq
        %v1979 = vshrl.u32 %v1978, 7
        %v1980 = vsub.s32 %v1977, %v1979
        %v1981 = vrot.slane %v1967, %v1980
        %v1982 = vcombine.high %v1958, 0.0
        %v1983 = vcombine.high %v1965, 0.0
        %v1984 = vcombine.high %v1974, 0.0
        %v1985 = vcombine.high %v1981, 0.0
        %v1986 = vcombine.low %v1958, %v1965
        %v1988 = vunpack.c.l.s4 1983009808
        %v1989 = vunpack.c.0.s8 %v1988
        %v1990 = vlaneseq
        %v1991 = vshrl.u32 %v1990, 7
        %v1992 = vsub.s32 %v1989, %v1991
        %v1993 = vrot.slane %v1986, %v1992
        %v1994 = vcombine.low %v1982, %v1983
        %v1996 = vunpack.c.l.s4 1983009808
        %v1997 = vunpack.c.0.s8 %v1996
        %v1998 = vlaneseq
        %v1999 = vshrl.u32 %v1998, 7
        %v2000 = vsub.s32 %v1997, %v1999
        %v2001 = vrot.slane %v1994, %v2000
        %v2002 = vcombine.low %v1974, %v1981
        %v2004 = vunpack.c.l.s4 1983009808
        %v2005 = vunpack.c.0.s8 %v2004
        %v2006 = vlaneseq
        %v2007 = vshrl.u32 %v2006, 7
        %v2008 = vsub.s32 %v2005, %v2007
        %v2009 = vrot.slane %v2002, %v2008
        %v2010 = vcombine.low %v1984, %v1985
        %v2012 = vunpack.c.l.s4 1983009808
        %v2013 = vunpack.c.0.s8 %v2012
        %v2014 = vlaneseq
        %v2015 = vshrl.u32 %v2014, 7
        %v2016 = vsub.s32 %v2013, %v2015
        %v2017 = vrot.slane %v2010, %v2016
        %v2018 = vcombine.low %v1993, %v2001
        %v2019 = vcombine.high %v1993, %v2001
        %v2021 = vunpack.c.l.s4 1934713408
        %v2022 = vunpack.c.0.s8 %v2021
        %v2023 = vlaneseq
        %v2024 = vshrl.u32 %v2023, 7
        %v2025 = vsub.s32 %v2022, %v2024
        %v2026 = vrot.slane %v2018, %v2025
        %v2028 = vunpack.c.l.s4 1934713408
        %v2029 = vunpack.c.0.s8 %v2028
        %v2030 = vlaneseq
        %v2031 = vshrl.u32 %v2030, 7
        %v2032 = vsub.s32 %v2029, %v2031
        %v2033 = vrot.slane %v2019, %v2032
        %v2034 = vcombine.low %v2009, %v2017
        %v2035 = vcombine.high %v2009, %v2017
        %v2037 = vunpack.c.l.s4 1934713408
        %v2038 = vunpack.c.0.s8 %v2037
        %v2039 = vlaneseq
        %v2040 = vshrl.u32 %v2039, 7
        %v2041 = vsub.s32 %v2038, %v2040
        %v2042 = vrot.slane %v2034, %v2041
        %v2044 = vunpack.c.l.s4 1934713408
        %v2045 = vunpack.c.0.s8 %v2044
        %v2046 = vlaneseq
        %v2047 = vshrl.u32 %v2046, 7
        %v2048 = vsub.s32 %v2045, %v2047
        %v2049 = vrot.slane %v2035, %v2048
        %v2050 = vcombine.low %v2026, %v2042
        %v2051 = vcombine.high %v2026, %v2042
        %v2052 = vcombine.low %v2033, %v2049
        %v2053 = vcombine.high %v2033, %v2049
        %2055 = vrot.lane.b32.xlu0 %v1756, 96
        %v2056 = vpop.permute.xlu0 %2055
        %2058 = vrot.lane.b32.xlu0 %v1756, 64
        %v2059 = vpop.permute.xlu0 %2058
        %2061 = vrot.lane.b32.xlu0 %v1756, 32
        %v2062 = vpop.permute.xlu0 %2061
        %v2064 = vcombine.low %v1756, %v2059
        %v2065 = vcombine.high %v1756, %v2059
        %v2067 = vunpack.c.l.s4 1983009808
        %v2068 = vunpack.c.0.s8 %v2067
        %v2069 = vlaneseq
        %v2070 = vshrl.u32 %v2069, 7
        %v2071 = vsub.s32 %v2068, %v2070
        %v2072 = vrot.slane %v2064, %v2071
        %v2074 = vunpack.c.l.s4 1983009808
        %v2075 = vunpack.c.0.s8 %v2074
        %v2076 = vlaneseq
        %v2077 = vshrl.u32 %v2076, 7
        %v2078 = vsub.s32 %v2075, %v2077
        %v2079 = vrot.slane %v2065, %v2078
        %v2080 = vcombine.low %v2056, %v2062
        %v2081 = vcombine.high %v2056, %v2062
        %v2083 = vunpack.c.l.s4 1983009808
        %v2084 = vunpack.c.0.s8 %v2083
        %v2085 = vlaneseq
        %v2086 = vshrl.u32 %v2085, 7
        %v2087 = vsub.s32 %v2084, %v2086
        %v2088 = vrot.slane %v2080, %v2087
        %v2090 = vunpack.c.l.s4 1983009808
        %v2091 = vunpack.c.0.s8 %v2090
        %v2092 = vlaneseq
        %v2093 = vshrl.u32 %v2092, 7
        %v2094 = vsub.s32 %v2091, %v2093
        %v2095 = vrot.slane %v2081, %v2094
        %v2096 = vcombine.low %v2072, %v2088
        %v2097 = vcombine.high %v2072, %v2088
        %v2099 = vunpack.c.l.s4 1934713408
        %v2100 = vunpack.c.0.s8 %v2099
        %v2101 = vlaneseq
        %v2102 = vshrl.u32 %v2101, 7
        %v2103 = vsub.s32 %v2100, %v2102
        %v2104 = vrot.slane %v2096, %v2103
        %v2106 = vunpack.c.l.s4 1934713408
        %v2107 = vunpack.c.0.s8 %v2106
        %v2108 = vlaneseq
        %v2109 = vshrl.u32 %v2108, 7
        %v2110 = vsub.s32 %v2107, %v2109
        %v2111 = vrot.slane %v2097, %v2110
        %v2112 = vcombine.low %v2079, %v2095
        %v2113 = vcombine.high %v2079, %v2095
        %v2115 = vunpack.c.l.s4 1934713408
        %v2116 = vunpack.c.0.s8 %v2115
        %v2117 = vlaneseq
        %v2118 = vshrl.u32 %v2117, 7
        %v2119 = vsub.s32 %v2116, %v2118
        %v2120 = vrot.slane %v2112, %v2119
        %v2122 = vunpack.c.l.s4 1934713408
        %v2123 = vunpack.c.0.s8 %v2122
        %v2124 = vlaneseq
        %v2125 = vshrl.u32 %v2124, 7
        %v2126 = vsub.s32 %v2123, %v2125
        %v2127 = vrot.slane %v2113, %v2126
        %v2128 = vcombine.high %v2104, 0.0
        %v2129 = vcombine.high %v2111, 0.0
        %v2130 = vcombine.high %v2120, 0.0
        %v2131 = vcombine.high %v2127, 0.0
        %v2132 = vcombine.low %v2104, %v2111
        %v2134 = vunpack.c.l.s4 1983009808
        %v2135 = vunpack.c.0.s8 %v2134
        %v2136 = vlaneseq
        %v2137 = vshrl.u32 %v2136, 7
        %v2138 = vsub.s32 %v2135, %v2137
        %v2139 = vrot.slane %v2132, %v2138
        %v2140 = vcombine.low %v2128, %v2129
        %v2142 = vunpack.c.l.s4 1983009808
        %v2143 = vunpack.c.0.s8 %v2142
        %v2144 = vlaneseq
        %v2145 = vshrl.u32 %v2144, 7
        %v2146 = vsub.s32 %v2143, %v2145
        %v2147 = vrot.slane %v2140, %v2146
        %v2148 = vcombine.low %v2120, %v2127
        %v2150 = vunpack.c.l.s4 1983009808
        %v2151 = vunpack.c.0.s8 %v2150
        %v2152 = vlaneseq
        %v2153 = vshrl.u32 %v2152, 7
        %v2154 = vsub.s32 %v2151, %v2153
        %v2155 = vrot.slane %v2148, %v2154
        %v2156 = vcombine.low %v2130, %v2131
        %v2158 = vunpack.c.l.s4 1983009808
        %v2159 = vunpack.c.0.s8 %v2158
        %v2160 = vlaneseq
        %v2161 = vshrl.u32 %v2160, 7
        %v2162 = vsub.s32 %v2159, %v2161
        %v2163 = vrot.slane %v2156, %v2162
        %v2164 = vcombine.low %v2139, %v2147
        %v2165 = vcombine.high %v2139, %v2147
        %v2167 = vunpack.c.l.s4 1934713408
        %v2168 = vunpack.c.0.s8 %v2167
        %v2169 = vlaneseq
        %v2170 = vshrl.u32 %v2169, 7
        %v2171 = vsub.s32 %v2168, %v2170
        %v2172 = vrot.slane %v2164, %v2171
        %v2174 = vunpack.c.l.s4 1934713408
        %v2175 = vunpack.c.0.s8 %v2174
        %v2176 = vlaneseq
        %v2177 = vshrl.u32 %v2176, 7
        %v2178 = vsub.s32 %v2175, %v2177
        %v2179 = vrot.slane %v2165, %v2178
        %v2180 = vcombine.low %v2155, %v2163
        %v2181 = vcombine.high %v2155, %v2163
        %v2183 = vunpack.c.l.s4 1934713408
        %v2184 = vunpack.c.0.s8 %v2183
        %v2185 = vlaneseq
        %v2186 = vshrl.u32 %v2185, 7
        %v2187 = vsub.s32 %v2184, %v2186
        %v2188 = vrot.slane %v2180, %v2187
        %v2190 = vunpack.c.l.s4 1934713408
        %v2191 = vunpack.c.0.s8 %v2190
        %v2192 = vlaneseq
        %v2193 = vshrl.u32 %v2192, 7
        %v2194 = vsub.s32 %v2191, %v2193
        %v2195 = vrot.slane %v2181, %v2194
        %v2196 = vcombine.low %v2172, %v2188
        %v2197 = vcombine.high %v2172, %v2188
        %v2198 = vcombine.low %v2179, %v2195
        %v2199 = vcombine.high %v2179, %v2195
        %vm2200 = vcmask 261120
        %v2202 = vsel %vm2200, %v1904, 0
        %v2205 = vsel %vm2200, %v2050, 0
        %2207 = vmatprep.subr.mxu0 0.0
        %2208 = vmatpush1.xpose.msra.mxu0 %v2205
        %2209 = vmatprep.subr.mxu0 0.0
        %2210 = vmatpush1.xpose.msra.mxu0 0.0
        %2211 = vmatprep.subr.mxu0 0.0
        %2212 = vmatpush1.xpose.msra.mxu0 0.0
        %2213 = vmatprep.subr.mxu0 0.0
        %2214 = vmatpush1.xpose.msra.mxu0 0.0
        %2215 = vmatprep.subr.mxu0 0.0
        %2216 = vmatpush1.xpose.msra.mxu0 0.0
        %2217 = vmatprep.subr.mxu0 0.0
        %2218 = vmatpush1.xpose.msra.mxu0 0.0
        %2219 = vmatprep.subr.mxu0 0.0
        %2220 = vmatpush1.xpose.msra.mxu0 0.0
        %2221 = vmatprep.subr.mxu0 0.0
        %2222 = vmatpush1.xpose.msra.mxu0 0.0
        %2223 = vmatprep.subr.mxu0 0.0
        %2224 = vmatpush1.xpose.msra.mxu0 0.0
        %2225 = vmatprep.subr.mxu0 0.0
        %2226 = vmatpush1.xpose.msra.mxu0 0.0
        %2227 = vmatprep.subr.mxu0 0.0
        %2228 = vmatpush1.xpose.msra.mxu0 0.0
        %2229 = vmatprep.subr.mxu0 0.0
        %2230 = vmatpush1.xpose.msra.mxu0 0.0
        %2231 = vmatprep.subr.mxu0 0.0
        %2232 = vmatpush1.xpose.msra.mxu0 0.0
        %2233 = vmatprep.subr.mxu0 0.0
        %2234 = vmatpush1.xpose.msra.mxu0 0.0
        %2235 = vmatprep.subr.mxu0 0.0
        %2236 = vmatpush1.xpose.msra.mxu0 0.0
        %2237 = vmatprep.subr.mxu0 0.0
        %2238 = vmatpush1.xpose.msra.mxu0 0.0
        %2239 = vmatprep.subr.mxu0 0.0
        %2240 = vmatpush1.xpose.msra.mxu0 0.0
        %2241 = vmatprep.subr.mxu0 0.0
        %2242 = vmatpush1.xpose.msra.mxu0 0.0
        %2243 = vmatprep.subr.mxu0 0.0
        %2244 = vmatpush1.xpose.msra.mxu0 0.0
        %2245 = vmatprep.subr.mxu0 0.0
        %2246 = vmatpush1.xpose.msra.mxu0 0.0
        %2247 = vmatprep.subr.mxu0 0.0
        %2248 = vmatpush1.xpose.msra.mxu0 0.0
        %2249 = vmatprep.subr.mxu0 0.0
        %2250 = vmatpush1.xpose.msra.mxu0 0.0
        %2251 = vmatprep.subr.mxu0 0.0
        %2252 = vmatpush1.xpose.msra.mxu0 0.0
        %2253 = vmatprep.subr.mxu0 0.0
        %2254 = vmatpush1.xpose.msra.mxu0 0.0
        %2255 = vmatprep.subr.mxu0 0.0
        %2256 = vmatpush1.xpose.msra.mxu0 0.0
        %2257 = vmatprep.subr.mxu0 0.0
        %2258 = vmatpush1.xpose.msra.mxu0 0.0
        %2259 = vmatprep.subr.mxu0 0.0
        %2260 = vmatpush1.xpose.msra.mxu0 0.0
        %2261 = vmatprep.subr.mxu0 0.0
        %2262 = vmatpush1.xpose.msra.mxu0 0.0
        %2263 = vmatprep.subr.mxu0 0.0
        %2264 = vmatpush1.xpose.msra.mxu0 0.0
        %2265 = vmatprep.subr.mxu0 0.0
        %2266 = vmatpush1.xpose.msra.mxu0 0.0
        %2267 = vmatprep.subr.mxu0 0.0
        %2268 = vmatpush1.xpose.msra.mxu0 0.0
        %2269 = vmatprep.subr.mxu0 0.0
        %2270 = vmatpush1.xpose.msra.mxu0 0.0
        %2271 = vmatprep.mubr.f32.mxu0 0.0
        %2272 = vmatmul.mubr.f32.gmra.mrb[0].mxu0 %v2202
        %v2273 = vpop.f32.mrb[0].mxu0
        %v2274 = vadd.f32 0.0, %v2273
        %v2275 = vpop.f32.mrb[0].mxu0
        %2276 = vdwg.mxu0
        %v2278 = vsel %vm2200, %v1905, 0
        %v2281 = vsel %vm2200, %v2051, 0
        %2283 = vmatprep.subr.mxu0 0.0
        %2284 = vmatpush1.xpose.msra.mxu0 %v2281
        %2285 = vmatprep.subr.mxu0 0.0
        %2286 = vmatpush1.xpose.msra.mxu0 0.0
        %2287 = vmatprep.subr.mxu0 0.0
        %2288 = vmatpush1.xpose.msra.mxu0 0.0
        %2289 = vmatprep.subr.mxu0 0.0
        %2290 = vmatpush1.xpose.msra.mxu0 0.0
        %2291 = vmatprep.subr.mxu0 0.0
        %2292 = vmatpush1.xpose.msra.mxu0 0.0
        %2293 = vmatprep.subr.mxu0 0.0
        %2294 = vmatpush1.xpose.msra.mxu0 0.0
        %2295 = vmatprep.subr.mxu0 0.0
        %2296 = vmatpush1.xpose.msra.mxu0 0.0
        %2297 = vmatprep.subr.mxu0 0.0
        %2298 = vmatpush1.xpose.msra.mxu0 0.0
        %2299 = vmatprep.subr.mxu0 0.0
        %2300 = vmatpush1.xpose.msra.mxu0 0.0
        %2301 = vmatprep.subr.mxu0 0.0
        %2302 = vmatpush1.xpose.msra.mxu0 0.0
        %2303 = vmatprep.subr.mxu0 0.0
        %2304 = vmatpush1.xpose.msra.mxu0 0.0
        %2305 = vmatprep.subr.mxu0 0.0
        %2306 = vmatpush1.xpose.msra.mxu0 0.0
        %2307 = vmatprep.subr.mxu0 0.0
        %2308 = vmatpush1.xpose.msra.mxu0 0.0
        %2309 = vmatprep.subr.mxu0 0.0
        %2310 = vmatpush1.xpose.msra.mxu0 0.0
        %2311 = vmatprep.subr.mxu0 0.0
        %2312 = vmatpush1.xpose.msra.mxu0 0.0
        %2313 = vmatprep.subr.mxu0 0.0
        %2314 = vmatpush1.xpose.msra.mxu0 0.0
        %2315 = vmatprep.subr.mxu0 0.0
        %2316 = vmatpush1.xpose.msra.mxu0 0.0
        %2317 = vmatprep.subr.mxu0 0.0
        %2318 = vmatpush1.xpose.msra.mxu0 0.0
        %2319 = vmatprep.subr.mxu0 0.0
        %2320 = vmatpush1.xpose.msra.mxu0 0.0
        %2321 = vmatprep.subr.mxu0 0.0
        %2322 = vmatpush1.xpose.msra.mxu0 0.0
        %2323 = vmatprep.subr.mxu0 0.0
        %2324 = vmatpush1.xpose.msra.mxu0 0.0
        %2325 = vmatprep.subr.mxu0 0.0
        %2326 = vmatpush1.xpose.msra.mxu0 0.0
        %2327 = vmatprep.subr.mxu0 0.0
        %2328 = vmatpush1.xpose.msra.mxu0 0.0
        %2329 = vmatprep.subr.mxu0 0.0
        %2330 = vmatpush1.xpose.msra.mxu0 0.0
        %2331 = vmatprep.subr.mxu0 0.0
        %2332 = vmatpush1.xpose.msra.mxu0 0.0
        %2333 = vmatprep.subr.mxu0 0.0
        %2334 = vmatpush1.xpose.msra.mxu0 0.0
        %2335 = vmatprep.subr.mxu0 0.0
        %2336 = vmatpush1.xpose.msra.mxu0 0.0
        %2337 = vmatprep.subr.mxu0 0.0
        %2338 = vmatpush1.xpose.msra.mxu0 0.0
        %2339 = vmatprep.subr.mxu0 0.0
        %2340 = vmatpush1.xpose.msra.mxu0 0.0
        %2341 = vmatprep.subr.mxu0 0.0
        %2342 = vmatpush1.xpose.msra.mxu0 0.0
        %2343 = vmatprep.subr.mxu0 0.0
        %2344 = vmatpush1.xpose.msra.mxu0 0.0
        %2345 = vmatprep.subr.mxu0 0.0
        %2346 = vmatpush1.xpose.msra.mxu0 0.0
        %2347 = vmatprep.mubr.f32.mxu0 0.0
        %2348 = vmatmul.mubr.f32.gmra.mrb[0].mxu0 %v2278
        %v2349 = vpop.f32.mrb[0].mxu0
        %v2350 = vadd.f32 0.0, %v2349
        %v2351 = vpop.f32.mrb[0].mxu0
        %2352 = vdwg.mxu0
        %v2354 = vsel %vm2200, %v1906, 0
        %v2357 = vsel %vm2200, %v2052, 0
        %2359 = vmatprep.subr.mxu0 0.0
        %2360 = vmatpush1.xpose.msra.mxu0 %v2357
        %2361 = vmatprep.subr.mxu0 0.0
        %2362 = vmatpush1.xpose.msra.mxu0 0.0
        %2363 = vmatprep.subr.mxu0 0.0
        %2364 = vmatpush1.xpose.msra.mxu0 0.0
        %2365 = vmatprep.subr.mxu0 0.0
        %2366 = vmatpush1.xpose.msra.mxu0 0.0
        %2367 = vmatprep.subr.mxu0 0.0
        %2368 = vmatpush1.xpose.msra.mxu0 0.0
        %2369 = vmatprep.subr.mxu0 0.0
        %2370 = vmatpush1.xpose.msra.mxu0 0.0
        %2371 = vmatprep.subr.mxu0 0.0
        %2372 = vmatpush1.xpose.msra.mxu0 0.0
        %2373 = vmatprep.subr.mxu0 0.0
        %2374 = vmatpush1.xpose.msra.mxu0 0.0
        %2375 = vmatprep.subr.mxu0 0.0
        %2376 = vmatpush1.xpose.msra.mxu0 0.0
        %2377 = vmatprep.subr.mxu0 0.0
        %2378 = vmatpush1.xpose.msra.mxu0 0.0
        %2379 = vmatprep.subr.mxu0 0.0
        %2380 = vmatpush1.xpose.msra.mxu0 0.0
        %2381 = vmatprep.subr.mxu0 0.0
        %2382 = vmatpush1.xpose.msra.mxu0 0.0
        %2383 = vmatprep.subr.mxu0 0.0
        %2384 = vmatpush1.xpose.msra.mxu0 0.0
        %2385 = vmatprep.subr.mxu0 0.0
        %2386 = vmatpush1.xpose.msra.mxu0 0.0
        %2387 = vmatprep.subr.mxu0 0.0
        %2388 = vmatpush1.xpose.msra.mxu0 0.0
        %2389 = vmatprep.subr.mxu0 0.0
        %2390 = vmatpush1.xpose.msra.mxu0 0.0
        %2391 = vmatprep.subr.mxu0 0.0
        %2392 = vmatpush1.xpose.msra.mxu0 0.0
        %2393 = vmatprep.subr.mxu0 0.0
        %2394 = vmatpush1.xpose.msra.mxu0 0.0
        %2395 = vmatprep.subr.mxu0 0.0
        %2396 = vmatpush1.xpose.msra.mxu0 0.0
        %2397 = vmatprep.subr.mxu0 0.0
        %2398 = vmatpush1.xpose.msra.mxu0 0.0
        %2399 = vmatprep.subr.mxu0 0.0
        %2400 = vmatpush1.xpose.msra.mxu0 0.0
        %2401 = vmatprep.subr.mxu0 0.0
        %2402 = vmatpush1.xpose.msra.mxu0 0.0
        %2403 = vmatprep.subr.mxu0 0.0
        %2404 = vmatpush1.xpose.msra.mxu0 0.0
        %2405 = vmatprep.subr.mxu0 0.0
        %2406 = vmatpush1.xpose.msra.mxu0 0.0
        %2407 = vmatprep.subr.mxu0 0.0
        %2408 = vmatpush1.xpose.msra.mxu0 0.0
        %2409 = vmatprep.subr.mxu0 0.0
        %2410 = vmatpush1.xpose.msra.mxu0 0.0
        %2411 = vmatprep.subr.mxu0 0.0
        %2412 = vmatpush1.xpose.msra.mxu0 0.0
        %2413 = vmatprep.subr.mxu0 0.0
        %2414 = vmatpush1.xpose.msra.mxu0 0.0
        %2415 = vmatprep.subr.mxu0 0.0
        %2416 = vmatpush1.xpose.msra.mxu0 0.0
        %2417 = vmatprep.subr.mxu0 0.0
        %2418 = vmatpush1.xpose.msra.mxu0 0.0
        %2419 = vmatprep.subr.mxu0 0.0
        %2420 = vmatpush1.xpose.msra.mxu0 0.0
        %2421 = vmatprep.subr.mxu0 0.0
        %2422 = vmatpush1.xpose.msra.mxu0 0.0
        %2423 = vmatprep.mubr.f32.mxu0 0.0
        %2424 = vmatmul.mubr.f32.gmra.mrb[0].mxu0 %v2354
        %v2425 = vpop.f32.mrb[0].mxu0
        %v2426 = vadd.f32 0.0, %v2425
        %v2427 = vpop.f32.mrb[0].mxu0
        %2428 = vdwg.mxu0
        %v2430 = vsel %vm2200, %v1907, 0
        %v2433 = vsel %vm2200, %v2053, 0
        %2435 = vmatprep.subr.mxu0 0.0
        %2436 = vmatpush1.xpose.msra.mxu0 %v2433
        %2437 = vmatprep.subr.mxu0 0.0
        %2438 = vmatpush1.xpose.msra.mxu0 0.0
        %2439 = vmatprep.subr.mxu0 0.0
        %2440 = vmatpush1.xpose.msra.mxu0 0.0
        %2441 = vmatprep.subr.mxu0 0.0
        %2442 = vmatpush1.xpose.msra.mxu0 0.0
        %2443 = vmatprep.subr.mxu0 0.0
        %2444 = vmatpush1.xpose.msra.mxu0 0.0
        %2445 = vmatprep.subr.mxu0 0.0
        %2446 = vmatpush1.xpose.msra.mxu0 0.0
        %2447 = vmatprep.subr.mxu0 0.0
        %2448 = vmatpush1.xpose.msra.mxu0 0.0
        %2449 = vmatprep.subr.mxu0 0.0
        %2450 = vmatpush1.xpose.msra.mxu0 0.0
        %2451 = vmatprep.subr.mxu0 0.0
        %2452 = vmatpush1.xpose.msra.mxu0 0.0
        %2453 = vmatprep.subr.mxu0 0.0
        %2454 = vmatpush1.xpose.msra.mxu0 0.0
        %2455 = vmatprep.subr.mxu0 0.0
        %2456 = vmatpush1.xpose.msra.mxu0 0.0
        %2457 = vmatprep.subr.mxu0 0.0
        %2458 = vmatpush1.xpose.msra.mxu0 0.0
        %2459 = vmatprep.subr.mxu0 0.0
        %2460 = vmatpush1.xpose.msra.mxu0 0.0
        %2461 = vmatprep.subr.mxu0 0.0
        %2462 = vmatpush1.xpose.msra.mxu0 0.0
        %2463 = vmatprep.subr.mxu0 0.0
        %2464 = vmatpush1.xpose.msra.mxu0 0.0
        %2465 = vmatprep.subr.mxu0 0.0
        %2466 = vmatpush1.xpose.msra.mxu0 0.0
        %2467 = vmatprep.subr.mxu0 0.0
        %2468 = vmatpush1.xpose.msra.mxu0 0.0
        %2469 = vmatprep.subr.mxu0 0.0
        %2470 = vmatpush1.xpose.msra.mxu0 0.0
        %2471 = vmatprep.subr.mxu0 0.0
        %2472 = vmatpush1.xpose.msra.mxu0 0.0
        %2473 = vmatprep.subr.mxu0 0.0
        %2474 = vmatpush1.xpose.msra.mxu0 0.0
        %2475 = vmatprep.subr.mxu0 0.0
        %2476 = vmatpush1.xpose.msra.mxu0 0.0
        %2477 = vmatprep.subr.mxu0 0.0
        %2478 = vmatpush1.xpose.msra.mxu0 0.0
        %2479 = vmatprep.subr.mxu0 0.0
        %2480 = vmatpush1.xpose.msra.mxu0 0.0
        %2481 = vmatprep.subr.mxu0 0.0
        %2482 = vmatpush1.xpose.msra.mxu0 0.0
        %2483 = vmatprep.subr.mxu0 0.0
        %2484 = vmatpush1.xpose.msra.mxu0 0.0
        %2485 = vmatprep.subr.mxu0 0.0
        %2486 = vmatpush1.xpose.msra.mxu0 0.0
        %2487 = vmatprep.subr.mxu0 0.0
        %2488 = vmatpush1.xpose.msra.mxu0 0.0
        %2489 = vmatprep.subr.mxu0 0.0
        %2490 = vmatpush1.xpose.msra.mxu0 0.0
        %2491 = vmatprep.subr.mxu0 0.0
        %2492 = vmatpush1.xpose.msra.mxu0 0.0
        %2493 = vmatprep.subr.mxu0 0.0
        %2494 = vmatpush1.xpose.msra.mxu0 0.0
        %2495 = vmatprep.subr.mxu0 0.0
        %2496 = vmatpush1.xpose.msra.mxu0 0.0
        %2497 = vmatprep.subr.mxu0 0.0
        %2498 = vmatpush1.xpose.msra.mxu0 0.0
        %2499 = vmatprep.mubr.f32.mxu0 0.0
        %2500 = vmatmul.mubr.f32.gmra.mrb[0].mxu0 %v2430
        %v2501 = vpop.f32.mrb[0].mxu0
        %v2502 = vadd.f32 0.0, %v2501
        %v2503 = vpop.f32.mrb[0].mxu0
        %2504 = vdwg.mxu0
        %v2505 = vmul.f32 %v2274, 0.17677669
        %v2506 = vmul.f32 %v2350, 0.17677669
        %v2507 = vmul.f32 %v2426, 0.17677669
        %v2508 = vmul.f32 %v2502, 0.17677669
        %v2509 = vadd.f32 %v2505, %v1529
        %v2510 = vadd.f32 %v2506, %v1529
        %v2511 = vadd.f32 %v2507, %v1529
        %v2512 = vadd.f32 %v2508, %v1529
        %vm2513 = vcmask 64512
        %v2514 = vsel %vm2513, %v2509, -inf
        %2515 = vmax.xlane.f32.xlu0 %v2514
        %v2516 = vpop.xlane.xlu0 %2515
        %v2517 = vsel %vm2513, %v2510, -inf
        %2518 = vmax.xlane.f32.xlu0 %v2517
        %v2519 = vpop.xlane.xlu0 %2518
        %v2520 = vsel %vm2513, %v2511, -inf
        %2521 = vmax.xlane.f32.xlu0 %v2520
        %v2522 = vpop.xlane.xlu0 %2521
        %v2523 = vsel %vm2513, %v2512, -inf
        %2524 = vmax.xlane.f32.xlu0 %v2523
        %v2525 = vpop.xlane.xlu0 %2524
        %v2526 = vsub.f32 %v2509, %v2516
        %v2527 = vsub.f32 %v2510, %v2519
        %v2528 = vsub.f32 %v2511, %v2522
        %v2529 = vsub.f32 %v2512, %v2525
        %v2530 = vmul.f32 %v2526, 1.442695
        %v2531 = vpow.pop %v2530
        %v2532 = vmul.f32 %v2527, 1.442695
        %v2533 = vpow.pop %v2532
        %v2534 = vmul.f32 %v2528, 1.442695
        %v2535 = vpow.pop %v2534
        %v2536 = vmul.f32 %v2529, 1.442695
        %v2537 = vpow.pop %v2536
        %v2538 = vsel %vm2513, %v2531, 0.0
        %2539 = vadd.xlane.f32.xlu0 %v2538
        %v2540 = vpop.xlane.xlu0 %2539
        %v2541 = vsel %vm2513, %v2533, 0.0
        %2542 = vadd.xlane.f32.xlu0 %v2541
        %v2543 = vpop.xlane.xlu0 %2542
        %v2544 = vsel %vm2513, %v2535, 0.0
        %2545 = vadd.xlane.f32.xlu0 %v2544
        %v2546 = vpop.xlane.xlu0 %2545
        %v2547 = vsel %vm2513, %v2537, 0.0
        %2548 = vadd.xlane.f32.xlu0 %v2547
        %v2549 = vpop.xlane.xlu0 %2548
        %v2550 = vrcp.pop %v2540
        %v2551 = vrcp.pop %v2543
        %v2552 = vrcp.pop %v2546
        %v2553 = vrcp.pop %v2549
        %v2554 = vmul.f32 %v2531, %v2550
        %v2555 = vmul.f32 %v2533, %v2551
        %v2556 = vmul.f32 %v2535, %v2552
        %v2557 = vmul.f32 %v2537, %v2553
        %v2559 = vsel %vm2513, %v2554, 0
        %2561 = vmatprep.subr.mxu0 0.0
        %2562 = vmatpush1.msra.mxu0 %v2196
        %2563 = vmatprep.subr.mxu0 0.0
        %2564 = vmatpush1.msra.mxu0 0.0
        %2565 = vmatprep.subr.mxu0 0.0
        %2566 = vmatpush1.msra.mxu0 0.0
        %2567 = vmatprep.subr.mxu0 0.0
        %2568 = vmatpush1.msra.mxu0 0.0
        %2569 = vmatprep.subr.mxu0 0.0
        %2570 = vmatpush1.msra.mxu0 0.0
        %2571 = vmatprep.subr.mxu0 0.0
        %2572 = vmatpush1.msra.mxu0 0.0
        %2573 = vmatprep.subr.mxu0 0.0
        %2574 = vmatpush1.msra.mxu0 0.0
        %2575 = vmatprep.subr.mxu0 0.0
        %2576 = vmatpush1.msra.mxu0 0.0
        %2577 = vmatprep.subr.mxu0 0.0
        %2578 = vmatpush1.msra.mxu0 0.0
        %2579 = vmatprep.subr.mxu0 0.0
        %2580 = vmatpush1.msra.mxu0 0.0
        %2581 = vmatprep.subr.mxu0 0.0
        %2582 = vmatpush1.msra.mxu0 0.0
        %2583 = vmatprep.subr.mxu0 0.0
        %2584 = vmatpush1.msra.mxu0 0.0
        %2585 = vmatprep.subr.mxu0 0.0
        %2586 = vmatpush1.msra.mxu0 0.0
        %2587 = vmatprep.subr.mxu0 0.0
        %2588 = vmatpush1.msra.mxu0 0.0
        %2589 = vmatprep.subr.mxu0 0.0
        %2590 = vmatpush1.msra.mxu0 0.0
        %2591 = vmatprep.subr.mxu0 0.0
        %2592 = vmatpush1.msra.mxu0 0.0
        %2593 = vmatprep.subr.mxu0 0.0
        %2594 = vmatpush1.msra.mxu0 0.0
        %2595 = vmatprep.subr.mxu0 0.0
        %2596 = vmatpush1.msra.mxu0 0.0
        %2597 = vmatprep.subr.mxu0 0.0
        %2598 = vmatpush1.msra.mxu0 0.0
        %2599 = vmatprep.subr.mxu0 0.0
        %2600 = vmatpush1.msra.mxu0 0.0
        %2601 = vmatprep.subr.mxu0 0.0
        %2602 = vmatpush1.msra.mxu0 0.0
        %2603 = vmatprep.subr.mxu0 0.0
        %2604 = vmatpush1.msra.mxu0 0.0
        %2605 = vmatprep.subr.mxu0 0.0
        %2606 = vmatpush1.msra.mxu0 0.0
        %2607 = vmatprep.subr.mxu0 0.0
        %2608 = vmatpush1.msra.mxu0 0.0
        %2609 = vmatprep.subr.mxu0 0.0
        %2610 = vmatpush1.msra.mxu0 0.0
        %2611 = vmatprep.subr.mxu0 0.0
        %2612 = vmatpush1.msra.mxu0 0.0
        %2613 = vmatprep.subr.mxu0 0.0
        %2614 = vmatpush1.msra.mxu0 0.0
        %2615 = vmatprep.subr.mxu0 0.0
        %2616 = vmatpush1.msra.mxu0 0.0
        %2617 = vmatprep.subr.mxu0 0.0
        %2618 = vmatpush1.msra.mxu0 0.0
        %2619 = vmatprep.subr.mxu0 0.0
        %2620 = vmatpush1.msra.mxu0 0.0
        %2621 = vmatprep.subr.mxu0 0.0
        %2622 = vmatpush1.msra.mxu0 0.0
        %2623 = vmatprep.subr.mxu0 0.0
        %2624 = vmatpush1.msra.mxu0 0.0
        %2625 = vmatprep.mubr.f32.mxu0 0.0
        %2626 = vmatmul.mubr.f32.gmra.mrb[0].mxu0 %v2559
        %v2627 = vpop.f32.mrb[0].mxu0
        %v2628 = vadd.f32 0.0, %v2627
        %v2629 = vpop.f32.mrb[0].mxu0
        %2630 = vdwg.mxu0
        %v2632 = vsel %vm2513, %v2555, 0
        %2634 = vmatprep.subr.mxu0 0.0
        %2635 = vmatpush1.msra.mxu0 %v2197
        %2636 = vmatprep.subr.mxu0 0.0
        %2637 = vmatpush1.msra.mxu0 0.0
        %2638 = vmatprep.subr.mxu0 0.0
        %2639 = vmatpush1.msra.mxu0 0.0
        %2640 = vmatprep.subr.mxu0 0.0
        %2641 = vmatpush1.msra.mxu0 0.0
        %2642 = vmatprep.subr.mxu0 0.0
        %2643 = vmatpush1.msra.mxu0 0.0
        %2644 = vmatprep.subr.mxu0 0.0
        %2645 = vmatpush1.msra.mxu0 0.0
        %2646 = vmatprep.subr.mxu0 0.0
        %2647 = vmatpush1.msra.mxu0 0.0
        %2648 = vmatprep.subr.mxu0 0.0
        %2649 = vmatpush1.msra.mxu0 0.0
        %2650 = vmatprep.subr.mxu0 0.0
        %2651 = vmatpush1.msra.mxu0 0.0
        %2652 = vmatprep.subr.mxu0 0.0
        %2653 = vmatpush1.msra.mxu0 0.0
        %2654 = vmatprep.subr.mxu0 0.0
        %2655 = vmatpush1.msra.mxu0 0.0
        %2656 = vmatprep.subr.mxu0 0.0
        %2657 = vmatpush1.msra.mxu0 0.0
        %2658 = vmatprep.subr.mxu0 0.0
        %2659 = vmatpush1.msra.mxu0 0.0
        %2660 = vmatprep.subr.mxu0 0.0
        %2661 = vmatpush1.msra.mxu0 0.0
        %2662 = vmatprep.subr.mxu0 0.0
        %2663 = vmatpush1.msra.mxu0 0.0
        %2664 = vmatprep.subr.mxu0 0.0
        %2665 = vmatpush1.msra.mxu0 0.0
        %2666 = vmatprep.subr.mxu0 0.0
        %2667 = vmatpush1.msra.mxu0 0.0
        %2668 = vmatprep.subr.mxu0 0.0
        %2669 = vmatpush1.msra.mxu0 0.0
        %2670 = vmatprep.subr.mxu0 0.0
        %2671 = vmatpush1.msra.mxu0 0.0
        %2672 = vmatprep.subr.mxu0 0.0
        %2673 = vmatpush1.msra.mxu0 0.0
        %2674 = vmatprep.subr.mxu0 0.0
        %2675 = vmatpush1.msra.mxu0 0.0
        %2676 = vmatprep.subr.mxu0 0.0
        %2677 = vmatpush1.msra.mxu0 0.0
        %2678 = vmatprep.subr.mxu0 0.0
        %2679 = vmatpush1.msra.mxu0 0.0
        %2680 = vmatprep.subr.mxu0 0.0
        %2681 = vmatpush1.msra.mxu0 0.0
        %2682 = vmatprep.subr.mxu0 0.0
        %2683 = vmatpush1.msra.mxu0 0.0
        %2684 = vmatprep.subr.mxu0 0.0
        %2685 = vmatpush1.msra.mxu0 0.0
        %2686 = vmatprep.subr.mxu0 0.0
        %2687 = vmatpush1.msra.mxu0 0.0
        %2688 = vmatprep.subr.mxu0 0.0
        %2689 = vmatpush1.msra.mxu0 0.0
        %2690 = vmatprep.subr.mxu0 0.0
        %2691 = vmatpush1.msra.mxu0 0.0
        %2692 = vmatprep.subr.mxu0 0.0
        %2693 = vmatpush1.msra.mxu0 0.0
        %2694 = vmatprep.subr.mxu0 0.0
        %2695 = vmatpush1.msra.mxu0 0.0
        %2696 = vmatprep.subr.mxu0 0.0
        %2697 = vmatpush1.msra.mxu0 0.0
        %2698 = vmatprep.mubr.f32.mxu0 0.0
        %2699 = vmatmul.mubr.f32.gmra.mrb[0].mxu0 %v2632
        %v2700 = vpop.f32.mrb[0].mxu0
        %v2701 = vadd.f32 0.0, %v2700
        %v2702 = vpop.f32.mrb[0].mxu0
        %2703 = vdwg.mxu0
        %v2705 = vsel %vm2513, %v2556, 0
        %2707 = vmatprep.subr.mxu0 0.0
        %2708 = vmatpush1.msra.mxu0 %v2198
        %2709 = vmatprep.subr.mxu0 0.0
        %2710 = vmatpush1.msra.mxu0 0.0
        %2711 = vmatprep.subr.mxu0 0.0
        %2712 = vmatpush1.msra.mxu0 0.0
        %2713 = vmatprep.subr.mxu0 0.0
        %2714 = vmatpush1.msra.mxu0 0.0
        %2715 = vmatprep.subr.mxu0 0.0
        %2716 = vmatpush1.msra.mxu0 0.0
        %2717 = vmatprep.subr.mxu0 0.0
        %2718 = vmatpush1.msra.mxu0 0.0
        %2719 = vmatprep.subr.mxu0 0.0
        %2720 = vmatpush1.msra.mxu0 0.0
        %2721 = vmatprep.subr.mxu0 0.0
        %2722 = vmatpush1.msra.mxu0 0.0
        %2723 = vmatprep.subr.mxu0 0.0
        %2724 = vmatpush1.msra.mxu0 0.0
        %2725 = vmatprep.subr.mxu0 0.0
        %2726 = vmatpush1.msra.mxu0 0.0
        %2727 = vmatprep.subr.mxu0 0.0
        %2728 = vmatpush1.msra.mxu0 0.0
        %2729 = vmatprep.subr.mxu0 0.0
        %2730 = vmatpush1.msra.mxu0 0.0
        %2731 = vmatprep.subr.mxu0 0.0
        %2732 = vmatpush1.msra.mxu0 0.0
        %2733 = vmatprep.subr.mxu0 0.0
        %2734 = vmatpush1.msra.mxu0 0.0
        %2735 = vmatprep.subr.mxu0 0.0
        %2736 = vmatpush1.msra.mxu0 0.0
        %2737 = vmatprep.subr.mxu0 0.0
        %2738 = vmatpush1.msra.mxu0 0.0
        %2739 = vmatprep.subr.mxu0 0.0
        %2740 = vmatpush1.msra.mxu0 0.0
        %2741 = vmatprep.subr.mxu0 0.0
        %2742 = vmatpush1.msra.mxu0 0.0
        %2743 = vmatprep.subr.mxu0 0.0
        %2744 = vmatpush1.msra.mxu0 0.0
        %2745 = vmatprep.subr.mxu0 0.0
        %2746 = vmatpush1.msra.mxu0 0.0
        %2747 = vmatprep.subr.mxu0 0.0
        %2748 = vmatpush1.msra.mxu0 0.0
        %2749 = vmatprep.subr.mxu0 0.0
        %2750 = vmatpush1.msra.mxu0 0.0
        %2751 = vmatprep.subr.mxu0 0.0
        %2752 = vmatpush1.msra.mxu0 0.0
        %2753 = vmatprep.subr.mxu0 0.0
        %2754 = vmatpush1.msra.mxu0 0.0
        %2755 = vmatprep.subr.mxu0 0.0
        %2756 = vmatpush1.msra.mxu0 0.0
        %2757 = vmatprep.subr.mxu0 0.0
        %2758 = vmatpush1.msra.mxu0 0.0
        %2759 = vmatprep.subr.mxu0 0.0
        %2760 = vmatpush1.msra.mxu0 0.0
        %2761 = vmatprep.subr.mxu0 0.0
        %2762 = vmatpush1.msra.mxu0 0.0
        %2763 = vmatprep.subr.mxu0 0.0
        %2764 = vmatpush1.msra.mxu0 0.0
        %2765 = vmatprep.subr.mxu0 0.0
        %2766 = vmatpush1.msra.mxu0 0.0
        %2767 = vmatprep.subr.mxu0 0.0
        %2768 = vmatpush1.msra.mxu0 0.0
        %2769 = vmatprep.subr.mxu0 0.0
        %2770 = vmatpush1.msra.mxu0 0.0
        %2771 = vmatprep.mubr.f32.mxu0 0.0
        %2772 = vmatmul.mubr.f32.gmra.mrb[0].mxu0 %v2705
        %v2773 = vpop.f32.mrb[0].mxu0
        %v2774 = vadd.f32 0.0, %v2773
        %v2775 = vpop.f32.mrb[0].mxu0
        %2776 = vdwg.mxu0
        %v2778 = vsel %vm2513, %v2557, 0
        %2780 = vmatprep.subr.mxu0 0.0
        %2781 = vmatpush1.msra.mxu0 %v2199
        %2782 = vmatprep.subr.mxu0 0.0
        %2783 = vmatpush1.msra.mxu0 0.0
        %2784 = vmatprep.subr.mxu0 0.0
        %2785 = vmatpush1.msra.mxu0 0.0
        %2786 = vmatprep.subr.mxu0 0.0
        %2787 = vmatpush1.msra.mxu0 0.0
        %2788 = vmatprep.subr.mxu0 0.0
        %2789 = vmatpush1.msra.mxu0 0.0
        %2790 = vmatprep.subr.mxu0 0.0
        %2791 = vmatpush1.msra.mxu0 0.0
        %2792 = vmatprep.subr.mxu0 0.0
        %2793 = vmatpush1.msra.mxu0 0.0
        %2794 = vmatprep.subr.mxu0 0.0
        %2795 = vmatpush1.msra.mxu0 0.0
        %2796 = vmatprep.subr.mxu0 0.0
        %2797 = vmatpush1.msra.mxu0 0.0
        %2798 = vmatprep.subr.mxu0 0.0
        %2799 = vmatpush1.msra.mxu0 0.0
        %2800 = vmatprep.subr.mxu0 0.0
        %2801 = vmatpush1.msra.mxu0 0.0
        %2802 = vmatprep.subr.mxu0 0.0
        %2803 = vmatpush1.msra.mxu0 0.0
        %2804 = vmatprep.subr.mxu0 0.0
        %2805 = vmatpush1.msra.mxu0 0.0
        %2806 = vmatprep.subr.mxu0 0.0
        %2807 = vmatpush1.msra.mxu0 0.0
        %2808 = vmatprep.subr.mxu0 0.0
        %2809 = vmatpush1.msra.mxu0 0.0
        %2810 = vmatprep.subr.mxu0 0.0
        %2811 = vmatpush1.msra.mxu0 0.0
        %2812 = vmatprep.subr.mxu0 0.0
        %2813 = vmatpush1.msra.mxu0 0.0
        %2814 = vmatprep.subr.mxu0 0.0
        %2815 = vmatpush1.msra.mxu0 0.0
        %2816 = vmatprep.subr.mxu0 0.0
        %2817 = vmatpush1.msra.mxu0 0.0
        %2818 = vmatprep.subr.mxu0 0.0
        %2819 = vmatpush1.msra.mxu0 0.0
        %2820 = vmatprep.subr.mxu0 0.0
        %2821 = vmatpush1.msra.mxu0 0.0
        %2822 = vmatprep.subr.mxu0 0.0
        %2823 = vmatpush1.msra.mxu0 0.0
        %2824 = vmatprep.subr.mxu0 0.0
        %2825 = vmatpush1.msra.mxu0 0.0
        %2826 = vmatprep.subr.mxu0 0.0
        %2827 = vmatpush1.msra.mxu0 0.0
        %2828 = vmatprep.subr.mxu0 0.0
        %2829 = vmatpush1.msra.mxu0 0.0
        %2830 = vmatprep.subr.mxu0 0.0
        %2831 = vmatpush1.msra.mxu0 0.0
        %2832 = vmatprep.subr.mxu0 0.0
        %2833 = vmatpush1.msra.mxu0 0.0
        %2834 = vmatprep.subr.mxu0 0.0
        %2835 = vmatpush1.msra.mxu0 0.0
        %2836 = vmatprep.subr.mxu0 0.0
        %2837 = vmatpush1.msra.mxu0 0.0
        %2838 = vmatprep.subr.mxu0 0.0
        %2839 = vmatpush1.msra.mxu0 0.0
        %2840 = vmatprep.subr.mxu0 0.0
        %2841 = vmatpush1.msra.mxu0 0.0
        %2842 = vmatprep.subr.mxu0 0.0
        %2843 = vmatpush1.msra.mxu0 0.0
        %2844 = vmatprep.mubr.f32.mxu0 0.0
        %2845 = vmatmul.mubr.f32.gmra.mrb[0].mxu0 %v2778
        %v2846 = vpop.f32.mrb[0].mxu0
        %v2847 = vadd.f32 0.0, %v2846
        %v2848 = vpop.f32.mrb[0].mxu0
        %2849 = vdwg.mxu0
        %v2850 = vcombine.low %v2628, %v2774
        %v2851 = vcombine.high %v2628, %v2774
        %v2853 = vunpack.c.l.s4 1983009808
        %v2854 = vunpack.c.0.s8 %v2853
        %v2855 = vlaneseq
        %v2856 = vshrl.u32 %v2855, 7
        %v2857 = vsub.s32 %v2854, %v2856
        %v2858 = vrot.slane %v2850, %v2857
        %v2860 = vunpack.c.l.s4 1983009808
        %v2861 = vunpack.c.0.s8 %v2860
        %v2862 = vlaneseq
        %v2863 = vshrl.u32 %v2862, 7
        %v2864 = vsub.s32 %v2861, %v2863
        %v2865 = vrot.slane %v2851, %v2864
        %v2866 = vcombine.low %v2701, %v2847
        %v2867 = vcombine.high %v2701, %v2847
        %v2869 = vunpack.c.l.s4 1983009808
        %v2870 = vunpack.c.0.s8 %v2869
        %v2871 = vlaneseq
        %v2872 = vshrl.u32 %v2871, 7
        %v2873 = vsub.s32 %v2870, %v2872
        %v2874 = vrot.slane %v2866, %v2873
        %v2876 = vunpack.c.l.s4 1983009808
        %v2877 = vunpack.c.0.s8 %v2876
        %v2878 = vlaneseq
        %v2879 = vshrl.u32 %v2878, 7
        %v2880 = vsub.s32 %v2877, %v2879
        %v2881 = vrot.slane %v2867, %v2880
        %v2882 = vcombine.low %v2858, %v2874
        %v2883 = vcombine.high %v2858, %v2874
        %v2885 = vunpack.c.l.s4 1934713408
        %v2886 = vunpack.c.0.s8 %v2885
        %v2887 = vlaneseq
        %v2888 = vshrl.u32 %v2887, 7
        %v2889 = vsub.s32 %v2886, %v2888
        %v2890 = vrot.slane %v2882, %v2889
        %v2892 = vunpack.c.l.s4 1934713408
        %v2893 = vunpack.c.0.s8 %v2892
        %v2894 = vlaneseq
        %v2895 = vshrl.u32 %v2894, 7
        %v2896 = vsub.s32 %v2893, %v2895
        %v2897 = vrot.slane %v2883, %v2896
        %v2898 = vcombine.low %v2865, %v2881
        %v2899 = vcombine.high %v2865, %v2881
        %v2901 = vunpack.c.l.s4 1934713408
        %v2902 = vunpack.c.0.s8 %v2901
        %v2903 = vlaneseq
        %v2904 = vshrl.u32 %v2903, 7
        %v2905 = vsub.s32 %v2902, %v2904
        %v2906 = vrot.slane %v2898, %v2905
        %v2908 = vunpack.c.l.s4 1934713408
        %v2909 = vunpack.c.0.s8 %v2908
        %v2910 = vlaneseq
        %v2911 = vshrl.u32 %v2910, 7
        %v2912 = vsub.s32 %v2909, %v2911
        %v2913 = vrot.slane %v2899, %v2912
        %v2914 = vcombine.high %v2890, 0.0
        %v2915 = vcombine.high %v2897, 0.0
        %v2916 = vcombine.high %v2906, 0.0
        %v2917 = vcombine.high %v2913, 0.0
        %v2918 = vcombine.low %v2890, %v2897
        %v2920 = vunpack.c.l.s4 1983009808
        %v2921 = vunpack.c.0.s8 %v2920
        %v2922 = vlaneseq
        %v2923 = vshrl.u32 %v2922, 7
        %v2924 = vsub.s32 %v2921, %v2923
        %v2925 = vrot.slane %v2918, %v2924
        %v2926 = vcombine.low %v2914, %v2915
        %v2928 = vunpack.c.l.s4 1983009808
        %v2929 = vunpack.c.0.s8 %v2928
        %v2930 = vlaneseq
        %v2931 = vshrl.u32 %v2930, 7
        %v2932 = vsub.s32 %v2929, %v2931
        %v2933 = vrot.slane %v2926, %v2932
        %v2934 = vcombine.low %v2906, %v2913
        %v2936 = vunpack.c.l.s4 1983009808
        %v2937 = vunpack.c.0.s8 %v2936
        %v2938 = vlaneseq
        %v2939 = vshrl.u32 %v2938, 7
        %v2940 = vsub.s32 %v2937, %v2939
        %v2941 = vrot.slane %v2934, %v2940
        %v2942 = vcombine.low %v2916, %v2917
        %v2944 = vunpack.c.l.s4 1983009808
        %v2945 = vunpack.c.0.s8 %v2944
        %v2946 = vlaneseq
        %v2947 = vshrl.u32 %v2946, 7
        %v2948 = vsub.s32 %v2945, %v2947
        %v2949 = vrot.slane %v2942, %v2948
        %v2950 = vcombine.low %v2925, %v2933
        %v2951 = vcombine.high %v2925, %v2933
        %v2953 = vunpack.c.l.s4 1934713408
        %v2954 = vunpack.c.0.s8 %v2953
        %v2955 = vlaneseq
        %v2956 = vshrl.u32 %v2955, 7
        %v2957 = vsub.s32 %v2954, %v2956
        %v2958 = vrot.slane %v2950, %v2957
        %v2960 = vunpack.c.l.s4 1934713408
        %v2961 = vunpack.c.0.s8 %v2960
        %v2962 = vlaneseq
        %v2963 = vshrl.u32 %v2962, 7
        %v2964 = vsub.s32 %v2961, %v2963
        %v2965 = vrot.slane %v2951, %v2964
        %v2966 = vcombine.low %v2941, %v2949
        %v2967 = vcombine.high %v2941, %v2949
        %v2969 = vunpack.c.l.s4 1934713408
        %v2970 = vunpack.c.0.s8 %v2969
        %v2971 = vlaneseq
        %v2972 = vshrl.u32 %v2971, 7
        %v2973 = vsub.s32 %v2970, %v2972
        %v2974 = vrot.slane %v2966, %v2973
        %v2976 = vunpack.c.l.s4 1934713408
        %v2977 = vunpack.c.0.s8 %v2976
        %v2978 = vlaneseq
        %v2979 = vshrl.u32 %v2978, 7
        %v2980 = vsub.s32 %v2977, %v2979
        %v2981 = vrot.slane %v2967, %v2980
        %v2982 = vcombine.low %v2958, %v2974
        %v2983 = vcombine.high %v2958, %v2974
        %v2984 = vcombine.low %v2965, %v2981
        %v2985 = vcombine.high %v2965, %v2981
        %2987 = vrot.lane.b32.xlu0 %v2983, 32
        %v2988 = vpop.permute.xlu0 %2987
        %2991 = vrot.lane.b32.xlu0 %v2984, 64
        %v2992 = vpop.permute.xlu0 %2991
        %2995 = vrot.lane.b32.xlu0 %v2985, 96
        %v2996 = vpop.permute.xlu0 %2995
        %v2998 = vsel %vm2200, %v2982, %v2988
        %vm2999 = vcmask 523264
        %v3000 = vsel %vm2999, %v2998, %v2992
        %vm3001 = vcmask 785408
        %v3002 = vsel %vm3001, %v3000, %v2996
        %3004 = vrot.lane.b32.xlu0 %v1717, 96
        %v3005 = vpop.permute.xlu0 %3004
        %3007 = vrot.lane.b32.xlu0 %v1717, 64
        %v3008 = vpop.permute.xlu0 %3007
        %3010 = vrot.lane.b32.xlu0 %v1717, 32
        %v3011 = vpop.permute.xlu0 %3010
        %v3013 = vcombine.low %v1717, %v3008
        %v3014 = vcombine.high %v1717, %v3008
        %v3016 = vunpack.c.l.s4 1983009808
        %v3017 = vunpack.c.0.s8 %v3016
        %v3018 = vlaneseq
        %v3019 = vshrl.u32 %v3018, 7
        %v3020 = vsub.s32 %v3017, %v3019
        %v3021 = vrot.slane %v3013, %v3020
        %v3023 = vunpack.c.l.s4 1983009808
        %v3024 = vunpack.c.0.s8 %v3023
        %v3025 = vlaneseq
        %v3026 = vshrl.u32 %v3025, 7
        %v3027 = vsub.s32 %v3024, %v3026
        %v3028 = vrot.slane %v3014, %v3027
        %v3029 = vcombine.low %v3005, %v3011
        %v3030 = vcombine.high %v3005, %v3011
        %v3032 = vunpack.c.l.s4 1983009808
        %v3033 = vunpack.c.0.s8 %v3032
        %v3034 = vlaneseq
        %v3035 = vshrl.u32 %v3034, 7
        %v3036 = vsub.s32 %v3033, %v3035
        %v3037 = vrot.slane %v3029, %v3036
        %v3039 = vunpack.c.l.s4 1983009808
        %v3040 = vunpack.c.0.s8 %v3039
        %v3041 = vlaneseq
        %v3042 = vshrl.u32 %v3041, 7
        %v3043 = vsub.s32 %v3040, %v3042
        %v3044 = vrot.slane %v3030, %v3043
        %v3045 = vcombine.low %v3021, %v3037
        %v3046 = vcombine.high %v3021, %v3037
        %v3048 = vunpack.c.l.s4 1934713408
        %v3049 = vunpack.c.0.s8 %v3048
        %v3050 = vlaneseq
        %v3051 = vshrl.u32 %v3050, 7
        %v3052 = vsub.s32 %v3049, %v3051
        %v3053 = vrot.slane %v3045, %v3052
        %v3055 = vunpack.c.l.s4 1934713408
        %v3056 = vunpack.c.0.s8 %v3055
        %v3057 = vlaneseq
        %v3058 = vshrl.u32 %v3057, 7
        %v3059 = vsub.s32 %v3056, %v3058
        %v3060 = vrot.slane %v3046, %v3059
        %v3061 = vcombine.low %v3028, %v3044
        %v3062 = vcombine.high %v3028, %v3044
        %v3064 = vunpack.c.l.s4 1934713408
        %v3065 = vunpack.c.0.s8 %v3064
        %v3066 = vlaneseq
        %v3067 = vshrl.u32 %v3066, 7
        %v3068 = vsub.s32 %v3065, %v3067
        %v3069 = vrot.slane %v3061, %v3068
        %v3071 = vunpack.c.l.s4 1934713408
        %v3072 = vunpack.c.0.s8 %v3071
        %v3073 = vlaneseq
        %v3074 = vshrl.u32 %v3073, 7
        %v3075 = vsub.s32 %v3072, %v3074
        %v3076 = vrot.slane %v3062, %v3075
        %v3077 = vcombine.high %v3053, 0.0
        %v3078 = vcombine.high %v3060, 0.0
        %v3079 = vcombine.high %v3069, 0.0
        %v3080 = vcombine.high %v3076, 0.0
        %v3081 = vcombine.low %v3053, %v3060
        %v3083 = vunpack.c.l.s4 1983009808
        %v3084 = vunpack.c.0.s8 %v3083
        %v3085 = vlaneseq
        %v3086 = vshrl.u32 %v3085, 7
        %v3087 = vsub.s32 %v3084, %v3086
        %v3088 = vrot.slane %v3081, %v3087
        %v3089 = vcombine.low %v3077, %v3078
        %v3091 = vunpack.c.l.s4 1983009808
        %v3092 = vunpack.c.0.s8 %v3091
        %v3093 = vlaneseq
        %v3094 = vshrl.u32 %v3093, 7
        %v3095 = vsub.s32 %v3092, %v3094
        %v3096 = vrot.slane %v3089, %v3095
        %v3097 = vcombine.low %v3069, %v3076
        %v3099 = vunpack.c.l.s4 1983009808
        %v3100 = vunpack.c.0.s8 %v3099
        %v3101 = vlaneseq
        %v3102 = vshrl.u32 %v3101, 7
        %v3103 = vsub.s32 %v3100, %v3102
        %v3104 = vrot.slane %v3097, %v3103
        %v3105 = vcombine.low %v3079, %v3080
        %v3107 = vunpack.c.l.s4 1983009808
        %v3108 = vunpack.c.0.s8 %v3107
        %v3109 = vlaneseq
        %v3110 = vshrl.u32 %v3109, 7
        %v3111 = vsub.s32 %v3108, %v3110
        %v3112 = vrot.slane %v3105, %v3111
        %v3113 = vcombine.low %v3088, %v3096
        %v3114 = vcombine.high %v3088, %v3096
        %v3116 = vunpack.c.l.s4 1934713408
        %v3117 = vunpack.c.0.s8 %v3116
        %v3118 = vlaneseq
        %v3119 = vshrl.u32 %v3118, 7
        %v3120 = vsub.s32 %v3117, %v3119
        %v3121 = vrot.slane %v3113, %v3120
        %v3123 = vunpack.c.l.s4 1934713408
        %v3124 = vunpack.c.0.s8 %v3123
        %v3125 = vlaneseq
        %v3126 = vshrl.u32 %v3125, 7
        %v3127 = vsub.s32 %v3124, %v3126
        %v3128 = vrot.slane %v3114, %v3127
        %v3129 = vcombine.low %v3104, %v3112
        %v3130 = vcombine.high %v3104, %v3112
        %v3132 = vunpack.c.l.s4 1934713408
        %v3133 = vunpack.c.0.s8 %v3132
        %v3134 = vlaneseq
        %v3135 = vshrl.u32 %v3134, 7
        %v3136 = vsub.s32 %v3133, %v3135
        %v3137 = vrot.slane %v3129, %v3136
        %v3139 = vunpack.c.l.s4 1934713408
        %v3140 = vunpack.c.0.s8 %v3139
        %v3141 = vlaneseq
        %v3142 = vshrl.u32 %v3141, 7
        %v3143 = vsub.s32 %v3140, %v3142
        %v3144 = vrot.slane %v3130, %v3143
        %v3145 = vcombine.low %v3121, %v3137
        %v3146 = vcombine.high %v3121, %v3137
        %v3147 = vcombine.low %v3128, %v3144
        %v3148 = vcombine.high %v3128, %v3144
        %3150 = vrot.lane.b32.xlu0 %v1719, 96
        %v3151 = vpop.permute.xlu0 %3150
        %3153 = vrot.lane.b32.xlu0 %v1719, 64
        %v3154 = vpop.permute.xlu0 %3153
        %3156 = vrot.lane.b32.xlu0 %v1719, 32
        %v3157 = vpop.permute.xlu0 %3156
        %v3159 = vcombine.low %v1719, %v3154
        %v3160 = vcombine.high %v1719, %v3154
        %v3162 = vunpack.c.l.s4 1983009808
        %v3163 = vunpack.c.0.s8 %v3162
        %v3164 = vlaneseq
        %v3165 = vshrl.u32 %v3164, 7
        %v3166 = vsub.s32 %v3163, %v3165
        %v3167 = vrot.slane %v3159, %v3166
        %v3169 = vunpack.c.l.s4 1983009808
        %v3170 = vunpack.c.0.s8 %v3169
        %v3171 = vlaneseq
        %v3172 = vshrl.u32 %v3171, 7
        %v3173 = vsub.s32 %v3170, %v3172
        %v3174 = vrot.slane %v3160, %v3173
        %v3175 = vcombine.low %v3151, %v3157
        %v3176 = vcombine.high %v3151, %v3157
        %v3178 = vunpack.c.l.s4 1983009808
        %v3179 = vunpack.c.0.s8 %v3178
        %v3180 = vlaneseq
        %v3181 = vshrl.u32 %v3180, 7
        %v3182 = vsub.s32 %v3179, %v3181
        %v3183 = vrot.slane %v3175, %v3182
        %v3185 = vunpack.c.l.s4 1983009808
        %v3186 = vunpack.c.0.s8 %v3185
        %v3187 = vlaneseq
        %v3188 = vshrl.u32 %v3187, 7
        %v3189 = vsub.s32 %v3186, %v3188
        %v3190 = vrot.slane %v3176, %v3189
        %v3191 = vcombine.low %v3167, %v3183
        %v3192 = vcombine.high %v3167, %v3183
        %v3194 = vunpack.c.l.s4 1934713408
        %v3195 = vunpack.c.0.s8 %v3194
        %v3196 = vlaneseq
        %v3197 = vshrl.u32 %v3196, 7
        %v3198 = vsub.s32 %v3195, %v3197
        %v3199 = vrot.slane %v3191, %v3198
        %v3201 = vunpack.c.l.s4 1934713408
        %v3202 = vunpack.c.0.s8 %v3201
        %v3203 = vlaneseq
        %v3204 = vshrl.u32 %v3203, 7
        %v3205 = vsub.s32 %v3202, %v3204
        %v3206 = vrot.slane %v3192, %v3205
        %v3207 = vcombine.low %v3174, %v3190
        %v3208 = vcombine.high %v3174, %v3190
        %v3210 = vunpack.c.l.s4 1934713408
        %v3211 = vunpack.c.0.s8 %v3210
        %v3212 = vlaneseq
        %v3213 = vshrl.u32 %v3212, 7
        %v3214 = vsub.s32 %v3211, %v3213
        %v3215 = vrot.slane %v3207, %v3214
        %v3217 = vunpack.c.l.s4 1934713408
        %v3218 = vunpack.c.0.s8 %v3217
        %v3219 = vlaneseq
        %v3220 = vshrl.u32 %v3219, 7
        %v3221 = vsub.s32 %v3218, %v3220
        %v3222 = vrot.slane %v3208, %v3221
        %v3223 = vcombine.high %v3199, 0.0
        %v3224 = vcombine.high %v3206, 0.0
        %v3225 = vcombine.high %v3215, 0.0
        %v3226 = vcombine.high %v3222, 0.0
        %v3227 = vcombine.low %v3199, %v3206
        %v3229 = vunpack.c.l.s4 1983009808
        %v3230 = vunpack.c.0.s8 %v3229
        %v3231 = vlaneseq
        %v3232 = vshrl.u32 %v3231, 7
        %v3233 = vsub.s32 %v3230, %v3232
        %v3234 = vrot.slane %v3227, %v3233
        %v3235 = vcombine.low %v3223, %v3224
        %v3237 = vunpack.c.l.s4 1983009808
        %v3238 = vunpack.c.0.s8 %v3237
        %v3239 = vlaneseq
        %v3240 = vshrl.u32 %v3239, 7
        %v3241 = vsub.s32 %v3238, %v3240
        %v3242 = vrot.slane %v3235, %v3241
        %v3243 = vcombine.low %v3215, %v3222
        %v3245 = vunpack.c.l.s4 1983009808
        %v3246 = vunpack.c.0.s8 %v3245
        %v3247 = vlaneseq
        %v3248 = vshrl.u32 %v3247, 7
        %v3249 = vsub.s32 %v3246, %v3248
        %v3250 = vrot.slane %v3243, %v3249
        %v3251 = vcombine.low %v3225, %v3226
        %v3253 = vunpack.c.l.s4 1983009808
        %v3254 = vunpack.c.0.s8 %v3253
        %v3255 = vlaneseq
        %v3256 = vshrl.u32 %v3255, 7
        %v3257 = vsub.s32 %v3254, %v3256
        %v3258 = vrot.slane %v3251, %v3257
        %v3259 = vcombine.low %v3234, %v3242
        %v3260 = vcombine.high %v3234, %v3242
        %v3262 = vunpack.c.l.s4 1934713408
        %v3263 = vunpack.c.0.s8 %v3262
        %v3264 = vlaneseq
        %v3265 = vshrl.u32 %v3264, 7
        %v3266 = vsub.s32 %v3263, %v3265
        %v3267 = vrot.slane %v3259, %v3266
        %v3269 = vunpack.c.l.s4 1934713408
        %v3270 = vunpack.c.0.s8 %v3269
        %v3271 = vlaneseq
        %v3272 = vshrl.u32 %v3271, 7
        %v3273 = vsub.s32 %v3270, %v3272
        %v3274 = vrot.slane %v3260, %v3273
        %v3275 = vcombine.low %v3250, %v3258
        %v3276 = vcombine.high %v3250, %v3258
        %v3278 = vunpack.c.l.s4 1934713408
        %v3279 = vunpack.c.0.s8 %v3278
        %v3280 = vlaneseq
        %v3281 = vshrl.u32 %v3280, 7
        %v3282 = vsub.s32 %v3279, %v3281
        %v3283 = vrot.slane %v3275, %v3282
        %v3285 = vunpack.c.l.s4 1934713408
        %v3286 = vunpack.c.0.s8 %v3285
        %v3287 = vlaneseq
        %v3288 = vshrl.u32 %v3287, 7
        %v3289 = vsub.s32 %v3286, %v3288
        %v3290 = vrot.slane %v3276, %v3289
        %v3291 = vcombine.low %v3267, %v3283
        %v3292 = vcombine.high %v3267, %v3283
        %v3293 = vcombine.low %v3274, %v3290
        %v3294 = vcombine.high %v3274, %v3290
        %3296 = vrot.lane.b32.xlu0 %v1759, 96
        %v3297 = vpop.permute.xlu0 %3296
        %3299 = vrot.lane.b32.xlu0 %v1759, 64
        %v3300 = vpop.permute.xlu0 %3299
        %3302 = vrot.lane.b32.xlu0 %v1759, 32
        %v3303 = vpop.permute.xlu0 %3302
        %v3305 = vcombine.low %v1759, %v3300
        %v3306 = vcombine.high %v1759, %v3300
        %v3308 = vunpack.c.l.s4 1983009808
        %v3309 = vunpack.c.0.s8 %v3308
        %v3310 = vlaneseq
        %v3311 = vshrl.u32 %v3310, 7
        %v3312 = vsub.s32 %v3309, %v3311
        %v3313 = vrot.slane %v3305, %v3312
        %v3315 = vunpack.c.l.s4 1983009808
        %v3316 = vunpack.c.0.s8 %v3315
        %v3317 = vlaneseq
        %v3318 = vshrl.u32 %v3317, 7
        %v3319 = vsub.s32 %v3316, %v3318
        %v3320 = vrot.slane %v3306, %v3319
        %v3321 = vcombine.low %v3297, %v3303
        %v3322 = vcombine.high %v3297, %v3303
        %v3324 = vunpack.c.l.s4 1983009808
        %v3325 = vunpack.c.0.s8 %v3324
        %v3326 = vlaneseq
        %v3327 = vshrl.u32 %v3326, 7
        %v3328 = vsub.s32 %v3325, %v3327
        %v3329 = vrot.slane %v3321, %v3328
        %v3331 = vunpack.c.l.s4 1983009808
        %v3332 = vunpack.c.0.s8 %v3331
        %v3333 = vlaneseq
        %v3334 = vshrl.u32 %v3333, 7
        %v3335 = vsub.s32 %v3332, %v3334
        %v3336 = vrot.slane %v3322, %v3335
        %v3337 = vcombine.low %v3313, %v3329
        %v3338 = vcombine.high %v3313, %v3329
        %v3340 = vunpack.c.l.s4 1934713408
        %v3341 = vunpack.c.0.s8 %v3340
        %v3342 = vlaneseq
        %v3343 = vshrl.u32 %v3342, 7
        %v3344 = vsub.s32 %v3341, %v3343
        %v3345 = vrot.slane %v3337, %v3344
        %v3347 = vunpack.c.l.s4 1934713408
        %v3348 = vunpack.c.0.s8 %v3347
        %v3349 = vlaneseq
        %v3350 = vshrl.u32 %v3349, 7
        %v3351 = vsub.s32 %v3348, %v3350
        %v3352 = vrot.slane %v3338, %v3351
        %v3353 = vcombine.low %v3320, %v3336
        %v3354 = vcombine.high %v3320, %v3336
        %v3356 = vunpack.c.l.s4 1934713408
        %v3357 = vunpack.c.0.s8 %v3356
        %v3358 = vlaneseq
        %v3359 = vshrl.u32 %v3358, 7
        %v3360 = vsub.s32 %v3357, %v3359
        %v3361 = vrot.slane %v3353, %v3360
        %v3363 = vunpack.c.l.s4 1934713408
        %v3364 = vunpack.c.0.s8 %v3363
        %v3365 = vlaneseq
        %v3366 = vshrl.u32 %v3365, 7
        %v3367 = vsub.s32 %v3364, %v3366
        %v3368 = vrot.slane %v3354, %v3367
        %v3369 = vcombine.high %v3345, 0.0
        %v3370 = vcombine.high %v3352, 0.0
        %v3371 = vcombine.high %v3361, 0.0
        %v3372 = vcombine.high %v3368, 0.0
        %v3373 = vcombine.low %v3345, %v3352
        %v3375 = vunpack.c.l.s4 1983009808
        %v3376 = vunpack.c.0.s8 %v3375
        %v3377 = vlaneseq
        %v3378 = vshrl.u32 %v3377, 7
        %v3379 = vsub.s32 %v3376, %v3378
        %v3380 = vrot.slane %v3373, %v3379
        %v3381 = vcombine.low %v3369, %v3370
        %v3383 = vunpack.c.l.s4 1983009808
        %v3384 = vunpack.c.0.s8 %v3383
        %v3385 = vlaneseq
        %v3386 = vshrl.u32 %v3385, 7
        %v3387 = vsub.s32 %v3384, %v3386
        %v3388 = vrot.slane %v3381, %v3387
        %v3389 = vcombine.low %v3361, %v3368
        %v3391 = vunpack.c.l.s4 1983009808
        %v3392 = vunpack.c.0.s8 %v3391
        %v3393 = vlaneseq
        %v3394 = vshrl.u32 %v3393, 7
        %v3395 = vsub.s32 %v3392, %v3394
        %v3396 = vrot.slane %v3389, %v3395
        %v3397 = vcombine.low %v3371, %v3372
        %v3399 = vunpack.c.l.s4 1983009808
        %v3400 = vunpack.c.0.s8 %v3399
        %v3401 = vlaneseq
        %v3402 = vshrl.u32 %v3401, 7
        %v3403 = vsub.s32 %v3400, %v3402
        %v3404 = vrot.slane %v3397, %v3403
        %v3405 = vcombine.low %v3380, %v3388
        %v3406 = vcombine.high %v3380, %v3388
        %v3408 = vunpack.c.l.s4 1934713408
        %v3409 = vunpack.c.0.s8 %v3408
        %v3410 = vlaneseq
        %v3411 = vshrl.u32 %v3410, 7
        %v3412 = vsub.s32 %v3409, %v3411
        %v3413 = vrot.slane %v3405, %v3412
        %v3415 = vunpack.c.l.s4 1934713408
        %v3416 = vunpack.c.0.s8 %v3415
        %v3417 = vlaneseq
        %v3418 = vshrl.u32 %v3417, 7
        %v3419 = vsub.s32 %v3416, %v3418
        %v3420 = vrot.slane %v3406, %v3419
        %v3421 = vcombine.low %v3396, %v3404
        %v3422 = vcombine.high %v3396, %v3404
        %v3424 = vunpack.c.l.s4 1934713408
        %v3425 = vunpack.c.0.s8 %v3424
        %v3426 = vlaneseq
        %v3427 = vshrl.u32 %v3426, 7
        %v3428 = vsub.s32 %v3425, %v3427
        %v3429 = vrot.slane %v3421, %v3428
        %v3431 = vunpack.c.l.s4 1934713408
        %v3432 = vunpack.c.0.s8 %v3431
        %v3433 = vlaneseq
        %v3434 = vshrl.u32 %v3433, 7
        %v3435 = vsub.s32 %v3432, %v3434
        %v3436 = vrot.slane %v3422, %v3435
        %v3437 = vcombine.low %v3413, %v3429
        %v3438 = vcombine.high %v3413, %v3429
        %v3439 = vcombine.low %v3420, %v3436
        %v3440 = vcombine.high %v3420, %v3436
        %v3442 = vsel %vm2200, %v3145, 0
        %v3445 = vsel %vm2200, %v3291, 0
        %3447 = vmatprep.subr.mxu0 0.0
        %3448 = vmatpush1.xpose.msra.mxu0 %v3445
        %3449 = vmatprep.subr.mxu0 0.0
        %3450 = vmatpush1.xpose.msra.mxu0 0.0
        %3451 = vmatprep.subr.mxu0 0.0
        %3452 = vmatpush1.xpose.msra.mxu0 0.0
        %3453 = vmatprep.subr.mxu0 0.0
        %3454 = vmatpush1.xpose.msra.mxu0 0.0
        %3455 = vmatprep.subr.mxu0 0.0
        %3456 = vmatpush1.xpose.msra.mxu0 0.0
        %3457 = vmatprep.subr.mxu0 0.0
        %3458 = vmatpush1.xpose.msra.mxu0 0.0
        %3459 = vmatprep.subr.mxu0 0.0
        %3460 = vmatpush1.xpose.msra.mxu0 0.0
        %3461 = vmatprep.subr.mxu0 0.0
        %3462 = vmatpush1.xpose.msra.mxu0 0.0
        %3463 = vmatprep.subr.mxu0 0.0
        %3464 = vmatpush1.xpose.msra.mxu0 0.0
        %3465 = vmatprep.subr.mxu0 0.0
        %3466 = vmatpush1.xpose.msra.mxu0 0.0
        %3467 = vmatprep.subr.mxu0 0.0
        %3468 = vmatpush1.xpose.msra.mxu0 0.0
        %3469 = vmatprep.subr.mxu0 0.0
        %3470 = vmatpush1.xpose.msra.mxu0 0.0
        %3471 = vmatprep.subr.mxu0 0.0
        %3472 = vmatpush1.xpose.msra.mxu0 0.0
        %3473 = vmatprep.subr.mxu0 0.0
        %3474 = vmatpush1.xpose.msra.mxu0 0.0
        %3475 = vmatprep.subr.mxu0 0.0
        %3476 = vmatpush1.xpose.msra.mxu0 0.0
        %3477 = vmatprep.subr.mxu0 0.0
        %3478 = vmatpush1.xpose.msra.mxu0 0.0
        %3479 = vmatprep.subr.mxu0 0.0
        %3480 = vmatpush1.xpose.msra.mxu0 0.0
        %3481 = vmatprep.subr.mxu0 0.0
        %3482 = vmatpush1.xpose.msra.mxu0 0.0
        %3483 = vmatprep.subr.mxu0 0.0
        %3484 = vmatpush1.xpose.msra.mxu0 0.0
        %3485 = vmatprep.subr.mxu0 0.0
        %3486 = vmatpush1.xpose.msra.mxu0 0.0
        %3487 = vmatprep.subr.mxu0 0.0
        %3488 = vmatpush1.xpose.msra.mxu0 0.0
        %3489 = vmatprep.subr.mxu0 0.0
        %3490 = vmatpush1.xpose.msra.mxu0 0.0
        %3491 = vmatprep.subr.mxu0 0.0
        %3492 = vmatpush1.xpose.msra.mxu0 0.0
        %3493 = vmatprep.subr.mxu0 0.0
        %3494 = vmatpush1.xpose.msra.mxu0 0.0
        %3495 = vmatprep.subr.mxu0 0.0
        %3496 = vmatpush1.xpose.msra.mxu0 0.0
        %3497 = vmatprep.subr.mxu0 0.0
        %3498 = vmatpush1.xpose.msra.mxu0 0.0
        %3499 = vmatprep.subr.mxu0 0.0
        %3500 = vmatpush1.xpose.msra.mxu0 0.0
        %3501 = vmatprep.subr.mxu0 0.0
        %3502 = vmatpush1.xpose.msra.mxu0 0.0
        %3503 = vmatprep.subr.mxu0 0.0
        %3504 = vmatpush1.xpose.msra.mxu0 0.0
        %3505 = vmatprep.subr.mxu0 0.0
        %3506 = vmatpush1.xpose.msra.mxu0 0.0
        %3507 = vmatprep.subr.mxu0 0.0
        %3508 = vmatpush1.xpose.msra.mxu0 0.0
        %3509 = vmatprep.subr.mxu0 0.0
        %3510 = vmatpush1.xpose.msra.mxu0 0.0
        %3511 = vmatprep.mubr.f32.mxu0 0.0
        %3512 = vmatmul.mubr.f32.gmra.mrb[0].mxu0 %v3442
        %v3513 = vpop.f32.mrb[0].mxu0
        %v3514 = vadd.f32 0.0, %v3513
        %v3515 = vpop.f32.mrb[0].mxu0
        %3516 = vdwg.mxu0
        %v3518 = vsel %vm2200, %v3146, 0
        %v3521 = vsel %vm2200, %v3292, 0
        %3523 = vmatprep.subr.mxu0 0.0
        %3524 = vmatpush1.xpose.msra.mxu0 %v3521
        %3525 = vmatprep.subr.mxu0 0.0
        %3526 = vmatpush1.xpose.msra.mxu0 0.0
        %3527 = vmatprep.subr.mxu0 0.0
        %3528 = vmatpush1.xpose.msra.mxu0 0.0
        %3529 = vmatprep.subr.mxu0 0.0
        %3530 = vmatpush1.xpose.msra.mxu0 0.0
        %3531 = vmatprep.subr.mxu0 0.0
        %3532 = vmatpush1.xpose.msra.mxu0 0.0
        %3533 = vmatprep.subr.mxu0 0.0
        %3534 = vmatpush1.xpose.msra.mxu0 0.0
        %3535 = vmatprep.subr.mxu0 0.0
        %3536 = vmatpush1.xpose.msra.mxu0 0.0
        %3537 = vmatprep.subr.mxu0 0.0
        %3538 = vmatpush1.xpose.msra.mxu0 0.0
        %3539 = vmatprep.subr.mxu0 0.0
        %3540 = vmatpush1.xpose.msra.mxu0 0.0
        %3541 = vmatprep.subr.mxu0 0.0
        %3542 = vmatpush1.xpose.msra.mxu0 0.0
        %3543 = vmatprep.subr.mxu0 0.0
        %3544 = vmatpush1.xpose.msra.mxu0 0.0
        %3545 = vmatprep.subr.mxu0 0.0
        %3546 = vmatpush1.xpose.msra.mxu0 0.0
        %3547 = vmatprep.subr.mxu0 0.0
        %3548 = vmatpush1.xpose.msra.mxu0 0.0
        %3549 = vmatprep.subr.mxu0 0.0
        %3550 = vmatpush1.xpose.msra.mxu0 0.0
        %3551 = vmatprep.subr.mxu0 0.0
        %3552 = vmatpush1.xpose.msra.mxu0 0.0
        %3553 = vmatprep.subr.mxu0 0.0
        %3554 = vmatpush1.xpose.msra.mxu0 0.0
        %3555 = vmatprep.subr.mxu0 0.0
        %3556 = vmatpush1.xpose.msra.mxu0 0.0
        %3557 = vmatprep.subr.mxu0 0.0
        %3558 = vmatpush1.xpose.msra.mxu0 0.0
        %3559 = vmatprep.subr.mxu0 0.0
        %3560 = vmatpush1.xpose.msra.mxu0 0.0
        %3561 = vmatprep.subr.mxu0 0.0
        %3562 = vmatpush1.xpose.msra.mxu0 0.0
        %3563 = vmatprep.subr.mxu0 0.0
        %3564 = vmatpush1.xpose.msra.mxu0 0.0
        %3565 = vmatprep.subr.mxu0 0.0
        %3566 = vmatpush1.xpose.msra.mxu0 0.0
        %3567 = vmatprep.subr.mxu0 0.0
        %3568 = vmatpush1.xpose.msra.mxu0 0.0
        %3569 = vmatprep.subr.mxu0 0.0
        %3570 = vmatpush1.xpose.msra.mxu0 0.0
        %3571 = vmatprep.subr.mxu0 0.0
        %3572 = vmatpush1.xpose.msra.mxu0 0.0
        %3573 = vmatprep.subr.mxu0 0.0
        %3574 = vmatpush1.xpose.msra.mxu0 0.0
        %3575 = vmatprep.subr.mxu0 0.0
        %3576 = vmatpush1.xpose.msra.mxu0 0.0
        %3577 = vmatprep.subr.mxu0 0.0
        %3578 = vmatpush1.xpose.msra.mxu0 0.0
        %3579 = vmatprep.subr.mxu0 0.0
        %3580 = vmatpush1.xpose.msra.mxu0 0.0
        %3581 = vmatprep.subr.mxu0 0.0
        %3582 = vmatpush1.xpose.msra.mxu0 0.0
        %3583 = vmatprep.subr.mxu0 0.0
        %3584 = vmatpush1.xpose.msra.mxu0 0.0
        %3585 = vmatprep.subr.mxu0 0.0
        %3586 = vmatpush1.xpose.msra.mxu0 0.0
        %3587 = vmatprep.mubr.f32.mxu0 0.0
        %3588 = vmatmul.mubr.f32.gmra.mrb[0].mxu0 %v3518
        %v3589 = vpop.f32.mrb[0].mxu0
        %v3590 = vadd.f32 0.0, %v3589
        %v3591 = vpop.f32.mrb[0].mxu0
        %3592 = vdwg.mxu0
        %v3594 = vsel %vm2200, %v3147, 0
        %v3597 = vsel %vm2200, %v3293, 0
        %3599 = vmatprep.subr.mxu0 0.0
        %3600 = vmatpush1.xpose.msra.mxu0 %v3597
        %3601 = vmatprep.subr.mxu0 0.0
        %3602 = vmatpush1.xpose.msra.mxu0 0.0
        %3603 = vmatprep.subr.mxu0 0.0
        %3604 = vmatpush1.xpose.msra.mxu0 0.0
        %3605 = vmatprep.subr.mxu0 0.0
        %3606 = vmatpush1.xpose.msra.mxu0 0.0
        %3607 = vmatprep.subr.mxu0 0.0
        %3608 = vmatpush1.xpose.msra.mxu0 0.0
        %3609 = vmatprep.subr.mxu0 0.0
        %3610 = vmatpush1.xpose.msra.mxu0 0.0
        %3611 = vmatprep.subr.mxu0 0.0
        %3612 = vmatpush1.xpose.msra.mxu0 0.0
        %3613 = vmatprep.subr.mxu0 0.0
        %3614 = vmatpush1.xpose.msra.mxu0 0.0
        %3615 = vmatprep.subr.mxu0 0.0
        %3616 = vmatpush1.xpose.msra.mxu0 0.0
        %3617 = vmatprep.subr.mxu0 0.0
        %3618 = vmatpush1.xpose.msra.mxu0 0.0
        %3619 = vmatprep.subr.mxu0 0.0
        %3620 = vmatpush1.xpose.msra.mxu0 0.0
        %3621 = vmatprep.subr.mxu0 0.0
        %3622 = vmatpush1.xpose.msra.mxu0 0.0
        %3623 = vmatprep.subr.mxu0 0.0
        %3624 = vmatpush1.xpose.msra.mxu0 0.0
        %3625 = vmatprep.subr.mxu0 0.0
        %3626 = vmatpush1.xpose.msra.mxu0 0.0
        %3627 = vmatprep.subr.mxu0 0.0
        %3628 = vmatpush1.xpose.msra.mxu0 0.0
        %3629 = vmatprep.subr.mxu0 0.0
        %3630 = vmatpush1.xpose.msra.mxu0 0.0
        %3631 = vmatprep.subr.mxu0 0.0
        %3632 = vmatpush1.xpose.msra.mxu0 0.0
        %3633 = vmatprep.subr.mxu0 0.0
        %3634 = vmatpush1.xpose.msra.mxu0 0.0
        %3635 = vmatprep.subr.mxu0 0.0
        %3636 = vmatpush1.xpose.msra.mxu0 0.0
        %3637 = vmatprep.subr.mxu0 0.0
        %3638 = vmatpush1.xpose.msra.mxu0 0.0
        %3639 = vmatprep.subr.mxu0 0.0
        %3640 = vmatpush1.xpose.msra.mxu0 0.0
        %3641 = vmatprep.subr.mxu0 0.0
        %3642 = vmatpush1.xpose.msra.mxu0 0.0
        %3643 = vmatprep.subr.mxu0 0.0
        %3644 = vmatpush1.xpose.msra.mxu0 0.0
        %3645 = vmatprep.subr.mxu0 0.0
        %3646 = vmatpush1.xpose.msra.mxu0 0.0
        %3647 = vmatprep.subr.mxu0 0.0
        %3648 = vmatpush1.xpose.msra.mxu0 0.0
        %3649 = vmatprep.subr.mxu0 0.0
        %3650 = vmatpush1.xpose.msra.mxu0 0.0
        %3651 = vmatprep.subr.mxu0 0.0
        %3652 = vmatpush1.xpose.msra.mxu0 0.0
        %3653 = vmatprep.subr.mxu0 0.0
        %3654 = vmatpush1.xpose.msra.mxu0 0.0
        %3655 = vmatprep.subr.mxu0 0.0
        %3656 = vmatpush1.xpose.msra.mxu0 0.0
        %3657 = vmatprep.subr.mxu0 0.0
        %3658 = vmatpush1.xpose.msra.mxu0 0.0
        %3659 = vmatprep.subr.mxu0 0.0
        %3660 = vmatpush1.xpose.msra.mxu0 0.0
        %3661 = vmatprep.subr.mxu0 0.0
        %3662 = vmatpush1.xpose.msra.mxu0 0.0
        %3663 = vmatprep.mubr.f32.mxu0 0.0
        %3664 = vmatmul.mubr.f32.gmra.mrb[0].mxu0 %v3594
        %v3665 = vpop.f32.mrb[0].mxu0
        %v3666 = vadd.f32 0.0, %v3665
        %v3667 = vpop.f32.mrb[0].mxu0
        %3668 = vdwg.mxu0
        %v3670 = vsel %vm2200, %v3148, 0
        %v3673 = vsel %vm2200, %v3294, 0
        %3675 = vmatprep.subr.mxu0 0.0
        %3676 = vmatpush1.xpose.msra.mxu0 %v3673
        %3677 = vmatprep.subr.mxu0 0.0
        %3678 = vmatpush1.xpose.msra.mxu0 0.0
        %3679 = vmatprep.subr.mxu0 0.0
        %3680 = vmatpush1.xpose.msra.mxu0 0.0
        %3681 = vmatprep.subr.mxu0 0.0
        %3682 = vmatpush1.xpose.msra.mxu0 0.0
        %3683 = vmatprep.subr.mxu0 0.0
        %3684 = vmatpush1.xpose.msra.mxu0 0.0
        %3685 = vmatprep.subr.mxu0 0.0
        %3686 = vmatpush1.xpose.msra.mxu0 0.0
        %3687 = vmatprep.subr.mxu0 0.0
        %3688 = vmatpush1.xpose.msra.mxu0 0.0
        %3689 = vmatprep.subr.mxu0 0.0
        %3690 = vmatpush1.xpose.msra.mxu0 0.0
        %3691 = vmatprep.subr.mxu0 0.0
        %3692 = vmatpush1.xpose.msra.mxu0 0.0
        %3693 = vmatprep.subr.mxu0 0.0
        %3694 = vmatpush1.xpose.msra.mxu0 0.0
        %3695 = vmatprep.subr.mxu0 0.0
        %3696 = vmatpush1.xpose.msra.mxu0 0.0
        %3697 = vmatprep.subr.mxu0 0.0
        %3698 = vmatpush1.xpose.msra.mxu0 0.0
        %3699 = vmatprep.subr.mxu0 0.0
        %3700 = vmatpush1.xpose.msra.mxu0 0.0
        %3701 = vmatprep.subr.mxu0 0.0
        %3702 = vmatpush1.xpose.msra.mxu0 0.0
        %3703 = vmatprep.subr.mxu0 0.0
        %3704 = vmatpush1.xpose.msra.mxu0 0.0
        %3705 = vmatprep.subr.mxu0 0.0
        %3706 = vmatpush1.xpose.msra.mxu0 0.0
        %3707 = vmatprep.subr.mxu0 0.0
        %3708 = vmatpush1.xpose.msra.mxu0 0.0
        %3709 = vmatprep.subr.mxu0 0.0
        %3710 = vmatpush1.xpose.msra.mxu0 0.0
        %3711 = vmatprep.subr.mxu0 0.0
        %3712 = vmatpush1.xpose.msra.mxu0 0.0
        %3713 = vmatprep.subr.mxu0 0.0
        %3714 = vmatpush1.xpose.msra.mxu0 0.0
        %3715 = vmatprep.subr.mxu0 0.0
        %3716 = vmatpush1.xpose.msra.mxu0 0.0
        %3717 = vmatprep.subr.mxu0 0.0
        %3718 = vmatpush1.xpose.msra.mxu0 0.0
        %3719 = vmatprep.subr.mxu0 0.0
        %3720 = vmatpush1.xpose.msra.mxu0 0.0
        %3721 = vmatprep.subr.mxu0 0.0
        %3722 = vmatpush1.xpose.msra.mxu0 0.0
        %3723 = vmatprep.subr.mxu0 0.0
        %3724 = vmatpush1.xpose.msra.mxu0 0.0
        %3725 = vmatprep.subr.mxu0 0.0
        %3726 = vmatpush1.xpose.msra.mxu0 0.0
        %3727 = vmatprep.subr.mxu0 0.0
        %3728 = vmatpush1.xpose.msra.mxu0 0.0
        %3729 = vmatprep.subr.mxu0 0.0
        %3730 = vmatpush1.xpose.msra.mxu0 0.0
        %3731 = vmatprep.subr.mxu0 0.0
        %3732 = vmatpush1.xpose.msra.mxu0 0.0
        %3733 = vmatprep.subr.mxu0 0.0
        %3734 = vmatpush1.xpose.msra.mxu0 0.0
        %3735 = vmatprep.subr.mxu0 0.0
        %3736 = vmatpush1.xpose.msra.mxu0 0.0
        %3737 = vmatprep.subr.mxu0 0.0
        %3738 = vmatpush1.xpose.msra.mxu0 0.0
        %3739 = vmatprep.mubr.f32.mxu0 0.0
        %3740 = vmatmul.mubr.f32.gmra.mrb[0].mxu0 %v3670
        %v3741 = vpop.f32.mrb[0].mxu0
        %v3742 = vadd.f32 0.0, %v3741
        %v3743 = vpop.f32.mrb[0].mxu0
        %3744 = vdwg.mxu0
        %v3745 = vmul.f32 %v3514, 0.17677669
        %v3746 = vmul.f32 %v3590, 0.17677669
        %v3747 = vmul.f32 %v3666, 0.17677669
        %v3748 = vmul.f32 %v3742, 0.17677669
        %v3749 = vadd.f32 %v3745, %v1530
        %v3750 = vadd.f32 %v3746, %v1530
        %v3751 = vadd.f32 %v3747, %v1530
        %v3752 = vadd.f32 %v3748, %v1530
        %v3753 = vsel %vm2513, %v3749, -inf
        %3754 = vmax.xlane.f32.xlu0 %v3753
        %v3755 = vpop.xlane.xlu0 %3754
        %v3756 = vsel %vm2513, %v3750, -inf
        %3757 = vmax.xlane.f32.xlu0 %v3756
        %v3758 = vpop.xlane.xlu0 %3757
        %v3759 = vsel %vm2513, %v3751, -inf
        %3760 = vmax.xlane.f32.xlu0 %v3759
        %v3761 = vpop.xlane.xlu0 %3760
        %v3762 = vsel %vm2513, %v3752, -inf
        %3763 = vmax.xlane.f32.xlu0 %v3762
        %v3764 = vpop.xlane.xlu0 %3763
        %v3765 = vsub.f32 %v3749, %v3755
        %v3766 = vsub.f32 %v3750, %v3758
        %v3767 = vsub.f32 %v3751, %v3761
        %v3768 = vsub.f32 %v3752, %v3764
        %v3769 = vmul.f32 %v3765, 1.442695
        %v3770 = vpow.pop %v3769
        %v3771 = vmul.f32 %v3766, 1.442695
        %v3772 = vpow.pop %v3771
        %v3773 = vmul.f32 %v3767, 1.442695
        %v3774 = vpow.pop %v3773
        %v3775 = vmul.f32 %v3768, 1.442695
        %v3776 = vpow.pop %v3775
        %v3777 = vsel %vm2513, %v3770, 0.0
        %3778 = vadd.xlane.f32.xlu0 %v3777
        %v3779 = vpop.xlane.xlu0 %3778
        %v3780 = vsel %vm2513, %v3772, 0.0
        %3781 = vadd.xlane.f32.xlu0 %v3780
        %v3782 = vpop.xlane.xlu0 %3781
        %v3783 = vsel %vm2513, %v3774, 0.0
        %3784 = vadd.xlane.f32.xlu0 %v3783
        %v3785 = vpop.xlane.xlu0 %3784
        %v3786 = vsel %vm2513, %v3776, 0.0
        %3787 = vadd.xlane.f32.xlu0 %v3786
        %v3788 = vpop.xlane.xlu0 %3787
        %v3789 = vrcp.pop %v3779
        %v3790 = vrcp.pop %v3782
        %v3791 = vrcp.pop %v3785
        %v3792 = vrcp.pop %v3788
        %v3793 = vmul.f32 %v3770, %v3789
        %v3794 = vmul.f32 %v3772, %v3790
        %v3795 = vmul.f32 %v3774, %v3791
        %v3796 = vmul.f32 %v3776, %v3792
        %v3798 = vsel %vm2513, %v3793, 0
        %3800 = vmatprep.subr.mxu0 0.0
        %3801 = vmatpush1.msra.mxu0 %v3437
        %3802 = vmatprep.subr.mxu0 0.0
        %3803 = vmatpush1.msra.mxu0 0.0
        %3804 = vmatprep.subr.mxu0 0.0
        %3805 = vmatpush1.msra.mxu0 0.0
        %3806 = vmatprep.subr.mxu0 0.0
        %3807 = vmatpush1.msra.mxu0 0.0
        %3808 = vmatprep.subr.mxu0 0.0
        %3809 = vmatpush1.msra.mxu0 0.0
        %3810 = vmatprep.subr.mxu0 0.0
        %3811 = vmatpush1.msra.mxu0 0.0
        %3812 = vmatprep.subr.mxu0 0.0
        %3813 = vmatpush1.msra.mxu0 0.0
        %3814 = vmatprep.subr.mxu0 0.0
        %3815 = vmatpush1.msra.mxu0 0.0
        %3816 = vmatprep.subr.mxu0 0.0
        %3817 = vmatpush1.msra.mxu0 0.0
        %3818 = vmatprep.subr.mxu0 0.0
        %3819 = vmatpush1.msra.mxu0 0.0
        %3820 = vmatprep.subr.mxu0 0.0
        %3821 = vmatpush1.msra.mxu0 0.0
        %3822 = vmatprep.subr.mxu0 0.0
        %3823 = vmatpush1.msra.mxu0 0.0
        %3824 = vmatprep.subr.mxu0 0.0
        %3825 = vmatpush1.msra.mxu0 0.0
        %3826 = vmatprep.subr.mxu0 0.0
        %3827 = vmatpush1.msra.mxu0 0.0
        %3828 = vmatprep.subr.mxu0 0.0
        %3829 = vmatpush1.msra.mxu0 0.0
        %3830 = vmatprep.subr.mxu0 0.0
        %3831 = vmatpush1.msra.mxu0 0.0
        %3832 = vmatprep.subr.mxu0 0.0
        %3833 = vmatpush1.msra.mxu0 0.0
        %3834 = vmatprep.subr.mxu0 0.0
        %3835 = vmatpush1.msra.mxu0 0.0
        %3836 = vmatprep.subr.mxu0 0.0
        %3837 = vmatpush1.msra.mxu0 0.0
        %3838 = vmatprep.subr.mxu0 0.0
        %3839 = vmatpush1.msra.mxu0 0.0
        %3840 = vmatprep.subr.mxu0 0.0
        %3841 = vmatpush1.msra.mxu0 0.0
        %3842 = vmatprep.subr.mxu0 0.0
        %3843 = vmatpush1.msra.mxu0 0.0
        %3844 = vmatprep.subr.mxu0 0.0
        %3845 = vmatpush1.msra.mxu0 0.0
        %3846 = vmatprep.subr.mxu0 0.0
        %3847 = vmatpush1.msra.mxu0 0.0
        %3848 = vmatprep.subr.mxu0 0.0
        %3849 = vmatpush1.msra.mxu0 0.0
        %3850 = vmatprep.subr.mxu0 0.0
        %3851 = vmatpush1.msra.mxu0 0.0
        %3852 = vmatprep.subr.mxu0 0.0
        %3853 = vmatpush1.msra.mxu0 0.0
        %3854 = vmatprep.subr.mxu0 0.0
        %3855 = vmatpush1.msra.mxu0 0.0
        %3856 = vmatprep.subr.mxu0 0.0
        %3857 = vmatpush1.msra.mxu0 0.0
        %3858 = vmatprep.subr.mxu0 0.0
        %3859 = vmatpush1.msra.mxu0 0.0
        %3860 = vmatprep.subr.mxu0 0.0
        %3861 = vmatpush1.msra.mxu0 0.0
        %3862 = vmatprep.subr.mxu0 0.0
        %3863 = vmatpush1.msra.mxu0 0.0
        %3864 = vmatprep.mubr.f32.mxu0 0.0
        %3865 = vmatmul.mubr.f32.gmra.mrb[0].mxu0 %v3798
        %v3866 = vpop.f32.mrb[0].mxu0
        %v3867 = vadd.f32 0.0, %v3866
        %v3868 = vpop.f32.mrb[0].mxu0
        %3869 = vdwg.mxu0
        %v3871 = vsel %vm2513, %v3794, 0
        %3873 = vmatprep.subr.mxu0 0.0
        %3874 = vmatpush1.msra.mxu0 %v3438
        %3875 = vmatprep.subr.mxu0 0.0
        %3876 = vmatpush1.msra.mxu0 0.0
        %3877 = vmatprep.subr.mxu0 0.0
        %3878 = vmatpush1.msra.mxu0 0.0
        %3879 = vmatprep.subr.mxu0 0.0
        %3880 = vmatpush1.msra.mxu0 0.0
        %3881 = vmatprep.subr.mxu0 0.0
        %3882 = vmatpush1.msra.mxu0 0.0
        %3883 = vmatprep.subr.mxu0 0.0
        %3884 = vmatpush1.msra.mxu0 0.0
        %3885 = vmatprep.subr.mxu0 0.0
        %3886 = vmatpush1.msra.mxu0 0.0
        %3887 = vmatprep.subr.mxu0 0.0
        %3888 = vmatpush1.msra.mxu0 0.0
        %3889 = vmatprep.subr.mxu0 0.0
        %3890 = vmatpush1.msra.mxu0 0.0
        %3891 = vmatprep.subr.mxu0 0.0
        %3892 = vmatpush1.msra.mxu0 0.0
        %3893 = vmatprep.subr.mxu0 0.0
        %3894 = vmatpush1.msra.mxu0 0.0
        %3895 = vmatprep.subr.mxu0 0.0
        %3896 = vmatpush1.msra.mxu0 0.0
        %3897 = vmatprep.subr.mxu0 0.0
        %3898 = vmatpush1.msra.mxu0 0.0
        %3899 = vmatprep.subr.mxu0 0.0
        %3900 = vmatpush1.msra.mxu0 0.0
        %3901 = vmatprep.subr.mxu0 0.0
        %3902 = vmatpush1.msra.mxu0 0.0
        %3903 = vmatprep.subr.mxu0 0.0
        %3904 = vmatpush1.msra.mxu0 0.0
        %3905 = vmatprep.subr.mxu0 0.0
        %3906 = vmatpush1.msra.mxu0 0.0
        %3907 = vmatprep.subr.mxu0 0.0
        %3908 = vmatpush1.msra.mxu0 0.0
        %3909 = vmatprep.subr.mxu0 0.0
        %3910 = vmatpush1.msra.mxu0 0.0
        %3911 = vmatprep.subr.mxu0 0.0
        %3912 = vmatpush1.msra.mxu0 0.0
        %3913 = vmatprep.subr.mxu0 0.0
        %3914 = vmatpush1.msra.mxu0 0.0
        %3915 = vmatprep.subr.mxu0 0.0
        %3916 = vmatpush1.msra.mxu0 0.0
        %3917 = vmatprep.subr.mxu0 0.0
        %3918 = vmatpush1.msra.mxu0 0.0
        %3919 = vmatprep.subr.mxu0 0.0
        %3920 = vmatpush1.msra.mxu0 0.0
        %3921 = vmatprep.subr.mxu0 0.0
        %3922 = vmatpush1.msra.mxu0 0.0
        %3923 = vmatprep.subr.mxu0 0.0
        %3924 = vmatpush1.msra.mxu0 0.0
        %3925 = vmatprep.subr.mxu0 0.0
        %3926 = vmatpush1.msra.mxu0 0.0
        %3927 = vmatprep.subr.mxu0 0.0
        %3928 = vmatpush1.msra.mxu0 0.0
        %3929 = vmatprep.subr.mxu0 0.0
        %3930 = vmatpush1.msra.mxu0 0.0
        %3931 = vmatprep.subr.mxu0 0.0
        %3932 = vmatpush1.msra.mxu0 0.0
        %3933 = vmatprep.subr.mxu0 0.0
        %3934 = vmatpush1.msra.mxu0 0.0
        %3935 = vmatprep.subr.mxu0 0.0
        %3936 = vmatpush1.msra.mxu0 0.0
        %3937 = vmatprep.mubr.f32.mxu0 0.0
        %3938 = vmatmul.mubr.f32.gmra.mrb[0].mxu0 %v3871
        %v3939 = vpop.f32.mrb[0].mxu0
        %v3940 = vadd.f32 0.0, %v3939
        %v3941 = vpop.f32.mrb[0].mxu0
        %3942 = vdwg.mxu0
        %v3944 = vsel %vm2513, %v3795, 0
        %3946 = vmatprep.subr.mxu0 0.0
        %3947 = vmatpush1.msra.mxu0 %v3439
        %3948 = vmatprep.subr.mxu0 0.0
        %3949 = vmatpush1.msra.mxu0 0.0
        %3950 = vmatprep.subr.mxu0 0.0
        %3951 = vmatpush1.msra.mxu0 0.0
        %3952 = vmatprep.subr.mxu0 0.0
        %3953 = vmatpush1.msra.mxu0 0.0
        %3954 = vmatprep.subr.mxu0 0.0
        %3955 = vmatpush1.msra.mxu0 0.0
        %3956 = vmatprep.subr.mxu0 0.0
        %3957 = vmatpush1.msra.mxu0 0.0
        %3958 = vmatprep.subr.mxu0 0.0
        %3959 = vmatpush1.msra.mxu0 0.0
        %3960 = vmatprep.subr.mxu0 0.0
        %3961 = vmatpush1.msra.mxu0 0.0
        %3962 = vmatprep.subr.mxu0 0.0
        %3963 = vmatpush1.msra.mxu0 0.0
        %3964 = vmatprep.subr.mxu0 0.0
        %3965 = vmatpush1.msra.mxu0 0.0
        %3966 = vmatprep.subr.mxu0 0.0
        %3967 = vmatpush1.msra.mxu0 0.0
        %3968 = vmatprep.subr.mxu0 0.0
        %3969 = vmatpush1.msra.mxu0 0.0
        %3970 = vmatprep.subr.mxu0 0.0
        %3971 = vmatpush1.msra.mxu0 0.0
        %3972 = vmatprep.subr.mxu0 0.0
        %3973 = vmatpush1.msra.mxu0 0.0
        %3974 = vmatprep.subr.mxu0 0.0
        %3975 = vmatpush1.msra.mxu0 0.0
        %3976 = vmatprep.subr.mxu0 0.0
        %3977 = vmatpush1.msra.mxu0 0.0
        %3978 = vmatprep.subr.mxu0 0.0
        %3979 = vmatpush1.msra.mxu0 0.0
        %3980 = vmatprep.subr.mxu0 0.0
        %3981 = vmatpush1.msra.mxu0 0.0
        %3982 = vmatprep.subr.mxu0 0.0
        %3983 = vmatpush1.msra.mxu0 0.0
        %3984 = vmatprep.subr.mxu0 0.0
        %3985 = vmatpush1.msra.mxu0 0.0
        %3986 = vmatprep.subr.mxu0 0.0
        %3987 = vmatpush1.msra.mxu0 0.0
        %3988 = vmatprep.subr.mxu0 0.0
        %3989 = vmatpush1.msra.mxu0 0.0
        %3990 = vmatprep.subr.mxu0 0.0
        %3991 = vmatpush1.msra.mxu0 0.0
        %3992 = vmatprep.subr.mxu0 0.0
        %3993 = vmatpush1.msra.mxu0 0.0
        %3994 = vmatprep.subr.mxu0 0.0
        %3995 = vmatpush1.msra.mxu0 0.0
        %3996 = vmatprep.subr.mxu0 0.0
        %3997 = vmatpush1.msra.mxu0 0.0
        %3998 = vmatprep.subr.mxu0 0.0
        %3999 = vmatpush1.msra.mxu0 0.0
        %4000 = vmatprep.subr.mxu0 0.0
        %4001 = vmatpush1.msra.mxu0 0.0
        %4002 = vmatprep.subr.mxu0 0.0
        %4003 = vmatpush1.msra.mxu0 0.0
        %4004 = vmatprep.subr.mxu0 0.0
        %4005 = vmatpush1.msra.mxu0 0.0
        %4006 = vmatprep.subr.mxu0 0.0
        %4007 = vmatpush1.msra.mxu0 0.0
        %4008 = vmatprep.subr.mxu0 0.0
        %4009 = vmatpush1.msra.mxu0 0.0
        %4010 = vmatprep.mubr.f32.mxu0 0.0
        %4011 = vmatmul.mubr.f32.gmra.mrb[0].mxu0 %v3944
        %v4012 = vpop.f32.mrb[0].mxu0
        %v4013 = vadd.f32 0.0, %v4012
        %v4014 = vpop.f32.mrb[0].mxu0
        %4015 = vdwg.mxu0
        %v4017 = vsel %vm2513, %v3796, 0
        %4019 = vmatprep.subr.mxu0 0.0
        %4020 = vmatpush1.msra.mxu0 %v3440
        %4021 = vmatprep.subr.mxu0 0.0
        %4022 = vmatpush1.msra.mxu0 0.0
        %4023 = vmatprep.subr.mxu0 0.0
        %4024 = vmatpush1.msra.mxu0 0.0
        %4025 = vmatprep.subr.mxu0 0.0
        %4026 = vmatpush1.msra.mxu0 0.0
        %4027 = vmatprep.subr.mxu0 0.0
        %4028 = vmatpush1.msra.mxu0 0.0
        %4029 = vmatprep.subr.mxu0 0.0
        %4030 = vmatpush1.msra.mxu0 0.0
        %4031 = vmatprep.subr.mxu0 0.0
        %4032 = vmatpush1.msra.mxu0 0.0
        %4033 = vmatprep.subr.mxu0 0.0
        %4034 = vmatpush1.msra.mxu0 0.0
        %4035 = vmatprep.subr.mxu0 0.0
        %4036 = vmatpush1.msra.mxu0 0.0
        %4037 = vmatprep.subr.mxu0 0.0
        %4038 = vmatpush1.msra.mxu0 0.0
        %4039 = vmatprep.subr.mxu0 0.0
        %4040 = vmatpush1.msra.mxu0 0.0
        %4041 = vmatprep.subr.mxu0 0.0
        %4042 = vmatpush1.msra.mxu0 0.0
        %4043 = vmatprep.subr.mxu0 0.0
        %4044 = vmatpush1.msra.mxu0 0.0
        %4045 = vmatprep.subr.mxu0 0.0
        %4046 = vmatpush1.msra.mxu0 0.0
        %4047 = vmatprep.subr.mxu0 0.0
        %4048 = vmatpush1.msra.mxu0 0.0
        %4049 = vmatprep.subr.mxu0 0.0
        %4050 = vmatpush1.msra.mxu0 0.0
        %4051 = vmatprep.subr.mxu0 0.0
        %4052 = vmatpush1.msra.mxu0 0.0
        %4053 = vmatprep.subr.mxu0 0.0
        %4054 = vmatpush1.msra.mxu0 0.0
        %4055 = vmatprep.subr.mxu0 0.0
        %4056 = vmatpush1.msra.mxu0 0.0
        %4057 = vmatprep.subr.mxu0 0.0
        %4058 = vmatpush1.msra.mxu0 0.0
        %4059 = vmatprep.subr.mxu0 0.0
        %4060 = vmatpush1.msra.mxu0 0.0
        %4061 = vmatprep.subr.mxu0 0.0
        %4062 = vmatpush1.msra.mxu0 0.0
        %4063 = vmatprep.subr.mxu0 0.0
        %4064 = vmatpush1.msra.mxu0 0.0
        %4065 = vmatprep.subr.mxu0 0.0
        %4066 = vmatpush1.msra.mxu0 0.0
        %4067 = vmatprep.subr.mxu0 0.0
        %4068 = vmatpush1.msra.mxu0 0.0
        %4069 = vmatprep.subr.mxu0 0.0
        %4070 = vmatpush1.msra.mxu0 0.0
        %4071 = vmatprep.subr.mxu0 0.0
        %4072 = vmatpush1.msra.mxu0 0.0
        %4073 = vmatprep.subr.mxu0 0.0
        %4074 = vmatpush1.msra.mxu0 0.0
        %4075 = vmatprep.subr.mxu0 0.0
        %4076 = vmatpush1.msra.mxu0 0.0
        %4077 = vmatprep.subr.mxu0 0.0
        %4078 = vmatpush1.msra.mxu0 0.0
        %4079 = vmatprep.subr.mxu0 0.0
        %4080 = vmatpush1.msra.mxu0 0.0
        %4081 = vmatprep.subr.mxu0 0.0
        %4082 = vmatpush1.msra.mxu0 0.0
        %4083 = vmatprep.mubr.f32.mxu0 0.0
        %4084 = vmatmul.mubr.f32.gmra.mrb[0].mxu0 %v4017
        %v4085 = vpop.f32.mrb[0].mxu0
        %v4086 = vadd.f32 0.0, %v4085
        %v4087 = vpop.f32.mrb[0].mxu0
        %4088 = vdwg.mxu0
        %v4089 = vcombine.low %v3867, %v4013
        %v4090 = vcombine.high %v3867, %v4013
        %v4092 = vunpack.c.l.s4 1983009808
        %v4093 = vunpack.c.0.s8 %v4092
        %v4094 = vlaneseq
        %v4095 = vshrl.u32 %v4094, 7
        %v4096 = vsub.s32 %v4093, %v4095
        %v4097 = vrot.slane %v4089, %v4096
        %v4099 = vunpack.c.l.s4 1983009808
        %v4100 = vunpack.c.0.s8 %v4099
        %v4101 = vlaneseq
        %v4102 = vshrl.u32 %v4101, 7
        %v4103 = vsub.s32 %v4100, %v4102
        %v4104 = vrot.slane %v4090, %v4103
        %v4105 = vcombine.low %v3940, %v4086
        %v4106 = vcombine.high %v3940, %v4086
        %v4108 = vunpack.c.l.s4 1983009808
        %v4109 = vunpack.c.0.s8 %v4108
        %v4110 = vlaneseq
        %v4111 = vshrl.u32 %v4110, 7
        %v4112 = vsub.s32 %v4109, %v4111
        %v4113 = vrot.slane %v4105, %v4112
        %v4115 = vunpack.c.l.s4 1983009808
        %v4116 = vunpack.c.0.s8 %v4115
        %v4117 = vlaneseq
        %v4118 = vshrl.u32 %v4117, 7
        %v4119 = vsub.s32 %v4116, %v4118
        %v4120 = vrot.slane %v4106, %v4119
        %v4121 = vcombine.low %v4097, %v4113
        %v4122 = vcombine.high %v4097, %v4113
        %v4124 = vunpack.c.l.s4 1934713408
        %v4125 = vunpack.c.0.s8 %v4124
        %v4126 = vlaneseq
        %v4127 = vshrl.u32 %v4126, 7
        %v4128 = vsub.s32 %v4125, %v4127
        %v4129 = vrot.slane %v4121, %v4128
        %v4131 = vunpack.c.l.s4 1934713408
        %v4132 = vunpack.c.0.s8 %v4131
        %v4133 = vlaneseq
        %v4134 = vshrl.u32 %v4133, 7
        %v4135 = vsub.s32 %v4132, %v4134
        %v4136 = vrot.slane %v4122, %v4135
        %v4137 = vcombine.low %v4104, %v4120
        %v4138 = vcombine.high %v4104, %v4120
        %v4140 = vunpack.c.l.s4 1934713408
        %v4141 = vunpack.c.0.s8 %v4140
        %v4142 = vlaneseq
        %v4143 = vshrl.u32 %v4142, 7
        %v4144 = vsub.s32 %v4141, %v4143
        %v4145 = vrot.slane %v4137, %v4144
        %v4147 = vunpack.c.l.s4 1934713408
        %v4148 = vunpack.c.0.s8 %v4147
        %v4149 = vlaneseq
        %v4150 = vshrl.u32 %v4149, 7
        %v4151 = vsub.s32 %v4148, %v4150
        %v4152 = vrot.slane %v4138, %v4151
        %v4153 = vcombine.high %v4129, 0.0
        %v4154 = vcombine.high %v4136, 0.0
        %v4155 = vcombine.high %v4145, 0.0
        %v4156 = vcombine.high %v4152, 0.0
        %v4157 = vcombine.low %v4129, %v4136
        %v4159 = vunpack.c.l.s4 1983009808
        %v4160 = vunpack.c.0.s8 %v4159
        %v4161 = vlaneseq
        %v4162 = vshrl.u32 %v4161, 7
        %v4163 = vsub.s32 %v4160, %v4162
        %v4164 = vrot.slane %v4157, %v4163
        %v4165 = vcombine.low %v4153, %v4154
        %v4167 = vunpack.c.l.s4 1983009808
        %v4168 = vunpack.c.0.s8 %v4167
        %v4169 = vlaneseq
        %v4170 = vshrl.u32 %v4169, 7
        %v4171 = vsub.s32 %v4168, %v4170
        %v4172 = vrot.slane %v4165, %v4171
        %v4173 = vcombine.low %v4145, %v4152
        %v4175 = vunpack.c.l.s4 1983009808
        %v4176 = vunpack.c.0.s8 %v4175
        %v4177 = vlaneseq
        %v4178 = vshrl.u32 %v4177, 7
        %v4179 = vsub.s32 %v4176, %v4178
        %v4180 = vrot.slane %v4173, %v4179
        %v4181 = vcombine.low %v4155, %v4156
        %v4183 = vunpack.c.l.s4 1983009808
        %v4184 = vunpack.c.0.s8 %v4183
        %v4185 = vlaneseq
        %v4186 = vshrl.u32 %v4185, 7
        %v4187 = vsub.s32 %v4184, %v4186
        %v4188 = vrot.slane %v4181, %v4187
        %v4189 = vcombine.low %v4164, %v4172
        %v4190 = vcombine.high %v4164, %v4172
        %v4192 = vunpack.c.l.s4 1934713408
        %v4193 = vunpack.c.0.s8 %v4192
        %v4194 = vlaneseq
        %v4195 = vshrl.u32 %v4194, 7
        %v4196 = vsub.s32 %v4193, %v4195
        %v4197 = vrot.slane %v4189, %v4196
        %v4199 = vunpack.c.l.s4 1934713408
        %v4200 = vunpack.c.0.s8 %v4199
        %v4201 = vlaneseq
        %v4202 = vshrl.u32 %v4201, 7
        %v4203 = vsub.s32 %v4200, %v4202
        %v4204 = vrot.slane %v4190, %v4203
        %v4205 = vcombine.low %v4180, %v4188
        %v4206 = vcombine.high %v4180, %v4188
        %v4208 = vunpack.c.l.s4 1934713408
        %v4209 = vunpack.c.0.s8 %v4208
        %v4210 = vlaneseq
        %v4211 = vshrl.u32 %v4210, 7
        %v4212 = vsub.s32 %v4209, %v4211
        %v4213 = vrot.slane %v4205, %v4212
        %v4215 = vunpack.c.l.s4 1934713408
        %v4216 = vunpack.c.0.s8 %v4215
        %v4217 = vlaneseq
        %v4218 = vshrl.u32 %v4217, 7
        %v4219 = vsub.s32 %v4216, %v4218
        %v4220 = vrot.slane %v4206, %v4219
        %v4221 = vcombine.low %v4197, %v4213
        %v4222 = vcombine.high %v4197, %v4213
        %v4223 = vcombine.low %v4204, %v4220
        %v4224 = vcombine.high %v4204, %v4220
        %4226 = vrot.lane.b32.xlu0 %v4222, 32
        %v4227 = vpop.permute.xlu0 %4226
        %4230 = vrot.lane.b32.xlu0 %v4223, 64
        %v4231 = vpop.permute.xlu0 %4230
        %4234 = vrot.lane.b32.xlu0 %v4224, 96
        %v4235 = vpop.permute.xlu0 %4234
        %v4237 = vsel %vm2200, %v4221, %v4227
        %v4238 = vsel %vm2999, %v4237, %v4231
        %v4239 = vsel %vm3001, %v4238, %v4235
        %v4240 = vpack.c.bf16 %v4239, %v3002
        %v4242 = vlaneseq
        %v4243 = vshrl.u32 %v4242, 7
        %v4244 = vsub.s32 0, %v4243
        %v4245 = vrot.slane %v1415, %v4244
        %v4263 = vunpack.c.l.b16 %v1399
        %v4264 = vunpack.c.l.b16 %v1400
        %v4265 = vunpack.c.l.b16 %v1401
        %v4266 = vunpack.c.l.b16 %v1402
        %v4267 = vunpack.c.l.b16 %v1403
        %v4268 = vunpack.c.l.b16 %v1404
        %v4269 = vunpack.c.l.b16 %v1405
        %v4270 = vunpack.c.l.b16 %v1406
        %v4271 = vunpack.c.l.b16 %v1407
        %v4272 = vunpack.c.l.b16 %v1408
        %v4273 = vunpack.c.l.b16 %v1409
        %v4274 = vunpack.c.l.b16 %v1410
        %v4275 = vunpack.c.l.b16 %v1411
        %v4276 = vunpack.c.l.b16 %v1412
        %v4277 = vunpack.c.l.b16 %v1413
        %v4278 = vunpack.c.l.b16 %v1414
        %v4279 = vpack.c.b16 %v4264, %v4263
        %v4280 = vpack.c.b16 %v4266, %v4265
        %v4281 = vpack.c.b16 %v4268, %v4267
        %v4282 = vpack.c.b16 %v4270, %v4269
        %v4283 = vpack.c.b16 %v4272, %v4271
        %v4284 = vpack.c.b16 %v4274, %v4273
        %v4285 = vpack.c.b16 %v4276, %v4275
        %v4286 = vpack.c.b16 %v4278, %v4277
        %4295 = vmatprep.subr.bf16.mxu0 0
        %4296 = vmatpush1.bf16.msra.mxu0 %v4279
        %4297 = vmatprep.subr.bf16.mxu0 0
        %4298 = vmatpush1.bf16.msra.mxu0 %v4280
        %4299 = vmatprep.subr.bf16.mxu0 0
        %4300 = vmatpush1.bf16.msra.mxu0 %v4281
        %4301 = vmatprep.subr.bf16.mxu0 0
        %4302 = vmatpush1.bf16.msra.mxu0 %v4282
        %4303 = vmatprep.subr.bf16.mxu0 0
        %4304 = vmatpush1.bf16.msra.mxu0 %v4283
        %4305 = vmatprep.subr.bf16.mxu0 0
        %4306 = vmatpush1.bf16.msra.mxu0 %v4284
        %4307 = vmatprep.subr.bf16.mxu0 0
        %4308 = vmatpush1.bf16.msra.mxu0 %v4285
        %4309 = vmatprep.subr.bf16.mxu0 0
        %4310 = vmatpush1.bf16.msra.mxu0 %v4286
        %4311 = vmatprep.subr.bf16.mxu0 0
        %4312 = vmatpush1.bf16.msra.mxu0 0
        %4313 = vmatprep.subr.bf16.mxu0 0
        %4314 = vmatpush1.bf16.msra.mxu0 0
        %4315 = vmatprep.subr.bf16.mxu0 0
        %4316 = vmatpush1.bf16.msra.mxu0 0
        %4317 = vmatprep.subr.bf16.mxu0 0
        %4318 = vmatpush1.bf16.msra.mxu0 0
        %4319 = vmatprep.subr.bf16.mxu0 0
        %4320 = vmatpush1.bf16.msra.mxu0 0
        %4321 = vmatprep.subr.bf16.mxu0 0
        %4322 = vmatpush1.bf16.msra.mxu0 0
        %4323 = vmatprep.subr.bf16.mxu0 0
        %4324 = vmatpush1.bf16.msra.mxu0 0
        %4325 = vmatprep.subr.bf16.mxu0 0
        %4326 = vmatpush1.bf16.msra.mxu0 0
        %4327 = vmatprep.mubr.bf16.mxu0 0
        %4328 = vmatmul.mubr.bf16.gmra.mrb[0].mxu0 %v4240
        %v4329 = vpop.f32.mrb[0].mxu0
        %v4330 = vadd.f32 %v4245, %v4329
        %v4331 = vpop.f32.mrb[0].mxu0
        %v4332 = vpop.f32.mrb[0].mxu0
        %v4333 = vadd.f32 %v4245, %v4332
        %v4334 = vpop.f32.mrb[0].mxu0
        %4335 = vdwg.mxu0
        %v4336 = vadd.f32 %v4330, %v1523
        %v4337 = vadd.f32 %v4333, %v1524
        %4338 = vadd.xlane.f32.xlu0 %v4336
        %v4339 = vpop.xlane.xlu0 %4338
        %4340 = vadd.xlane.f32.xlu0 %v4337
        %v4341 = vpop.xlane.xlu0 %4340
        %v4342 = vrcp.pop 128.0
        %v4343 = vmul.f32 %v4339, %v4342
        %v4344 = vmul.f32 %v4341, %v4342
        %v4345 = vsub.f32 %v4336, %v4343
        %v4346 = vsub.f32 %v4337, %v4344
        %v4347 = vmul.f32 %v4345, %v4345
        %v4348 = vmul.f32 %v4346, %v4346
        %4349 = vadd.xlane.f32.xlu0 %v4347
        %v4350 = vpop.xlane.xlu0 %4349
        %4351 = vadd.xlane.f32.xlu0 %v4348
        %v4352 = vpop.xlane.xlu0 %4351
        %v4353 = vmul.f32 %v4350, %v4342
        %v4354 = vmul.f32 %v4352, %v4342
        %v4355 = vadd.f32 %v4353, 1e-12
        %v4356 = vadd.f32 %v4354, 1e-12
        %v4357 = vrsqrt.pop %v4355
        %v4358 = vrsqrt.pop %v4356
        %v4359 = vmul.f32 %v4345, %v4357
        %v4360 = vmul.f32 %v4346, %v4358
        %v4362 = vlaneseq
        %v4363 = vshrl.u32 %v4362, 7
        %v4364 = vsub.s32 0, %v4363
        %v4365 = vrot.slane %v1416, %v4364
        %v4367 = vmul.f32 %v4365, %v4359
        %v4368 = vmul.f32 %v4365, %v4360
        %v4370 = vlaneseq
        %v4371 = vshrl.u32 %v4370, 7
        %v4372 = vsub.s32 0, %v4371
        %v4373 = vrot.slane %v1417, %v4372
        %v4375 = vadd.f32 %v4367, %v4373
        %v4376 = vadd.f32 %v4368, %v4373
        %v4377 = vpack.c.bf16 %v4376, %v4375
        %v4379 = vlaneseq
        %v4380 = vshrl.u32 %v4379, 7
        %v4381 = vsub.s32 0, %v4380
        %v4382 = vrot.slane %v1434, %v4381
        %v4400 = vunpack.c.l.b16 %v1418
        %v4401 = vunpack.c.l.b16 %v1419
        %v4402 = vunpack.c.l.b16 %v1420
        %v4403 = vunpack.c.l.b16 %v1421
        %v4404 = vunpack.c.l.b16 %v1422
        %v4405 = vunpack.c.l.b16 %v1423
        %v4406 = vunpack.c.l.b16 %v1424
        %v4407 = vunpack.c.l.b16 %v1425
        %v4408 = vunpack.c.l.b16 %v1426
        %v4409 = vunpack.c.l.b16 %v1427
        %v4410 = vunpack.c.l.b16 %v1428
        %v4411 = vunpack.c.l.b16 %v1429
        %v4412 = vunpack.c.l.b16 %v1430
        %v4413 = vunpack.c.l.b16 %v1431
        %v4414 = vunpack.c.l.b16 %v1432
        %v4415 = vunpack.c.l.b16 %v1433
        %v4416 = vpack.c.b16 %v4401, %v4400
        %v4417 = vpack.c.b16 %v4403, %v4402
        %v4418 = vpack.c.b16 %v4405, %v4404
        %v4419 = vpack.c.b16 %v4407, %v4406
        %v4420 = vpack.c.b16 %v4409, %v4408
        %v4421 = vpack.c.b16 %v4411, %v4410
        %v4422 = vpack.c.b16 %v4413, %v4412
        %v4423 = vpack.c.b16 %v4415, %v4414
        %4432 = vmatprep.subr.bf16.mxu0 0
        %4433 = vmatpush1.bf16.msra.mxu0 %v4416
        %4434 = vmatprep.subr.bf16.mxu0 0
        %4435 = vmatpush1.bf16.msra.mxu0 %v4417
        %4436 = vmatprep.subr.bf16.mxu0 0
        %4437 = vmatpush1.bf16.msra.mxu0 %v4418
        %4438 = vmatprep.subr.bf16.mxu0 0
        %4439 = vmatpush1.bf16.msra.mxu0 %v4419
        %4440 = vmatprep.subr.bf16.mxu0 0
        %4441 = vmatpush1.bf16.msra.mxu0 %v4420
        %4442 = vmatprep.subr.bf16.mxu0 0
        %4443 = vmatpush1.bf16.msra.mxu0 %v4421
        %4444 = vmatprep.subr.bf16.mxu0 0
        %4445 = vmatpush1.bf16.msra.mxu0 %v4422
        %4446 = vmatprep.subr.bf16.mxu0 0
        %4447 = vmatpush1.bf16.msra.mxu0 %v4423
        %4448 = vmatprep.subr.bf16.mxu0 0
        %4449 = vmatpush1.bf16.msra.mxu0 0
        %4450 = vmatprep.subr.bf16.mxu0 0
        %4451 = vmatpush1.bf16.msra.mxu0 0
        %4452 = vmatprep.subr.bf16.mxu0 0
        %4453 = vmatpush1.bf16.msra.mxu0 0
        %4454 = vmatprep.subr.bf16.mxu0 0
        %4455 = vmatpush1.bf16.msra.mxu0 0
        %4456 = vmatprep.subr.bf16.mxu0 0
        %4457 = vmatpush1.bf16.msra.mxu0 0
        %4458 = vmatprep.subr.bf16.mxu0 0
        %4459 = vmatpush1.bf16.msra.mxu0 0
        %4460 = vmatprep.subr.bf16.mxu0 0
        %4461 = vmatpush1.bf16.msra.mxu0 0
        %4462 = vmatprep.subr.bf16.mxu0 0
        %4463 = vmatpush1.bf16.msra.mxu0 0
        %4464 = vmatprep.mubr.bf16.mxu0 0
        %4465 = vmatmul.mubr.bf16.gmra.mrb[0].mxu0 %v4377
        %v4466 = vpop.f32.mrb[0].mxu0
        %v4467 = vadd.f32 %v4382, %v4466
        %v4468 = vpop.f32.mrb[0].mxu0
        %v4469 = vpop.f32.mrb[0].mxu0
        %v4470 = vadd.f32 %v4382, %v4469
        %v4471 = vpop.f32.mrb[0].mxu0
        %4472 = vdwg.mxu0
        %v4473 = vpack.c.bf16 %v1526, %v1525
        %v4474 = vpack.c.bf16 %v1528, %v1527
        %v4476 = vlaneseq
        %v4477 = vshrl.u32 %v4476, 7
        %v4478 = vsub.s32 0, %v4477
        %v4479 = vrot.slane %v1451, %v4478
        %v4480 = vlaneseq
        %v4481 = vshrl.u32 %v4480, 7
        %v4482 = vsub.s32 1, %v4481
        %v4483 = vrot.slane %v1451, %v4482
        %v4502 = vunpack.c.l.b16 %v1435
        %v4503 = vunpack.c.h.b16 %v1435
        %v4504 = vunpack.c.l.b16 %v1436
        %v4505 = vunpack.c.h.b16 %v1436
        %v4506 = vunpack.c.l.b16 %v1437
        %v4507 = vunpack.c.h.b16 %v1437
        %v4508 = vunpack.c.l.b16 %v1438
        %v4509 = vunpack.c.h.b16 %v1438
        %v4510 = vunpack.c.l.b16 %v1439
        %v4511 = vunpack.c.h.b16 %v1439
        %v4512 = vunpack.c.l.b16 %v1440
        %v4513 = vunpack.c.h.b16 %v1440
        %v4514 = vunpack.c.l.b16 %v1441
        %v4515 = vunpack.c.h.b16 %v1441
        %v4516 = vunpack.c.l.b16 %v1442
        %v4517 = vunpack.c.h.b16 %v1442
        %v4518 = vunpack.c.l.b16 %v1443
        %v4519 = vunpack.c.h.b16 %v1443
        %v4520 = vunpack.c.l.b16 %v1444
        %v4521 = vunpack.c.h.b16 %v1444
        %v4522 = vunpack.c.l.b16 %v1445
        %v4523 = vunpack.c.h.b16 %v1445
        %v4524 = vunpack.c.l.b16 %v1446
        %v4525 = vunpack.c.h.b16 %v1446
        %v4526 = vunpack.c.l.b16 %v1447
        %v4527 = vunpack.c.h.b16 %v1447
        %v4528 = vunpack.c.l.b16 %v1448
        %v4529 = vunpack.c.h.b16 %v1448
        %v4530 = vunpack.c.l.b16 %v1449
        %v4531 = vunpack.c.h.b16 %v1449
        %v4532 = vunpack.c.l.b16 %v1450
        %v4533 = vunpack.c.h.b16 %v1450
        %v4534 = vpack.c.b16 %v4504, %v4502
        %v4535 = vpack.c.b16 %v4505, %v4503
        %v4536 = vpack.c.b16 %v4508, %v4506
        %v4537 = vpack.c.b16 %v4509, %v4507
        %v4538 = vpack.c.b16 %v4512, %v4510
        %v4539 = vpack.c.b16 %v4513, %v4511
        %v4540 = vpack.c.b16 %v4516, %v4514
        %v4541 = vpack.c.b16 %v4517, %v4515
        %v4542 = vpack.c.b16 %v4520, %v4518
        %v4543 = vpack.c.b16 %v4521, %v4519
        %v4544 = vpack.c.b16 %v4524, %v4522
        %v4545 = vpack.c.b16 %v4525, %v4523
        %v4546 = vpack.c.b16 %v4528, %v4526
        %v4547 = vpack.c.b16 %v4529, %v4527
        %v4548 = vpack.c.b16 %v4532, %v4530
        %v4549 = vpack.c.b16 %v4533, %v4531
        %4566 = vmatprep.subr.bf16.mxu0 %v4535
        %4567 = vmatpush1.bf16.msra.mxu0 %v4534
        %4568 = vmatprep.subr.bf16.mxu0 %v4537
        %4569 = vmatpush1.bf16.msra.mxu0 %v4536
        %4570 = vmatprep.subr.bf16.mxu0 %v4539
        %4571 = vmatpush1.bf16.msra.mxu0 %v4538
        %4572 = vmatprep.subr.bf16.mxu0 %v4541
        %4573 = vmatpush1.bf16.msra.mxu0 %v4540
        %4574 = vmatprep.subr.bf16.mxu0 %v4543
        %4575 = vmatpush1.bf16.msra.mxu0 %v4542
        %4576 = vmatprep.subr.bf16.mxu0 %v4545
        %4577 = vmatpush1.bf16.msra.mxu0 %v4544
        %4578 = vmatprep.subr.bf16.mxu0 %v4547
        %4579 = vmatpush1.bf16.msra.mxu0 %v4546
        %4580 = vmatprep.subr.bf16.mxu0 %v4549
        %4581 = vmatpush1.bf16.msra.mxu0 %v4548
        %4582 = vmatprep.subr.bf16.mxu0 0
        %4583 = vmatpush1.bf16.msra.mxu0 0
        %4584 = vmatprep.subr.bf16.mxu0 0
        %4585 = vmatpush1.bf16.msra.mxu0 0
        %4586 = vmatprep.subr.bf16.mxu0 0
        %4587 = vmatpush1.bf16.msra.mxu0 0
        %4588 = vmatprep.subr.bf16.mxu0 0
        %4589 = vmatpush1.bf16.msra.mxu0 0
        %4590 = vmatprep.subr.bf16.mxu0 0
        %4591 = vmatpush1.bf16.msra.mxu0 0
        %4592 = vmatprep.subr.bf16.mxu0 0
        %4593 = vmatpush1.bf16.msra.mxu0 0
        %4594 = vmatprep.subr.bf16.mxu0 0
        %4595 = vmatpush1.bf16.msra.mxu0 0
        %4596 = vmatprep.subr.bf16.mxu0 0
        %4597 = vmatpush1.bf16.msra.mxu0 0
        %4598 = vmatprep.mubr.bf16.mxu0 0
        %4599 = vmatmul.mubr.bf16.gmra.mrb[0].mxu0 %v4473
        %v4600 = vpop.f32.mrb[0].mxu0
        %v4601 = vadd.f32 %v4479, %v4600
        %v4602 = vpop.f32.mrb[0].mxu0
        %v4603 = vadd.f32 %v4483, %v4602
        %v4604 = vpop.f32.mrb[0].mxu0
        %v4605 = vadd.f32 %v4479, %v4604
        %v4606 = vpop.f32.mrb[0].mxu0
        %v4607 = vadd.f32 %v4483, %v4606
        %4608 = vmatprep.mubr.bf16.mxu0 0
        %4609 = vmatmul.mubr.bf16.gmra.mrb[0].mxu0 %v4474
        %v4610 = vpop.f32.mrb[0].mxu0
        %v4611 = vadd.f32 %v4479, %v4610
        %v4612 = vpop.f32.mrb[0].mxu0
        %v4613 = vadd.f32 %v4483, %v4612
        %v4614 = vpop.f32.mrb[0].mxu0
        %v4615 = vadd.f32 %v4479, %v4614
        %v4616 = vpop.f32.mrb[0].mxu0
        %v4617 = vadd.f32 %v4483, %v4616
        %4618 = vdwg.mxu0
        %4620 = vrot.lane.b32.xlu0 %v4467, 96
        %v4621 = vpop.permute.xlu0 %4620
        %4623 = vrot.lane.b32.xlu0 %v4467, 64
        %v4624 = vpop.permute.xlu0 %4623
        %4626 = vrot.lane.b32.xlu0 %v4467, 32
        %v4627 = vpop.permute.xlu0 %4626
        %v4629 = vcombine.low %v4467, %v4624
        %v4630 = vcombine.high %v4467, %v4624
        %v4632 = vunpack.c.l.s4 1983009808
        %v4633 = vunpack.c.0.s8 %v4632
        %v4634 = vlaneseq
        %v4635 = vshrl.u32 %v4634, 7
        %v4636 = vsub.s32 %v4633, %v4635
        %v4637 = vrot.slane %v4629, %v4636
        %v4639 = vunpack.c.l.s4 1983009808
        %v4640 = vunpack.c.0.s8 %v4639
        %v4641 = vlaneseq
        %v4642 = vshrl.u32 %v4641, 7
        %v4643 = vsub.s32 %v4640, %v4642
        %v4644 = vrot.slane %v4630, %v4643
        %v4645 = vcombine.low %v4621, %v4627
        %v4646 = vcombine.high %v4621, %v4627
        %v4648 = vunpack.c.l.s4 1983009808
        %v4649 = vunpack.c.0.s8 %v4648
        %v4650 = vlaneseq
        %v4651 = vshrl.u32 %v4650, 7
        %v4652 = vsub.s32 %v4649, %v4651
        %v4653 = vrot.slane %v4645, %v4652
        %v4655 = vunpack.c.l.s4 1983009808
        %v4656 = vunpack.c.0.s8 %v4655
        %v4657 = vlaneseq
        %v4658 = vshrl.u32 %v4657, 7
        %v4659 = vsub.s32 %v4656, %v4658
        %v4660 = vrot.slane %v4646, %v4659
        %v4661 = vcombine.low %v4637, %v4653
        %v4662 = vcombine.high %v4637, %v4653
        %v4664 = vunpack.c.l.s4 1934713408
        %v4665 = vunpack.c.0.s8 %v4664
        %v4666 = vlaneseq
        %v4667 = vshrl.u32 %v4666, 7
        %v4668 = vsub.s32 %v4665, %v4667
        %v4669 = vrot.slane %v4661, %v4668
        %v4671 = vunpack.c.l.s4 1934713408
        %v4672 = vunpack.c.0.s8 %v4671
        %v4673 = vlaneseq
        %v4674 = vshrl.u32 %v4673, 7
        %v4675 = vsub.s32 %v4672, %v4674
        %v4676 = vrot.slane %v4662, %v4675
        %v4677 = vcombine.low %v4644, %v4660
        %v4678 = vcombine.high %v4644, %v4660
        %v4680 = vunpack.c.l.s4 1934713408
        %v4681 = vunpack.c.0.s8 %v4680
        %v4682 = vlaneseq
        %v4683 = vshrl.u32 %v4682, 7
        %v4684 = vsub.s32 %v4681, %v4683
        %v4685 = vrot.slane %v4677, %v4684
        %v4687 = vunpack.c.l.s4 1934713408
        %v4688 = vunpack.c.0.s8 %v4687
        %v4689 = vlaneseq
        %v4690 = vshrl.u32 %v4689, 7
        %v4691 = vsub.s32 %v4688, %v4690
        %v4692 = vrot.slane %v4678, %v4691
        %v4693 = vcombine.high %v4669, 0.0
        %v4694 = vcombine.high %v4676, 0.0
        %v4695 = vcombine.high %v4685, 0.0
        %v4696 = vcombine.high %v4692, 0.0
        %v4697 = vcombine.low %v4669, %v4676
        %v4699 = vunpack.c.l.s4 1983009808
        %v4700 = vunpack.c.0.s8 %v4699
        %v4701 = vlaneseq
        %v4702 = vshrl.u32 %v4701, 7
        %v4703 = vsub.s32 %v4700, %v4702
        %v4704 = vrot.slane %v4697, %v4703
        %v4705 = vcombine.low %v4693, %v4694
        %v4707 = vunpack.c.l.s4 1983009808
        %v4708 = vunpack.c.0.s8 %v4707
        %v4709 = vlaneseq
        %v4710 = vshrl.u32 %v4709, 7
        %v4711 = vsub.s32 %v4708, %v4710
        %v4712 = vrot.slane %v4705, %v4711
        %v4713 = vcombine.low %v4685, %v4692
        %v4715 = vunpack.c.l.s4 1983009808
        %v4716 = vunpack.c.0.s8 %v4715
        %v4717 = vlaneseq
        %v4718 = vshrl.u32 %v4717, 7
        %v4719 = vsub.s32 %v4716, %v4718
        %v4720 = vrot.slane %v4713, %v4719
        %v4721 = vcombine.low %v4695, %v4696
        %v4723 = vunpack.c.l.s4 1983009808
        %v4724 = vunpack.c.0.s8 %v4723
        %v4725 = vlaneseq
        %v4726 = vshrl.u32 %v4725, 7
        %v4727 = vsub.s32 %v4724, %v4726
        %v4728 = vrot.slane %v4721, %v4727
        %v4729 = vcombine.low %v4704, %v4712
        %v4730 = vcombine.high %v4704, %v4712
        %v4732 = vunpack.c.l.s4 1934713408
        %v4733 = vunpack.c.0.s8 %v4732
        %v4734 = vlaneseq
        %v4735 = vshrl.u32 %v4734, 7
        %v4736 = vsub.s32 %v4733, %v4735
        %v4737 = vrot.slane %v4729, %v4736
        %v4739 = vunpack.c.l.s4 1934713408
        %v4740 = vunpack.c.0.s8 %v4739
        %v4741 = vlaneseq
        %v4742 = vshrl.u32 %v4741, 7
        %v4743 = vsub.s32 %v4740, %v4742
        %v4744 = vrot.slane %v4730, %v4743
        %v4745 = vcombine.low %v4720, %v4728
        %v4746 = vcombine.high %v4720, %v4728
        %v4748 = vunpack.c.l.s4 1934713408
        %v4749 = vunpack.c.0.s8 %v4748
        %v4750 = vlaneseq
        %v4751 = vshrl.u32 %v4750, 7
        %v4752 = vsub.s32 %v4749, %v4751
        %v4753 = vrot.slane %v4745, %v4752
        %v4755 = vunpack.c.l.s4 1934713408
        %v4756 = vunpack.c.0.s8 %v4755
        %v4757 = vlaneseq
        %v4758 = vshrl.u32 %v4757, 7
        %v4759 = vsub.s32 %v4756, %v4758
        %v4760 = vrot.slane %v4746, %v4759
        %v4761 = vcombine.low %v4737, %v4753
        %v4762 = vcombine.high %v4737, %v4753
        %v4763 = vcombine.low %v4744, %v4760
        %v4764 = vcombine.high %v4744, %v4760
        %4767 = vrot.lane.b32.xlu0 %v4601, 96
        %v4768 = vpop.permute.xlu0 %4767
        %4769 = vrot.lane.b32.xlu0 %v4605, 96
        %v4770 = vpop.permute.xlu0 %4769
        %4773 = vrot.lane.b32.xlu0 %v4601, 64
        %v4774 = vpop.permute.xlu0 %4773
        %4775 = vrot.lane.b32.xlu0 %v4605, 64
        %v4776 = vpop.permute.xlu0 %4775
        %4779 = vrot.lane.b32.xlu0 %v4601, 32
        %v4780 = vpop.permute.xlu0 %4779
        %4781 = vrot.lane.b32.xlu0 %v4605, 32
        %v4782 = vpop.permute.xlu0 %4781
        %v4785 = vcombine.low %v4601, %v4774
        %v4786 = vcombine.high %v4601, %v4774
        %v4788 = vunpack.c.l.s4 1983009808
        %v4789 = vunpack.c.0.s8 %v4788
        %v4790 = vlaneseq
        %v4791 = vshrl.u32 %v4790, 7
        %v4792 = vsub.s32 %v4789, %v4791
        %v4793 = vrot.slane %v4785, %v4792
        %v4795 = vunpack.c.l.s4 1983009808
        %v4796 = vunpack.c.0.s8 %v4795
        %v4797 = vlaneseq
        %v4798 = vshrl.u32 %v4797, 7
        %v4799 = vsub.s32 %v4796, %v4798
        %v4800 = vrot.slane %v4786, %v4799
        %v4801 = vcombine.low %v4768, %v4780
        %v4802 = vcombine.high %v4768, %v4780
        %v4804 = vunpack.c.l.s4 1983009808
        %v4805 = vunpack.c.0.s8 %v4804
        %v4806 = vlaneseq
        %v4807 = vshrl.u32 %v4806, 7
        %v4808 = vsub.s32 %v4805, %v4807
        %v4809 = vrot.slane %v4801, %v4808
        %v4811 = vunpack.c.l.s4 1983009808
        %v4812 = vunpack.c.0.s8 %v4811
        %v4813 = vlaneseq
        %v4814 = vshrl.u32 %v4813, 7
        %v4815 = vsub.s32 %v4812, %v4814
        %v4816 = vrot.slane %v4802, %v4815
        %v4817 = vcombine.low %v4793, %v4809
        %v4818 = vcombine.high %v4793, %v4809
        %v4820 = vunpack.c.l.s4 1934713408
        %v4821 = vunpack.c.0.s8 %v4820
        %v4822 = vlaneseq
        %v4823 = vshrl.u32 %v4822, 7
        %v4824 = vsub.s32 %v4821, %v4823
        %v4825 = vrot.slane %v4817, %v4824
        %v4827 = vunpack.c.l.s4 1934713408
        %v4828 = vunpack.c.0.s8 %v4827
        %v4829 = vlaneseq
        %v4830 = vshrl.u32 %v4829, 7
        %v4831 = vsub.s32 %v4828, %v4830
        %v4832 = vrot.slane %v4818, %v4831
        %v4833 = vcombine.low %v4800, %v4816
        %v4834 = vcombine.high %v4800, %v4816
        %v4836 = vunpack.c.l.s4 1934713408
        %v4837 = vunpack.c.0.s8 %v4836
        %v4838 = vlaneseq
        %v4839 = vshrl.u32 %v4838, 7
        %v4840 = vsub.s32 %v4837, %v4839
        %v4841 = vrot.slane %v4833, %v4840
        %v4843 = vunpack.c.l.s4 1934713408
        %v4844 = vunpack.c.0.s8 %v4843
        %v4845 = vlaneseq
        %v4846 = vshrl.u32 %v4845, 7
        %v4847 = vsub.s32 %v4844, %v4846
        %v4848 = vrot.slane %v4834, %v4847
        %v4849 = vcombine.high %v4825, 0.0
        %v4850 = vcombine.high %v4832, 0.0
        %v4851 = vcombine.high %v4841, 0.0
        %v4852 = vcombine.high %v4848, 0.0
        %v4853 = vcombine.low %v4605, %v4776
        %v4854 = vcombine.high %v4605, %v4776
        %v4856 = vunpack.c.l.s4 1983009808
        %v4857 = vunpack.c.0.s8 %v4856
        %v4858 = vlaneseq
        %v4859 = vshrl.u32 %v4858, 7
        %v4860 = vsub.s32 %v4857, %v4859
        %v4861 = vrot.slane %v4853, %v4860
        %v4863 = vunpack.c.l.s4 1983009808
        %v4864 = vunpack.c.0.s8 %v4863
        %v4865 = vlaneseq
        %v4866 = vshrl.u32 %v4865, 7
        %v4867 = vsub.s32 %v4864, %v4866
        %v4868 = vrot.slane %v4854, %v4867
        %v4869 = vcombine.low %v4770, %v4782
        %v4870 = vcombine.high %v4770, %v4782
        %v4872 = vunpack.c.l.s4 1983009808
        %v4873 = vunpack.c.0.s8 %v4872
        %v4874 = vlaneseq
        %v4875 = vshrl.u32 %v4874, 7
        %v4876 = vsub.s32 %v4873, %v4875
        %v4877 = vrot.slane %v4869, %v4876
        %v4879 = vunpack.c.l.s4 1983009808
        %v4880 = vunpack.c.0.s8 %v4879
        %v4881 = vlaneseq
        %v4882 = vshrl.u32 %v4881, 7
        %v4883 = vsub.s32 %v4880, %v4882
        %v4884 = vrot.slane %v4870, %v4883
        %v4885 = vcombine.low %v4861, %v4877
        %v4886 = vcombine.high %v4861, %v4877
        %v4888 = vunpack.c.l.s4 1934713408
        %v4889 = vunpack.c.0.s8 %v4888
        %v4890 = vlaneseq
        %v4891 = vshrl.u32 %v4890, 7
        %v4892 = vsub.s32 %v4889, %v4891
        %v4893 = vrot.slane %v4885, %v4892
        %v4895 = vunpack.c.l.s4 1934713408
        %v4896 = vunpack.c.0.s8 %v4895
        %v4897 = vlaneseq
        %v4898 = vshrl.u32 %v4897, 7
        %v4899 = vsub.s32 %v4896, %v4898
        %v4900 = vrot.slane %v4886, %v4899
        %v4901 = vcombine.low %v4868, %v4884
        %v4902 = vcombine.high %v4868, %v4884
        %v4904 = vunpack.c.l.s4 1934713408
        %v4905 = vunpack.c.0.s8 %v4904
        %v4906 = vlaneseq
        %v4907 = vshrl.u32 %v4906, 7
        %v4908 = vsub.s32 %v4905, %v4907
        %v4909 = vrot.slane %v4901, %v4908
        %v4911 = vunpack.c.l.s4 1934713408
        %v4912 = vunpack.c.0.s8 %v4911
        %v4913 = vlaneseq
        %v4914 = vshrl.u32 %v4913, 7
        %v4915 = vsub.s32 %v4912, %v4914
        %v4916 = vrot.slane %v4902, %v4915
        %v4917 = vcombine.high %v4893, 0.0
        %v4918 = vcombine.high %v4900, 0.0
        %v4919 = vcombine.high %v4909, 0.0
        %v4920 = vcombine.high %v4916, 0.0
        %v4921 = vcombine.low %v4825, %v4832
        %v4923 = vunpack.c.l.s4 1983009808
        %v4924 = vunpack.c.0.s8 %v4923
        %v4925 = vlaneseq
        %v4926 = vshrl.u32 %v4925, 7
        %v4927 = vsub.s32 %v4924, %v4926
        %v4928 = vrot.slane %v4921, %v4927
        %v4929 = vcombine.low %v4849, %v4850
        %v4931 = vunpack.c.l.s4 1983009808
        %v4932 = vunpack.c.0.s8 %v4931
        %v4933 = vlaneseq
        %v4934 = vshrl.u32 %v4933, 7
        %v4935 = vsub.s32 %v4932, %v4934
        %v4936 = vrot.slane %v4929, %v4935
        %v4937 = vcombine.low %v4841, %v4848
        %v4939 = vunpack.c.l.s4 1983009808
        %v4940 = vunpack.c.0.s8 %v4939
        %v4941 = vlaneseq
        %v4942 = vshrl.u32 %v4941, 7
        %v4943 = vsub.s32 %v4940, %v4942
        %v4944 = vrot.slane %v4937, %v4943
        %v4945 = vcombine.low %v4851, %v4852
        %v4947 = vunpack.c.l.s4 1983009808
        %v4948 = vunpack.c.0.s8 %v4947
        %v4949 = vlaneseq
        %v4950 = vshrl.u32 %v4949, 7
        %v4951 = vsub.s32 %v4948, %v4950
        %v4952 = vrot.slane %v4945, %v4951
        %v4953 = vcombine.low %v4928, %v4936
        %v4954 = vcombine.high %v4928, %v4936
        %v4956 = vunpack.c.l.s4 1934713408
        %v4957 = vunpack.c.0.s8 %v4956
        %v4958 = vlaneseq
        %v4959 = vshrl.u32 %v4958, 7
        %v4960 = vsub.s32 %v4957, %v4959
        %v4961 = vrot.slane %v4953, %v4960
        %v4963 = vunpack.c.l.s4 1934713408
        %v4964 = vunpack.c.0.s8 %v4963
        %v4965 = vlaneseq
        %v4966 = vshrl.u32 %v4965, 7
        %v4967 = vsub.s32 %v4964, %v4966
        %v4968 = vrot.slane %v4954, %v4967
        %v4969 = vcombine.low %v4944, %v4952
        %v4970 = vcombine.high %v4944, %v4952
        %v4972 = vunpack.c.l.s4 1934713408
        %v4973 = vunpack.c.0.s8 %v4972
        %v4974 = vlaneseq
        %v4975 = vshrl.u32 %v4974, 7
        %v4976 = vsub.s32 %v4973, %v4975
        %v4977 = vrot.slane %v4969, %v4976
        %v4979 = vunpack.c.l.s4 1934713408
        %v4980 = vunpack.c.0.s8 %v4979
        %v4981 = vlaneseq
        %v4982 = vshrl.u32 %v4981, 7
        %v4983 = vsub.s32 %v4980, %v4982
        %v4984 = vrot.slane %v4970, %v4983
        %v4985 = vcombine.low %v4961, %v4977
        %v4986 = vcombine.high %v4961, %v4977
        %v4987 = vcombine.low %v4968, %v4984
        %v4988 = vcombine.high %v4968, %v4984
        %v4989 = vcombine.low %v4893, %v4900
        %v4991 = vunpack.c.l.s4 1983009808
        %v4992 = vunpack.c.0.s8 %v4991
        %v4993 = vlaneseq
        %v4994 = vshrl.u32 %v4993, 7
        %v4995 = vsub.s32 %v4992, %v4994
        %v4996 = vrot.slane %v4989, %v4995
        %v4997 = vcombine.low %v4917, %v4918
        %v4999 = vunpack.c.l.s4 1983009808
        %v5000 = vunpack.c.0.s8 %v4999
        %v5001 = vlaneseq
        %v5002 = vshrl.u32 %v5001, 7
        %v5003 = vsub.s32 %v5000, %v5002
        %v5004 = vrot.slane %v4997, %v5003
        %v5005 = vcombine.low %v4909, %v4916
        %v5007 = vunpack.c.l.s4 1983009808
        %v5008 = vunpack.c.0.s8 %v5007
        %v5009 = vlaneseq
        %v5010 = vshrl.u32 %v5009, 7
        %v5011 = vsub.s32 %v5008, %v5010
        %v5012 = vrot.slane %v5005, %v5011
        %v5013 = vcombine.low %v4919, %v4920
        %v5015 = vunpack.c.l.s4 1983009808
        %v5016 = vunpack.c.0.s8 %v5015
        %v5017 = vlaneseq
        %v5018 = vshrl.u32 %v5017, 7
        %v5019 = vsub.s32 %v5016, %v5018
        %v5020 = vrot.slane %v5013, %v5019
        %v5021 = vcombine.low %v4996, %v5004
        %v5022 = vcombine.high %v4996, %v5004
        %v5024 = vunpack.c.l.s4 1934713408
        %v5025 = vunpack.c.0.s8 %v5024
        %v5026 = vlaneseq
        %v5027 = vshrl.u32 %v5026, 7
        %v5028 = vsub.s32 %v5025, %v5027
        %v5029 = vrot.slane %v5021, %v5028
        %v5031 = vunpack.c.l.s4 1934713408
        %v5032 = vunpack.c.0.s8 %v5031
        %v5033 = vlaneseq
        %v5034 = vshrl.u32 %v5033, 7
        %v5035 = vsub.s32 %v5032, %v5034
        %v5036 = vrot.slane %v5022, %v5035
        %v5037 = vcombine.low %v5012, %v5020
        %v5038 = vcombine.high %v5012, %v5020
        %v5040 = vunpack.c.l.s4 1934713408
        %v5041 = vunpack.c.0.s8 %v5040
        %v5042 = vlaneseq
        %v5043 = vshrl.u32 %v5042, 7
        %v5044 = vsub.s32 %v5041, %v5043
        %v5045 = vrot.slane %v5037, %v5044
        %v5047 = vunpack.c.l.s4 1934713408
        %v5048 = vunpack.c.0.s8 %v5047
        %v5049 = vlaneseq
        %v5050 = vshrl.u32 %v5049, 7
        %v5051 = vsub.s32 %v5048, %v5050
        %v5052 = vrot.slane %v5038, %v5051
        %v5053 = vcombine.low %v5029, %v5045
        %v5054 = vcombine.high %v5029, %v5045
        %v5055 = vcombine.low %v5036, %v5052
        %v5056 = vcombine.high %v5036, %v5052
        %5059 = vrot.lane.b32.xlu0 %v4603, 96
        %v5060 = vpop.permute.xlu0 %5059
        %5061 = vrot.lane.b32.xlu0 %v4607, 96
        %v5062 = vpop.permute.xlu0 %5061
        %5065 = vrot.lane.b32.xlu0 %v4603, 64
        %v5066 = vpop.permute.xlu0 %5065
        %5067 = vrot.lane.b32.xlu0 %v4607, 64
        %v5068 = vpop.permute.xlu0 %5067
        %5071 = vrot.lane.b32.xlu0 %v4603, 32
        %v5072 = vpop.permute.xlu0 %5071
        %5073 = vrot.lane.b32.xlu0 %v4607, 32
        %v5074 = vpop.permute.xlu0 %5073
        %v5077 = vcombine.low %v4603, %v5066
        %v5078 = vcombine.high %v4603, %v5066
        %v5080 = vunpack.c.l.s4 1983009808
        %v5081 = vunpack.c.0.s8 %v5080
        %v5082 = vlaneseq
        %v5083 = vshrl.u32 %v5082, 7
        %v5084 = vsub.s32 %v5081, %v5083
        %v5085 = vrot.slane %v5077, %v5084
        %v5087 = vunpack.c.l.s4 1983009808
        %v5088 = vunpack.c.0.s8 %v5087
        %v5089 = vlaneseq
        %v5090 = vshrl.u32 %v5089, 7
        %v5091 = vsub.s32 %v5088, %v5090
        %v5092 = vrot.slane %v5078, %v5091
        %v5093 = vcombine.low %v5060, %v5072
        %v5094 = vcombine.high %v5060, %v5072
        %v5096 = vunpack.c.l.s4 1983009808
        %v5097 = vunpack.c.0.s8 %v5096
        %v5098 = vlaneseq
        %v5099 = vshrl.u32 %v5098, 7
        %v5100 = vsub.s32 %v5097, %v5099
        %v5101 = vrot.slane %v5093, %v5100
        %v5103 = vunpack.c.l.s4 1983009808
        %v5104 = vunpack.c.0.s8 %v5103
        %v5105 = vlaneseq
        %v5106 = vshrl.u32 %v5105, 7
        %v5107 = vsub.s32 %v5104, %v5106
        %v5108 = vrot.slane %v5094, %v5107
        %v5109 = vcombine.low %v5085, %v5101
        %v5110 = vcombine.high %v5085, %v5101
        %v5112 = vunpack.c.l.s4 1934713408
        %v5113 = vunpack.c.0.s8 %v5112
        %v5114 = vlaneseq
        %v5115 = vshrl.u32 %v5114, 7
        %v5116 = vsub.s32 %v5113, %v5115
        %v5117 = vrot.slane %v5109, %v5116
        %v5119 = vunpack.c.l.s4 1934713408
        %v5120 = vunpack.c.0.s8 %v5119
        %v5121 = vlaneseq
        %v5122 = vshrl.u32 %v5121, 7
        %v5123 = vsub.s32 %v5120, %v5122
        %v5124 = vrot.slane %v5110, %v5123
        %v5125 = vcombine.low %v5092, %v5108
        %v5126 = vcombine.high %v5092, %v5108
        %v5128 = vunpack.c.l.s4 1934713408
        %v5129 = vunpack.c.0.s8 %v5128
        %v5130 = vlaneseq
        %v5131 = vshrl.u32 %v5130, 7
        %v5132 = vsub.s32 %v5129, %v5131
        %v5133 = vrot.slane %v5125, %v5132
        %v5135 = vunpack.c.l.s4 1934713408
        %v5136 = vunpack.c.0.s8 %v5135
        %v5137 = vlaneseq
        %v5138 = vshrl.u32 %v5137, 7
        %v5139 = vsub.s32 %v5136, %v5138
        %v5140 = vrot.slane %v5126, %v5139
        %v5141 = vcombine.high %v5117, 0.0
        %v5142 = vcombine.high %v5124, 0.0
        %v5143 = vcombine.high %v5133, 0.0
        %v5144 = vcombine.high %v5140, 0.0
        %v5145 = vcombine.low %v4607, %v5068
        %v5146 = vcombine.high %v4607, %v5068
        %v5148 = vunpack.c.l.s4 1983009808
        %v5149 = vunpack.c.0.s8 %v5148
        %v5150 = vlaneseq
        %v5151 = vshrl.u32 %v5150, 7
        %v5152 = vsub.s32 %v5149, %v5151
        %v5153 = vrot.slane %v5145, %v5152
        %v5155 = vunpack.c.l.s4 1983009808
        %v5156 = vunpack.c.0.s8 %v5155
        %v5157 = vlaneseq
        %v5158 = vshrl.u32 %v5157, 7
        %v5159 = vsub.s32 %v5156, %v5158
        %v5160 = vrot.slane %v5146, %v5159
        %v5161 = vcombine.low %v5062, %v5074
        %v5162 = vcombine.high %v5062, %v5074
        %v5164 = vunpack.c.l.s4 1983009808
        %v5165 = vunpack.c.0.s8 %v5164
        %v5166 = vlaneseq
        %v5167 = vshrl.u32 %v5166, 7
        %v5168 = vsub.s32 %v5165, %v5167
        %v5169 = vrot.slane %v5161, %v5168
        %v5171 = vunpack.c.l.s4 1983009808
        %v5172 = vunpack.c.0.s8 %v5171
        %v5173 = vlaneseq
        %v5174 = vshrl.u32 %v5173, 7
        %v5175 = vsub.s32 %v5172, %v5174
        %v5176 = vrot.slane %v5162, %v5175
        %v5177 = vcombine.low %v5153, %v5169
        %v5178 = vcombine.high %v5153, %v5169
        %v5180 = vunpack.c.l.s4 1934713408
        %v5181 = vunpack.c.0.s8 %v5180
        %v5182 = vlaneseq
        %v5183 = vshrl.u32 %v5182, 7
        %v5184 = vsub.s32 %v5181, %v5183
        %v5185 = vrot.slane %v5177, %v5184
        %v5187 = vunpack.c.l.s4 1934713408
        %v5188 = vunpack.c.0.s8 %v5187
        %v5189 = vlaneseq
        %v5190 = vshrl.u32 %v5189, 7
        %v5191 = vsub.s32 %v5188, %v5190
        %v5192 = vrot.slane %v5178, %v5191
        %v5193 = vcombine.low %v5160, %v5176
        %v5194 = vcombine.high %v5160, %v5176
        %v5196 = vunpack.c.l.s4 1934713408
        %v5197 = vunpack.c.0.s8 %v5196
        %v5198 = vlaneseq
        %v5199 = vshrl.u32 %v5198, 7
        %v5200 = vsub.s32 %v5197, %v5199
        %v5201 = vrot.slane %v5193, %v5200
        %v5203 = vunpack.c.l.s4 1934713408
        %v5204 = vunpack.c.0.s8 %v5203
        %v5205 = vlaneseq
        %v5206 = vshrl.u32 %v5205, 7
        %v5207 = vsub.s32 %v5204, %v5206
        %v5208 = vrot.slane %v5194, %v5207
        %v5209 = vcombine.high %v5185, 0.0
        %v5210 = vcombine.high %v5192, 0.0
        %v5211 = vcombine.high %v5201, 0.0
        %v5212 = vcombine.high %v5208, 0.0
        %v5213 = vcombine.low %v5117, %v5124
        %v5215 = vunpack.c.l.s4 1983009808
        %v5216 = vunpack.c.0.s8 %v5215
        %v5217 = vlaneseq
        %v5218 = vshrl.u32 %v5217, 7
        %v5219 = vsub.s32 %v5216, %v5218
        %v5220 = vrot.slane %v5213, %v5219
        %v5221 = vcombine.low %v5141, %v5142
        %v5223 = vunpack.c.l.s4 1983009808
        %v5224 = vunpack.c.0.s8 %v5223
        %v5225 = vlaneseq
        %v5226 = vshrl.u32 %v5225, 7
        %v5227 = vsub.s32 %v5224, %v5226
        %v5228 = vrot.slane %v5221, %v5227
        %v5229 = vcombine.low %v5133, %v5140
        %v5231 = vunpack.c.l.s4 1983009808
        %v5232 = vunpack.c.0.s8 %v5231
        %v5233 = vlaneseq
        %v5234 = vshrl.u32 %v5233, 7
        %v5235 = vsub.s32 %v5232, %v5234
        %v5236 = vrot.slane %v5229, %v5235
        %v5237 = vcombine.low %v5143, %v5144
        %v5239 = vunpack.c.l.s4 1983009808
        %v5240 = vunpack.c.0.s8 %v5239
        %v5241 = vlaneseq
        %v5242 = vshrl.u32 %v5241, 7
        %v5243 = vsub.s32 %v5240, %v5242
        %v5244 = vrot.slane %v5237, %v5243
        %v5245 = vcombine.low %v5220, %v5228
        %v5246 = vcombine.high %v5220, %v5228
        %v5248 = vunpack.c.l.s4 1934713408
        %v5249 = vunpack.c.0.s8 %v5248
        %v5250 = vlaneseq
        %v5251 = vshrl.u32 %v5250, 7
        %v5252 = vsub.s32 %v5249, %v5251
        %v5253 = vrot.slane %v5245, %v5252
        %v5255 = vunpack.c.l.s4 1934713408
        %v5256 = vunpack.c.0.s8 %v5255
        %v5257 = vlaneseq
        %v5258 = vshrl.u32 %v5257, 7
        %v5259 = vsub.s32 %v5256, %v5258
        %v5260 = vrot.slane %v5246, %v5259
        %v5261 = vcombine.low %v5236, %v5244
        %v5262 = vcombine.high %v5236, %v5244
        %v5264 = vunpack.c.l.s4 1934713408
        %v5265 = vunpack.c.0.s8 %v5264
        %v5266 = vlaneseq
        %v5267 = vshrl.u32 %v5266, 7
        %v5268 = vsub.s32 %v5265, %v5267
        %v5269 = vrot.slane %v5261, %v5268
        %v5271 = vunpack.c.l.s4 1934713408
        %v5272 = vunpack.c.0.s8 %v5271
        %v5273 = vlaneseq
        %v5274 = vshrl.u32 %v5273, 7
        %v5275 = vsub.s32 %v5272, %v5274
        %v5276 = vrot.slane %v5262, %v5275
        %v5277 = vcombine.low %v5253, %v5269
        %v5278 = vcombine.high %v5253, %v5269
        %v5279 = vcombine.low %v5260, %v5276
        %v5280 = vcombine.high %v5260, %v5276
        %v5281 = vcombine.low %v5185, %v5192
        %v5283 = vunpack.c.l.s4 1983009808
        %v5284 = vunpack.c.0.s8 %v5283
        %v5285 = vlaneseq
        %v5286 = vshrl.u32 %v5285, 7
        %v5287 = vsub.s32 %v5284, %v5286
        %v5288 = vrot.slane %v5281, %v5287
        %v5289 = vcombine.low %v5209, %v5210
        %v5291 = vunpack.c.l.s4 1983009808
        %v5292 = vunpack.c.0.s8 %v5291
        %v5293 = vlaneseq
        %v5294 = vshrl.u32 %v5293, 7
        %v5295 = vsub.s32 %v5292, %v5294
        %v5296 = vrot.slane %v5289, %v5295
        %v5297 = vcombine.low %v5201, %v5208
        %v5299 = vunpack.c.l.s4 1983009808
        %v5300 = vunpack.c.0.s8 %v5299
        %v5301 = vlaneseq
        %v5302 = vshrl.u32 %v5301, 7
        %v5303 = vsub.s32 %v5300, %v5302
        %v5304 = vrot.slane %v5297, %v5303
        %v5305 = vcombine.low %v5211, %v5212
        %v5307 = vunpack.c.l.s4 1983009808
        %v5308 = vunpack.c.0.s8 %v5307
        %v5309 = vlaneseq
        %v5310 = vshrl.u32 %v5309, 7
        %v5311 = vsub.s32 %v5308, %v5310
        %v5312 = vrot.slane %v5305, %v5311
        %v5313 = vcombine.low %v5288, %v5296
        %v5314 = vcombine.high %v5288, %v5296
        %v5316 = vunpack.c.l.s4 1934713408
        %v5317 = vunpack.c.0.s8 %v5316
        %v5318 = vlaneseq
        %v5319 = vshrl.u32 %v5318, 7
        %v5320 = vsub.s32 %v5317, %v5319
        %v5321 = vrot.slane %v5313, %v5320
        %v5323 = vunpack.c.l.s4 1934713408
        %v5324 = vunpack.c.0.s8 %v5323
        %v5325 = vlaneseq
        %v5326 = vshrl.u32 %v5325, 7
        %v5327 = vsub.s32 %v5324, %v5326
        %v5328 = vrot.slane %v5314, %v5327
        %v5329 = vcombine.low %v5304, %v5312
        %v5330 = vcombine.high %v5304, %v5312
        %v5332 = vunpack.c.l.s4 1934713408
        %v5333 = vunpack.c.0.s8 %v5332
        %v5334 = vlaneseq
        %v5335 = vshrl.u32 %v5334, 7
        %v5336 = vsub.s32 %v5333, %v5335
        %v5337 = vrot.slane %v5329, %v5336
        %v5339 = vunpack.c.l.s4 1934713408
        %v5340 = vunpack.c.0.s8 %v5339
        %v5341 = vlaneseq
        %v5342 = vshrl.u32 %v5341, 7
        %v5343 = vsub.s32 %v5340, %v5342
        %v5344 = vrot.slane %v5330, %v5343
        %v5345 = vcombine.low %v5321, %v5337
        %v5346 = vcombine.high %v5321, %v5337
        %v5347 = vcombine.low %v5328, %v5344
        %v5348 = vcombine.high %v5328, %v5344
        %v5350 = vsel %vm2200, %v4761, 0
        %v5353 = vsel %vm2200, %v4985, 0
        %v5356 = vsel %vm2200, %v5053, 0
        %5358 = vmatprep.subr.mxu0 0.0
        %5359 = vmatpush1.xpose.msra.mxu0 %v5353
        %5360 = vmatprep.subr.mxu0 0.0
        %5361 = vmatpush1.xpose.msra.mxu0 %v5356
        %5362 = vmatprep.subr.mxu0 0.0
        %5363 = vmatpush1.xpose.msra.mxu0 0.0
        %5364 = vmatprep.subr.mxu0 0.0
        %5365 = vmatpush1.xpose.msra.mxu0 0.0
        %5366 = vmatprep.subr.mxu0 0.0
        %5367 = vmatpush1.xpose.msra.mxu0 0.0
        %5368 = vmatprep.subr.mxu0 0.0
        %5369 = vmatpush1.xpose.msra.mxu0 0.0
        %5370 = vmatprep.subr.mxu0 0.0
        %5371 = vmatpush1.xpose.msra.mxu0 0.0
        %5372 = vmatprep.subr.mxu0 0.0
        %5373 = vmatpush1.xpose.msra.mxu0 0.0
        %5374 = vmatprep.subr.mxu0 0.0
        %5375 = vmatpush1.xpose.msra.mxu0 0.0
        %5376 = vmatprep.subr.mxu0 0.0
        %5377 = vmatpush1.xpose.msra.mxu0 0.0
        %5378 = vmatprep.subr.mxu0 0.0
        %5379 = vmatpush1.xpose.msra.mxu0 0.0
        %5380 = vmatprep.subr.mxu0 0.0
        %5381 = vmatpush1.xpose.msra.mxu0 0.0
        %5382 = vmatprep.subr.mxu0 0.0
        %5383 = vmatpush1.xpose.msra.mxu0 0.0
        %5384 = vmatprep.subr.mxu0 0.0
        %5385 = vmatpush1.xpose.msra.mxu0 0.0
        %5386 = vmatprep.subr.mxu0 0.0
        %5387 = vmatpush1.xpose.msra.mxu0 0.0
        %5388 = vmatprep.subr.mxu0 0.0
        %5389 = vmatpush1.xpose.msra.mxu0 0.0
        %5390 = vmatprep.subr.mxu0 0.0
        %5391 = vmatpush1.xpose.msra.mxu0 0.0
        %5392 = vmatprep.subr.mxu0 0.0
        %5393 = vmatpush1.xpose.msra.mxu0 0.0
        %5394 = vmatprep.subr.mxu0 0.0
        %5395 = vmatpush1.xpose.msra.mxu0 0.0
        %5396 = vmatprep.subr.mxu0 0.0
        %5397 = vmatpush1.xpose.msra.mxu0 0.0
        %5398 = vmatprep.subr.mxu0 0.0
        %5399 = vmatpush1.xpose.msra.mxu0 0.0
        %5400 = vmatprep.subr.mxu0 0.0
        %5401 = vmatpush1.xpose.msra.mxu0 0.0
        %5402 = vmatprep.subr.mxu0 0.0
        %5403 = vmatpush1.xpose.msra.mxu0 0.0
        %5404 = vmatprep.subr.mxu0 0.0
        %5405 = vmatpush1.xpose.msra.mxu0 0.0
        %5406 = vmatprep.subr.mxu0 0.0
        %5407 = vmatpush1.xpose.msra.mxu0 0.0
        %5408 = vmatprep.subr.mxu0 0.0
        %5409 = vmatpush1.xpose.msra.mxu0 0.0
        %5410 = vmatprep.subr.mxu0 0.0
        %5411 = vmatpush1.xpose.msra.mxu0 0.0
        %5412 = vmatprep.subr.mxu0 0.0
        %5413 = vmatpush1.xpose.msra.mxu0 0.0
        %5414 = vmatprep.subr.mxu0 0.0
        %5415 = vmatpush1.xpose.msra.mxu0 0.0
        %5416 = vmatprep.subr.mxu0 0.0
        %5417 = vmatpush1.xpose.msra.mxu0 0.0
        %5418 = vmatprep.subr.mxu0 0.0
        %5419 = vmatpush1.xpose.msra.mxu0 0.0
        %5420 = vmatprep.subr.mxu0 0.0
        %5421 = vmatpush1.xpose.msra.mxu0 0.0
        %5422 = vmatprep.mubr.f32.mxu0 0.0
        %5423 = vmatmul.mubr.f32.gmra.mrb[0].mxu0 %v5350
        %v5424 = vpop.f32.mrb[0].mxu0
        %v5425 = vadd.f32 0.0, %v5424
        %v5426 = vpop.f32.mrb[0].mxu0
        %5427 = vdwg.mxu0
        %v5429 = vsel %vm2200, %v4762, 0
        %v5432 = vsel %vm2200, %v4986, 0
        %v5435 = vsel %vm2200, %v5054, 0
        %5437 = vmatprep.subr.mxu0 0.0
        %5438 = vmatpush1.xpose.msra.mxu0 %v5432
        %5439 = vmatprep.subr.mxu0 0.0
        %5440 = vmatpush1.xpose.msra.mxu0 %v5435
        %5441 = vmatprep.subr.mxu0 0.0
        %5442 = vmatpush1.xpose.msra.mxu0 0.0
        %5443 = vmatprep.subr.mxu0 0.0
        %5444 = vmatpush1.xpose.msra.mxu0 0.0
        %5445 = vmatprep.subr.mxu0 0.0
        %5446 = vmatpush1.xpose.msra.mxu0 0.0
        %5447 = vmatprep.subr.mxu0 0.0
        %5448 = vmatpush1.xpose.msra.mxu0 0.0
        %5449 = vmatprep.subr.mxu0 0.0
        %5450 = vmatpush1.xpose.msra.mxu0 0.0
        %5451 = vmatprep.subr.mxu0 0.0
        %5452 = vmatpush1.xpose.msra.mxu0 0.0
        %5453 = vmatprep.subr.mxu0 0.0
        %5454 = vmatpush1.xpose.msra.mxu0 0.0
        %5455 = vmatprep.subr.mxu0 0.0
        %5456 = vmatpush1.xpose.msra.mxu0 0.0
        %5457 = vmatprep.subr.mxu0 0.0
        %5458 = vmatpush1.xpose.msra.mxu0 0.0
        %5459 = vmatprep.subr.mxu0 0.0
        %5460 = vmatpush1.xpose.msra.mxu0 0.0
        %5461 = vmatprep.subr.mxu0 0.0
        %5462 = vmatpush1.xpose.msra.mxu0 0.0
        %5463 = vmatprep.subr.mxu0 0.0
        %5464 = vmatpush1.xpose.msra.mxu0 0.0
        %5465 = vmatprep.subr.mxu0 0.0
        %5466 = vmatpush1.xpose.msra.mxu0 0.0
        %5467 = vmatprep.subr.mxu0 0.0
        %5468 = vmatpush1.xpose.msra.mxu0 0.0
        %5469 = vmatprep.subr.mxu0 0.0
        %5470 = vmatpush1.xpose.msra.mxu0 0.0
        %5471 = vmatprep.subr.mxu0 0.0
        %5472 = vmatpush1.xpose.msra.mxu0 0.0
        %5473 = vmatprep.subr.mxu0 0.0
        %5474 = vmatpush1.xpose.msra.mxu0 0.0
        %5475 = vmatprep.subr.mxu0 0.0
        %5476 = vmatpush1.xpose.msra.mxu0 0.0
        %5477 = vmatprep.subr.mxu0 0.0
        %5478 = vmatpush1.xpose.msra.mxu0 0.0
        %5479 = vmatprep.subr.mxu0 0.0
        %5480 = vmatpush1.xpose.msra.mxu0 0.0
        %5481 = vmatprep.subr.mxu0 0.0
        %5482 = vmatpush1.xpose.msra.mxu0 0.0
        %5483 = vmatprep.subr.mxu0 0.0
        %5484 = vmatpush1.xpose.msra.mxu0 0.0
        %5485 = vmatprep.subr.mxu0 0.0
        %5486 = vmatpush1.xpose.msra.mxu0 0.0
        %5487 = vmatprep.subr.mxu0 0.0
        %5488 = vmatpush1.xpose.msra.mxu0 0.0
        %5489 = vmatprep.subr.mxu0 0.0
        %5490 = vmatpush1.xpose.msra.mxu0 0.0
        %5491 = vmatprep.subr.mxu0 0.0
        %5492 = vmatpush1.xpose.msra.mxu0 0.0
        %5493 = vmatprep.subr.mxu0 0.0
        %5494 = vmatpush1.xpose.msra.mxu0 0.0
        %5495 = vmatprep.subr.mxu0 0.0
        %5496 = vmatpush1.xpose.msra.mxu0 0.0
        %5497 = vmatprep.subr.mxu0 0.0
        %5498 = vmatpush1.xpose.msra.mxu0 0.0
        %5499 = vmatprep.subr.mxu0 0.0
        %5500 = vmatpush1.xpose.msra.mxu0 0.0
        %5501 = vmatprep.mubr.f32.mxu0 0.0
        %5502 = vmatmul.mubr.f32.gmra.mrb[0].mxu0 %v5429
        %v5503 = vpop.f32.mrb[0].mxu0
        %v5504 = vadd.f32 0.0, %v5503
        %v5505 = vpop.f32.mrb[0].mxu0
        %5506 = vdwg.mxu0
        %v5508 = vsel %vm2200, %v4763, 0
        %v5511 = vsel %vm2200, %v4987, 0
        %v5514 = vsel %vm2200, %v5055, 0
        %5516 = vmatprep.subr.mxu0 0.0
        %5517 = vmatpush1.xpose.msra.mxu0 %v5511
        %5518 = vmatprep.subr.mxu0 0.0
        %5519 = vmatpush1.xpose.msra.mxu0 %v5514
        %5520 = vmatprep.subr.mxu0 0.0
        %5521 = vmatpush1.xpose.msra.mxu0 0.0
        %5522 = vmatprep.subr.mxu0 0.0
        %5523 = vmatpush1.xpose.msra.mxu0 0.0
        %5524 = vmatprep.subr.mxu0 0.0
        %5525 = vmatpush1.xpose.msra.mxu0 0.0
        %5526 = vmatprep.subr.mxu0 0.0
        %5527 = vmatpush1.xpose.msra.mxu0 0.0
        %5528 = vmatprep.subr.mxu0 0.0
        %5529 = vmatpush1.xpose.msra.mxu0 0.0
        %5530 = vmatprep.subr.mxu0 0.0
        %5531 = vmatpush1.xpose.msra.mxu0 0.0
        %5532 = vmatprep.subr.mxu0 0.0
        %5533 = vmatpush1.xpose.msra.mxu0 0.0
        %5534 = vmatprep.subr.mxu0 0.0
        %5535 = vmatpush1.xpose.msra.mxu0 0.0
        %5536 = vmatprep.subr.mxu0 0.0
        %5537 = vmatpush1.xpose.msra.mxu0 0.0
        %5538 = vmatprep.subr.mxu0 0.0
        %5539 = vmatpush1.xpose.msra.mxu0 0.0
        %5540 = vmatprep.subr.mxu0 0.0
        %5541 = vmatpush1.xpose.msra.mxu0 0.0
        %5542 = vmatprep.subr.mxu0 0.0
        %5543 = vmatpush1.xpose.msra.mxu0 0.0
        %5544 = vmatprep.subr.mxu0 0.0
        %5545 = vmatpush1.xpose.msra.mxu0 0.0
        %5546 = vmatprep.subr.mxu0 0.0
        %5547 = vmatpush1.xpose.msra.mxu0 0.0
        %5548 = vmatprep.subr.mxu0 0.0
        %5549 = vmatpush1.xpose.msra.mxu0 0.0
        %5550 = vmatprep.subr.mxu0 0.0
        %5551 = vmatpush1.xpose.msra.mxu0 0.0
        %5552 = vmatprep.subr.mxu0 0.0
        %5553 = vmatpush1.xpose.msra.mxu0 0.0
        %5554 = vmatprep.subr.mxu0 0.0
        %5555 = vmatpush1.xpose.msra.mxu0 0.0
        %5556 = vmatprep.subr.mxu0 0.0
        %5557 = vmatpush1.xpose.msra.mxu0 0.0
        %5558 = vmatprep.subr.mxu0 0.0
        %5559 = vmatpush1.xpose.msra.mxu0 0.0
        %5560 = vmatprep.subr.mxu0 0.0
        %5561 = vmatpush1.xpose.msra.mxu0 0.0
        %5562 = vmatprep.subr.mxu0 0.0
        %5563 = vmatpush1.xpose.msra.mxu0 0.0
        %5564 = vmatprep.subr.mxu0 0.0
        %5565 = vmatpush1.xpose.msra.mxu0 0.0
        %5566 = vmatprep.subr.mxu0 0.0
        %5567 = vmatpush1.xpose.msra.mxu0 0.0
        %5568 = vmatprep.subr.mxu0 0.0
        %5569 = vmatpush1.xpose.msra.mxu0 0.0
        %5570 = vmatprep.subr.mxu0 0.0
        %5571 = vmatpush1.xpose.msra.mxu0 0.0
        %5572 = vmatprep.subr.mxu0 0.0
        %5573 = vmatpush1.xpose.msra.mxu0 0.0
        %5574 = vmatprep.subr.mxu0 0.0
        %5575 = vmatpush1.xpose.msra.mxu0 0.0
        %5576 = vmatprep.subr.mxu0 0.0
        %5577 = vmatpush1.xpose.msra.mxu0 0.0
        %5578 = vmatprep.subr.mxu0 0.0
        %5579 = vmatpush1.xpose.msra.mxu0 0.0
        %5580 = vmatprep.mubr.f32.mxu0 0.0
        %5581 = vmatmul.mubr.f32.gmra.mrb[0].mxu0 %v5508
        %v5582 = vpop.f32.mrb[0].mxu0
        %v5583 = vadd.f32 0.0, %v5582
        %v5584 = vpop.f32.mrb[0].mxu0
        %5585 = vdwg.mxu0
        %v5587 = vsel %vm2200, %v4764, 0
        %v5590 = vsel %vm2200, %v4988, 0
        %v5593 = vsel %vm2200, %v5056, 0
        %5595 = vmatprep.subr.mxu0 0.0
        %5596 = vmatpush1.xpose.msra.mxu0 %v5590
        %5597 = vmatprep.subr.mxu0 0.0
        %5598 = vmatpush1.xpose.msra.mxu0 %v5593
        %5599 = vmatprep.subr.mxu0 0.0
        %5600 = vmatpush1.xpose.msra.mxu0 0.0
        %5601 = vmatprep.subr.mxu0 0.0
        %5602 = vmatpush1.xpose.msra.mxu0 0.0
        %5603 = vmatprep.subr.mxu0 0.0
        %5604 = vmatpush1.xpose.msra.mxu0 0.0
        %5605 = vmatprep.subr.mxu0 0.0
        %5606 = vmatpush1.xpose.msra.mxu0 0.0
        %5607 = vmatprep.subr.mxu0 0.0
        %5608 = vmatpush1.xpose.msra.mxu0 0.0
        %5609 = vmatprep.subr.mxu0 0.0
        %5610 = vmatpush1.xpose.msra.mxu0 0.0
        %5611 = vmatprep.subr.mxu0 0.0
        %5612 = vmatpush1.xpose.msra.mxu0 0.0
        %5613 = vmatprep.subr.mxu0 0.0
        %5614 = vmatpush1.xpose.msra.mxu0 0.0
        %5615 = vmatprep.subr.mxu0 0.0
        %5616 = vmatpush1.xpose.msra.mxu0 0.0
        %5617 = vmatprep.subr.mxu0 0.0
        %5618 = vmatpush1.xpose.msra.mxu0 0.0
        %5619 = vmatprep.subr.mxu0 0.0
        %5620 = vmatpush1.xpose.msra.mxu0 0.0
        %5621 = vmatprep.subr.mxu0 0.0
        %5622 = vmatpush1.xpose.msra.mxu0 0.0
        %5623 = vmatprep.subr.mxu0 0.0
        %5624 = vmatpush1.xpose.msra.mxu0 0.0
        %5625 = vmatprep.subr.mxu0 0.0
        %5626 = vmatpush1.xpose.msra.mxu0 0.0
        %5627 = vmatprep.subr.mxu0 0.0
        %5628 = vmatpush1.xpose.msra.mxu0 0.0
        %5629 = vmatprep.subr.mxu0 0.0
        %5630 = vmatpush1.xpose.msra.mxu0 0.0
        %5631 = vmatprep.subr.mxu0 0.0
        %5632 = vmatpush1.xpose.msra.mxu0 0.0
        %5633 = vmatprep.subr.mxu0 0.0
        %5634 = vmatpush1.xpose.msra.mxu0 0.0
        %5635 = vmatprep.subr.mxu0 0.0
        %5636 = vmatpush1.xpose.msra.mxu0 0.0
        %5637 = vmatprep.subr.mxu0 0.0
        %5638 = vmatpush1.xpose.msra.mxu0 0.0
        %5639 = vmatprep.subr.mxu0 0.0
        %5640 = vmatpush1.xpose.msra.mxu0 0.0
        %5641 = vmatprep.subr.mxu0 0.0
        %5642 = vmatpush1.xpose.msra.mxu0 0.0
        %5643 = vmatprep.subr.mxu0 0.0
        %5644 = vmatpush1.xpose.msra.mxu0 0.0
        %5645 = vmatprep.subr.mxu0 0.0
        %5646 = vmatpush1.xpose.msra.mxu0 0.0
        %5647 = vmatprep.subr.mxu0 0.0
        %5648 = vmatpush1.xpose.msra.mxu0 0.0
        %5649 = vmatprep.subr.mxu0 0.0
        %5650 = vmatpush1.xpose.msra.mxu0 0.0
        %5651 = vmatprep.subr.mxu0 0.0
        %5652 = vmatpush1.xpose.msra.mxu0 0.0
        %5653 = vmatprep.subr.mxu0 0.0
        %5654 = vmatpush1.xpose.msra.mxu0 0.0
        %5655 = vmatprep.subr.mxu0 0.0
        %5656 = vmatpush1.xpose.msra.mxu0 0.0
        %5657 = vmatprep.subr.mxu0 0.0
        %5658 = vmatpush1.xpose.msra.mxu0 0.0
        %5659 = vmatprep.mubr.f32.mxu0 0.0
        %5660 = vmatmul.mubr.f32.gmra.mrb[0].mxu0 %v5587
        %v5661 = vpop.f32.mrb[0].mxu0
        %v5662 = vadd.f32 0.0, %v5661
        %v5663 = vpop.f32.mrb[0].mxu0
        %5664 = vdwg.mxu0
        %v5665 = vmul.f32 %v5425, 0.17677669
        %v5666 = vmul.f32 %v5504, 0.17677669
        %v5667 = vmul.f32 %v5583, 0.17677669
        %v5668 = vmul.f32 %v5662, 0.17677669
        %v5670 = vlaneseq
        %v5671 = vshrl.u32 %v5670, 7
        %v5672 = vsub.s32 0, %v5671
        %v5673 = vrot.slane %v1531, %v5672
        %v5675 = vadd.f32 %v5665, %v5673
        %v5676 = vadd.f32 %v5666, %v5673
        %v5677 = vadd.f32 %v5667, %v5673
        %v5678 = vadd.f32 %v5668, %v5673
        %vm5679 = vcmask 130048
        %v5680 = vsel %vm5679, %v5675, -inf
        %5681 = vmax.xlane.f32.xlu0 %v5680
        %v5682 = vpop.xlane.xlu0 %5681
        %v5683 = vsel %vm5679, %v5676, -inf
        %5684 = vmax.xlane.f32.xlu0 %v5683
        %v5685 = vpop.xlane.xlu0 %5684
        %v5686 = vsel %vm5679, %v5677, -inf
        %5687 = vmax.xlane.f32.xlu0 %v5686
        %v5688 = vpop.xlane.xlu0 %5687
        %v5689 = vsel %vm5679, %v5678, -inf
        %5690 = vmax.xlane.f32.xlu0 %v5689
        %v5691 = vpop.xlane.xlu0 %5690
        %v5692 = vsub.f32 %v5675, %v5682
        %v5693 = vsub.f32 %v5676, %v5685
        %v5694 = vsub.f32 %v5677, %v5688
        %v5695 = vsub.f32 %v5678, %v5691
        %v5696 = vmul.f32 %v5692, 1.442695
        %v5697 = vpow.pop %v5696
        %v5698 = vmul.f32 %v5693, 1.442695
        %v5699 = vpow.pop %v5698
        %v5700 = vmul.f32 %v5694, 1.442695
        %v5701 = vpow.pop %v5700
        %v5702 = vmul.f32 %v5695, 1.442695
        %v5703 = vpow.pop %v5702
        %v5704 = vsel %vm5679, %v5697, 0.0
        %5705 = vadd.xlane.f32.xlu0 %v5704
        %v5706 = vpop.xlane.xlu0 %5705
        %v5707 = vsel %vm5679, %v5699, 0.0
        %5708 = vadd.xlane.f32.xlu0 %v5707
        %v5709 = vpop.xlane.xlu0 %5708
        %v5710 = vsel %vm5679, %v5701, 0.0
        %5711 = vadd.xlane.f32.xlu0 %v5710
        %v5712 = vpop.xlane.xlu0 %5711
        %v5713 = vsel %vm5679, %v5703, 0.0
        %5714 = vadd.xlane.f32.xlu0 %v5713
        %v5715 = vpop.xlane.xlu0 %5714
        %v5716 = vrcp.pop %v5706
        %v5717 = vrcp.pop %v5709
        %v5718 = vrcp.pop %v5712
        %v5719 = vrcp.pop %v5715
        %v5720 = vmul.f32 %v5697, %v5716
        %v5721 = vmul.f32 %v5699, %v5717
        %v5722 = vmul.f32 %v5701, %v5718
        %v5723 = vmul.f32 %v5703, %v5719
        %v5725 = vsel %vm5679, %v5720, 0
        %5727 = vmatprep.subr.mxu0 0.0
        %5728 = vmatpush1.msra.mxu0 %v5277
        %5729 = vmatprep.subr.mxu0 0.0
        %5730 = vmatpush1.msra.mxu0 %v5345
        %5731 = vmatprep.subr.mxu0 0.0
        %5732 = vmatpush1.msra.mxu0 0.0
        %5733 = vmatprep.subr.mxu0 0.0
        %5734 = vmatpush1.msra.mxu0 0.0
        %5735 = vmatprep.subr.mxu0 0.0
        %5736 = vmatpush1.msra.mxu0 0.0
        %5737 = vmatprep.subr.mxu0 0.0
        %5738 = vmatpush1.msra.mxu0 0.0
        %5739 = vmatprep.subr.mxu0 0.0
        %5740 = vmatpush1.msra.mxu0 0.0
        %5741 = vmatprep.subr.mxu0 0.0
        %5742 = vmatpush1.msra.mxu0 0.0
        %5743 = vmatprep.subr.mxu0 0.0
        %5744 = vmatpush1.msra.mxu0 0.0
        %5745 = vmatprep.subr.mxu0 0.0
        %5746 = vmatpush1.msra.mxu0 0.0
        %5747 = vmatprep.subr.mxu0 0.0
        %5748 = vmatpush1.msra.mxu0 0.0
        %5749 = vmatprep.subr.mxu0 0.0
        %5750 = vmatpush1.msra.mxu0 0.0
        %5751 = vmatprep.subr.mxu0 0.0
        %5752 = vmatpush1.msra.mxu0 0.0
        %5753 = vmatprep.subr.mxu0 0.0
        %5754 = vmatpush1.msra.mxu0 0.0
        %5755 = vmatprep.subr.mxu0 0.0
        %5756 = vmatpush1.msra.mxu0 0.0
        %5757 = vmatprep.subr.mxu0 0.0
        %5758 = vmatpush1.msra.mxu0 0.0
        %5759 = vmatprep.subr.mxu0 0.0
        %5760 = vmatpush1.msra.mxu0 0.0
        %5761 = vmatprep.subr.mxu0 0.0
        %5762 = vmatpush1.msra.mxu0 0.0
        %5763 = vmatprep.subr.mxu0 0.0
        %5764 = vmatpush1.msra.mxu0 0.0
        %5765 = vmatprep.subr.mxu0 0.0
        %5766 = vmatpush1.msra.mxu0 0.0
        %5767 = vmatprep.subr.mxu0 0.0
        %5768 = vmatpush1.msra.mxu0 0.0
        %5769 = vmatprep.subr.mxu0 0.0
        %5770 = vmatpush1.msra.mxu0 0.0
        %5771 = vmatprep.subr.mxu0 0.0
        %5772 = vmatpush1.msra.mxu0 0.0
        %5773 = vmatprep.subr.mxu0 0.0
        %5774 = vmatpush1.msra.mxu0 0.0
        %5775 = vmatprep.subr.mxu0 0.0
        %5776 = vmatpush1.msra.mxu0 0.0
        %5777 = vmatprep.subr.mxu0 0.0
        %5778 = vmatpush1.msra.mxu0 0.0
        %5779 = vmatprep.subr.mxu0 0.0
        %5780 = vmatpush1.msra.mxu0 0.0
        %5781 = vmatprep.subr.mxu0 0.0
        %5782 = vmatpush1.msra.mxu0 0.0
        %5783 = vmatprep.subr.mxu0 0.0
        %5784 = vmatpush1.msra.mxu0 0.0
        %5785 = vmatprep.subr.mxu0 0.0
        %5786 = vmatpush1.msra.mxu0 0.0
        %5787 = vmatprep.subr.mxu0 0.0
        %5788 = vmatpush1.msra.mxu0 0.0
        %5789 = vmatprep.subr.mxu0 0.0
        %5790 = vmatpush1.msra.mxu0 0.0
        %5791 = vmatprep.mubr.f32.mxu0 0.0
        %5792 = vmatmul.mubr.f32.gmra.mrb[0].mxu0 %v5725
        %v5793 = vpop.f32.mrb[0].mxu0
        %v5794 = vadd.f32 0.0, %v5793
        %v5795 = vpop.f32.mrb[0].mxu0
        %5796 = vdwg.mxu0
        %v5798 = vsel %vm5679, %v5721, 0
        %5800 = vmatprep.subr.mxu0 0.0
        %5801 = vmatpush1.msra.mxu0 %v5278
        %5802 = vmatprep.subr.mxu0 0.0
        %5803 = vmatpush1.msra.mxu0 %v5346
        %5804 = vmatprep.subr.mxu0 0.0
        %5805 = vmatpush1.msra.mxu0 0.0
        %5806 = vmatprep.subr.mxu0 0.0
        %5807 = vmatpush1.msra.mxu0 0.0
        %5808 = vmatprep.subr.mxu0 0.0
        %5809 = vmatpush1.msra.mxu0 0.0
        %5810 = vmatprep.subr.mxu0 0.0
        %5811 = vmatpush1.msra.mxu0 0.0
        %5812 = vmatprep.subr.mxu0 0.0
        %5813 = vmatpush1.msra.mxu0 0.0
        %5814 = vmatprep.subr.mxu0 0.0
        %5815 = vmatpush1.msra.mxu0 0.0
        %5816 = vmatprep.subr.mxu0 0.0
        %5817 = vmatpush1.msra.mxu0 0.0
        %5818 = vmatprep.subr.mxu0 0.0
        %5819 = vmatpush1.msra.mxu0 0.0
        %5820 = vmatprep.subr.mxu0 0.0
        %5821 = vmatpush1.msra.mxu0 0.0
        %5822 = vmatprep.subr.mxu0 0.0
        %5823 = vmatpush1.msra.mxu0 0.0
        %5824 = vmatprep.subr.mxu0 0.0
        %5825 = vmatpush1.msra.mxu0 0.0
        %5826 = vmatprep.subr.mxu0 0.0
        %5827 = vmatpush1.msra.mxu0 0.0
        %5828 = vmatprep.subr.mxu0 0.0
        %5829 = vmatpush1.msra.mxu0 0.0
        %5830 = vmatprep.subr.mxu0 0.0
        %5831 = vmatpush1.msra.mxu0 0.0
        %5832 = vmatprep.subr.mxu0 0.0
        %5833 = vmatpush1.msra.mxu0 0.0
        %5834 = vmatprep.subr.mxu0 0.0
        %5835 = vmatpush1.msra.mxu0 0.0
        %5836 = vmatprep.subr.mxu0 0.0
        %5837 = vmatpush1.msra.mxu0 0.0
        %5838 = vmatprep.subr.mxu0 0.0
        %5839 = vmatpush1.msra.mxu0 0.0
        %5840 = vmatprep.subr.mxu0 0.0
        %5841 = vmatpush1.msra.mxu0 0.0
        %5842 = vmatprep.subr.mxu0 0.0
        %5843 = vmatpush1.msra.mxu0 0.0
        %5844 = vmatprep.subr.mxu0 0.0
        %5845 = vmatpush1.msra.mxu0 0.0
        %5846 = vmatprep.subr.mxu0 0.0
        %5847 = vmatpush1.msra.mxu0 0.0
        %5848 = vmatprep.subr.mxu0 0.0
        %5849 = vmatpush1.msra.mxu0 0.0
        %5850 = vmatprep.subr.mxu0 0.0
        %5851 = vmatpush1.msra.mxu0 0.0
        %5852 = vmatprep.subr.mxu0 0.0
        %5853 = vmatpush1.msra.mxu0 0.0
        %5854 = vmatprep.subr.mxu0 0.0
        %5855 = vmatpush1.msra.mxu0 0.0
        %5856 = vmatprep.subr.mxu0 0.0
        %5857 = vmatpush1.msra.mxu0 0.0
        %5858 = vmatprep.subr.mxu0 0.0
        %5859 = vmatpush1.msra.mxu0 0.0
        %5860 = vmatprep.subr.mxu0 0.0
        %5861 = vmatpush1.msra.mxu0 0.0
        %5862 = vmatprep.subr.mxu0 0.0
        %5863 = vmatpush1.msra.mxu0 0.0
        %5864 = vmatprep.mubr.f32.mxu0 0.0
        %5865 = vmatmul.mubr.f32.gmra.mrb[0].mxu0 %v5798
        %v5866 = vpop.f32.mrb[0].mxu0
        %v5867 = vadd.f32 0.0, %v5866
        %v5868 = vpop.f32.mrb[0].mxu0
        %5869 = vdwg.mxu0
        %v5871 = vsel %vm5679, %v5722, 0
        %5873 = vmatprep.subr.mxu0 0.0
        %5874 = vmatpush1.msra.mxu0 %v5279
        %5875 = vmatprep.subr.mxu0 0.0
        %5876 = vmatpush1.msra.mxu0 %v5347
        %5877 = vmatprep.subr.mxu0 0.0
        %5878 = vmatpush1.msra.mxu0 0.0
        %5879 = vmatprep.subr.mxu0 0.0
        %5880 = vmatpush1.msra.mxu0 0.0
        %5881 = vmatprep.subr.mxu0 0.0
        %5882 = vmatpush1.msra.mxu0 0.0
        %5883 = vmatprep.subr.mxu0 0.0
        %5884 = vmatpush1.msra.mxu0 0.0
        %5885 = vmatprep.subr.mxu0 0.0
        %5886 = vmatpush1.msra.mxu0 0.0
        %5887 = vmatprep.subr.mxu0 0.0
        %5888 = vmatpush1.msra.mxu0 0.0
        %5889 = vmatprep.subr.mxu0 0.0
        %5890 = vmatpush1.msra.mxu0 0.0
        %5891 = vmatprep.subr.mxu0 0.0
        %5892 = vmatpush1.msra.mxu0 0.0
        %5893 = vmatprep.subr.mxu0 0.0
        %5894 = vmatpush1.msra.mxu0 0.0
        %5895 = vmatprep.subr.mxu0 0.0
        %5896 = vmatpush1.msra.mxu0 0.0
        %5897 = vmatprep.subr.mxu0 0.0
        %5898 = vmatpush1.msra.mxu0 0.0
        %5899 = vmatprep.subr.mxu0 0.0
        %5900 = vmatpush1.msra.mxu0 0.0
        %5901 = vmatprep.subr.mxu0 0.0
        %5902 = vmatpush1.msra.mxu0 0.0
        %5903 = vmatprep.subr.mxu0 0.0
        %5904 = vmatpush1.msra.mxu0 0.0
        %5905 = vmatprep.subr.mxu0 0.0
        %5906 = vmatpush1.msra.mxu0 0.0
        %5907 = vmatprep.subr.mxu0 0.0
        %5908 = vmatpush1.msra.mxu0 0.0
        %5909 = vmatprep.subr.mxu0 0.0
        %5910 = vmatpush1.msra.mxu0 0.0
        %5911 = vmatprep.subr.mxu0 0.0
        %5912 = vmatpush1.msra.mxu0 0.0
        %5913 = vmatprep.subr.mxu0 0.0
        %5914 = vmatpush1.msra.mxu0 0.0
        %5915 = vmatprep.subr.mxu0 0.0
        %5916 = vmatpush1.msra.mxu0 0.0
        %5917 = vmatprep.subr.mxu0 0.0
        %5918 = vmatpush1.msra.mxu0 0.0
        %5919 = vmatprep.subr.mxu0 0.0
        %5920 = vmatpush1.msra.mxu0 0.0
        %5921 = vmatprep.subr.mxu0 0.0
        %5922 = vmatpush1.msra.mxu0 0.0
        %5923 = vmatprep.subr.mxu0 0.0
        %5924 = vmatpush1.msra.mxu0 0.0
        %5925 = vmatprep.subr.mxu0 0.0
        %5926 = vmatpush1.msra.mxu0 0.0
        %5927 = vmatprep.subr.mxu0 0.0
        %5928 = vmatpush1.msra.mxu0 0.0
        %5929 = vmatprep.subr.mxu0 0.0
        %5930 = vmatpush1.msra.mxu0 0.0
        %5931 = vmatprep.subr.mxu0 0.0
        %5932 = vmatpush1.msra.mxu0 0.0
        %5933 = vmatprep.subr.mxu0 0.0
        %5934 = vmatpush1.msra.mxu0 0.0
        %5935 = vmatprep.subr.mxu0 0.0
        %5936 = vmatpush1.msra.mxu0 0.0
        %5937 = vmatprep.mubr.f32.mxu0 0.0
        %5938 = vmatmul.mubr.f32.gmra.mrb[0].mxu0 %v5871
        %v5939 = vpop.f32.mrb[0].mxu0
        %v5940 = vadd.f32 0.0, %v5939
        %v5941 = vpop.f32.mrb[0].mxu0
        %5942 = vdwg.mxu0
        %v5944 = vsel %vm5679, %v5723, 0
        %5946 = vmatprep.subr.mxu0 0.0
        %5947 = vmatpush1.msra.mxu0 %v5280
        %5948 = vmatprep.subr.mxu0 0.0
        %5949 = vmatpush1.msra.mxu0 %v5348
        %5950 = vmatprep.subr.mxu0 0.0
        %5951 = vmatpush1.msra.mxu0 0.0
        %5952 = vmatprep.subr.mxu0 0.0
        %5953 = vmatpush1.msra.mxu0 0.0
        %5954 = vmatprep.subr.mxu0 0.0
        %5955 = vmatpush1.msra.mxu0 0.0
        %5956 = vmatprep.subr.mxu0 0.0
        %5957 = vmatpush1.msra.mxu0 0.0
        %5958 = vmatprep.subr.mxu0 0.0
        %5959 = vmatpush1.msra.mxu0 0.0
        %5960 = vmatprep.subr.mxu0 0.0
        %5961 = vmatpush1.msra.mxu0 0.0
        %5962 = vmatprep.subr.mxu0 0.0
        %5963 = vmatpush1.msra.mxu0 0.0
        %5964 = vmatprep.subr.mxu0 0.0
        %5965 = vmatpush1.msra.mxu0 0.0
        %5966 = vmatprep.subr.mxu0 0.0
        %5967 = vmatpush1.msra.mxu0 0.0
        %5968 = vmatprep.subr.mxu0 0.0
        %5969 = vmatpush1.msra.mxu0 0.0
        %5970 = vmatprep.subr.mxu0 0.0
        %5971 = vmatpush1.msra.mxu0 0.0
        %5972 = vmatprep.subr.mxu0 0.0
        %5973 = vmatpush1.msra.mxu0 0.0
        %5974 = vmatprep.subr.mxu0 0.0
        %5975 = vmatpush1.msra.mxu0 0.0
        %5976 = vmatprep.subr.mxu0 0.0
        %5977 = vmatpush1.msra.mxu0 0.0
        %5978 = vmatprep.subr.mxu0 0.0
        %5979 = vmatpush1.msra.mxu0 0.0
        %5980 = vmatprep.subr.mxu0 0.0
        %5981 = vmatpush1.msra.mxu0 0.0
        %5982 = vmatprep.subr.mxu0 0.0
        %5983 = vmatpush1.msra.mxu0 0.0
        %5984 = vmatprep.subr.mxu0 0.0
        %5985 = vmatpush1.msra.mxu0 0.0
        %5986 = vmatprep.subr.mxu0 0.0
        %5987 = vmatpush1.msra.mxu0 0.0
        %5988 = vmatprep.subr.mxu0 0.0
        %5989 = vmatpush1.msra.mxu0 0.0
        %5990 = vmatprep.subr.mxu0 0.0
        %5991 = vmatpush1.msra.mxu0 0.0
        %5992 = vmatprep.subr.mxu0 0.0
        %5993 = vmatpush1.msra.mxu0 0.0
        %5994 = vmatprep.subr.mxu0 0.0
        %5995 = vmatpush1.msra.mxu0 0.0
        %5996 = vmatprep.subr.mxu0 0.0
        %5997 = vmatpush1.msra.mxu0 0.0
        %5998 = vmatprep.subr.mxu0 0.0
        %5999 = vmatpush1.msra.mxu0 0.0
        %6000 = vmatprep.subr.mxu0 0.0
        %6001 = vmatpush1.msra.mxu0 0.0
        %6002 = vmatprep.subr.mxu0 0.0
        %6003 = vmatpush1.msra.mxu0 0.0
        %6004 = vmatprep.subr.mxu0 0.0
        %6005 = vmatpush1.msra.mxu0 0.0
        %6006 = vmatprep.subr.mxu0 0.0
        %6007 = vmatpush1.msra.mxu0 0.0
        %6008 = vmatprep.subr.mxu0 0.0
        %6009 = vmatpush1.msra.mxu0 0.0
        %6010 = vmatprep.mubr.f32.mxu0 0.0
        %6011 = vmatmul.mubr.f32.gmra.mrb[0].mxu0 %v5944
        %v6012 = vpop.f32.mrb[0].mxu0
        %v6013 = vadd.f32 0.0, %v6012
        %v6014 = vpop.f32.mrb[0].mxu0
        %6015 = vdwg.mxu0
        %v6016 = vcombine.low %v5794, %v5940
        %v6017 = vcombine.high %v5794, %v5940
        %v6019 = vunpack.c.l.s4 1983009808
        %v6020 = vunpack.c.0.s8 %v6019
        %v6021 = vlaneseq
        %v6022 = vshrl.u32 %v6021, 7
        %v6023 = vsub.s32 %v6020, %v6022
        %v6024 = vrot.slane %v6016, %v6023
        %v6026 = vunpack.c.l.s4 1983009808
        %v6027 = vunpack.c.0.s8 %v6026
        %v6028 = vlaneseq
        %v6029 = vshrl.u32 %v6028, 7
        %v6030 = vsub.s32 %v6027, %v6029
        %v6031 = vrot.slane %v6017, %v6030
        %v6032 = vcombine.low %v5867, %v6013
        %v6033 = vcombine.high %v5867, %v6013
        %v6035 = vunpack.c.l.s4 1983009808
        %v6036 = vunpack.c.0.s8 %v6035
        %v6037 = vlaneseq
        %v6038 = vshrl.u32 %v6037, 7
        %v6039 = vsub.s32 %v6036, %v6038
        %v6040 = vrot.slane %v6032, %v6039
        %v6042 = vunpack.c.l.s4 1983009808
        %v6043 = vunpack.c.0.s8 %v6042
        %v6044 = vlaneseq
        %v6045 = vshrl.u32 %v6044, 7
        %v6046 = vsub.s32 %v6043, %v6045
        %v6047 = vrot.slane %v6033, %v6046
        %v6048 = vcombine.low %v6024, %v6040
        %v6049 = vcombine.high %v6024, %v6040
        %v6051 = vunpack.c.l.s4 1934713408
        %v6052 = vunpack.c.0.s8 %v6051
        %v6053 = vlaneseq
        %v6054 = vshrl.u32 %v6053, 7
        %v6055 = vsub.s32 %v6052, %v6054
        %v6056 = vrot.slane %v6048, %v6055
        %v6058 = vunpack.c.l.s4 1934713408
        %v6059 = vunpack.c.0.s8 %v6058
        %v6060 = vlaneseq
        %v6061 = vshrl.u32 %v6060, 7
        %v6062 = vsub.s32 %v6059, %v6061
        %v6063 = vrot.slane %v6049, %v6062
        %v6064 = vcombine.low %v6031, %v6047
        %v6065 = vcombine.high %v6031, %v6047
        %v6067 = vunpack.c.l.s4 1934713408
        %v6068 = vunpack.c.0.s8 %v6067
        %v6069 = vlaneseq
        %v6070 = vshrl.u32 %v6069, 7
        %v6071 = vsub.s32 %v6068, %v6070
        %v6072 = vrot.slane %v6064, %v6071
        %v6074 = vunpack.c.l.s4 1934713408
        %v6075 = vunpack.c.0.s8 %v6074
        %v6076 = vlaneseq
        %v6077 = vshrl.u32 %v6076, 7
        %v6078 = vsub.s32 %v6075, %v6077
        %v6079 = vrot.slane %v6065, %v6078
        %v6080 = vcombine.high %v6056, 0.0
        %v6081 = vcombine.high %v6063, 0.0
        %v6082 = vcombine.high %v6072, 0.0
        %v6083 = vcombine.high %v6079, 0.0
        %v6084 = vcombine.low %v6056, %v6063
        %v6086 = vunpack.c.l.s4 1983009808
        %v6087 = vunpack.c.0.s8 %v6086
        %v6088 = vlaneseq
        %v6089 = vshrl.u32 %v6088, 7
        %v6090 = vsub.s32 %v6087, %v6089
        %v6091 = vrot.slane %v6084, %v6090
        %v6092 = vcombine.low %v6080, %v6081
        %v6094 = vunpack.c.l.s4 1983009808
        %v6095 = vunpack.c.0.s8 %v6094
        %v6096 = vlaneseq
        %v6097 = vshrl.u32 %v6096, 7
        %v6098 = vsub.s32 %v6095, %v6097
        %v6099 = vrot.slane %v6092, %v6098
        %v6100 = vcombine.low %v6072, %v6079
        %v6102 = vunpack.c.l.s4 1983009808
        %v6103 = vunpack.c.0.s8 %v6102
        %v6104 = vlaneseq
        %v6105 = vshrl.u32 %v6104, 7
        %v6106 = vsub.s32 %v6103, %v6105
        %v6107 = vrot.slane %v6100, %v6106
        %v6108 = vcombine.low %v6082, %v6083
        %v6110 = vunpack.c.l.s4 1983009808
        %v6111 = vunpack.c.0.s8 %v6110
        %v6112 = vlaneseq
        %v6113 = vshrl.u32 %v6112, 7
        %v6114 = vsub.s32 %v6111, %v6113
        %v6115 = vrot.slane %v6108, %v6114
        %v6116 = vcombine.low %v6091, %v6099
        %v6117 = vcombine.high %v6091, %v6099
        %v6119 = vunpack.c.l.s4 1934713408
        %v6120 = vunpack.c.0.s8 %v6119
        %v6121 = vlaneseq
        %v6122 = vshrl.u32 %v6121, 7
        %v6123 = vsub.s32 %v6120, %v6122
        %v6124 = vrot.slane %v6116, %v6123
        %v6126 = vunpack.c.l.s4 1934713408
        %v6127 = vunpack.c.0.s8 %v6126
        %v6128 = vlaneseq
        %v6129 = vshrl.u32 %v6128, 7
        %v6130 = vsub.s32 %v6127, %v6129
        %v6131 = vrot.slane %v6117, %v6130
        %v6132 = vcombine.low %v6107, %v6115
        %v6133 = vcombine.high %v6107, %v6115
        %v6135 = vunpack.c.l.s4 1934713408
        %v6136 = vunpack.c.0.s8 %v6135
        %v6137 = vlaneseq
        %v6138 = vshrl.u32 %v6137, 7
        %v6139 = vsub.s32 %v6136, %v6138
        %v6140 = vrot.slane %v6132, %v6139
        %v6142 = vunpack.c.l.s4 1934713408
        %v6143 = vunpack.c.0.s8 %v6142
        %v6144 = vlaneseq
        %v6145 = vshrl.u32 %v6144, 7
        %v6146 = vsub.s32 %v6143, %v6145
        %v6147 = vrot.slane %v6133, %v6146
        %v6148 = vcombine.low %v6124, %v6140
        %v6149 = vcombine.high %v6124, %v6140
        %v6150 = vcombine.low %v6131, %v6147
        %v6151 = vcombine.high %v6131, %v6147
        %6153 = vrot.lane.b32.xlu0 %v6149, 32
        %v6154 = vpop.permute.xlu0 %6153
        %6157 = vrot.lane.b32.xlu0 %v6150, 64
        %v6158 = vpop.permute.xlu0 %6157
        %6161 = vrot.lane.b32.xlu0 %v6151, 96
        %v6162 = vpop.permute.xlu0 %6161
        %v6164 = vsel %vm2200, %v6148, %v6154
        %v6165 = vsel %vm2999, %v6164, %v6158
        %v6166 = vsel %vm3001, %v6165, %v6162
        %6168 = vrot.lane.b32.xlu0 %v4470, 96
        %v6169 = vpop.permute.xlu0 %6168
        %6171 = vrot.lane.b32.xlu0 %v4470, 64
        %v6172 = vpop.permute.xlu0 %6171
        %6174 = vrot.lane.b32.xlu0 %v4470, 32
        %v6175 = vpop.permute.xlu0 %6174
        %v6177 = vcombine.low %v4470, %v6172
        %v6178 = vcombine.high %v4470, %v6172
        %v6180 = vunpack.c.l.s4 1983009808
        %v6181 = vunpack.c.0.s8 %v6180
        %v6182 = vlaneseq
        %v6183 = vshrl.u32 %v6182, 7
        %v6184 = vsub.s32 %v6181, %v6183
        %v6185 = vrot.slane %v6177, %v6184
        %v6187 = vunpack.c.l.s4 1983009808
        %v6188 = vunpack.c.0.s8 %v6187
        %v6189 = vlaneseq
        %v6190 = vshrl.u32 %v6189, 7
        %v6191 = vsub.s32 %v6188, %v6190
        %v6192 = vrot.slane %v6178, %v6191
        %v6193 = vcombine.low %v6169, %v6175
        %v6194 = vcombine.high %v6169, %v6175
        %v6196 = vunpack.c.l.s4 1983009808
        %v6197 = vunpack.c.0.s8 %v6196
        %v6198 = vlaneseq
        %v6199 = vshrl.u32 %v6198, 7
        %v6200 = vsub.s32 %v6197, %v6199
        %v6201 = vrot.slane %v6193, %v6200
        %v6203 = vunpack.c.l.s4 1983009808
        %v6204 = vunpack.c.0.s8 %v6203
        %v6205 = vlaneseq
        %v6206 = vshrl.u32 %v6205, 7
        %v6207 = vsub.s32 %v6204, %v6206
        %v6208 = vrot.slane %v6194, %v6207
        %v6209 = vcombine.low %v6185, %v6201
        %v6210 = vcombine.high %v6185, %v6201
        %v6212 = vunpack.c.l.s4 1934713408
        %v6213 = vunpack.c.0.s8 %v6212
        %v6214 = vlaneseq
        %v6215 = vshrl.u32 %v6214, 7
        %v6216 = vsub.s32 %v6213, %v6215
        %v6217 = vrot.slane %v6209, %v6216
        %v6219 = vunpack.c.l.s4 1934713408
        %v6220 = vunpack.c.0.s8 %v6219
        %v6221 = vlaneseq
        %v6222 = vshrl.u32 %v6221, 7
        %v6223 = vsub.s32 %v6220, %v6222
        %v6224 = vrot.slane %v6210, %v6223
        %v6225 = vcombine.low %v6192, %v6208
        %v6226 = vcombine.high %v6192, %v6208
        %v6228 = vunpack.c.l.s4 1934713408
        %v6229 = vunpack.c.0.s8 %v6228
        %v6230 = vlaneseq
        %v6231 = vshrl.u32 %v6230, 7
        %v6232 = vsub.s32 %v6229, %v6231
        %v6233 = vrot.slane %v6225, %v6232
        %v6235 = vunpack.c.l.s4 1934713408
        %v6236 = vunpack.c.0.s8 %v6235
        %v6237 = vlaneseq
        %v6238 = vshrl.u32 %v6237, 7
        %v6239 = vsub.s32 %v6236, %v6238
        %v6240 = vrot.slane %v6226, %v6239
        %v6241 = vcombine.high %v6217, 0.0
        %v6242 = vcombine.high %v6224, 0.0
        %v6243 = vcombine.high %v6233, 0.0
        %v6244 = vcombine.high %v6240, 0.0
        %v6245 = vcombine.low %v6217, %v6224
        %v6247 = vunpack.c.l.s4 1983009808
        %v6248 = vunpack.c.0.s8 %v6247
        %v6249 = vlaneseq
        %v6250 = vshrl.u32 %v6249, 7
        %v6251 = vsub.s32 %v6248, %v6250
        %v6252 = vrot.slane %v6245, %v6251
        %v6253 = vcombine.low %v6241, %v6242
        %v6255 = vunpack.c.l.s4 1983009808
        %v6256 = vunpack.c.0.s8 %v6255
        %v6257 = vlaneseq
        %v6258 = vshrl.u32 %v6257, 7
        %v6259 = vsub.s32 %v6256, %v6258
        %v6260 = vrot.slane %v6253, %v6259
        %v6261 = vcombine.low %v6233, %v6240
        %v6263 = vunpack.c.l.s4 1983009808
        %v6264 = vunpack.c.0.s8 %v6263
        %v6265 = vlaneseq
        %v6266 = vshrl.u32 %v6265, 7
        %v6267 = vsub.s32 %v6264, %v6266
        %v6268 = vrot.slane %v6261, %v6267
        %v6269 = vcombine.low %v6243, %v6244
        %v6271 = vunpack.c.l.s4 1983009808
        %v6272 = vunpack.c.0.s8 %v6271
        %v6273 = vlaneseq
        %v6274 = vshrl.u32 %v6273, 7
        %v6275 = vsub.s32 %v6272, %v6274
        %v6276 = vrot.slane %v6269, %v6275
        %v6277 = vcombine.low %v6252, %v6260
        %v6278 = vcombine.high %v6252, %v6260
        %v6280 = vunpack.c.l.s4 1934713408
        %v6281 = vunpack.c.0.s8 %v6280
        %v6282 = vlaneseq
        %v6283 = vshrl.u32 %v6282, 7
        %v6284 = vsub.s32 %v6281, %v6283
        %v6285 = vrot.slane %v6277, %v6284
        %v6287 = vunpack.c.l.s4 1934713408
        %v6288 = vunpack.c.0.s8 %v6287
        %v6289 = vlaneseq
        %v6290 = vshrl.u32 %v6289, 7
        %v6291 = vsub.s32 %v6288, %v6290
        %v6292 = vrot.slane %v6278, %v6291
        %v6293 = vcombine.low %v6268, %v6276
        %v6294 = vcombine.high %v6268, %v6276
        %v6296 = vunpack.c.l.s4 1934713408
        %v6297 = vunpack.c.0.s8 %v6296
        %v6298 = vlaneseq
        %v6299 = vshrl.u32 %v6298, 7
        %v6300 = vsub.s32 %v6297, %v6299
        %v6301 = vrot.slane %v6293, %v6300
        %v6303 = vunpack.c.l.s4 1934713408
        %v6304 = vunpack.c.0.s8 %v6303
        %v6305 = vlaneseq
        %v6306 = vshrl.u32 %v6305, 7
        %v6307 = vsub.s32 %v6304, %v6306
        %v6308 = vrot.slane %v6294, %v6307
        %v6309 = vcombine.low %v6285, %v6301
        %v6310 = vcombine.high %v6285, %v6301
        %v6311 = vcombine.low %v6292, %v6308
        %v6312 = vcombine.high %v6292, %v6308
        %6315 = vrot.lane.b32.xlu0 %v4611, 96
        %v6316 = vpop.permute.xlu0 %6315
        %6317 = vrot.lane.b32.xlu0 %v4615, 96
        %v6318 = vpop.permute.xlu0 %6317
        %6321 = vrot.lane.b32.xlu0 %v4611, 64
        %v6322 = vpop.permute.xlu0 %6321
        %6323 = vrot.lane.b32.xlu0 %v4615, 64
        %v6324 = vpop.permute.xlu0 %6323
        %6327 = vrot.lane.b32.xlu0 %v4611, 32
        %v6328 = vpop.permute.xlu0 %6327
        %6329 = vrot.lane.b32.xlu0 %v4615, 32
        %v6330 = vpop.permute.xlu0 %6329
        %v6333 = vcombine.low %v4611, %v6322
        %v6334 = vcombine.high %v4611, %v6322
        %v6336 = vunpack.c.l.s4 1983009808
        %v6337 = vunpack.c.0.s8 %v6336
        %v6338 = vlaneseq
        %v6339 = vshrl.u32 %v6338, 7
        %v6340 = vsub.s32 %v6337, %v6339
        %v6341 = vrot.slane %v6333, %v6340
        %v6343 = vunpack.c.l.s4 1983009808
        %v6344 = vunpack.c.0.s8 %v6343
        %v6345 = vlaneseq
        %v6346 = vshrl.u32 %v6345, 7
        %v6347 = vsub.s32 %v6344, %v6346
        %v6348 = vrot.slane %v6334, %v6347
        %v6349 = vcombine.low %v6316, %v6328
        %v6350 = vcombine.high %v6316, %v6328
        %v6352 = vunpack.c.l.s4 1983009808
        %v6353 = vunpack.c.0.s8 %v6352
        %v6354 = vlaneseq
        %v6355 = vshrl.u32 %v6354, 7
        %v6356 = vsub.s32 %v6353, %v6355
        %v6357 = vrot.slane %v6349, %v6356
        %v6359 = vunpack.c.l.s4 1983009808
        %v6360 = vunpack.c.0.s8 %v6359
        %v6361 = vlaneseq
        %v6362 = vshrl.u32 %v6361, 7
        %v6363 = vsub.s32 %v6360, %v6362
        %v6364 = vrot.slane %v6350, %v6363
        %v6365 = vcombine.low %v6341, %v6357
        %v6366 = vcombine.high %v6341, %v6357
        %v6368 = vunpack.c.l.s4 1934713408
        %v6369 = vunpack.c.0.s8 %v6368
        %v6370 = vlaneseq
        %v6371 = vshrl.u32 %v6370, 7
        %v6372 = vsub.s32 %v6369, %v6371
        %v6373 = vrot.slane %v6365, %v6372
        %v6375 = vunpack.c.l.s4 1934713408
        %v6376 = vunpack.c.0.s8 %v6375
        %v6377 = vlaneseq
        %v6378 = vshrl.u32 %v6377, 7
        %v6379 = vsub.s32 %v6376, %v6378
        %v6380 = vrot.slane %v6366, %v6379
        %v6381 = vcombine.low %v6348, %v6364
        %v6382 = vcombine.high %v6348, %v6364
        %v6384 = vunpack.c.l.s4 1934713408
        %v6385 = vunpack.c.0.s8 %v6384
        %v6386 = vlaneseq
        %v6387 = vshrl.u32 %v6386, 7
        %v6388 = vsub.s32 %v6385, %v6387
        %v6389 = vrot.slane %v6381, %v6388
        %v6391 = vunpack.c.l.s4 1934713408
        %v6392 = vunpack.c.0.s8 %v6391
        %v6393 = vlaneseq
        %v6394 = vshrl.u32 %v6393, 7
        %v6395 = vsub.s32 %v6392, %v6394
        %v6396 = vrot.slane %v6382, %v6395
        %v6397 = vcombine.high %v6373, 0.0
        %v6398 = vcombine.high %v6380, 0.0
        %v6399 = vcombine.high %v6389, 0.0
        %v6400 = vcombine.high %v6396, 0.0
        %v6401 = vcombine.low %v4615, %v6324
        %v6402 = vcombine.high %v4615, %v6324
        %v6404 = vunpack.c.l.s4 1983009808
        %v6405 = vunpack.c.0.s8 %v6404
        %v6406 = vlaneseq
        %v6407 = vshrl.u32 %v6406, 7
        %v6408 = vsub.s32 %v6405, %v6407
        %v6409 = vrot.slane %v6401, %v6408
        %v6411 = vunpack.c.l.s4 1983009808
        %v6412 = vunpack.c.0.s8 %v6411
        %v6413 = vlaneseq
        %v6414 = vshrl.u32 %v6413, 7
        %v6415 = vsub.s32 %v6412, %v6414
        %v6416 = vrot.slane %v6402, %v6415
        %v6417 = vcombine.low %v6318, %v6330
        %v6418 = vcombine.high %v6318, %v6330
        %v6420 = vunpack.c.l.s4 1983009808
        %v6421 = vunpack.c.0.s8 %v6420
        %v6422 = vlaneseq
        %v6423 = vshrl.u32 %v6422, 7
        %v6424 = vsub.s32 %v6421, %v6423
        %v6425 = vrot.slane %v6417, %v6424
        %v6427 = vunpack.c.l.s4 1983009808
        %v6428 = vunpack.c.0.s8 %v6427
        %v6429 = vlaneseq
        %v6430 = vshrl.u32 %v6429, 7
        %v6431 = vsub.s32 %v6428, %v6430
        %v6432 = vrot.slane %v6418, %v6431
        %v6433 = vcombine.low %v6409, %v6425
        %v6434 = vcombine.high %v6409, %v6425
        %v6436 = vunpack.c.l.s4 1934713408
        %v6437 = vunpack.c.0.s8 %v6436
        %v6438 = vlaneseq
        %v6439 = vshrl.u32 %v6438, 7
        %v6440 = vsub.s32 %v6437, %v6439
        %v6441 = vrot.slane %v6433, %v6440
        %v6443 = vunpack.c.l.s4 1934713408
        %v6444 = vunpack.c.0.s8 %v6443
        %v6445 = vlaneseq
        %v6446 = vshrl.u32 %v6445, 7
        %v6447 = vsub.s32 %v6444, %v6446
        %v6448 = vrot.slane %v6434, %v6447
        %v6449 = vcombine.low %v6416, %v6432
        %v6450 = vcombine.high %v6416, %v6432
        %v6452 = vunpack.c.l.s4 1934713408
        %v6453 = vunpack.c.0.s8 %v6452
        %v6454 = vlaneseq
        %v6455 = vshrl.u32 %v6454, 7
        %v6456 = vsub.s32 %v6453, %v6455
        %v6457 = vrot.slane %v6449, %v6456
        %v6459 = vunpack.c.l.s4 1934713408
        %v6460 = vunpack.c.0.s8 %v6459
        %v6461 = vlaneseq
        %v6462 = vshrl.u32 %v6461, 7
        %v6463 = vsub.s32 %v6460, %v6462
        %v6464 = vrot.slane %v6450, %v6463
        %v6465 = vcombine.high %v6441, 0.0
        %v6466 = vcombine.high %v6448, 0.0
        %v6467 = vcombine.high %v6457, 0.0
        %v6468 = vcombine.high %v6464, 0.0
        %v6469 = vcombine.low %v6373, %v6380
        %v6471 = vunpack.c.l.s4 1983009808
        %v6472 = vunpack.c.0.s8 %v6471
        %v6473 = vlaneseq
        %v6474 = vshrl.u32 %v6473, 7
        %v6475 = vsub.s32 %v6472, %v6474
        %v6476 = vrot.slane %v6469, %v6475
        %v6477 = vcombine.low %v6397, %v6398
        %v6479 = vunpack.c.l.s4 1983009808
        %v6480 = vunpack.c.0.s8 %v6479
        %v6481 = vlaneseq
        %v6482 = vshrl.u32 %v6481, 7
        %v6483 = vsub.s32 %v6480, %v6482
        %v6484 = vrot.slane %v6477, %v6483
        %v6485 = vcombine.low %v6389, %v6396
        %v6487 = vunpack.c.l.s4 1983009808
        %v6488 = vunpack.c.0.s8 %v6487
        %v6489 = vlaneseq
        %v6490 = vshrl.u32 %v6489, 7
        %v6491 = vsub.s32 %v6488, %v6490
        %v6492 = vrot.slane %v6485, %v6491
        %v6493 = vcombine.low %v6399, %v6400
        %v6495 = vunpack.c.l.s4 1983009808
        %v6496 = vunpack.c.0.s8 %v6495
        %v6497 = vlaneseq
        %v6498 = vshrl.u32 %v6497, 7
        %v6499 = vsub.s32 %v6496, %v6498
        %v6500 = vrot.slane %v6493, %v6499
        %v6501 = vcombine.low %v6476, %v6484
        %v6502 = vcombine.high %v6476, %v6484
        %v6504 = vunpack.c.l.s4 1934713408
        %v6505 = vunpack.c.0.s8 %v6504
        %v6506 = vlaneseq
        %v6507 = vshrl.u32 %v6506, 7
        %v6508 = vsub.s32 %v6505, %v6507
        %v6509 = vrot.slane %v6501, %v6508
        %v6511 = vunpack.c.l.s4 1934713408
        %v6512 = vunpack.c.0.s8 %v6511
        %v6513 = vlaneseq
        %v6514 = vshrl.u32 %v6513, 7
        %v6515 = vsub.s32 %v6512, %v6514
        %v6516 = vrot.slane %v6502, %v6515
        %v6517 = vcombine.low %v6492, %v6500
        %v6518 = vcombine.high %v6492, %v6500
        %v6520 = vunpack.c.l.s4 1934713408
        %v6521 = vunpack.c.0.s8 %v6520
        %v6522 = vlaneseq
        %v6523 = vshrl.u32 %v6522, 7
        %v6524 = vsub.s32 %v6521, %v6523
        %v6525 = vrot.slane %v6517, %v6524
        %v6527 = vunpack.c.l.s4 1934713408
        %v6528 = vunpack.c.0.s8 %v6527
        %v6529 = vlaneseq
        %v6530 = vshrl.u32 %v6529, 7
        %v6531 = vsub.s32 %v6528, %v6530
        %v6532 = vrot.slane %v6518, %v6531
        %v6533 = vcombine.low %v6509, %v6525
        %v6534 = vcombine.high %v6509, %v6525
        %v6535 = vcombine.low %v6516, %v6532
        %v6536 = vcombine.high %v6516, %v6532
        %v6537 = vcombine.low %v6441, %v6448
        %v6539 = vunpack.c.l.s4 1983009808
        %v6540 = vunpack.c.0.s8 %v6539
        %v6541 = vlaneseq
        %v6542 = vshrl.u32 %v6541, 7
        %v6543 = vsub.s32 %v6540, %v6542
        %v6544 = vrot.slane %v6537, %v6543
        %v6545 = vcombine.low %v6465, %v6466
        %v6547 = vunpack.c.l.s4 1983009808
        %v6548 = vunpack.c.0.s8 %v6547
        %v6549 = vlaneseq
        %v6550 = vshrl.u32 %v6549, 7
        %v6551 = vsub.s32 %v6548, %v6550
        %v6552 = vrot.slane %v6545, %v6551
        %v6553 = vcombine.low %v6457, %v6464
        %v6555 = vunpack.c.l.s4 1983009808
        %v6556 = vunpack.c.0.s8 %v6555
        %v6557 = vlaneseq
        %v6558 = vshrl.u32 %v6557, 7
        %v6559 = vsub.s32 %v6556, %v6558
        %v6560 = vrot.slane %v6553, %v6559
        %v6561 = vcombine.low %v6467, %v6468
        %v6563 = vunpack.c.l.s4 1983009808
        %v6564 = vunpack.c.0.s8 %v6563
        %v6565 = vlaneseq
        %v6566 = vshrl.u32 %v6565, 7
        %v6567 = vsub.s32 %v6564, %v6566
        %v6568 = vrot.slane %v6561, %v6567
        %v6569 = vcombine.low %v6544, %v6552
        %v6570 = vcombine.high %v6544, %v6552
        %v6572 = vunpack.c.l.s4 1934713408
        %v6573 = vunpack.c.0.s8 %v6572
        %v6574 = vlaneseq
        %v6575 = vshrl.u32 %v6574, 7
        %v6576 = vsub.s32 %v6573, %v6575
        %v6577 = vrot.slane %v6569, %v6576
        %v6579 = vunpack.c.l.s4 1934713408
        %v6580 = vunpack.c.0.s8 %v6579
        %v6581 = vlaneseq
        %v6582 = vshrl.u32 %v6581, 7
        %v6583 = vsub.s32 %v6580, %v6582
        %v6584 = vrot.slane %v6570, %v6583
        %v6585 = vcombine.low %v6560, %v6568
        %v6586 = vcombine.high %v6560, %v6568
        %v6588 = vunpack.c.l.s4 1934713408
        %v6589 = vunpack.c.0.s8 %v6588
        %v6590 = vlaneseq
        %v6591 = vshrl.u32 %v6590, 7
        %v6592 = vsub.s32 %v6589, %v6591
        %v6593 = vrot.slane %v6585, %v6592
        %v6595 = vunpack.c.l.s4 1934713408
        %v6596 = vunpack.c.0.s8 %v6595
        %v6597 = vlaneseq
        %v6598 = vshrl.u32 %v6597, 7
        %v6599 = vsub.s32 %v6596, %v6598
        %v6600 = vrot.slane %v6586, %v6599
        %v6601 = vcombine.low %v6577, %v6593
        %v6602 = vcombine.high %v6577, %v6593
        %v6603 = vcombine.low %v6584, %v6600
        %v6604 = vcombine.high %v6584, %v6600
        %6607 = vrot.lane.b32.xlu0 %v4613, 96
        %v6608 = vpop.permute.xlu0 %6607
        %6609 = vrot.lane.b32.xlu0 %v4617, 96
        %v6610 = vpop.permute.xlu0 %6609
        %6613 = vrot.lane.b32.xlu0 %v4613, 64
        %v6614 = vpop.permute.xlu0 %6613
        %6615 = vrot.lane.b32.xlu0 %v4617, 64
        %v6616 = vpop.permute.xlu0 %6615
        %6619 = vrot.lane.b32.xlu0 %v4613, 32
        %v6620 = vpop.permute.xlu0 %6619
        %6621 = vrot.lane.b32.xlu0 %v4617, 32
        %v6622 = vpop.permute.xlu0 %6621
        %v6625 = vcombine.low %v4613, %v6614
        %v6626 = vcombine.high %v4613, %v6614
        %v6628 = vunpack.c.l.s4 1983009808
        %v6629 = vunpack.c.0.s8 %v6628
        %v6630 = vlaneseq
        %v6631 = vshrl.u32 %v6630, 7
        %v6632 = vsub.s32 %v6629, %v6631
        %v6633 = vrot.slane %v6625, %v6632
        %v6635 = vunpack.c.l.s4 1983009808
        %v6636 = vunpack.c.0.s8 %v6635
        %v6637 = vlaneseq
        %v6638 = vshrl.u32 %v6637, 7
        %v6639 = vsub.s32 %v6636, %v6638
        %v6640 = vrot.slane %v6626, %v6639
        %v6641 = vcombine.low %v6608, %v6620
        %v6642 = vcombine.high %v6608, %v6620
        %v6644 = vunpack.c.l.s4 1983009808
        %v6645 = vunpack.c.0.s8 %v6644
        %v6646 = vlaneseq
        %v6647 = vshrl.u32 %v6646, 7
        %v6648 = vsub.s32 %v6645, %v6647
        %v6649 = vrot.slane %v6641, %v6648
        %v6651 = vunpack.c.l.s4 1983009808
        %v6652 = vunpack.c.0.s8 %v6651
        %v6653 = vlaneseq
        %v6654 = vshrl.u32 %v6653, 7
        %v6655 = vsub.s32 %v6652, %v6654
        %v6656 = vrot.slane %v6642, %v6655
        %v6657 = vcombine.low %v6633, %v6649
        %v6658 = vcombine.high %v6633, %v6649
        %v6660 = vunpack.c.l.s4 1934713408
        %v6661 = vunpack.c.0.s8 %v6660
        %v6662 = vlaneseq
        %v6663 = vshrl.u32 %v6662, 7
        %v6664 = vsub.s32 %v6661, %v6663
        %v6665 = vrot.slane %v6657, %v6664
        %v6667 = vunpack.c.l.s4 1934713408
        %v6668 = vunpack.c.0.s8 %v6667
        %v6669 = vlaneseq
        %v6670 = vshrl.u32 %v6669, 7
        %v6671 = vsub.s32 %v6668, %v6670
        %v6672 = vrot.slane %v6658, %v6671
        %v6673 = vcombine.low %v6640, %v6656
        %v6674 = vcombine.high %v6640, %v6656
        %v6676 = vunpack.c.l.s4 1934713408
        %v6677 = vunpack.c.0.s8 %v6676
        %v6678 = vlaneseq
        %v6679 = vshrl.u32 %v6678, 7
        %v6680 = vsub.s32 %v6677, %v6679
        %v6681 = vrot.slane %v6673, %v6680
        %v6683 = vunpack.c.l.s4 1934713408
        %v6684 = vunpack.c.0.s8 %v6683
        %v6685 = vlaneseq
        %v6686 = vshrl.u32 %v6685, 7
        %v6687 = vsub.s32 %v6684, %v6686
        %v6688 = vrot.slane %v6674, %v6687
        %v6689 = vcombine.high %v6665, 0.0
        %v6690 = vcombine.high %v6672, 0.0
        %v6691 = vcombine.high %v6681, 0.0
        %v6692 = vcombine.high %v6688, 0.0
        %v6693 = vcombine.low %v4617, %v6616
        %v6694 = vcombine.high %v4617, %v6616
        %v6696 = vunpack.c.l.s4 1983009808
        %v6697 = vunpack.c.0.s8 %v6696
        %v6698 = vlaneseq
        %v6699 = vshrl.u32 %v6698, 7
        %v6700 = vsub.s32 %v6697, %v6699
        %v6701 = vrot.slane %v6693, %v6700
        %v6703 = vunpack.c.l.s4 1983009808
        %v6704 = vunpack.c.0.s8 %v6703
        %v6705 = vlaneseq
        %v6706 = vshrl.u32 %v6705, 7
        %v6707 = vsub.s32 %v6704, %v6706
        %v6708 = vrot.slane %v6694, %v6707
        %v6709 = vcombine.low %v6610, %v6622
        %v6710 = vcombine.high %v6610, %v6622
        %v6712 = vunpack.c.l.s4 1983009808
        %v6713 = vunpack.c.0.s8 %v6712
        %v6714 = vlaneseq
        %v6715 = vshrl.u32 %v6714, 7
        %v6716 = vsub.s32 %v6713, %v6715
        %v6717 = vrot.slane %v6709, %v6716
        %v6719 = vunpack.c.l.s4 1983009808
        %v6720 = vunpack.c.0.s8 %v6719
        %v6721 = vlaneseq
        %v6722 = vshrl.u32 %v6721, 7
        %v6723 = vsub.s32 %v6720, %v6722
        %v6724 = vrot.slane %v6710, %v6723
        %v6725 = vcombine.low %v6701, %v6717
        %v6726 = vcombine.high %v6701, %v6717
        %v6728 = vunpack.c.l.s4 1934713408
        %v6729 = vunpack.c.0.s8 %v6728
        %v6730 = vlaneseq
        %v6731 = vshrl.u32 %v6730, 7
        %v6732 = vsub.s32 %v6729, %v6731
        %v6733 = vrot.slane %v6725, %v6732
        %v6735 = vunpack.c.l.s4 1934713408
        %v6736 = vunpack.c.0.s8 %v6735
        %v6737 = vlaneseq
        %v6738 = vshrl.u32 %v6737, 7
        %v6739 = vsub.s32 %v6736, %v6738
        %v6740 = vrot.slane %v6726, %v6739
        %v6741 = vcombine.low %v6708, %v6724
        %v6742 = vcombine.high %v6708, %v6724
        %v6744 = vunpack.c.l.s4 1934713408
        %v6745 = vunpack.c.0.s8 %v6744
        %v6746 = vlaneseq
        %v6747 = vshrl.u32 %v6746, 7
        %v6748 = vsub.s32 %v6745, %v6747
        %v6749 = vrot.slane %v6741, %v6748
        %v6751 = vunpack.c.l.s4 1934713408
        %v6752 = vunpack.c.0.s8 %v6751
        %v6753 = vlaneseq
        %v6754 = vshrl.u32 %v6753, 7
        %v6755 = vsub.s32 %v6752, %v6754
        %v6756 = vrot.slane %v6742, %v6755
        %v6757 = vcombine.high %v6733, 0.0
        %v6758 = vcombine.high %v6740, 0.0
        %v6759 = vcombine.high %v6749, 0.0
        %v6760 = vcombine.high %v6756, 0.0
        %v6761 = vcombine.low %v6665, %v6672
        %v6763 = vunpack.c.l.s4 1983009808
        %v6764 = vunpack.c.0.s8 %v6763
        %v6765 = vlaneseq
        %v6766 = vshrl.u32 %v6765, 7
        %v6767 = vsub.s32 %v6764, %v6766
        %v6768 = vrot.slane %v6761, %v6767
        %v6769 = vcombine.low %v6689, %v6690
        %v6771 = vunpack.c.l.s4 1983009808
        %v6772 = vunpack.c.0.s8 %v6771
        %v6773 = vlaneseq
        %v6774 = vshrl.u32 %v6773, 7
        %v6775 = vsub.s32 %v6772, %v6774
        %v6776 = vrot.slane %v6769, %v6775
        %v6777 = vcombine.low %v6681, %v6688
        %v6779 = vunpack.c.l.s4 1983009808
        %v6780 = vunpack.c.0.s8 %v6779
        %v6781 = vlaneseq
        %v6782 = vshrl.u32 %v6781, 7
        %v6783 = vsub.s32 %v6780, %v6782
        %v6784 = vrot.slane %v6777, %v6783
        %v6785 = vcombine.low %v6691, %v6692
        %v6787 = vunpack.c.l.s4 1983009808
        %v6788 = vunpack.c.0.s8 %v6787
        %v6789 = vlaneseq
        %v6790 = vshrl.u32 %v6789, 7
        %v6791 = vsub.s32 %v6788, %v6790
        %v6792 = vrot.slane %v6785, %v6791
        %v6793 = vcombine.low %v6768, %v6776
        %v6794 = vcombine.high %v6768, %v6776
        %v6796 = vunpack.c.l.s4 1934713408
        %v6797 = vunpack.c.0.s8 %v6796
        %v6798 = vlaneseq
        %v6799 = vshrl.u32 %v6798, 7
        %v6800 = vsub.s32 %v6797, %v6799
        %v6801 = vrot.slane %v6793, %v6800
        %v6803 = vunpack.c.l.s4 1934713408
        %v6804 = vunpack.c.0.s8 %v6803
        %v6805 = vlaneseq
        %v6806 = vshrl.u32 %v6805, 7
        %v6807 = vsub.s32 %v6804, %v6806
        %v6808 = vrot.slane %v6794, %v6807
        %v6809 = vcombine.low %v6784, %v6792
        %v6810 = vcombine.high %v6784, %v6792
        %v6812 = vunpack.c.l.s4 1934713408
        %v6813 = vunpack.c.0.s8 %v6812
        %v6814 = vlaneseq
        %v6815 = vshrl.u32 %v6814, 7
        %v6816 = vsub.s32 %v6813, %v6815
        %v6817 = vrot.slane %v6809, %v6816
        %v6819 = vunpack.c.l.s4 1934713408
        %v6820 = vunpack.c.0.s8 %v6819
        %v6821 = vlaneseq
        %v6822 = vshrl.u32 %v6821, 7
        %v6823 = vsub.s32 %v6820, %v6822
        %v6824 = vrot.slane %v6810, %v6823
        %v6825 = vcombine.low %v6801, %v6817
        %v6826 = vcombine.high %v6801, %v6817
        %v6827 = vcombine.low %v6808, %v6824
        %v6828 = vcombine.high %v6808, %v6824
        %v6829 = vcombine.low %v6733, %v6740
        %v6831 = vunpack.c.l.s4 1983009808
        %v6832 = vunpack.c.0.s8 %v6831
        %v6833 = vlaneseq
        %v6834 = vshrl.u32 %v6833, 7
        %v6835 = vsub.s32 %v6832, %v6834
        %v6836 = vrot.slane %v6829, %v6835
        %v6837 = vcombine.low %v6757, %v6758
        %v6839 = vunpack.c.l.s4 1983009808
        %v6840 = vunpack.c.0.s8 %v6839
        %v6841 = vlaneseq
        %v6842 = vshrl.u32 %v6841, 7
        %v6843 = vsub.s32 %v6840, %v6842
        %v6844 = vrot.slane %v6837, %v6843
        %v6845 = vcombine.low %v6749, %v6756
        %v6847 = vunpack.c.l.s4 1983009808
        %v6848 = vunpack.c.0.s8 %v6847
        %v6849 = vlaneseq
        %v6850 = vshrl.u32 %v6849, 7
        %v6851 = vsub.s32 %v6848, %v6850
        %v6852 = vrot.slane %v6845, %v6851
        %v6853 = vcombine.low %v6759, %v6760
        %v6855 = vunpack.c.l.s4 1983009808
        %v6856 = vunpack.c.0.s8 %v6855
        %v6857 = vlaneseq
        %v6858 = vshrl.u32 %v6857, 7
        %v6859 = vsub.s32 %v6856, %v6858
        %v6860 = vrot.slane %v6853, %v6859
        %v6861 = vcombine.low %v6836, %v6844
        %v6862 = vcombine.high %v6836, %v6844
        %v6864 = vunpack.c.l.s4 1934713408
        %v6865 = vunpack.c.0.s8 %v6864
        %v6866 = vlaneseq
        %v6867 = vshrl.u32 %v6866, 7
        %v6868 = vsub.s32 %v6865, %v6867
        %v6869 = vrot.slane %v6861, %v6868
        %v6871 = vunpack.c.l.s4 1934713408
        %v6872 = vunpack.c.0.s8 %v6871
        %v6873 = vlaneseq
        %v6874 = vshrl.u32 %v6873, 7
        %v6875 = vsub.s32 %v6872, %v6874
        %v6876 = vrot.slane %v6862, %v6875
        %v6877 = vcombine.low %v6852, %v6860
        %v6878 = vcombine.high %v6852, %v6860
        %v6880 = vunpack.c.l.s4 1934713408
        %v6881 = vunpack.c.0.s8 %v6880
        %v6882 = vlaneseq
        %v6883 = vshrl.u32 %v6882, 7
        %v6884 = vsub.s32 %v6881, %v6883
        %v6885 = vrot.slane %v6877, %v6884
        %v6887 = vunpack.c.l.s4 1934713408
        %v6888 = vunpack.c.0.s8 %v6887
        %v6889 = vlaneseq
        %v6890 = vshrl.u32 %v6889, 7
        %v6891 = vsub.s32 %v6888, %v6890
        %v6892 = vrot.slane %v6878, %v6891
        %v6893 = vcombine.low %v6869, %v6885
        %v6894 = vcombine.high %v6869, %v6885
        %v6895 = vcombine.low %v6876, %v6892
        %v6896 = vcombine.high %v6876, %v6892
        %v6898 = vsel %vm2200, %v6309, 0
        %v6901 = vsel %vm2200, %v6533, 0
        %v6904 = vsel %vm2200, %v6601, 0
        %6906 = vmatprep.subr.mxu0 0.0
        %6907 = vmatpush1.xpose.msra.mxu0 %v6901
        %6908 = vmatprep.subr.mxu0 0.0
        %6909 = vmatpush1.xpose.msra.mxu0 %v6904
        %6910 = vmatprep.subr.mxu0 0.0
        %6911 = vmatpush1.xpose.msra.mxu0 0.0
        %6912 = vmatprep.subr.mxu0 0.0
        %6913 = vmatpush1.xpose.msra.mxu0 0.0
        %6914 = vmatprep.subr.mxu0 0.0
        %6915 = vmatpush1.xpose.msra.mxu0 0.0
        %6916 = vmatprep.subr.mxu0 0.0
        %6917 = vmatpush1.xpose.msra.mxu0 0.0
        %6918 = vmatprep.subr.mxu0 0.0
        %6919 = vmatpush1.xpose.msra.mxu0 0.0
        %6920 = vmatprep.subr.mxu0 0.0
        %6921 = vmatpush1.xpose.msra.mxu0 0.0
        %6922 = vmatprep.subr.mxu0 0.0
        %6923 = vmatpush1.xpose.msra.mxu0 0.0
        %6924 = vmatprep.subr.mxu0 0.0
        %6925 = vmatpush1.xpose.msra.mxu0 0.0
        %6926 = vmatprep.subr.mxu0 0.0
        %6927 = vmatpush1.xpose.msra.mxu0 0.0
        %6928 = vmatprep.subr.mxu0 0.0
        %6929 = vmatpush1.xpose.msra.mxu0 0.0
        %6930 = vmatprep.subr.mxu0 0.0
        %6931 = vmatpush1.xpose.msra.mxu0 0.0
        %6932 = vmatprep.subr.mxu0 0.0
        %6933 = vmatpush1.xpose.msra.mxu0 0.0
        %6934 = vmatprep.subr.mxu0 0.0
        %6935 = vmatpush1.xpose.msra.mxu0 0.0
        %6936 = vmatprep.subr.mxu0 0.0
        %6937 = vmatpush1.xpose.msra.mxu0 0.0
        %6938 = vmatprep.subr.mxu0 0.0
        %6939 = vmatpush1.xpose.msra.mxu0 0.0
        %6940 = vmatprep.subr.mxu0 0.0
        %6941 = vmatpush1.xpose.msra.mxu0 0.0
        %6942 = vmatprep.subr.mxu0 0.0
        %6943 = vmatpush1.xpose.msra.mxu0 0.0
        %6944 = vmatprep.subr.mxu0 0.0
        %6945 = vmatpush1.xpose.msra.mxu0 0.0
        %6946 = vmatprep.subr.mxu0 0.0
        %6947 = vmatpush1.xpose.msra.mxu0 0.0
        %6948 = vmatprep.subr.mxu0 0.0
        %6949 = vmatpush1.xpose.msra.mxu0 0.0
        %6950 = vmatprep.subr.mxu0 0.0
        %6951 = vmatpush1.xpose.msra.mxu0 0.0
        %6952 = vmatprep.subr.mxu0 0.0
        %6953 = vmatpush1.xpose.msra.mxu0 0.0
        %6954 = vmatprep.subr.mxu0 0.0
        %6955 = vmatpush1.xpose.msra.mxu0 0.0
        %6956 = vmatprep.subr.mxu0 0.0
        %6957 = vmatpush1.xpose.msra.mxu0 0.0
        %6958 = vmatprep.subr.mxu0 0.0
        %6959 = vmatpush1.xpose.msra.mxu0 0.0
        %6960 = vmatprep.subr.mxu0 0.0
        %6961 = vmatpush1.xpose.msra.mxu0 0.0
        %6962 = vmatprep.subr.mxu0 0.0
        %6963 = vmatpush1.xpose.msra.mxu0 0.0
        %6964 = vmatprep.subr.mxu0 0.0
        %6965 = vmatpush1.xpose.msra.mxu0 0.0
        %6966 = vmatprep.subr.mxu0 0.0
        %6967 = vmatpush1.xpose.msra.mxu0 0.0
        %6968 = vmatprep.subr.mxu0 0.0
        %6969 = vmatpush1.xpose.msra.mxu0 0.0
        %6970 = vmatprep.mubr.f32.mxu0 0.0
        %6971 = vmatmul.mubr.f32.gmra.mrb[0].mxu0 %v6898
        %v6972 = vpop.f32.mrb[0].mxu0
        %v6973 = vadd.f32 0.0, %v6972
        %v6974 = vpop.f32.mrb[0].mxu0
        %6975 = vdwg.mxu0
        %v6977 = vsel %vm2200, %v6310, 0
        %v6980 = vsel %vm2200, %v6534, 0
        %v6983 = vsel %vm2200, %v6602, 0
        %6985 = vmatprep.subr.mxu0 0.0
        %6986 = vmatpush1.xpose.msra.mxu0 %v6980
        %6987 = vmatprep.subr.mxu0 0.0
        %6988 = vmatpush1.xpose.msra.mxu0 %v6983
        %6989 = vmatprep.subr.mxu0 0.0
        %6990 = vmatpush1.xpose.msra.mxu0 0.0
        %6991 = vmatprep.subr.mxu0 0.0
        %6992 = vmatpush1.xpose.msra.mxu0 0.0
        %6993 = vmatprep.subr.mxu0 0.0
        %6994 = vmatpush1.xpose.msra.mxu0 0.0
        %6995 = vmatprep.subr.mxu0 0.0
        %6996 = vmatpush1.xpose.msra.mxu0 0.0
        %6997 = vmatprep.subr.mxu0 0.0
        %6998 = vmatpush1.xpose.msra.mxu0 0.0
        %6999 = vmatprep.subr.mxu0 0.0
        %7000 = vmatpush1.xpose.msra.mxu0 0.0
        %7001 = vmatprep.subr.mxu0 0.0
        %7002 = vmatpush1.xpose.msra.mxu0 0.0
        %7003 = vmatprep.subr.mxu0 0.0
        %7004 = vmatpush1.xpose.msra.mxu0 0.0
        %7005 = vmatprep.subr.mxu0 0.0
        %7006 = vmatpush1.xpose.msra.mxu0 0.0
        %7007 = vmatprep.subr.mxu0 0.0
        %7008 = vmatpush1.xpose.msra.mxu0 0.0
        %7009 = vmatprep.subr.mxu0 0.0
        %7010 = vmatpush1.xpose.msra.mxu0 0.0
        %7011 = vmatprep.subr.mxu0 0.0
        %7012 = vmatpush1.xpose.msra.mxu0 0.0
        %7013 = vmatprep.subr.mxu0 0.0
        %7014 = vmatpush1.xpose.msra.mxu0 0.0
        %7015 = vmatprep.subr.mxu0 0.0
        %7016 = vmatpush1.xpose.msra.mxu0 0.0
        %7017 = vmatprep.subr.mxu0 0.0
        %7018 = vmatpush1.xpose.msra.mxu0 0.0
        %7019 = vmatprep.subr.mxu0 0.0
        %7020 = vmatpush1.xpose.msra.mxu0 0.0
        %7021 = vmatprep.subr.mxu0 0.0
        %7022 = vmatpush1.xpose.msra.mxu0 0.0
        %7023 = vmatprep.subr.mxu0 0.0
        %7024 = vmatpush1.xpose.msra.mxu0 0.0
        %7025 = vmatprep.subr.mxu0 0.0
        %7026 = vmatpush1.xpose.msra.mxu0 0.0
        %7027 = vmatprep.subr.mxu0 0.0
        %7028 = vmatpush1.xpose.msra.mxu0 0.0
        %7029 = vmatprep.subr.mxu0 0.0
        %7030 = vmatpush1.xpose.msra.mxu0 0.0
        %7031 = vmatprep.subr.mxu0 0.0
        %7032 = vmatpush1.xpose.msra.mxu0 0.0
        %7033 = vmatprep.subr.mxu0 0.0
        %7034 = vmatpush1.xpose.msra.mxu0 0.0
        %7035 = vmatprep.subr.mxu0 0.0
        %7036 = vmatpush1.xpose.msra.mxu0 0.0
        %7037 = vmatprep.subr.mxu0 0.0
        %7038 = vmatpush1.xpose.msra.mxu0 0.0
        %7039 = vmatprep.subr.mxu0 0.0
        %7040 = vmatpush1.xpose.msra.mxu0 0.0
        %7041 = vmatprep.subr.mxu0 0.0
        %7042 = vmatpush1.xpose.msra.mxu0 0.0
        %7043 = vmatprep.subr.mxu0 0.0
        %7044 = vmatpush1.xpose.msra.mxu0 0.0
        %7045 = vmatprep.subr.mxu0 0.0
        %7046 = vmatpush1.xpose.msra.mxu0 0.0
        %7047 = vmatprep.subr.mxu0 0.0
        %7048 = vmatpush1.xpose.msra.mxu0 0.0
        %7049 = vmatprep.mubr.f32.mxu0 0.0
        %7050 = vmatmul.mubr.f32.gmra.mrb[0].mxu0 %v6977
        %v7051 = vpop.f32.mrb[0].mxu0
        %v7052 = vadd.f32 0.0, %v7051
        %v7053 = vpop.f32.mrb[0].mxu0
        %7054 = vdwg.mxu0
        %v7056 = vsel %vm2200, %v6311, 0
        %v7059 = vsel %vm2200, %v6535, 0
        %v7062 = vsel %vm2200, %v6603, 0
        %7064 = vmatprep.subr.mxu0 0.0
        %7065 = vmatpush1.xpose.msra.mxu0 %v7059
        %7066 = vmatprep.subr.mxu0 0.0
        %7067 = vmatpush1.xpose.msra.mxu0 %v7062
        %7068 = vmatprep.subr.mxu0 0.0
        %7069 = vmatpush1.xpose.msra.mxu0 0.0
        %7070 = vmatprep.subr.mxu0 0.0
        %7071 = vmatpush1.xpose.msra.mxu0 0.0
        %7072 = vmatprep.subr.mxu0 0.0
        %7073 = vmatpush1.xpose.msra.mxu0 0.0
        %7074 = vmatprep.subr.mxu0 0.0
        %7075 = vmatpush1.xpose.msra.mxu0 0.0
        %7076 = vmatprep.subr.mxu0 0.0
        %7077 = vmatpush1.xpose.msra.mxu0 0.0
        %7078 = vmatprep.subr.mxu0 0.0
        %7079 = vmatpush1.xpose.msra.mxu0 0.0
        %7080 = vmatprep.subr.mxu0 0.0
        %7081 = vmatpush1.xpose.msra.mxu0 0.0
        %7082 = vmatprep.subr.mxu0 0.0
        %7083 = vmatpush1.xpose.msra.mxu0 0.0
        %7084 = vmatprep.subr.mxu0 0.0
        %7085 = vmatpush1.xpose.msra.mxu0 0.0
        %7086 = vmatprep.subr.mxu0 0.0
        %7087 = vmatpush1.xpose.msra.mxu0 0.0
        %7088 = vmatprep.subr.mxu0 0.0
        %7089 = vmatpush1.xpose.msra.mxu0 0.0
        %7090 = vmatprep.subr.mxu0 0.0
        %7091 = vmatpush1.xpose.msra.mxu0 0.0
        %7092 = vmatprep.subr.mxu0 0.0
        %7093 = vmatpush1.xpose.msra.mxu0 0.0
        %7094 = vmatprep.subr.mxu0 0.0
        %7095 = vmatpush1.xpose.msra.mxu0 0.0
        %7096 = vmatprep.subr.mxu0 0.0
        %7097 = vmatpush1.xpose.msra.mxu0 0.0
        %7098 = vmatprep.subr.mxu0 0.0
        %7099 = vmatpush1.xpose.msra.mxu0 0.0
        %7100 = vmatprep.subr.mxu0 0.0
        %7101 = vmatpush1.xpose.msra.mxu0 0.0
        %7102 = vmatprep.subr.mxu0 0.0
        %7103 = vmatpush1.xpose.msra.mxu0 0.0
        %7104 = vmatprep.subr.mxu0 0.0
        %7105 = vmatpush1.xpose.msra.mxu0 0.0
        %7106 = vmatprep.subr.mxu0 0.0
        %7107 = vmatpush1.xpose.msra.mxu0 0.0
        %7108 = vmatprep.subr.mxu0 0.0
        %7109 = vmatpush1.xpose.msra.mxu0 0.0
        %7110 = vmatprep.subr.mxu0 0.0
        %7111 = vmatpush1.xpose.msra.mxu0 0.0
        %7112 = vmatprep.subr.mxu0 0.0
        %7113 = vmatpush1.xpose.msra.mxu0 0.0
        %7114 = vmatprep.subr.mxu0 0.0
        %7115 = vmatpush1.xpose.msra.mxu0 0.0
        %7116 = vmatprep.subr.mxu0 0.0
        %7117 = vmatpush1.xpose.msra.mxu0 0.0
        %7118 = vmatprep.subr.mxu0 0.0
        %7119 = vmatpush1.xpose.msra.mxu0 0.0
        %7120 = vmatprep.subr.mxu0 0.0
        %7121 = vmatpush1.xpose.msra.mxu0 0.0
        %7122 = vmatprep.subr.mxu0 0.0
        %7123 = vmatpush1.xpose.msra.mxu0 0.0
        %7124 = vmatprep.subr.mxu0 0.0
        %7125 = vmatpush1.xpose.msra.mxu0 0.0
        %7126 = vmatprep.subr.mxu0 0.0
        %7127 = vmatpush1.xpose.msra.mxu0 0.0
        %7128 = vmatprep.mubr.f32.mxu0 0.0
        %7129 = vmatmul.mubr.f32.gmra.mrb[0].mxu0 %v7056
        %v7130 = vpop.f32.mrb[0].mxu0
        %v7131 = vadd.f32 0.0, %v7130
        %v7132 = vpop.f32.mrb[0].mxu0
        %7133 = vdwg.mxu0
        %v7135 = vsel %vm2200, %v6312, 0
        %v7138 = vsel %vm2200, %v6536, 0
        %v7141 = vsel %vm2200, %v6604, 0
        %7143 = vmatprep.subr.mxu0 0.0
        %7144 = vmatpush1.xpose.msra.mxu0 %v7138
        %7145 = vmatprep.subr.mxu0 0.0
        %7146 = vmatpush1.xpose.msra.mxu0 %v7141
        %7147 = vmatprep.subr.mxu0 0.0
        %7148 = vmatpush1.xpose.msra.mxu0 0.0
        %7149 = vmatprep.subr.mxu0 0.0
        %7150 = vmatpush1.xpose.msra.mxu0 0.0
        %7151 = vmatprep.subr.mxu0 0.0
        %7152 = vmatpush1.xpose.msra.mxu0 0.0
        %7153 = vmatprep.subr.mxu0 0.0
        %7154 = vmatpush1.xpose.msra.mxu0 0.0
        %7155 = vmatprep.subr.mxu0 0.0
        %7156 = vmatpush1.xpose.msra.mxu0 0.0
        %7157 = vmatprep.subr.mxu0 0.0
        %7158 = vmatpush1.xpose.msra.mxu0 0.0
        %7159 = vmatprep.subr.mxu0 0.0
        %7160 = vmatpush1.xpose.msra.mxu0 0.0
        %7161 = vmatprep.subr.mxu0 0.0
        %7162 = vmatpush1.xpose.msra.mxu0 0.0
        %7163 = vmatprep.subr.mxu0 0.0
        %7164 = vmatpush1.xpose.msra.mxu0 0.0
        %7165 = vmatprep.subr.mxu0 0.0
        %7166 = vmatpush1.xpose.msra.mxu0 0.0
        %7167 = vmatprep.subr.mxu0 0.0
        %7168 = vmatpush1.xpose.msra.mxu0 0.0
        %7169 = vmatprep.subr.mxu0 0.0
        %7170 = vmatpush1.xpose.msra.mxu0 0.0
        %7171 = vmatprep.subr.mxu0 0.0
        %7172 = vmatpush1.xpose.msra.mxu0 0.0
        %7173 = vmatprep.subr.mxu0 0.0
        %7174 = vmatpush1.xpose.msra.mxu0 0.0
        %7175 = vmatprep.subr.mxu0 0.0
        %7176 = vmatpush1.xpose.msra.mxu0 0.0
        %7177 = vmatprep.subr.mxu0 0.0
        %7178 = vmatpush1.xpose.msra.mxu0 0.0
        %7179 = vmatprep.subr.mxu0 0.0
        %7180 = vmatpush1.xpose.msra.mxu0 0.0
        %7181 = vmatprep.subr.mxu0 0.0
        %7182 = vmatpush1.xpose.msra.mxu0 0.0
        %7183 = vmatprep.subr.mxu0 0.0
        %7184 = vmatpush1.xpose.msra.mxu0 0.0
        %7185 = vmatprep.subr.mxu0 0.0
        %7186 = vmatpush1.xpose.msra.mxu0 0.0
        %7187 = vmatprep.subr.mxu0 0.0
        %7188 = vmatpush1.xpose.msra.mxu0 0.0
        %7189 = vmatprep.subr.mxu0 0.0
        %7190 = vmatpush1.xpose.msra.mxu0 0.0
        %7191 = vmatprep.subr.mxu0 0.0
        %7192 = vmatpush1.xpose.msra.mxu0 0.0
        %7193 = vmatprep.subr.mxu0 0.0
        %7194 = vmatpush1.xpose.msra.mxu0 0.0
        %7195 = vmatprep.subr.mxu0 0.0
        %7196 = vmatpush1.xpose.msra.mxu0 0.0
        %7197 = vmatprep.subr.mxu0 0.0
        %7198 = vmatpush1.xpose.msra.mxu0 0.0
        %7199 = vmatprep.subr.mxu0 0.0
        %7200 = vmatpush1.xpose.msra.mxu0 0.0
        %7201 = vmatprep.subr.mxu0 0.0
        %7202 = vmatpush1.xpose.msra.mxu0 0.0
        %7203 = vmatprep.subr.mxu0 0.0
        %7204 = vmatpush1.xpose.msra.mxu0 0.0
        %7205 = vmatprep.subr.mxu0 0.0
        %7206 = vmatpush1.xpose.msra.mxu0 0.0
        %7207 = vmatprep.mubr.f32.mxu0 0.0
        %7208 = vmatmul.mubr.f32.gmra.mrb[0].mxu0 %v7135
        %v7209 = vpop.f32.mrb[0].mxu0
        %v7210 = vadd.f32 0.0, %v7209
        %v7211 = vpop.f32.mrb[0].mxu0
        %7212 = vdwg.mxu0
        %v7213 = vmul.f32 %v6973, 0.17677669
        %v7214 = vmul.f32 %v7052, 0.17677669
        %v7215 = vmul.f32 %v7131, 0.17677669
        %v7216 = vmul.f32 %v7210, 0.17677669
        %v7218 = vlaneseq
        %v7219 = vshrl.u32 %v7218, 7
        %v7220 = vsub.s32 0, %v7219
        %v7221 = vrot.slane %v1532, %v7220
        %v7223 = vadd.f32 %v7213, %v7221
        %v7224 = vadd.f32 %v7214, %v7221
        %v7225 = vadd.f32 %v7215, %v7221
        %v7226 = vadd.f32 %v7216, %v7221
        %v7227 = vsel %vm5679, %v7223, -inf
        %7228 = vmax.xlane.f32.xlu0 %v7227
        %v7229 = vpop.xlane.xlu0 %7228
        %v7230 = vsel %vm5679, %v7224, -inf
        %7231 = vmax.xlane.f32.xlu0 %v7230
        %v7232 = vpop.xlane.xlu0 %7231
        %v7233 = vsel %vm5679, %v7225, -inf
        %7234 = vmax.xlane.f32.xlu0 %v7233
        %v7235 = vpop.xlane.xlu0 %7234
        %v7236 = vsel %vm5679, %v7226, -inf
        %7237 = vmax.xlane.f32.xlu0 %v7236
        %v7238 = vpop.xlane.xlu0 %7237
        %v7239 = vsub.f32 %v7223, %v7229
        %v7240 = vsub.f32 %v7224, %v7232
        %v7241 = vsub.f32 %v7225, %v7235
        %v7242 = vsub.f32 %v7226, %v7238
        %v7243 = vmul.f32 %v7239, 1.442695
        %v7244 = vpow.pop %v7243
        %v7245 = vmul.f32 %v7240, 1.442695
        %v7246 = vpow.pop %v7245
        %v7247 = vmul.f32 %v7241, 1.442695
        %v7248 = vpow.pop %v7247
        %v7249 = vmul.f32 %v7242, 1.442695
        %v7250 = vpow.pop %v7249
        %v7251 = vsel %vm5679, %v7244, 0.0
        %7252 = vadd.xlane.f32.xlu0 %v7251
        %v7253 = vpop.xlane.xlu0 %7252
        %v7254 = vsel %vm5679, %v7246, 0.0
        %7255 = vadd.xlane.f32.xlu0 %v7254
        %v7256 = vpop.xlane.xlu0 %7255
        %v7257 = vsel %vm5679, %v7248, 0.0
        %7258 = vadd.xlane.f32.xlu0 %v7257
        %v7259 = vpop.xlane.xlu0 %7258
        %v7260 = vsel %vm5679, %v7250, 0.0
        %7261 = vadd.xlane.f32.xlu0 %v7260
        %v7262 = vpop.xlane.xlu0 %7261
        %v7263 = vrcp.pop %v7253
        %v7264 = vrcp.pop %v7256
        %v7265 = vrcp.pop %v7259
        %v7266 = vrcp.pop %v7262
        %v7267 = vmul.f32 %v7244, %v7263
        %v7268 = vmul.f32 %v7246, %v7264
        %v7269 = vmul.f32 %v7248, %v7265
        %v7270 = vmul.f32 %v7250, %v7266
        %v7272 = vsel %vm5679, %v7267, 0
        %7274 = vmatprep.subr.mxu0 0.0
        %7275 = vmatpush1.msra.mxu0 %v6825
        %7276 = vmatprep.subr.mxu0 0.0
        %7277 = vmatpush1.msra.mxu0 %v6893
        %7278 = vmatprep.subr.mxu0 0.0
        %7279 = vmatpush1.msra.mxu0 0.0
        %7280 = vmatprep.subr.mxu0 0.0
        %7281 = vmatpush1.msra.mxu0 0.0
        %7282 = vmatprep.subr.mxu0 0.0
        %7283 = vmatpush1.msra.mxu0 0.0
        %7284 = vmatprep.subr.mxu0 0.0
        %7285 = vmatpush1.msra.mxu0 0.0
        %7286 = vmatprep.subr.mxu0 0.0
        %7287 = vmatpush1.msra.mxu0 0.0
        %7288 = vmatprep.subr.mxu0 0.0
        %7289 = vmatpush1.msra.mxu0 0.0
        %7290 = vmatprep.subr.mxu0 0.0
        %7291 = vmatpush1.msra.mxu0 0.0
        %7292 = vmatprep.subr.mxu0 0.0
        %7293 = vmatpush1.msra.mxu0 0.0
        %7294 = vmatprep.subr.mxu0 0.0
        %7295 = vmatpush1.msra.mxu0 0.0
        %7296 = vmatprep.subr.mxu0 0.0
        %7297 = vmatpush1.msra.mxu0 0.0
        %7298 = vmatprep.subr.mxu0 0.0
        %7299 = vmatpush1.msra.mxu0 0.0
        %7300 = vmatprep.subr.mxu0 0.0
        %7301 = vmatpush1.msra.mxu0 0.0
        %7302 = vmatprep.subr.mxu0 0.0
        %7303 = vmatpush1.msra.mxu0 0.0
        %7304 = vmatprep.subr.mxu0 0.0
        %7305 = vmatpush1.msra.mxu0 0.0
        %7306 = vmatprep.subr.mxu0 0.0
        %7307 = vmatpush1.msra.mxu0 0.0
        %7308 = vmatprep.subr.mxu0 0.0
        %7309 = vmatpush1.msra.mxu0 0.0
        %7310 = vmatprep.subr.mxu0 0.0
        %7311 = vmatpush1.msra.mxu0 0.0
        %7312 = vmatprep.subr.mxu0 0.0
        %7313 = vmatpush1.msra.mxu0 0.0
        %7314 = vmatprep.subr.mxu0 0.0
        %7315 = vmatpush1.msra.mxu0 0.0
        %7316 = vmatprep.subr.mxu0 0.0
        %7317 = vmatpush1.msra.mxu0 0.0
        %7318 = vmatprep.subr.mxu0 0.0
        %7319 = vmatpush1.msra.mxu0 0.0
        %7320 = vmatprep.subr.mxu0 0.0
        %7321 = vmatpush1.msra.mxu0 0.0
        %7322 = vmatprep.subr.mxu0 0.0
        %7323 = vmatpush1.msra.mxu0 0.0
        %7324 = vmatprep.subr.mxu0 0.0
        %7325 = vmatpush1.msra.mxu0 0.0
        %7326 = vmatprep.subr.mxu0 0.0
        %7327 = vmatpush1.msra.mxu0 0.0
        %7328 = vmatprep.subr.mxu0 0.0
        %7329 = vmatpush1.msra.mxu0 0.0
        %7330 = vmatprep.subr.mxu0 0.0
        %7331 = vmatpush1.msra.mxu0 0.0
        %7332 = vmatprep.subr.mxu0 0.0
        %7333 = vmatpush1.msra.mxu0 0.0
        %7334 = vmatprep.subr.mxu0 0.0
        %7335 = vmatpush1.msra.mxu0 0.0
        %7336 = vmatprep.subr.mxu0 0.0
        %7337 = vmatpush1.msra.mxu0 0.0
        %7338 = vmatprep.mubr.f32.mxu0 0.0
        %7339 = vmatmul.mubr.f32.gmra.mrb[0].mxu0 %v7272
        %v7340 = vpop.f32.mrb[0].mxu0
        %v7341 = vadd.f32 0.0, %v7340
        %v7342 = vpop.f32.mrb[0].mxu0
        %7343 = vdwg.mxu0
        %v7345 = vsel %vm5679, %v7268, 0
        %7347 = vmatprep.subr.mxu0 0.0
        %7348 = vmatpush1.msra.mxu0 %v6826
        %7349 = vmatprep.subr.mxu0 0.0
        %7350 = vmatpush1.msra.mxu0 %v6894
        %7351 = vmatprep.subr.mxu0 0.0
        %7352 = vmatpush1.msra.mxu0 0.0
        %7353 = vmatprep.subr.mxu0 0.0
        %7354 = vmatpush1.msra.mxu0 0.0
        %7355 = vmatprep.subr.mxu0 0.0
        %7356 = vmatpush1.msra.mxu0 0.0
        %7357 = vmatprep.subr.mxu0 0.0
        %7358 = vmatpush1.msra.mxu0 0.0
        %7359 = vmatprep.subr.mxu0 0.0
        %7360 = vmatpush1.msra.mxu0 0.0
        %7361 = vmatprep.subr.mxu0 0.0
        %7362 = vmatpush1.msra.mxu0 0.0
        %7363 = vmatprep.subr.mxu0 0.0
        %7364 = vmatpush1.msra.mxu0 0.0
        %7365 = vmatprep.subr.mxu0 0.0
        %7366 = vmatpush1.msra.mxu0 0.0
        %7367 = vmatprep.subr.mxu0 0.0
        %7368 = vmatpush1.msra.mxu0 0.0
        %7369 = vmatprep.subr.mxu0 0.0
        %7370 = vmatpush1.msra.mxu0 0.0
        %7371 = vmatprep.subr.mxu0 0.0
        %7372 = vmatpush1.msra.mxu0 0.0
        %7373 = vmatprep.subr.mxu0 0.0
        %7374 = vmatpush1.msra.mxu0 0.0
        %7375 = vmatprep.subr.mxu0 0.0
        %7376 = vmatpush1.msra.mxu0 0.0
        %7377 = vmatprep.subr.mxu0 0.0
        %7378 = vmatpush1.msra.mxu0 0.0
        %7379 = vmatprep.subr.mxu0 0.0
        %7380 = vmatpush1.msra.mxu0 0.0
        %7381 = vmatprep.subr.mxu0 0.0
        %7382 = vmatpush1.msra.mxu0 0.0
        %7383 = vmatprep.subr.mxu0 0.0
        %7384 = vmatpush1.msra.mxu0 0.0
        %7385 = vmatprep.subr.mxu0 0.0
        %7386 = vmatpush1.msra.mxu0 0.0
        %7387 = vmatprep.subr.mxu0 0.0
        %7388 = vmatpush1.msra.mxu0 0.0
        %7389 = vmatprep.subr.mxu0 0.0
        %7390 = vmatpush1.msra.mxu0 0.0
        %7391 = vmatprep.subr.mxu0 0.0
        %7392 = vmatpush1.msra.mxu0 0.0
        %7393 = vmatprep.subr.mxu0 0.0
        %7394 = vmatpush1.msra.mxu0 0.0
        %7395 = vmatprep.subr.mxu0 0.0
        %7396 = vmatpush1.msra.mxu0 0.0
        %7397 = vmatprep.subr.mxu0 0.0
        %7398 = vmatpush1.msra.mxu0 0.0
        %7399 = vmatprep.subr.mxu0 0.0
        %7400 = vmatpush1.msra.mxu0 0.0
        %7401 = vmatprep.subr.mxu0 0.0
        %7402 = vmatpush1.msra.mxu0 0.0
        %7403 = vmatprep.subr.mxu0 0.0
        %7404 = vmatpush1.msra.mxu0 0.0
        %7405 = vmatprep.subr.mxu0 0.0
        %7406 = vmatpush1.msra.mxu0 0.0
        %7407 = vmatprep.subr.mxu0 0.0
        %7408 = vmatpush1.msra.mxu0 0.0
        %7409 = vmatprep.subr.mxu0 0.0
        %7410 = vmatpush1.msra.mxu0 0.0
        %7411 = vmatprep.mubr.f32.mxu0 0.0
        %7412 = vmatmul.mubr.f32.gmra.mrb[0].mxu0 %v7345
        %v7413 = vpop.f32.mrb[0].mxu0
        %v7414 = vadd.f32 0.0, %v7413
        %v7415 = vpop.f32.mrb[0].mxu0
        %7416 = vdwg.mxu0
        %v7418 = vsel %vm5679, %v7269, 0
        %7420 = vmatprep.subr.mxu0 0.0
        %7421 = vmatpush1.msra.mxu0 %v6827
        %7422 = vmatprep.subr.mxu0 0.0
        %7423 = vmatpush1.msra.mxu0 %v6895
        %7424 = vmatprep.subr.mxu0 0.0
        %7425 = vmatpush1.msra.mxu0 0.0
        %7426 = vmatprep.subr.mxu0 0.0
        %7427 = vmatpush1.msra.mxu0 0.0
        %7428 = vmatprep.subr.mxu0 0.0
        %7429 = vmatpush1.msra.mxu0 0.0
        %7430 = vmatprep.subr.mxu0 0.0
        %7431 = vmatpush1.msra.mxu0 0.0
        %7432 = vmatprep.subr.mxu0 0.0
        %7433 = vmatpush1.msra.mxu0 0.0
        %7434 = vmatprep.subr.mxu0 0.0
        %7435 = vmatpush1.msra.mxu0 0.0
        %7436 = vmatprep.subr.mxu0 0.0
        %7437 = vmatpush1.msra.mxu0 0.0
        %7438 = vmatprep.subr.mxu0 0.0
        %7439 = vmatpush1.msra.mxu0 0.0
        %7440 = vmatprep.subr.mxu0 0.0
        %7441 = vmatpush1.msra.mxu0 0.0
        %7442 = vmatprep.subr.mxu0 0.0
        %7443 = vmatpush1.msra.mxu0 0.0
        %7444 = vmatprep.subr.mxu0 0.0
        %7445 = vmatpush1.msra.mxu0 0.0
        %7446 = vmatprep.subr.mxu0 0.0
        %7447 = vmatpush1.msra.mxu0 0.0
        %7448 = vmatprep.subr.mxu0 0.0
        %7449 = vmatpush1.msra.mxu0 0.0
        %7450 = vmatprep.subr.mxu0 0.0
        %7451 = vmatpush1.msra.mxu0 0.0
        %7452 = vmatprep.subr.mxu0 0.0
        %7453 = vmatpush1.msra.mxu0 0.0
        %7454 = vmatprep.subr.mxu0 0.0
        %7455 = vmatpush1.msra.mxu0 0.0
        %7456 = vmatprep.subr.mxu0 0.0
        %7457 = vmatpush1.msra.mxu0 0.0
        %7458 = vmatprep.subr.mxu0 0.0
        %7459 = vmatpush1.msra.mxu0 0.0
        %7460 = vmatprep.subr.mxu0 0.0
        %7461 = vmatpush1.msra.mxu0 0.0
        %7462 = vmatprep.subr.mxu0 0.0
        %7463 = vmatpush1.msra.mxu0 0.0
        %7464 = vmatprep.subr.mxu0 0.0
        %7465 = vmatpush1.msra.mxu0 0.0
        %7466 = vmatprep.subr.mxu0 0.0
        %7467 = vmatpush1.msra.mxu0 0.0
        %7468 = vmatprep.subr.mxu0 0.0
        %7469 = vmatpush1.msra.mxu0 0.0
        %7470 = vmatprep.subr.mxu0 0.0
        %7471 = vmatpush1.msra.mxu0 0.0
        %7472 = vmatprep.subr.mxu0 0.0
        %7473 = vmatpush1.msra.mxu0 0.0
        %7474 = vmatprep.subr.mxu0 0.0
        %7475 = vmatpush1.msra.mxu0 0.0
        %7476 = vmatprep.subr.mxu0 0.0
        %7477 = vmatpush1.msra.mxu0 0.0
        %7478 = vmatprep.subr.mxu0 0.0
        %7479 = vmatpush1.msra.mxu0 0.0
        %7480 = vmatprep.subr.mxu0 0.0
        %7481 = vmatpush1.msra.mxu0 0.0
        %7482 = vmatprep.subr.mxu0 0.0
        %7483 = vmatpush1.msra.mxu0 0.0
        %7484 = vmatprep.mubr.f32.mxu0 0.0
        %7485 = vmatmul.mubr.f32.gmra.mrb[0].mxu0 %v7418
        %v7486 = vpop.f32.mrb[0].mxu0
        %v7487 = vadd.f32 0.0, %v7486
        %v7488 = vpop.f32.mrb[0].mxu0
        %7489 = vdwg.mxu0
        %v7491 = vsel %vm5679, %v7270, 0
        %7493 = vmatprep.subr.mxu0 0.0
        %7494 = vmatpush1.msra.mxu0 %v6828
        %7495 = vmatprep.subr.mxu0 0.0
        %7496 = vmatpush1.msra.mxu0 %v6896
        %7497 = vmatprep.subr.mxu0 0.0
        %7498 = vmatpush1.msra.mxu0 0.0
        %7499 = vmatprep.subr.mxu0 0.0
        %7500 = vmatpush1.msra.mxu0 0.0
        %7501 = vmatprep.subr.mxu0 0.0
        %7502 = vmatpush1.msra.mxu0 0.0
        %7503 = vmatprep.subr.mxu0 0.0
        %7504 = vmatpush1.msra.mxu0 0.0
        %7505 = vmatprep.subr.mxu0 0.0
        %7506 = vmatpush1.msra.mxu0 0.0
        %7507 = vmatprep.subr.mxu0 0.0
        %7508 = vmatpush1.msra.mxu0 0.0
        %7509 = vmatprep.subr.mxu0 0.0
        %7510 = vmatpush1.msra.mxu0 0.0
        %7511 = vmatprep.subr.mxu0 0.0
        %7512 = vmatpush1.msra.mxu0 0.0
        %7513 = vmatprep.subr.mxu0 0.0
        %7514 = vmatpush1.msra.mxu0 0.0
        %7515 = vmatprep.subr.mxu0 0.0
        %7516 = vmatpush1.msra.mxu0 0.0
        %7517 = vmatprep.subr.mxu0 0.0
        %7518 = vmatpush1.msra.mxu0 0.0
        %7519 = vmatprep.subr.mxu0 0.0
        %7520 = vmatpush1.msra.mxu0 0.0
        %7521 = vmatprep.subr.mxu0 0.0
        %7522 = vmatpush1.msra.mxu0 0.0
        %7523 = vmatprep.subr.mxu0 0.0
        %7524 = vmatpush1.msra.mxu0 0.0
        %7525 = vmatprep.subr.mxu0 0.0
        %7526 = vmatpush1.msra.mxu0 0.0
        %7527 = vmatprep.subr.mxu0 0.0
        %7528 = vmatpush1.msra.mxu0 0.0
        %7529 = vmatprep.subr.mxu0 0.0
        %7530 = vmatpush1.msra.mxu0 0.0
        %7531 = vmatprep.subr.mxu0 0.0
        %7532 = vmatpush1.msra.mxu0 0.0
        %7533 = vmatprep.subr.mxu0 0.0
        %7534 = vmatpush1.msra.mxu0 0.0
        %7535 = vmatprep.subr.mxu0 0.0
        %7536 = vmatpush1.msra.mxu0 0.0
        %7537 = vmatprep.subr.mxu0 0.0
        %7538 = vmatpush1.msra.mxu0 0.0
        %7539 = vmatprep.subr.mxu0 0.0
        %7540 = vmatpush1.msra.mxu0 0.0
        %7541 = vmatprep.subr.mxu0 0.0
        %7542 = vmatpush1.msra.mxu0 0.0
        %7543 = vmatprep.subr.mxu0 0.0
        %7544 = vmatpush1.msra.mxu0 0.0
        %7545 = vmatprep.subr.mxu0 0.0
        %7546 = vmatpush1.msra.mxu0 0.0
        %7547 = vmatprep.subr.mxu0 0.0
        %7548 = vmatpush1.msra.mxu0 0.0
        %7549 = vmatprep.subr.mxu0 0.0
        %7550 = vmatpush1.msra.mxu0 0.0
        %7551 = vmatprep.subr.mxu0 0.0
        %7552 = vmatpush1.msra.mxu0 0.0
        %7553 = vmatprep.subr.mxu0 0.0
        %7554 = vmatpush1.msra.mxu0 0.0
        %7555 = vmatprep.subr.mxu0 0.0
        %7556 = vmatpush1.msra.mxu0 0.0
        %7557 = vmatprep.mubr.f32.mxu0 0.0
        %7558 = vmatmul.mubr.f32.gmra.mrb[0].mxu0 %v7491
        %v7559 = vpop.f32.mrb[0].mxu0
        %v7560 = vadd.f32 0.0, %v7559
        %v7561 = vpop.f32.mrb[0].mxu0
        %7562 = vdwg.mxu0
        %v7563 = vcombine.low %v7341, %v7487
        %v7564 = vcombine.high %v7341, %v7487
        %v7566 = vunpack.c.l.s4 1983009808
        %v7567 = vunpack.c.0.s8 %v7566
        %v7568 = vlaneseq
        %v7569 = vshrl.u32 %v7568, 7
        %v7570 = vsub.s32 %v7567, %v7569
        %v7571 = vrot.slane %v7563, %v7570
        %v7573 = vunpack.c.l.s4 1983009808
        %v7574 = vunpack.c.0.s8 %v7573
        %v7575 = vlaneseq
        %v7576 = vshrl.u32 %v7575, 7
        %v7577 = vsub.s32 %v7574, %v7576
        %v7578 = vrot.slane %v7564, %v7577
        %v7579 = vcombine.low %v7414, %v7560
        %v7580 = vcombine.high %v7414, %v7560
        %v7582 = vunpack.c.l.s4 1983009808
        %v7583 = vunpack.c.0.s8 %v7582
        %v7584 = vlaneseq
        %v7585 = vshrl.u32 %v7584, 7
        %v7586 = vsub.s32 %v7583, %v7585
        %v7587 = vrot.slane %v7579, %v7586
        %v7589 = vunpack.c.l.s4 1983009808
        %v7590 = vunpack.c.0.s8 %v7589
        %v7591 = vlaneseq
        %v7592 = vshrl.u32 %v7591, 7
        %v7593 = vsub.s32 %v7590, %v7592
        %v7594 = vrot.slane %v7580, %v7593
        %v7595 = vcombine.low %v7571, %v7587
        %v7596 = vcombine.high %v7571, %v7587
        %v7598 = vunpack.c.l.s4 1934713408
        %v7599 = vunpack.c.0.s8 %v7598
        %v7600 = vlaneseq
        %v7601 = vshrl.u32 %v7600, 7
        %v7602 = vsub.s32 %v7599, %v7601
        %v7603 = vrot.slane %v7595, %v7602
        %v7605 = vunpack.c.l.s4 1934713408
        %v7606 = vunpack.c.0.s8 %v7605
        %v7607 = vlaneseq
        %v7608 = vshrl.u32 %v7607, 7
        %v7609 = vsub.s32 %v7606, %v7608
        %v7610 = vrot.slane %v7596, %v7609
        %v7611 = vcombine.low %v7578, %v7594
        %v7612 = vcombine.high %v7578, %v7594
        %v7614 = vunpack.c.l.s4 1934713408
        %v7615 = vunpack.c.0.s8 %v7614
        %v7616 = vlaneseq
        %v7617 = vshrl.u32 %v7616, 7
        %v7618 = vsub.s32 %v7615, %v7617
        %v7619 = vrot.slane %v7611, %v7618
        %v7621 = vunpack.c.l.s4 1934713408
        %v7622 = vunpack.c.0.s8 %v7621
        %v7623 = vlaneseq
        %v7624 = vshrl.u32 %v7623, 7
        %v7625 = vsub.s32 %v7622, %v7624
        %v7626 = vrot.slane %v7612, %v7625
        %v7627 = vcombine.high %v7603, 0.0
        %v7628 = vcombine.high %v7610, 0.0
        %v7629 = vcombine.high %v7619, 0.0
        %v7630 = vcombine.high %v7626, 0.0
        %v7631 = vcombine.low %v7603, %v7610
        %v7633 = vunpack.c.l.s4 1983009808
        %v7634 = vunpack.c.0.s8 %v7633
        %v7635 = vlaneseq
        %v7636 = vshrl.u32 %v7635, 7
        %v7637 = vsub.s32 %v7634, %v7636
        %v7638 = vrot.slane %v7631, %v7637
        %v7639 = vcombine.low %v7627, %v7628
        %v7641 = vunpack.c.l.s4 1983009808
        %v7642 = vunpack.c.0.s8 %v7641
        %v7643 = vlaneseq
        %v7644 = vshrl.u32 %v7643, 7
        %v7645 = vsub.s32 %v7642, %v7644
        %v7646 = vrot.slane %v7639, %v7645
        %v7647 = vcombine.low %v7619, %v7626
        %v7649 = vunpack.c.l.s4 1983009808
        %v7650 = vunpack.c.0.s8 %v7649
        %v7651 = vlaneseq
        %v7652 = vshrl.u32 %v7651, 7
        %v7653 = vsub.s32 %v7650, %v7652
        %v7654 = vrot.slane %v7647, %v7653
        %v7655 = vcombine.low %v7629, %v7630
        %v7657 = vunpack.c.l.s4 1983009808
        %v7658 = vunpack.c.0.s8 %v7657
        %v7659 = vlaneseq
        %v7660 = vshrl.u32 %v7659, 7
        %v7661 = vsub.s32 %v7658, %v7660
        %v7662 = vrot.slane %v7655, %v7661
        %v7663 = vcombine.low %v7638, %v7646
        %v7664 = vcombine.high %v7638, %v7646
        %v7666 = vunpack.c.l.s4 1934713408
        %v7667 = vunpack.c.0.s8 %v7666
        %v7668 = vlaneseq
        %v7669 = vshrl.u32 %v7668, 7
        %v7670 = vsub.s32 %v7667, %v7669
        %v7671 = vrot.slane %v7663, %v7670
        %v7673 = vunpack.c.l.s4 1934713408
        %v7674 = vunpack.c.0.s8 %v7673
        %v7675 = vlaneseq
        %v7676 = vshrl.u32 %v7675, 7
        %v7677 = vsub.s32 %v7674, %v7676
        %v7678 = vrot.slane %v7664, %v7677
        %v7679 = vcombine.low %v7654, %v7662
        %v7680 = vcombine.high %v7654, %v7662
        %v7682 = vunpack.c.l.s4 1934713408
        %v7683 = vunpack.c.0.s8 %v7682
        %v7684 = vlaneseq
        %v7685 = vshrl.u32 %v7684, 7
        %v7686 = vsub.s32 %v7683, %v7685
        %v7687 = vrot.slane %v7679, %v7686
        %v7689 = vunpack.c.l.s4 1934713408
        %v7690 = vunpack.c.0.s8 %v7689
        %v7691 = vlaneseq
        %v7692 = vshrl.u32 %v7691, 7
        %v7693 = vsub.s32 %v7690, %v7692
        %v7694 = vrot.slane %v7680, %v7693
        %v7695 = vcombine.low %v7671, %v7687
        %v7696 = vcombine.high %v7671, %v7687
        %v7697 = vcombine.low %v7678, %v7694
        %v7698 = vcombine.high %v7678, %v7694
        %7700 = vrot.lane.b32.xlu0 %v7696, 32
        %v7701 = vpop.permute.xlu0 %7700
        %7704 = vrot.lane.b32.xlu0 %v7697, 64
        %v7705 = vpop.permute.xlu0 %7704
        %7708 = vrot.lane.b32.xlu0 %v7698, 96
        %v7709 = vpop.permute.xlu0 %7708
        %v7711 = vsel %vm2200, %v7695, %v7701
        %v7712 = vsel %vm2999, %v7711, %v7705
        %v7713 = vsel %vm3001, %v7712, %v7709
        %v7714 = vpack.c.bf16 %v7713, %v6166
        %v7716 = vlaneseq
        %v7717 = vshrl.u32 %v7716, 7
        %v7718 = vsub.s32 0, %v7717
        %v7719 = vrot.slane %v1468, %v7718
        %v7737 = vunpack.c.l.b16 %v1452
        %v7738 = vunpack.c.l.b16 %v1453
        %v7739 = vunpack.c.l.b16 %v1454
        %v7740 = vunpack.c.l.b16 %v1455
        %v7741 = vunpack.c.l.b16 %v1456
        %v7742 = vunpack.c.l.b16 %v1457
        %v7743 = vunpack.c.l.b16 %v1458
        %v7744 = vunpack.c.l.b16 %v1459
        %v7745 = vunpack.c.l.b16 %v1460
        %v7746 = vunpack.c.l.b16 %v1461
        %v7747 = vunpack.c.l.b16 %v1462
        %v7748 = vunpack.c.l.b16 %v1463
        %v7749 = vunpack.c.l.b16 %v1464
        %v7750 = vunpack.c.l.b16 %v1465
        %v7751 = vunpack.c.l.b16 %v1466
        %v7752 = vunpack.c.l.b16 %v1467
        %v7753 = vpack.c.b16 %v7738, %v7737
        %v7754 = vpack.c.b16 %v7740, %v7739
        %v7755 = vpack.c.b16 %v7742, %v7741
        %v7756 = vpack.c.b16 %v7744, %v7743
        %v7757 = vpack.c.b16 %v7746, %v7745
        %v7758 = vpack.c.b16 %v7748, %v7747
        %v7759 = vpack.c.b16 %v7750, %v7749
        %v7760 = vpack.c.b16 %v7752, %v7751
        %7769 = vmatprep.subr.bf16.mxu0 0
        %7770 = vmatpush1.bf16.msra.mxu0 %v7753
        %7771 = vmatprep.subr.bf16.mxu0 0
        %7772 = vmatpush1.bf16.msra.mxu0 %v7754
        %7773 = vmatprep.subr.bf16.mxu0 0
        %7774 = vmatpush1.bf16.msra.mxu0 %v7755
        %7775 = vmatprep.subr.bf16.mxu0 0
        %7776 = vmatpush1.bf16.msra.mxu0 %v7756
        %7777 = vmatprep.subr.bf16.mxu0 0
        %7778 = vmatpush1.bf16.msra.mxu0 %v7757
        %7779 = vmatprep.subr.bf16.mxu0 0
        %7780 = vmatpush1.bf16.msra.mxu0 %v7758
        %7781 = vmatprep.subr.bf16.mxu0 0
        %7782 = vmatpush1.bf16.msra.mxu0 %v7759
        %7783 = vmatprep.subr.bf16.mxu0 0
        %7784 = vmatpush1.bf16.msra.mxu0 %v7760
        %7785 = vmatprep.subr.bf16.mxu0 0
        %7786 = vmatpush1.bf16.msra.mxu0 0
        %7787 = vmatprep.subr.bf16.mxu0 0
        %7788 = vmatpush1.bf16.msra.mxu0 0
        %7789 = vmatprep.subr.bf16.mxu0 0
        %7790 = vmatpush1.bf16.msra.mxu0 0
        %7791 = vmatprep.subr.bf16.mxu0 0
        %7792 = vmatpush1.bf16.msra.mxu0 0
        %7793 = vmatprep.subr.bf16.mxu0 0
        %7794 = vmatpush1.bf16.msra.mxu0 0
        %7795 = vmatprep.subr.bf16.mxu0 0
        %7796 = vmatpush1.bf16.msra.mxu0 0
        %7797 = vmatprep.subr.bf16.mxu0 0
        %7798 = vmatpush1.bf16.msra.mxu0 0
        %7799 = vmatprep.subr.bf16.mxu0 0
        %7800 = vmatpush1.bf16.msra.mxu0 0
        %7801 = vmatprep.mubr.bf16.mxu0 0
        %7802 = vmatmul.mubr.bf16.gmra.mrb[0].mxu0 %v7714
        %v7803 = vpop.f32.mrb[0].mxu0
        %v7804 = vadd.f32 %v7719, %v7803
        %v7805 = vpop.f32.mrb[0].mxu0
        %v7806 = vpop.f32.mrb[0].mxu0
        %v7807 = vadd.f32 %v7719, %v7806
        %v7808 = vpop.f32.mrb[0].mxu0
        %7809 = vdwg.mxu0
        %v7810 = vadd.f32 %v7804, %v4375
        %v7811 = vadd.f32 %v7807, %v4376
        %7812 = vadd.xlane.f32.xlu0 %v7810
        %v7813 = vpop.xlane.xlu0 %7812
        %7814 = vadd.xlane.f32.xlu0 %v7811
        %v7815 = vpop.xlane.xlu0 %7814
        %v7816 = vmul.f32 %v7813, %v4342
        %v7817 = vmul.f32 %v7815, %v4342
        %v7818 = vsub.f32 %v7810, %v7816
        %v7819 = vsub.f32 %v7811, %v7817
        %v7820 = vmul.f32 %v7818, %v7818
        %v7821 = vmul.f32 %v7819, %v7819
        %7822 = vadd.xlane.f32.xlu0 %v7820
        %v7823 = vpop.xlane.xlu0 %7822
        %7824 = vadd.xlane.f32.xlu0 %v7821
        %v7825 = vpop.xlane.xlu0 %7824
        %v7826 = vmul.f32 %v7823, %v4342
        %v7827 = vmul.f32 %v7825, %v4342
        %v7828 = vadd.f32 %v7826, 1e-12
        %v7829 = vadd.f32 %v7827, 1e-12
        %v7830 = vrsqrt.pop %v7828
        %v7831 = vrsqrt.pop %v7829
        %v7832 = vmul.f32 %v7818, %v7830
        %v7833 = vmul.f32 %v7819, %v7831
        %v7835 = vlaneseq
        %v7836 = vshrl.u32 %v7835, 7
        %v7837 = vsub.s32 0, %v7836
        %v7838 = vrot.slane %v1469, %v7837
        %v7840 = vmul.f32 %v7838, %v7832
        %v7841 = vmul.f32 %v7838, %v7833
        %v7843 = vlaneseq
        %v7844 = vshrl.u32 %v7843, 7
        %v7845 = vsub.s32 0, %v7844
        %v7846 = vrot.slane %v1470, %v7845
        %v7848 = vadd.f32 %v7840, %v7846
        %v7849 = vadd.f32 %v7841, %v7846
        %v7850 = vpack.c.bf16 %v7849, %v7848
        %v7852 = vlaneseq
        %v7853 = vshrl.u32 %v7852, 7
        %v7854 = vsub.s32 0, %v7853
        %v7855 = vrot.slane %v1487, %v7854
        %v7856 = vlaneseq
        %v7857 = vshrl.u32 %v7856, 7
        %v7858 = vsub.s32 1, %v7857
        %v7859 = vrot.slane %v1487, %v7858
        %v7878 = vunpack.c.l.b16 %v1471
        %v7879 = vunpack.c.h.b16 %v1471
        %v7880 = vunpack.c.l.b16 %v1472
        %v7881 = vunpack.c.h.b16 %v1472
        %v7882 = vunpack.c.l.b16 %v1473
        %v7883 = vunpack.c.h.b16 %v1473
        %v7884 = vunpack.c.l.b16 %v1474
        %v7885 = vunpack.c.h.b16 %v1474
        %v7886 = vunpack.c.l.b16 %v1475
        %v7887 = vunpack.c.h.b16 %v1475
        %v7888 = vunpack.c.l.b16 %v1476
        %v7889 = vunpack.c.h.b16 %v1476
        %v7890 = vunpack.c.l.b16 %v1477
        %v7891 = vunpack.c.h.b16 %v1477
        %v7892 = vunpack.c.l.b16 %v1478
        %v7893 = vunpack.c.h.b16 %v1478
        %v7894 = vunpack.c.l.b16 %v1479
        %v7895 = vunpack.c.h.b16 %v1479
        %v7896 = vunpack.c.l.b16 %v1480
        %v7897 = vunpack.c.h.b16 %v1480
        %v7898 = vunpack.c.l.b16 %v1481
        %v7899 = vunpack.c.h.b16 %v1481
        %v7900 = vunpack.c.l.b16 %v1482
        %v7901 = vunpack.c.h.b16 %v1482
        %v7902 = vunpack.c.l.b16 %v1483
        %v7903 = vunpack.c.h.b16 %v1483
        %v7904 = vunpack.c.l.b16 %v1484
        %v7905 = vunpack.c.h.b16 %v1484
        %v7906 = vunpack.c.l.b16 %v1485
        %v7907 = vunpack.c.h.b16 %v1485
        %v7908 = vunpack.c.l.b16 %v1486
        %v7909 = vunpack.c.h.b16 %v1486
        %v7910 = vpack.c.b16 %v7880, %v7878
        %v7911 = vpack.c.b16 %v7881, %v7879
        %v7912 = vpack.c.b16 %v7884, %v7882
        %v7913 = vpack.c.b16 %v7885, %v7883
        %v7914 = vpack.c.b16 %v7888, %v7886
        %v7915 = vpack.c.b16 %v7889, %v7887
        %v7916 = vpack.c.b16 %v7892, %v7890
        %v7917 = vpack.c.b16 %v7893, %v7891
        %v7918 = vpack.c.b16 %v7896, %v7894
        %v7919 = vpack.c.b16 %v7897, %v7895
        %v7920 = vpack.c.b16 %v7900, %v7898
        %v7921 = vpack.c.b16 %v7901, %v7899
        %v7922 = vpack.c.b16 %v7904, %v7902
        %v7923 = vpack.c.b16 %v7905, %v7903
        %v7924 = vpack.c.b16 %v7908, %v7906
        %v7925 = vpack.c.b16 %v7909, %v7907
        %7942 = vmatprep.subr.bf16.mxu0 %v7911
        %7943 = vmatpush1.bf16.msra.mxu0 %v7910
        %7944 = vmatprep.subr.bf16.mxu0 %v7913
        %7945 = vmatpush1.bf16.msra.mxu0 %v7912
        %7946 = vmatprep.subr.bf16.mxu0 %v7915
        %7947 = vmatpush1.bf16.msra.mxu0 %v7914
        %7948 = vmatprep.subr.bf16.mxu0 %v7917
        %7949 = vmatpush1.bf16.msra.mxu0 %v7916
        %7950 = vmatprep.subr.bf16.mxu0 %v7919
        %7951 = vmatpush1.bf16.msra.mxu0 %v7918
        %7952 = vmatprep.subr.bf16.mxu0 %v7921
        %7953 = vmatpush1.bf16.msra.mxu0 %v7920
        %7954 = vmatprep.subr.bf16.mxu0 %v7923
        %7955 = vmatpush1.bf16.msra.mxu0 %v7922
        %7956 = vmatprep.subr.bf16.mxu0 %v7925
        %7957 = vmatpush1.bf16.msra.mxu0 %v7924
        %7958 = vmatprep.subr.bf16.mxu0 0
        %7959 = vmatpush1.bf16.msra.mxu0 0
        %7960 = vmatprep.subr.bf16.mxu0 0
        %7961 = vmatpush1.bf16.msra.mxu0 0
        %7962 = vmatprep.subr.bf16.mxu0 0
        %7963 = vmatpush1.bf16.msra.mxu0 0
        %7964 = vmatprep.subr.bf16.mxu0 0
        %7965 = vmatpush1.bf16.msra.mxu0 0
        %7966 = vmatprep.subr.bf16.mxu0 0
        %7967 = vmatpush1.bf16.msra.mxu0 0
        %7968 = vmatprep.subr.bf16.mxu0 0
        %7969 = vmatpush1.bf16.msra.mxu0 0
        %7970 = vmatprep.subr.bf16.mxu0 0
        %7971 = vmatpush1.bf16.msra.mxu0 0
        %7972 = vmatprep.subr.bf16.mxu0 0
        %7973 = vmatpush1.bf16.msra.mxu0 0
        %7974 = vmatprep.mubr.bf16.mxu0 0
        %7975 = vmatmul.mubr.bf16.gmra.mrb[0].mxu0 %v7850
        %v7976 = vpop.f32.mrb[0].mxu0
        %v7977 = vadd.f32 %v7855, %v7976
        %v7978 = vpop.f32.mrb[0].mxu0
        %v7979 = vadd.f32 %v7859, %v7978
        %v7980 = vpop.f32.mrb[0].mxu0
        %v7981 = vadd.f32 %v7855, %v7980
        %v7982 = vpop.f32.mrb[0].mxu0
        %v7983 = vadd.f32 %v7859, %v7982
        %7984 = vdwg.mxu0
        %v7985 = vmax.f32 %v7977, 0.0
        %v7986 = vmax.f32 %v7979, 0.0
        %v7987 = vmax.f32 %v7981, 0.0
        %v7988 = vmax.f32 %v7983, 0.0
        %v7989 = vpack.c.bf16 %v7987, %v7985
        %v7990 = vpack.c.bf16 %v7988, %v7986
        %v7992 = vlaneseq
        %v7993 = vshrl.u32 %v7992, 7
        %v7994 = vsub.s32 0, %v7993
        %v7995 = vrot.slane %v1520, %v7994
        %v8029 = vunpack.c.l.b16 %v1488
        %v8030 = vunpack.c.l.b16 %v1489
        %v8031 = vunpack.c.l.b16 %v1490
        %v8032 = vunpack.c.l.b16 %v1491
        %v8033 = vunpack.c.l.b16 %v1492
        %v8034 = vunpack.c.l.b16 %v1493
        %v8035 = vunpack.c.l.b16 %v1494
        %v8036 = vunpack.c.l.b16 %v1495
        %v8037 = vunpack.c.l.b16 %v1496
        %v8038 = vunpack.c.l.b16 %v1497
        %v8039 = vunpack.c.l.b16 %v1498
        %v8040 = vunpack.c.l.b16 %v1499
        %v8041 = vunpack.c.l.b16 %v1500
        %v8042 = vunpack.c.l.b16 %v1501
        %v8043 = vunpack.c.l.b16 %v1502
        %v8044 = vunpack.c.l.b16 %v1503
        %v8045 = vunpack.c.l.b16 %v1504
        %v8046 = vunpack.c.l.b16 %v1505
        %v8047 = vunpack.c.l.b16 %v1506
        %v8048 = vunpack.c.l.b16 %v1507
        %v8049 = vunpack.c.l.b16 %v1508
        %v8050 = vunpack.c.l.b16 %v1509
        %v8051 = vunpack.c.l.b16 %v1510
        %v8052 = vunpack.c.l.b16 %v1511
        %v8053 = vunpack.c.l.b16 %v1512
        %v8054 = vunpack.c.l.b16 %v1513
        %v8055 = vunpack.c.l.b16 %v1514
        %v8056 = vunpack.c.l.b16 %v1515
        %v8057 = vunpack.c.l.b16 %v1516
        %v8058 = vunpack.c.l.b16 %v1517
        %v8059 = vunpack.c.l.b16 %v1518
        %v8060 = vunpack.c.l.b16 %v1519
        %v8061 = vpack.c.b16 %v8030, %v8029
        %v8062 = vpack.c.b16 %v8032, %v8031
        %v8063 = vpack.c.b16 %v8034, %v8033
        %v8064 = vpack.c.b16 %v8036, %v8035
        %v8065 = vpack.c.b16 %v8038, %v8037
        %v8066 = vpack.c.b16 %v8040, %v8039
        %v8067 = vpack.c.b16 %v8042, %v8041
        %v8068 = vpack.c.b16 %v8044, %v8043
        %v8069 = vpack.c.b16 %v8046, %v8045
        %v8070 = vpack.c.b16 %v8048, %v8047
        %v8071 = vpack.c.b16 %v8050, %v8049
        %v8072 = vpack.c.b16 %v8052, %v8051
        %v8073 = vpack.c.b16 %v8054, %v8053
        %v8074 = vpack.c.b16 %v8056, %v8055
        %v8075 = vpack.c.b16 %v8058, %v8057
        %v8076 = vpack.c.b16 %v8060, %v8059
        %8093 = vmatprep.subr.bf16.mxu0 0
        %8094 = vmatpush1.bf16.msra.mxu0 %v8061
        %8095 = vmatprep.subr.bf16.mxu0 0
        %8096 = vmatpush1.bf16.msra.mxu0 %v8062
        %8097 = vmatprep.subr.bf16.mxu0 0
        %8098 = vmatpush1.bf16.msra.mxu0 %v8063
        %8099 = vmatprep.subr.bf16.mxu0 0
        %8100 = vmatpush1.bf16.msra.mxu0 %v8064
        %8101 = vmatprep.subr.bf16.mxu0 0
        %8102 = vmatpush1.bf16.msra.mxu0 %v8065
        %8103 = vmatprep.subr.bf16.mxu0 0
        %8104 = vmatpush1.bf16.msra.mxu0 %v8066
        %8105 = vmatprep.subr.bf16.mxu0 0
        %8106 = vmatpush1.bf16.msra.mxu0 %v8067
        %8107 = vmatprep.subr.bf16.mxu0 0
        %8108 = vmatpush1.bf16.msra.mxu0 %v8068
        %8109 = vmatprep.subr.bf16.mxu0 0
        %8110 = vmatpush1.bf16.msra.mxu0 %v8069
        %8111 = vmatprep.subr.bf16.mxu0 0
        %8112 = vmatpush1.bf16.msra.mxu0 %v8070
        %8113 = vmatprep.subr.bf16.mxu0 0
        %8114 = vmatpush1.bf16.msra.mxu0 %v8071
        %8115 = vmatprep.subr.bf16.mxu0 0
        %8116 = vmatpush1.bf16.msra.mxu0 %v8072
        %8117 = vmatprep.subr.bf16.mxu0 0
        %8118 = vmatpush1.bf16.msra.mxu0 %v8073
        %8119 = vmatprep.subr.bf16.mxu0 0
        %8120 = vmatpush1.bf16.msra.mxu0 %v8074
        %8121 = vmatprep.subr.bf16.mxu0 0
        %8122 = vmatpush1.bf16.msra.mxu0 %v8075
        %8123 = vmatprep.subr.bf16.mxu0 0
        %8124 = vmatpush1.bf16.msra.mxu0 %v8076
        %8125 = vmatprep.mubr.bf16.mxu0 %v7990
        %8126 = vmatmul.mubr.bf16.gmra.mrb[0].mxu0 %v7989
        %v8127 = vpop.f32.mrb[0].mxu0
        %v8128 = vadd.f32 %v7995, %v8127
        %v8129 = vpop.f32.mrb[0].mxu0
        %v8130 = vpop.f32.mrb[0].mxu0
        %v8131 = vadd.f32 %v7995, %v8130
        %v8132 = vpop.f32.mrb[0].mxu0
        %8133 = vdwg.mxu0
        %v8134 = vadd.f32 %v8128, %v7848
        %v8135 = vadd.f32 %v8131, %v7849
        %8136 = vadd.xlane.f32.xlu0 %v8134
        %v8137 = vpop.xlane.xlu0 %8136
        %8138 = vadd.xlane.f32.xlu0 %v8135
        %v8139 = vpop.xlane.xlu0 %8138
        %v8140 = vmul.f32 %v8137, %v4342
        %v8141 = vmul.f32 %v8139, %v4342
        %v8142 = vsub.f32 %v8134, %v8140
        %v8143 = vsub.f32 %v8135, %v8141
        %v8144 = vmul.f32 %v8142, %v8142
        %v8145 = vmul.f32 %v8143, %v8143
        %8146 = vadd.xlane.f32.xlu0 %v8144
        %v8147 = vpop.xlane.xlu0 %8146
        %8148 = vadd.xlane.f32.xlu0 %v8145
        %v8149 = vpop.xlane.xlu0 %8148
        %v8150 = vmul.f32 %v8147, %v4342
        %v8151 = vmul.f32 %v8149, %v4342
        %v8152 = vadd.f32 %v8150, 1e-12
        %v8153 = vadd.f32 %v8151, 1e-12
        %v8154 = vrsqrt.pop %v8152
        %v8155 = vrsqrt.pop %v8153
        %v8156 = vmul.f32 %v8142, %v8154
        %v8157 = vmul.f32 %v8143, %v8155
        %v8159 = vlaneseq
        %v8160 = vshrl.u32 %v8159, 7
        %v8161 = vsub.s32 0, %v8160
        %v8162 = vrot.slane %v1521, %v8161
        %v8164 = vmul.f32 %v8162, %v8156
        %v8165 = vmul.f32 %v8162, %v8157
        %v8167 = vlaneseq
        %v8168 = vshrl.u32 %v8167, 7
        %v8169 = vsub.s32 0, %v8168
        %v8170 = vrot.slane %v1522, %v8169
        %v8172 = vadd.f32 %v8164, %v8170
        %v8173 = vadd.f32 %v8165, %v8170
        %8174 = vst [vmem:[%s1355] sm:$0xff] %v8172
        %8175 = vst [vmem:[%s1355 + $0x8] sm:$0xff] %v8173
        %s8176 = smul.u32 2, %s57
        %p8177 = scmp.lt.s32.totalorder %s8176, 1
        %s8178 = scalar_select %p8177, %s8176, 1
        %s8179 = smul.addr %s8178, 8
        %s8180 = scalar_lea.vmem %s24, %s8179
        // Predicated region
        $region165: #{decoder_forward.2} parent=115 // pred_check
          %p8181 = pneg %p707
        $region166: #{decoder_forward.2} parent=115 // pred_check_branch
          %8183 = sbr.rel (%p8181) target = $region168
        $region167: #{decoder_forward.2} parent=115 // pred_region
          %s8184 = smul.u32 2, %s57
        $region168: #{decoder_forward.2} parent=115 // pred_fallthru
          _
        // Predicated region
        $region169: #{decoder_forward.2} parent=115 // pred_check
          %p8185 = pneg %p707
        $region170: #{decoder_forward.2} parent=115 // pred_check_branch
          %8187 = sbr.rel (%p8185) target = $region172
        $region171: #{decoder_forward.2} parent=115 // pred_region
          %s8188 = smul.u32 2, %s57
          %p8189 = scmp.lt.s32.totalorder %s8188, 1
          %s8190 = scalar_select %p8189, %s8188, 1
          %s8191 = smul.addr %s8190, 8
          %s8192 = scalar_lea.vmem %s24, %s8191
        $region172: #{decoder_forward.2} parent=115 // pred_fallthru
          _
      $region116: #{decoder_forward.2} parent=5 // pred_fallthru
        _
      %p8193 = scmp.le.s32.totalorder 2, %s48
      // Predicated region
      $region173: #{decoder_forward.2} parent=5 // pred_check
        %p8194 = pneg %p8193
      $region174: #{decoder_forward.2} parent=5 // pred_check_branch
        %8196 = sbr.rel (%p8194) target = $region176
      $region175: #{decoder_forward.2} parent=5 // pred_region
        %s8197 = ssub.s32 %s48, 2
      $region176: #{decoder_forward.2} parent=5 // pred_fallthru
        _
    $region6: #{decoder_forward.2} parent=1 // loop_footer
      %s52 = sadd.s32 1, %s48
    $region7: #{decoder_forward.2} parent=1 // loop_footer_branch
      %47 = sbr.rel target = $region3
    $region8: #{decoder_forward.2} parent=1 // loop_exit
      _
    %8198 = vsyncpa [#allocation3], 1
    %s8199 = scalar_lea.sflag [#allocation3], 1
    %8200 = vsyncpa %s8199, 1
    %8201 = vsyncpa [#allocation5], 1
    %s8202 = scalar_lea.sflag [#allocation5], 1
    %8203 = vsyncpa %s8202, 1
    %8204 = vsyncpa [#allocation8], 1
    %s8205 = scalar_lea.sflag [#allocation8], 1
    %8206 = vsyncpa %s8205, 1
    %8207 = vsyncpa [#allocation11], 1
    %s8208 = scalar_lea.sflag [#allocation11], 1
    %8209 = vsyncpa %s8208, 1
    %8210 = vsyncpa [#allocation14], 1
    %s8211 = scalar_lea.sflag [#allocation14], 1
    %8212 = vsyncpa %s8211, 1
    %8213 = vsyncpa [#allocation17], 1
    %s8214 = scalar_lea.sflag [#allocation17], 1
    %8215 = vsyncpa %s8214, 1

</llo_original>
